<compile_context>
chip_gen: v5e
topology: v5e:2x2
jax: 0.10.0
libtpu: 0.0.40
codegen_flags: <defaults>
</compile_context>

<pallas_src>
import jax
import jax.numpy as jnp
from jax.experimental import pallas as pl
from jax.experimental.pallas import tpu as pltpu

EPS = 1e-5                  # PyTorch BatchNorm default eps
IMG = 28                    # decoded image side
PAD_IMG = IMG + 2           # 30: spatially padded side (conv halo)
PIX = PAD_IMG * PAD_IMG     # 900 padded pixels per image
CHAN_W = 1024               # per-image per-channel lane width (900 -> 1024)
C0 = 16                     # channels out of e_nn
CPAD = 8                    # padded channel count inside the conv blocks
TAP_OFFS = tuple(dy * PAD_IMG + dx for dy in (-1, 0, 1) for dx in (-1, 0, 1))

# Roll-wrap safety: interior flat positions lie in [31, 868]; max |tap offset|
# is PAD_IMG+1 = 31, so p+off stays inside [0, PIX) < CHAN_W — the circular
# roll over a CHAN_W-wide image slab never feeds wrapped (tail) data into an
# interior output.  Ring/tail outputs are re-zeroed by the mask after each conv.
assert (PIX - PAD_IMG - 2) + (PAD_IMG + 1) < CHAN_W
assert (PAD_IMG + 1) - (PAD_IMG + 1) >= 0


# --------------------------------------------------------------------------
# Kernel 1: e_nn  (Linear + folded BatchNorm1d + ReLU) -> padded conv layout
# --------------------------------------------------------------------------
def linear_relu_kernel(x_ref, w_ref, b_ref, o_ref):
    """o = relu(x @ w' + b'); BN folded into w'/b'; halo/tail are zero cols."""
    xb = x_ref[...].astype(jnp.bfloat16)
    acc = jnp.dot(xb, w_ref[...], preferred_element_type=jnp.float32)
    o_ref[...] = jnp.maximum(acc + b_ref[...], 0.0)


def linear_bn_relu(x, w_bf16, bias):
    n = x.shape[0]
    k, f = w_bf16.shape                       # (128, 16*CHAN_W)
    n_tiles = 2                               # 2 lane-dense tiles -> 2 v7x TCs
    col_tile = f // n_tiles
    cost = pl.CostEstimate(
        flops=2 * n * k * f,
        transcendentals=0,
        bytes_accessed=k * f * 2 + f * 4 + n * k * 4 + n * f * 4)
    return pl.pallas_call(
        linear_relu_kernel,
        out_shape=jax.ShapeDtypeStruct((n, f), jnp.float32),
        grid=(n_tiles,),
        in_specs=[
            pl.BlockSpec((n, k), lambda j: (0, 0)),
            pl.BlockSpec((k, col_tile), lambda j: (0, j)),
            pl.BlockSpec((1, col_tile), lambda j: (0, j)),
        ],
        out_specs=pl.BlockSpec((n, col_tile), lambda j: (0, j)),
        compiler_params=pltpu.CompilerParams(dimension_semantics=("parallel",)),
        cost_estimate=cost,
    )(x, w_bf16, bias)


# --------------------------------------------------------------------------
# Kernel 2: block2 + block1 fused, grid over images
# --------------------------------------------------------------------------
def _conv3x3_stacked(w_ref, act_bf16):
    """3x3 'same' conv over a zero-ring padded slab: ONE stacked matmul
    (9 taps along M), then 9 static lane rolls (XLU) + f32 adds."""
    z = jnp.dot(w_ref[...], act_bf16,
                preferred_element_type=jnp.float32)          # [9*CPAD, CHAN_W]
    acc = None
    for t, off in enumerate(TAP_OFFS):
        slab = z[t * CPAD:(t + 1) * CPAD, :]
        if off != 0:
            slab = pltpu.roll(slab, shift=(-off) % CHAN_W, axis=1)
        acc = slab if acc is None else acc + slab
    return acc


def decoder_blocks_kernel(act_ref, mask_ref,
                          w1a_ref, b1a_ref, w2a_ref, b2a_ref, wida_ref,
                          w1b_ref, b1b_ref, w2b_ref, b2b_ref, widb_ref,
                          o_ref, h_ref):
    # ---- block2: 16 -> 8 -> 4(pad 8).  Refs re-read at point of use; MXU
    #      operands bf16, epilogue math f32 (v5e-safe).
    mid = _conv3x3_stacked(w1a_ref, act_ref[...].astype(jnp.bfloat16))
    mid = jnp.maximum(mid + b1a_ref[...], 0.0) * mask_ref[...]
    acc = _conv3x3_stacked(w2a_ref, mid.astype(jnp.bfloat16))
    acc = acc + jnp.dot(wida_ref[...], act_ref[...].astype(jnp.bfloat16),
                        preferred_element_type=jnp.float32)
    h_ref[...] = jnp.maximum(acc + b2a_ref[...], 0.0) * mask_ref[...]
    # ---- block1: 4(8) -> 2(8) -> 1(8); block2 output re-read from VMEM scratch
    mid = _conv3x3_stacked(w1b_ref, h_ref[...].astype(jnp.bfloat16))
    mid = jnp.maximum(mid + b1b_ref[...], 0.0) * mask_ref[...]
    acc = _conv3x3_stacked(w2b_ref, mid.astype(jnp.bfloat16))
    acc = acc + jnp.dot(widb_ref[...], h_ref[...].astype(jnp.bfloat16),
                        preferred_element_type=jnp.float32)
    out = jnp.maximum(acc + b2b_ref[...], 0.0) * mask_ref[...]
    o_ref[...] = out[:1, :]                   # real output channel 0 only


def decoder_blocks(act, mask, blk2, blk1):
    n = act.shape[0]
    flops_img = 2 * CHAN_W * (9 * CPAD * C0 + 3 * 9 * CPAD * CPAD
                              + CPAD * C0 + CPAD * CPAD)
    cost = pl.CostEstimate(flops=n * flops_img, transcendentals=0,
                           bytes_accessed=n * (C0 * CHAN_W * 4 + CHAN_W * 4) + 8192)
    cmap = lambda i: (0, 0)
    return pl.pallas_call(
        decoder_blocks_kernel,
        out_shape=jax.ShapeDtypeStruct((n, 1, CHAN_W), jnp.float32),
        grid=(n,),
        in_specs=[
            pl.BlockSpec((None, C0, CHAN_W), lambda i: (i, 0, 0)),
            pl.BlockSpec((1, CHAN_W), cmap),
            pl.BlockSpec(blk2['w1'].shape, cmap), pl.BlockSpec(blk2['b1'].shape, cmap),
            pl.BlockSpec(blk2['w2'].shape, cmap), pl.BlockSpec(blk2['b2'].shape, cmap),
            pl.BlockSpec(blk2['wid'].shape, cmap),
            pl.BlockSpec(blk1['w1'].shape, cmap), pl.BlockSpec(blk1['b1'].shape, cmap),
            pl.BlockSpec(blk1['w2'].shape, cmap), pl.BlockSpec(blk1['b2'].shape, cmap),
            pl.BlockSpec(blk1['wid'].shape, cmap),
        ],
        out_specs=pl.BlockSpec((None, 1, CHAN_W), lambda i: (i, 0, 0)),
        scratch_shapes=[pltpu.VMEM((CPAD, CHAN_W), jnp.float32)],
        compiler_params=pltpu.CompilerParams(dimension_semantics=("parallel",)),
        cost_estimate=cost,
    )(act, mask,
      blk2['w1'], blk2['b1'], blk2['w2'], blk2['b2'], blk2['wid'],
      blk1['w1'], blk1['b1'], blk1['w2'], blk1['b2'], blk1['wid'])


# --------------------------------------------------------------------------
# One-time parameter preprocessing (BN folding, ConvT->taps, padding, bf16)
# --------------------------------------------------------------------------
def _bn_scale(g, v):
    return g * jax.lax.rsqrt(v + EPS)


def _convT3x3_taps(wct):
    """ConvTranspose2d weight [ci, co, 3, 3] (stride 1, pad 1) -> tap matrices
    [9, co, ci] such that out[co,y,x] = sum_{dy,dx,ci} tap[(dy+1)*3+dx+1][co,ci]
    * in[ci, y+dy, x+dx] (zero outside)."""
    w = wct[:, :, ::-1, ::-1]                 # spatial flip (transposed conv)
    w = jnp.transpose(w, (2, 3, 1, 0))        # [3, 3, co, ci]
    return w.reshape(9, w.shape[2], w.shape[3])


def _stack_taps(taps, co_pad, ci_pad):
    t = jnp.pad(taps, ((0, 0), (0, co_pad - taps.shape[1]),
                       (0, ci_pad - taps.shape[2])))
    return t.reshape(9 * co_pad, ci_pad)      # taps stacked along M


def _prep_block(p, ci_pad):
    s1 = _bn_scale(p['g1'], p['v1'])
    w1 = _convT3x3_taps(p['w1']) * s1[None, :, None]          # [9, cm, ci]
    b1 = (p['b1'] - p['mu1']) * s1 + p['be1']

    s2 = _bn_scale(p['g2'], p['v2'])
    w2 = _convT3x3_taps(p['w2']) * s2[None, :, None]          # [9, co, cm]
    b2 = (p['b2'] - p['mu2']) * s2 + p['be2'] + p['bid']      # + identity bias

    wid = p['wid'][:, :, 0, 0].T                              # [co, ci]

    padv = lambda a: jnp.pad(a, (0, CPAD - a.shape[0])).reshape(CPAD, 1)
    padw = lambda a: jnp.pad(a, ((0, CPAD - a.shape[0]),
                                 (0, ci_pad - a.shape[1])))

    # Zero-pad AFTER BN folding; zeros survive the bf16 cast exactly, so padded
    # channels stay identically zero through both blocks.
    return {
        'w1': _stack_taps(w1, CPAD, ci_pad).astype(jnp.bfloat16),   # [72, ci_pad]
        'b1': padv(b1).astype(jnp.float32),
        'w2': _stack_taps(w2, CPAD, CPAD).astype(jnp.bfloat16),     # [72, CPAD]
        'b2': padv(b2).astype(jnp.float32),
        'wid': padw(wid).astype(jnp.bfloat16),                      # [CPAD, ci_pad]
    }


def prepare_params(params):
    # Fold BN1d into the Linear; remap columns into the channel-major,
    # zero-ring padded conv layout [128, 16*CHAN_W]; store the weight in bf16.
    s = _bn_scale(params['enn_g'], params['enn_v'])
    w = params['enn_w'].T * s[None, :]                        # [128, 12544]
    b = (params['enn_b'] - params['enn_mu']) * s + params['enn_be']

    w4 = w.reshape(128, C0, IMG, IMG)
    w4 = jnp.pad(w4, ((0, 0), (0, 0), (1, 1), (1, 1))).reshape(128, C0, PIX)
    w4 = jnp.pad(w4, ((0, 0), (0, 0), (0, CHAN_W - PIX)))
    b3 = b.reshape(C0, IMG, IMG)
    b3 = jnp.pad(b3, ((0, 0), (1, 1), (1, 1))).reshape(C0, PIX)
    b3 = jnp.pad(b3, ((0, 0), (0, CHAN_W - PIX)))

    # interior mask for one padded image slab (re-zeroes ring + tail per conv)
    q = jnp.arange(CHAN_W)
    py, px = q // PAD_IMG, q % PAD_IMG
    interior = ((q < PIX) & (py >= 1) & (py <= IMG) & (px >= 1) & (px <= IMG))

    return {
        'enn_w': w4.reshape(128, C0 * CHAN_W).astype(jnp.bfloat16),
        'enn_b': b3.reshape(1, C0 * CHAN_W).astype(jnp.float32),
        'mask': interior.astype(jnp.float32).reshape(1, CHAN_W),
        'block2': _prep_block(params['block2'], ci_pad=16),   # ResNetBlock(16,8,4)
        'block1': _prep_block(params['block1'], ci_pad=CPAD),  # ResNetBlock(4,2,1)
    }


# --------------------------------------------------------------------------
# Forward (checker == 1): e_nn -> view(N,16,28,28) -> block2 -> block1
# --------------------------------------------------------------------------
def decoder_forward(x, prep):
    n = x.shape[0]
    feats = linear_bn_relu(x, prep['enn_w'], prep['enn_b'])   # [n, 16*CHAN_W]
    act = feats.reshape(n, C0, CHAN_W)                        # free reshape, no glue
    out = decoder_blocks(act, prep['mask'],
                         prep['block2'], prep['block1'])      # [n, 1, CHAN_W]
    img = out[:, 0, :PIX].reshape(n, PAD_IMG, PAD_IMG)[:, 1:IMG + 1, 1:IMG + 1]
    return img[:, None, :, :]                                 # NCHW: [n,1,28,28]


# --------------------------------------------------------------------------
# Pure-JAX reference (PyTorch semantics, f32) for numeric validation
# --------------------------------------------------------------------------
def _convT3x3_ref(x, w, b):
    """ConvTranspose2d(kernel=3, stride=1, padding=1), NCHW."""
    n, ci, h, wd = x.shape
    xp = jnp.pad(x, ((0, 0), (0, 0), (1, 1), (1, 1)))
    out = jnp.zeros((n, w.shape[1], h, wd), jnp.float32)
    for i in range(3):
        for j in range(3):
            patch = xp[:, :, 2 - i:2 - i + h, 2 - j:2 - j + wd]
            out = out + jnp.einsum('ncyx,co->noyx', patch, w[:, :, i, j],
                                   precision='highest')
    return out + b[None, :, None, None]


def _bn2d_ref(x, g, be, mu, v):
    s = _bn_scale(g, v)
    return ((x - mu[None, :, None, None]) * s[None, :, None, None]
            + be[None, :, None, None])


def _block_ref(x, p):
    identity = jnp.einsum('ncyx,co->noyx', x, p['wid'][:, :, 0, 0],
                          precision='highest') + p['bid'][None, :, None, None]
    out = _convT3x3_ref(x, p['w1'], p['b1'])
    out = jnp.maximum(_bn2d_ref(out, p['g1'], p['be1'], p['mu1'], p['v1']), 0.0)
    out = _convT3x3_ref(out, p['w2'], p['b2'])
    out = _bn2d_ref(out, p['g2'], p['be2'], p['mu2'], p['v2'])
    return jnp.maximum(out + identity, 0.0)


def reference_forward(x, params):
    # bf16-round the big e_nn weight / input like the kernel; else f32.
    w = params['enn_w'].astype(jnp.bfloat16).astype(jnp.float32)
    xr = x.astype(jnp.bfloat16).astype(jnp.float32)
    s = _bn_scale(params['enn_g'], params['enn_v'])
    feats = jnp.dot(xr, w.T, precision='highest') + params['enn_b']
    feats = jnp.maximum((feats - params['enn_mu']) * s + params['enn_be'], 0.0)
    feats = feats.reshape(-1, C0, IMG, IMG)
    h = _block_ref(feats, params['block2'])
    h = _block_ref(h, params['block1'])
    return h


# --------------------------------------------------------------------------
# Deterministic synthetic parameters (shapes follow the torch module)
# --------------------------------------------------------------------------
def init_params(key):
    keys = iter(jax.random.split(key, 64))

    def nrm(shape, scale=0.05):
        return (scale * jax.random.normal(next(keys), shape)).astype(jnp.float32)

    def pos(shape):
        return jax.random.uniform(next(keys), shape, minval=0.5,
                                  maxval=1.5).astype(jnp.float32)

    F = C0 * IMG * IMG
    p = {
        'enn_w': nrm((F, 128)),            # torch Linear weight layout [out, in]
        'enn_b': nrm((F,)),
        'enn_g': pos((F,)), 'enn_be': nrm((F,)),
        'enn_mu': nrm((F,)), 'enn_v': pos((F,)),
    }

    def block(ci, cm, co):
        return {
            'w1': nrm((ci, cm, 3, 3), 0.1), 'b1': nrm((cm,), 0.1),
            'g1': pos((cm,)), 'be1': nrm((cm,), 0.1),
            'mu1': nrm((cm,), 0.1), 'v1': pos((cm,)),
            'w2': nrm((cm, co, 3, 3), 0.1), 'b2': nrm((co,), 0.1),
            'g2': pos((co,)), 'be2': nrm((co,), 0.1),
            'mu2': nrm((co,), 0.1), 'v2': pos((co,)),
            'wid': nrm((ci, co, 1, 1), 0.1), 'bid': nrm((co,), 0.1),
        }

    p['block2'] = block(16, 8, 4)
    p['block1'] = block(4, 2, 1)
    return p


if __name__ == "__main__":
    root = jax.random.PRNGKey(0)
    k_params, k_x = jax.random.split(root)
    params = init_params(k_params)

    batch = 2
    x = jax.random.normal(k_x, (batch, 128), dtype=jnp.float32)

    prep = prepare_params(params)          # one-time: BN fold, taps, bf16, layout
    fwd = jax.jit(decoder_forward)
    out = jax.block_until_ready(fwd(x, prep))

    assert out.shape == (batch, 1, IMG, IMG), out.shape
    assert bool(jnp.all(jnp.isfinite(out)))

    ref = reference_forward(x, params)
    err = float(jnp.max(jnp.abs(out - ref)))
    assert err < 0.15, f"max abs diff vs reference: {err}"

    print("KERNEL_OK")
</pallas_src>

<mosaic_0001>
module attributes {stable_mosaic.version = 11 : i64} {
  func.func @linear_relu_kernel(%arg0: i32, %arg1: memref<2x128xf32, #tpu.memory_space<vmem>>, %arg2: memref<128x8192xbf16, #tpu.memory_space<vmem>>, %arg3: memref<1x8192xf32, #tpu.memory_space<vmem>>, %arg4: memref<2x8192xf32, #tpu.memory_space<vmem>>) attributes {dimension_semantics = [#tpu.dimension_semantics<parallel>], iteration_bounds = array<i64: 2>, scalar_prefetch = 0 : i64, scratch_operands = 0 : i64, tpu.core_type = #tpu.core_type<tc>, window_params = [{pipeline_mode = #tpu.pipeline_mode<synchronous>, transform_indices = @transform_0, window_bounds = array<i64: 2, 128>}, {transform_indices = @transform_1, window_bounds = array<i64: 128, 8192>}, {transform_indices = @transform_2, window_bounds = array<i64: 1, 8192>}, {transform_indices = @transform_3, window_bounds = array<i64: 2, 8192>}]} {
    %c0 = arith.constant 0 : index
    %c0_0 = arith.constant 0 : index
    %0 = vector.load %arg1[%c0, %c0_0] : memref<2x128xf32, #tpu.memory_space<vmem>>, vector<2x128xf32>
    %1 = arith.truncf %0 : vector<2x128xf32> to vector<2x128xbf16>
    %c0_1 = arith.constant 0 : index
    %c0_2 = arith.constant 0 : index
    %2 = vector.load %arg2[%c0_1, %c0_2] : memref<128x8192xbf16, #tpu.memory_space<vmem>>, vector<128x8192xbf16>
    %cst = arith.constant dense<0.000000e+00> : vector<2x8192xf32>
    %3 = tpu.matmul %1, %2, %cst {dimension_numbers = #tpu.dot_dimension_numbers<[1], [0], [0], [1], [0, 0, 1, 1], [], []>} : vector<2x128xbf16>, vector<128x8192xbf16>, vector<2x8192xf32> -> vector<2x8192xf32>
    %c0_3 = arith.constant 0 : index
    %c0_4 = arith.constant 0 : index
    %4 = vector.load %arg3[%c0_3, %c0_4] : memref<1x8192xf32, #tpu.memory_space<vmem>>, vector<1x8192xf32>
    %5 = vector.broadcast %4 : vector<1x8192xf32> to vector<2x8192xf32>
    %6 = arith.addf %3, %5 : vector<2x8192xf32>
    %cst_5 = arith.constant 0.000000e+00 : f32
    %7 = vector.broadcast %cst_5 : f32 to vector<2x8192xf32>
    %8 = arith.maximumf %6, %7 : vector<2x8192xf32>
    %c0_6 = arith.constant 0 : index
    %c0_7 = arith.constant 0 : index
    %9 = vector.load %arg4[%c0_6, %c0_7] : memref<2x8192xf32, #tpu.memory_space<vmem>>, vector<2x8192xf32>
    tpu.vector_store %arg4[%c0_6, %c0_7], %8 {strides = array<i32>} : memref<2x8192xf32, #tpu.memory_space<vmem>>, vector<2x8192xf32>,
    return
  }
  func.func @transform_0(%arg0: i32) -> (i32, i32) {
    %c0_i32 = arith.constant 0 : i32
    %c0_i32_0 = arith.constant 0 : i32
    %c0_i32_1 = arith.constant 0 : i32
    return %c0_i32, %c0_i32_0 : i32, i32
  }
  func.func @transform_1(%arg0: i32) -> (i32, i32) {
    %c0_i32 = arith.constant 0 : i32
    %c0_i32_0 = arith.constant 0 : i32
    return %c0_i32, %arg0 : i32, i32
  }
  func.func @transform_2(%arg0: i32) -> (i32, i32) {
    %c0_i32 = arith.constant 0 : i32
    %c0_i32_0 = arith.constant 0 : i32
    return %c0_i32, %arg0 : i32, i32
  }
  func.func @transform_3(%arg0: i32) -> (i32, i32) {
    %c0_i32 = arith.constant 0 : i32
    %c0_i32_0 = arith.constant 0 : i32
    return %c0_i32, %arg0 : i32, i32
  }
}

module attributes {stable_mosaic.version = 11 : i64} {
  func.func @decoder_blocks_kernel(%arg0: i32, %arg1: memref<1x16x1024xf32, #tpu.memory_space<vmem>>, %arg2: memref<1x1024xf32, #tpu.memory_space<vmem>>, %arg3: memref<72x16xbf16, #tpu.memory_space<vmem>>, %arg4: memref<8x1xf32, #tpu.memory_space<vmem>>, %arg5: memref<72x8xbf16, #tpu.memory_space<vmem>>, %arg6: memref<8x1xf32, #tpu.memory_space<vmem>>, %arg7: memref<8x16xbf16, #tpu.memory_space<vmem>>, %arg8: memref<72x8xbf16, #tpu.memory_space<vmem>>, %arg9: memref<8x1xf32, #tpu.memory_space<vmem>>, %arg10: memref<72x8xbf16, #tpu.memory_space<vmem>>, %arg11: memref<8x1xf32, #tpu.memory_space<vmem>>, %arg12: memref<8x8xbf16, #tpu.memory_space<vmem>>, %arg13: memref<1x1x1024xf32, #tpu.memory_space<vmem>>, %arg14: memref<8x1024xf32, #tpu.memory_space<vmem>>) attributes {dimension_semantics = [#tpu.dimension_semantics<parallel>], iteration_bounds = array<i64: 2>, scalar_prefetch = 0 : i64, scratch_operands = 1 : i64, tpu.core_type = #tpu.core_type<tc>, window_params = [{transform_indices = @transform_0, window_bounds = array<i64: 1, 16, 1024>}, {pipeline_mode = #tpu.pipeline_mode<synchronous>, transform_indices = @transform_1, window_bounds = array<i64: 1, 1024>}, {pipeline_mode = #tpu.pipeline_mode<synchronous>, transform_indices = @transform_2, window_bounds = array<i64: 72, 16>}, {pipeline_mode = #tpu.pipeline_mode<synchronous>, transform_indices = @transform_3, window_bounds = array<i64: 8, 1>}, {pipeline_mode = #tpu.pipeline_mode<synchronous>, transform_indices = @transform_4, window_bounds = array<i64: 72, 8>}, {pipeline_mode = #tpu.pipeline_mode<synchronous>, transform_indices = @transform_5, window_bounds = array<i64: 8, 1>}, {pipeline_mode = #tpu.pipeline_mode<synchronous>, transform_indices = @transform_6, window_bounds = array<i64: 8, 16>}, {pipeline_mode = #tpu.pipeline_mode<synchronous>, transform_indices = @transform_7, window_bounds = array<i64: 72, 8>}, {pipeline_mode = #tpu.pipeline_mode<synchronous>, transform_indices = @transform_8, window_bounds = array<i64: 8, 1>}, {pipeline_mode = #tpu.pipeline_mode<synchronous>, transform_indices = @transform_9, window_bounds = array<i64: 72, 8>}, {pipeline_mode = #tpu.pipeline_mode<synchronous>, transform_indices = @transform_10, window_bounds = array<i64: 8, 1>}, {pipeline_mode = #tpu.pipeline_mode<synchronous>, transform_indices = @transform_11, window_bounds = array<i64: 8, 8>}, {transform_indices = @transform_12, window_bounds = array<i64: 1, 1, 1024>}]} {
    %c0 = arith.constant 0 : index
    %c0_0 = arith.constant 0 : index
    %c0_1 = arith.constant 0 : index
    %0 = vector.load %arg1[%c0, %c0_0, %c0_1] : memref<1x16x1024xf32, #tpu.memory_space<vmem>>, vector<1x16x1024xf32>
    %1 = vector.shape_cast %0 : vector<1x16x1024xf32> to vector<16x1024xf32>
    %2 = arith.truncf %1 : vector<16x1024xf32> to vector<16x1024xbf16>
    %c0_2 = arith.constant 0 : index
    %c0_3 = arith.constant 0 : index
    %3 = vector.load %arg3[%c0_2, %c0_3] : memref<72x16xbf16, #tpu.memory_space<vmem>>, vector<72x16xbf16>
    %cst = arith.constant dense<0.000000e+00> : vector<72x1024xf32>
    %4 = tpu.matmul %3, %2, %cst {dimension_numbers = #tpu.dot_dimension_numbers<[1], [0], [0], [1], [0, 0, 1, 1], [], []>} : vector<72x16xbf16>, vector<16x1024xbf16>, vector<72x1024xf32> -> vector<72x1024xf32>
    %5 = vector.extract_strided_slice %4 {offsets = [0, 0], sizes = [8, 1024], strides = [1, 1]} : vector<72x1024xf32> to vector<8x1024xf32>
    %c31_i32 = arith.constant 31 : i32
    %6 = tpu.dynamic_rotate %5 by %c31_i32 dim 1 : vector<8x1024xf32>, i32 -> vector<8x1024xf32>
    %7 = vector.extract_strided_slice %4 {offsets = [8, 0], sizes = [8, 1024], strides = [1, 1]} : vector<72x1024xf32> to vector<8x1024xf32>
    %c30_i32 = arith.constant 30 : i32
    %8 = tpu.dynamic_rotate %7 by %c30_i32 dim 1 : vector<8x1024xf32>, i32 -> vector<8x1024xf32>
    %9 = arith.addf %6, %8 : vector<8x1024xf32>
    %10 = vector.extract_strided_slice %4 {offsets = [16, 0], sizes = [8, 1024], strides = [1, 1]} : vector<72x1024xf32> to vector<8x1024xf32>
    %c29_i32 = arith.constant 29 : i32
    %11 = tpu.dynamic_rotate %10 by %c29_i32 dim 1 : vector<8x1024xf32>, i32 -> vector<8x1024xf32>
    %12 = arith.addf %9, %11 : vector<8x1024xf32>
    %13 = vector.extract_strided_slice %4 {offsets = [24, 0], sizes = [8, 1024], strides = [1, 1]} : vector<72x1024xf32> to vector<8x1024xf32>
    %c1_i32 = arith.constant 1 : i32
    %14 = tpu.dynamic_rotate %13 by %c1_i32 dim 1 : vector<8x1024xf32>, i32 -> vector<8x1024xf32>
    %15 = arith.addf %12, %14 : vector<8x1024xf32>
    %16 = vector.extract_strided_slice %4 {offsets = [32, 0], sizes = [8, 1024], strides = [1, 1]} : vector<72x1024xf32> to vector<8x1024xf32>
    %17 = arith.addf %15, %16 : vector<8x1024xf32>
    %18 = vector.extract_strided_slice %4 {offsets = [40, 0], sizes = [8, 1024], strides = [1, 1]} : vector<72x1024xf32> to vector<8x1024xf32>
    %c1023_i32 = arith.constant 1023 : i32
    %19 = tpu.dynamic_rotate %18 by %c1023_i32 dim 1 : vector<8x1024xf32>, i32 -> vector<8x1024xf32>
    %20 = arith.addf %17, %19 : vector<8x1024xf32>
    %21 = vector.extract_strided_slice %4 {offsets = [48, 0], sizes = [8, 1024], strides = [1, 1]} : vector<72x1024xf32> to vector<8x1024xf32>
    %c995_i32 = arith.constant 995 : i32
    %22 = tpu.dynamic_rotate %21 by %c995_i32 dim 1 : vector<8x1024xf32>, i32 -> vector<8x1024xf32>
    %23 = arith.addf %20, %22 : vector<8x1024xf32>
    %24 = vector.extract_strided_slice %4 {offsets = [56, 0], sizes = [8, 1024], strides = [1, 1]} : vector<72x1024xf32> to vector<8x1024xf32>
    %c994_i32 = arith.constant 994 : i32
    %25 = tpu.dynamic_rotate %24 by %c994_i32 dim 1 : vector<8x1024xf32>, i32 -> vector<8x1024xf32>
    %26 = arith.addf %23, %25 : vector<8x1024xf32>
    %27 = vector.extract_strided_slice %4 {offsets = [64, 0], sizes = [8, 1024], strides = [1, 1]} : vector<72x1024xf32> to vector<8x1024xf32>
    %c993_i32 = arith.constant 993 : i32
    %28 = tpu.dynamic_rotate %27 by %c993_i32 dim 1 : vector<8x1024xf32>, i32 -> vector<8x1024xf32>
    %29 = arith.addf %26, %28 : vector<8x1024xf32>
    %c0_4 = arith.constant 0 : index
    %c0_5 = arith.constant 0 : index
    %30 = vector.load %arg4[%c0_4, %c0_5] : memref<8x1xf32, #tpu.memory_space<vmem>>, vector<8x1xf32>
    %31 = vector.broadcast %30 : vector<8x1xf32> to vector<8x1024xf32>
    %32 = arith.addf %29, %31 : vector<8x1024xf32>
    %cst_6 = arith.constant 0.000000e+00 : f32
    %33 = vector.broadcast %cst_6 : f32 to vector<8x1024xf32>
    %34 = arith.maximumf %32, %33 : vector<8x1024xf32>
    %c0_7 = arith.constant 0 : index
    %c0_8 = arith.constant 0 : index
    %35 = vector.load %arg2[%c0_7, %c0_8] : memref<1x1024xf32, #tpu.memory_space<vmem>>, vector<1x1024xf32>
    %36 = vector.broadcast %35 : vector<1x1024xf32> to vector<8x1024xf32>
    %37 = arith.mulf %34, %36 : vector<8x1024xf32>
    %38 = arith.truncf %37 : vector<8x1024xf32> to vector<8x1024xbf16>
    %c0_9 = arith.constant 0 : index
    %c0_10 = arith.constant 0 : index
    %39 = vector.load %arg5[%c0_9, %c0_10] : memref<72x8xbf16, #tpu.memory_space<vmem>>, vector<72x8xbf16>
    %cst_11 = arith.constant dense<0.000000e+00> : vector<72x1024xf32>
    %40 = tpu.matmul %39, %38, %cst_11 {dimension_numbers = #tpu.dot_dimension_numbers<[1], [0], [0], [1], [0, 0, 1, 1], [], []>} : vector<72x8xbf16>, vector<8x1024xbf16>, vector<72x1024xf32> -> vector<72x1024xf32>
    %41 = vector.extract_strided_slice %40 {offsets = [0, 0], sizes = [8, 1024], strides = [1, 1]} : vector<72x1024xf32> to vector<8x1024xf32>
    %c31_i32_12 = arith.constant 31 : i32
    %42 = tpu.dynamic_rotate %41 by %c31_i32_12 dim 1 : vector<8x1024xf32>, i32 -> vector<8x1024xf32>
    %43 = vector.extract_strided_slice %40 {offsets = [8, 0], sizes = [8, 1024], strides = [1, 1]} : vector<72x1024xf32> to vector<8x1024xf32>
    %c30_i32_13 = arith.constant 30 : i32
    %44 = tpu.dynamic_rotate %43 by %c30_i32_13 dim 1 : vector<8x1024xf32>, i32 -> vector<8x1024xf32>
    %45 = arith.addf %42, %44 : vector<8x1024xf32>
    %46 = vector.extract_strided_slice %40 {offsets = [16, 0], sizes = [8, 1024], strides = [1, 1]} : vector<72x1024xf32> to vector<8x1024xf32>
    %c29_i32_14 = arith.constant 29 : i32
    %47 = tpu.dynamic_rotate %46 by %c29_i32_14 dim 1 : vector<8x1024xf32>, i32 -> vector<8x1024xf32>
    %48 = arith.addf %45, %47 : vector<8x1024xf32>
    %49 = vector.extract_strided_slice %40 {offsets = [24, 0], sizes = [8, 1024], strides = [1, 1]} : vector<72x1024xf32> to vector<8x1024xf32>
    %c1_i32_15 = arith.constant 1 : i32
    %50 = tpu.dynamic_rotate %49 by %c1_i32_15 dim 1 : vector<8x1024xf32>, i32 -> vector<8x1024xf32>
    %51 = arith.addf %48, %50 : vector<8x1024xf32>
    %52 = vector.extract_strided_slice %40 {offsets = [32, 0], sizes = [8, 1024], strides = [1, 1]} : vector<72x1024xf32> to vector<8x1024xf32>
    %53 = arith.addf %51, %52 : vector<8x1024xf32>
    %54 = vector.extract_strided_slice %40 {offsets = [40, 0], sizes = [8, 1024], strides = [1, 1]} : vector<72x1024xf32> to vector<8x1024xf32>
    %c1023_i32_16 = arith.constant 1023 : i32
    %55 = tpu.dynamic_rotate %54 by %c1023_i32_16 dim 1 : vector<8x1024xf32>, i32 -> vector<8x1024xf32>
    %56 = arith.addf %53, %55 : vector<8x1024xf32>
    %57 = vector.extract_strided_slice %40 {offsets = [48, 0], sizes = [8, 1024], strides = [1, 1]} : vector<72x1024xf32> to vector<8x1024xf32>
    %c995_i32_17 = arith.constant 995 : i32
    %58 = tpu.dynamic_rotate %57 by %c995_i32_17 dim 1 : vector<8x1024xf32>, i32 -> vector<8x1024xf32>
    %59 = arith.addf %56, %58 : vector<8x1024xf32>
    %60 = vector.extract_strided_slice %40 {offsets = [56, 0], sizes = [8, 1024], strides = [1, 1]} : vector<72x1024xf32> to vector<8x1024xf32>
    %c994_i32_18 = arith.constant 994 : i32
    %61 = tpu.dynamic_rotate %60 by %c994_i32_18 dim 1 : vector<8x1024xf32>, i32 -> vector<8x1024xf32>
    %62 = arith.addf %59, %61 : vector<8x1024xf32>
    %63 = vector.extract_strided_slice %40 {offsets = [64, 0], sizes = [8, 1024], strides = [1, 1]} : vector<72x1024xf32> to vector<8x1024xf32>
    %c993_i32_19 = arith.constant 993 : i32
    %64 = tpu.dynamic_rotate %63 by %c993_i32_19 dim 1 : vector<8x1024xf32>, i32 -> vector<8x1024xf32>
    %65 = arith.addf %62, %64 : vector<8x1024xf32>
    %c0_20 = arith.constant 0 : index
    %c0_21 = arith.constant 0 : index
    %66 = vector.load %arg7[%c0_20, %c0_21] : memref<8x16xbf16, #tpu.memory_space<vmem>>, vector<8x16xbf16>
    %c0_22 = arith.constant 0 : index
    %c0_23 = arith.constant 0 : index
    %c0_24 = arith.constant 0 : index
    %67 = vector.load %arg1[%c0_22, %c0_23, %c0_24] : memref<1x16x1024xf32, #tpu.memory_space<vmem>>, vector<1x16x1024xf32>
    %68 = vector.shape_cast %67 : vector<1x16x1024xf32> to vector<16x1024xf32>
    %69 = arith.truncf %68 : vector<16x1024xf32> to vector<16x1024xbf16>
    %cst_25 = arith.constant dense<0.000000e+00> : vector<8x1024xf32>
    %70 = tpu.matmul %66, %69, %cst_25 {dimension_numbers = #tpu.dot_dimension_numbers<[1], [0], [0], [1], [0, 0, 1, 1], [], []>} : vector<8x16xbf16>, vector<16x1024xbf16>, vector<8x1024xf32> -> vector<8x1024xf32>
    %71 = arith.addf %65, %70 : vector<8x1024xf32>
    %c0_26 = arith.constant 0 : index
    %c0_27 = arith.constant 0 : index
    %72 = vector.load %arg6[%c0_26, %c0_27] : memref<8x1xf32, #tpu.memory_space<vmem>>, vector<8x1xf32>
    %73 = vector.broadcast %72 : vector<8x1xf32> to vector<8x1024xf32>
    %74 = arith.addf %71, %73 : vector<8x1024xf32>
    %cst_28 = arith.constant 0.000000e+00 : f32
    %75 = vector.broadcast %cst_28 : f32 to vector<8x1024xf32>
    %76 = arith.maximumf %74, %75 : vector<8x1024xf32>
    %c0_29 = arith.constant 0 : index
    %c0_30 = arith.constant 0 : index
    %77 = vector.load %arg2[%c0_29, %c0_30] : memref<1x1024xf32, #tpu.memory_space<vmem>>, vector<1x1024xf32>
    %78 = vector.broadcast %77 : vector<1x1024xf32> to vector<8x1024xf32>
    %79 = arith.mulf %76, %78 : vector<8x1024xf32>
    %c0_31 = arith.constant 0 : index
    %c0_32 = arith.constant 0 : index
    %80 = vector.load %arg14[%c0_31, %c0_32] : memref<8x1024xf32, #tpu.memory_space<vmem>>, vector<8x1024xf32>
    tpu.vector_store %arg14[%c0_31, %c0_32], %79 {strides = array<i32>} : memref<8x1024xf32, #tpu.memory_space<vmem>>, vector<8x1024xf32>,
    %c0_33 = arith.constant 0 : index
    %c0_34 = arith.constant 0 : index
    %81 = vector.load %arg14[%c0_33, %c0_34] : memref<8x1024xf32, #tpu.memory_space<vmem>>, vector<8x1024xf32>
    %82 = arith.truncf %81 : vector<8x1024xf32> to vector<8x1024xbf16>
    %c0_35 = arith.constant 0 : index
    %c0_36 = arith.constant 0 : index
    %83 = vector.load %arg8[%c0_35, %c0_36] : memref<72x8xbf16, #tpu.memory_space<vmem>>, vector<72x8xbf16>
    %cst_37 = arith.constant dense<0.000000e+00> : vector<72x1024xf32>
    %84 = tpu.matmul %83, %82, %cst_37 {dimension_numbers = #tpu.dot_dimension_numbers<[1], [0], [0], [1], [0, 0, 1, 1], [], []>} : vector<72x8xbf16>, vector<8x1024xbf16>, vector<72x1024xf32> -> vector<72x1024xf32>
    %85 = vector.extract_strided_slice %84 {offsets = [0, 0], sizes = [8, 1024], strides = [1, 1]} : vector<72x1024xf32> to vector<8x1024xf32>
    %c31_i32_38 = arith.constant 31 : i32
    %86 = tpu.dynamic_rotate %85 by %c31_i32_38 dim 1 : vector<8x1024xf32>, i32 -> vector<8x1024xf32>
    %87 = vector.extract_strided_slice %84 {offsets = [8, 0], sizes = [8, 1024], strides = [1, 1]} : vector<72x1024xf32> to vector<8x1024xf32>
    %c30_i32_39 = arith.constant 30 : i32
    %88 = tpu.dynamic_rotate %87 by %c30_i32_39 dim 1 : vector<8x1024xf32>, i32 -> vector<8x1024xf32>
    %89 = arith.addf %86, %88 : vector<8x1024xf32>
    %90 = vector.extract_strided_slice %84 {offsets = [16, 0], sizes = [8, 1024], strides = [1, 1]} : vector<72x1024xf32> to vector<8x1024xf32>
    %c29_i32_40 = arith.constant 29 : i32
    %91 = tpu.dynamic_rotate %90 by %c29_i32_40 dim 1 : vector<8x1024xf32>, i32 -> vector<8x1024xf32>
    %92 = arith.addf %89, %91 : vector<8x1024xf32>
    %93 = vector.extract_strided_slice %84 {offsets = [24, 0], sizes = [8, 1024], strides = [1, 1]} : vector<72x1024xf32> to vector<8x1024xf32>
    %c1_i32_41 = arith.constant 1 : i32
    %94 = tpu.dynamic_rotate %93 by %c1_i32_41 dim 1 : vector<8x1024xf32>, i32 -> vector<8x1024xf32>
    %95 = arith.addf %92, %94 : vector<8x1024xf32>
    %96 = vector.extract_strided_slice %84 {offsets = [32, 0], sizes = [8, 1024], strides = [1, 1]} : vector<72x1024xf32> to vector<8x1024xf32>
    %97 = arith.addf %95, %96 : vector<8x1024xf32>
    %98 = vector.extract_strided_slice %84 {offsets = [40, 0], sizes = [8, 1024], strides = [1, 1]} : vector<72x1024xf32> to vector<8x1024xf32>
    %c1023_i32_42 = arith.constant 1023 : i32
    %99 = tpu.dynamic_rotate %98 by %c1023_i32_42 dim 1 : vector<8x1024xf32>, i32 -> vector<8x1024xf32>
    %100 = arith.addf %97, %99 : vector<8x1024xf32>
    %101 = vector.extract_strided_slice %84 {offsets = [48, 0], sizes = [8, 1024], strides = [1, 1]} : vector<72x1024xf32> to vector<8x1024xf32>
    %c995_i32_43 = arith.constant 995 : i32
    %102 = tpu.dynamic_rotate %101 by %c995_i32_43 dim 1 : vector<8x1024xf32>, i32 -> vector<8x1024xf32>
    %103 = arith.addf %100, %102 : vector<8x1024xf32>
    %104 = vector.extract_strided_slice %84 {offsets = [56, 0], sizes = [8, 1024], strides = [1, 1]} : vector<72x1024xf32> to vector<8x1024xf32>
    %c994_i32_44 = arith.constant 994 : i32
    %105 = tpu.dynamic_rotate %104 by %c994_i32_44 dim 1 : vector<8x1024xf32>, i32 -> vector<8x1024xf32>
    %106 = arith.addf %103, %105 : vector<8x1024xf32>
    %107 = vector.extract_strided_slice %84 {offsets = [64, 0], sizes = [8, 1024], strides = [1, 1]} : vector<72x1024xf32> to vector<8x1024xf32>
    %c993_i32_45 = arith.constant 993 : i32
    %108 = tpu.dynamic_rotate %107 by %c993_i32_45 dim 1 : vector<8x1024xf32>, i32 -> vector<8x1024xf32>
    %109 = arith.addf %106, %108 : vector<8x1024xf32>
    %c0_46 = arith.constant 0 : index
    %c0_47 = arith.constant 0 : index
    %110 = vector.load %arg9[%c0_46, %c0_47] : memref<8x1xf32, #tpu.memory_space<vmem>>, vector<8x1xf32>
    %111 = vector.broadcast %110 : vector<8x1xf32> to vector<8x1024xf32>
    %112 = arith.addf %109, %111 : vector<8x1024xf32>
    %cst_48 = arith.constant 0.000000e+00 : f32
    %113 = vector.broadcast %cst_48 : f32 to vector<8x1024xf32>
    %114 = arith.maximumf %112, %113 : vector<8x1024xf32>
    %c0_49 = arith.constant 0 : index
    %c0_50 = arith.constant 0 : index
    %115 = vector.load %arg2[%c0_49, %c0_50] : memref<1x1024xf32, #tpu.memory_space<vmem>>, vector<1x1024xf32>
    %116 = vector.broadcast %115 : vector<1x1024xf32> to vector<8x1024xf32>
    %117 = arith.mulf %114, %116 : vector<8x1024xf32>
    %118 = arith.truncf %117 : vector<8x1024xf32> to vector<8x1024xbf16>
    %c0_51 = arith.constant 0 : index
    %c0_52 = arith.constant 0 : index
    %119 = vector.load %arg10[%c0_51, %c0_52] : memref<72x8xbf16, #tpu.memory_space<vmem>>, vector<72x8xbf16>
    %cst_53 = arith.constant dense<0.000000e+00> : vector<72x1024xf32>
    %120 = tpu.matmul %119, %118, %cst_53 {dimension_numbers = #tpu.dot_dimension_numbers<[1], [0], [0], [1], [0, 0, 1, 1], [], []>} : vector<72x8xbf16>, vector<8x1024xbf16>, vector<72x1024xf32> -> vector<72x1024xf32>
    %121 = vector.extract_strided_slice %120 {offsets = [0, 0], sizes = [8, 1024], strides = [1, 1]} : vector<72x1024xf32> to vector<8x1024xf32>
    %c31_i32_54 = arith.constant 31 : i32
    %122 = tpu.dynamic_rotate %121 by %c31_i32_54 dim 1 : vector<8x1024xf32>, i32 -> vector<8x1024xf32>
    %123 = vector.extract_strided_slice %120 {offsets = [8, 0], sizes = [8, 1024], strides = [1, 1]} : vector<72x1024xf32> to vector<8x1024xf32>
    %c30_i32_55 = arith.constant 30 : i32
    %124 = tpu.dynamic_rotate %123 by %c30_i32_55 dim 1 : vector<8x1024xf32>, i32 -> vector<8x1024xf32>
    %125 = arith.addf %122, %124 : vector<8x1024xf32>
    %126 = vector.extract_strided_slice %120 {offsets = [16, 0], sizes = [8, 1024], strides = [1, 1]} : vector<72x1024xf32> to vector<8x1024xf32>
    %c29_i32_56 = arith.constant 29 : i32
    %127 = tpu.dynamic_rotate %126 by %c29_i32_56 dim 1 : vector<8x1024xf32>, i32 -> vector<8x1024xf32>
    %128 = arith.addf %125, %127 : vector<8x1024xf32>
    %129 = vector.extract_strided_slice %120 {offsets = [24, 0], sizes = [8, 1024], strides = [1, 1]} : vector<72x1024xf32> to vector<8x1024xf32>
    %c1_i32_57 = arith.constant 1 : i32
    %130 = tpu.dynamic_rotate %129 by %c1_i32_57 dim 1 : vector<8x1024xf32>, i32 -> vector<8x1024xf32>
    %131 = arith.addf %128, %130 : vector<8x1024xf32>
    %132 = vector.extract_strided_slice %120 {offsets = [32, 0], sizes = [8, 1024], strides = [1, 1]} : vector<72x1024xf32> to vector<8x1024xf32>
    %133 = arith.addf %131, %132 : vector<8x1024xf32>
    %134 = vector.extract_strided_slice %120 {offsets = [40, 0], sizes = [8, 1024], strides = [1, 1]} : vector<72x1024xf32> to vector<8x1024xf32>
    %c1023_i32_58 = arith.constant 1023 : i32
    %135 = tpu.dynamic_rotate %134 by %c1023_i32_58 dim 1 : vector<8x1024xf32>, i32 -> vector<8x1024xf32>
    %136 = arith.addf %133, %135 : vector<8x1024xf32>
    %137 = vector.extract_strided_slice %120 {offsets = [48, 0], sizes = [8, 1024], strides = [1, 1]} : vector<72x1024xf32> to vector<8x1024xf32>
    %c995_i32_59 = arith.constant 995 : i32
    %138 = tpu.dynamic_rotate %137 by %c995_i32_59 dim 1 : vector<8x1024xf32>, i32 -> vector<8x1024xf32>
    %139 = arith.addf %136, %138 : vector<8x1024xf32>
    %140 = vector.extract_strided_slice %120 {offsets = [56, 0], sizes = [8, 1024], strides = [1, 1]} : vector<72x1024xf32> to vector<8x1024xf32>
    %c994_i32_60 = arith.constant 994 : i32
    %141 = tpu.dynamic_rotate %140 by %c994_i32_60 dim 1 : vector<8x1024xf32>, i32 -> vector<8x1024xf32>
    %142 = arith.addf %139, %141 : vector<8x1024xf32>
    %143 = vector.extract_strided_slice %120 {offsets = [64, 0], sizes = [8, 1024], strides = [1, 1]} : vector<72x1024xf32> to vector<8x1024xf32>
    %c993_i32_61 = arith.constant 993 : i32
    %144 = tpu.dynamic_rotate %143 by %c993_i32_61 dim 1 : vector<8x1024xf32>, i32 -> vector<8x1024xf32>
    %145 = arith.addf %142, %144 : vector<8x1024xf32>
    %c0_62 = arith.constant 0 : index
    %c0_63 = arith.constant 0 : index
    %146 = vector.load %arg12[%c0_62, %c0_63] : memref<8x8xbf16, #tpu.memory_space<vmem>>, vector<8x8xbf16>
    %c0_64 = arith.constant 0 : index
    %c0_65 = arith.constant 0 : index
    %147 = vector.load %arg14[%c0_64, %c0_65] : memref<8x1024xf32, #tpu.memory_space<vmem>>, vector<8x1024xf32>
    %148 = arith.truncf %147 : vector<8x1024xf32> to vector<8x1024xbf16>
    %cst_66 = arith.constant dense<0.000000e+00> : vector<8x1024xf32>
    %149 = tpu.matmul %146, %148, %cst_66 {dimension_numbers = #tpu.dot_dimension_numbers<[1], [0], [0], [1], [0, 0, 1, 1], [], []>} : vector<8x8xbf16>, vector<8x1024xbf16>, vector<8x1024xf32> -> vector<8x1024xf32>
    %150 = arith.addf %145, %149 : vector<8x1024xf32>
    %c0_67 = arith.constant 0 : index
    %c0_68 = arith.constant 0 : index
    %151 = vector.load %arg11[%c0_67, %c0_68] : memref<8x1xf32, #tpu.memory_space<vmem>>, vector<8x1xf32>
    %152 = vector.broadcast %151 : vector<8x1xf32> to vector<8x1024xf32>
    %153 = arith.addf %150, %152 : vector<8x1024xf32>
    %cst_69 = arith.constant 0.000000e+00 : f32
    %154 = vector.broadcast %cst_69 : f32 to vector<8x1024xf32>
    %155 = arith.maximumf %153, %154 : vector<8x1024xf32>
    %c0_70 = arith.constant 0 : index
    %c0_71 = arith.constant 0 : index
    %156 = vector.load %arg2[%c0_70, %c0_71] : memref<1x1024xf32, #tpu.memory_space<vmem>>, vector<1x1024xf32>
    %157 = vector.broadcast %156 : vector<1x1024xf32> to vector<8x1024xf32>
    %158 = arith.mulf %155, %157 : vector<8x1024xf32>
    %159 = vector.extract_strided_slice %158 {offsets = [0, 0], sizes = [1, 1024], strides = [1, 1]} : vector<8x1024xf32> to vector<1x1024xf32>
    %c0_72 = arith.constant 0 : index
    %c0_73 = arith.constant 0 : index
    %c0_74 = arith.constant 0 : index
    %160 = vector.load %arg13[%c0_72, %c0_73, %c0_74] : memref<1x1x1024xf32, #tpu.memory_space<vmem>>, vector<1x1x1024xf32>
    %161 = vector.shape_cast %160 : vector<1x1x1024xf32> to vector<1x1024xf32>
    %162 = vector.shape_cast %159 : vector<1x1024xf32> to vector<1x1x1024xf32>
    tpu.vector_store %arg13[%c0_72, %c0_73, %c0_74], %162 {strides = array<i32>} : memref<1x1x1024xf32, #tpu.memory_space<vmem>>, vector<1x1x1024xf32>,
    return
  }
  func.func @transform_0(%arg0: i32) -> (i32, i32, i32) {
    %c0_i32 = arith.constant 0 : i32
    %c0_i32_0 = arith.constant 0 : i32
    %c0_i32_1 = arith.constant 0 : i32
    return %arg0, %c0_i32, %c0_i32_0 : i32, i32, i32
  }
  func.func @transform_1(%arg0: i32) -> (i32, i32) {
    %c0_i32 = arith.constant 0 : i32
    %c0_i32_0 = arith.constant 0 : i32
    %c0_i32_1 = arith.constant 0 : i32
    return %c0_i32, %c0_i32_0 : i32, i32
  }
  func.func @transform_2(%arg0: i32) -> (i32, i32) {
    %c0_i32 = arith.constant 0 : i32
    %c0_i32_0 = arith.constant 0 : i32
    %c0_i32_1 = arith.constant 0 : i32
    return %c0_i32, %c0_i32_0 : i32, i32
  }
  func.func @transform_3(%arg0: i32) -> (i32, i32) {
    %c0_i32 = arith.constant 0 : i32
    %c0_i32_0 = arith.constant 0 : i32
    %c0_i32_1 = arith.constant 0 : i32
    return %c0_i32, %c0_i32_0 : i32, i32
  }
  func.func @transform_4(%arg0: i32) -> (i32, i32) {
    %c0_i32 = arith.constant 0 : i32
    %c0_i32_0 = arith.constant 0 : i32
    %c0_i32_1 = arith.constant 0 : i32
    return %c0_i32, %c0_i32_0 : i32, i32
  }
  func.func @transform_5(%arg0: i32) -> (i32, i32) {
    %c0_i32 = arith.constant 0 : i32
    %c0_i32_0 = arith.constant 0 : i32
    %c0_i32_1 = arith.constant 0 : i32
    return %c0_i32, %c0_i32_0 : i32, i32
  }
  func.func @transform_6(%arg0: i32) -> (i32, i32) {
    %c0_i32 = arith.constant 0 : i32
    %c0_i32_0 = arith.constant 0 : i32
    %c0_i32_1 = arith.constant 0 : i32
    return %c0_i32, %c0_i32_0 : i32, i32
  }
  func.func @transform_7(%arg0: i32) -> (i32, i32) {
    %c0_i32 = arith.constant 0 : i32
    %c0_i32_0 = arith.constant 0 : i32
    %c0_i32_1 = arith.constant 0 : i32
    return %c0_i32, %c0_i32_0 : i32, i32
  }
  func.func @transform_8(%arg0: i32) -> (i32, i32) {
    %c0_i32 = arith.constant 0 : i32
    %c0_i32_0 = arith.constant 0 : i32
    %c0_i32_1 = arith.constant 0 : i32
    return %c0_i32, %c0_i32_0 : i32, i32
  }
  func.func @transform_9(%arg0: i32) -> (i32, i32) {
    %c0_i32 = arith.constant 0 : i32
    %c0_i32_0 = arith.constant 0 : i32
    %c0_i32_1 = arith.constant 0 : i32
    return %c0_i32, %c0_i32_0 : i32, i32
  }
  func.func @transform_10(%arg0: i32) -> (i32, i32) {
    %c0_i32 = arith.constant 0 : i32
    %c0_i32_0 = arith.constant 0 : i32
    %c0_i32_1 = arith.constant 0 : i32
    return %c0_i32, %c0_i32_0 : i32, i32
  }
  func.func @transform_11(%arg0: i32) -> (i32, i32) {
    %c0_i32 = arith.constant 0 : i32
    %c0_i32_0 = arith.constant 0 : i32
    %c0_i32_1 = arith.constant 0 : i32
    return %c0_i32, %c0_i32_0 : i32, i32
  }
  func.func @transform_12(%arg0: i32) -> (i32, i32, i32) {
    %c0_i32 = arith.constant 0 : i32
    %c0_i32_0 = arith.constant 0 : i32
    %c0_i32_1 = arith.constant 0 : i32
    return %arg0, %c0_i32, %c0_i32_0 : i32, i32, i32
  }
}

</mosaic_0001>

<llo_original>
// kernel: squeeze.1
$region0: #{squeeze.1}
  %s0 = inlined_call_operand.vmem [shape: f32[2,900], index: 0, kind: input, shape index: {}]
  %s1 = inlined_call_operand.vmem [shape: f32[2,30,30], index: 1, kind: output, shape index: {}]
  $region1: #{squeeze.1} parent=0
    #allocation0 [shape = 'u8[32768]{0}', space=vmem, size = 0x8000, scoped, tag = 'scoped mem for input reshape']
    %s3 = ssub.s32 4, 1
    %s4 = scalar_lea.vmem %s0, 14
    %v5 = vld [vmem:[%s4] sm:%s3]
    %s6 = scalar_lea.vmem [#allocation0], 56
    %7 = vst [vmem:[%s6] sm:%s3] %v5
    %s8 = scalar_lea.vmem %s0, 12
    %v9 = vld [vmem:[%s8] sm:%s3]
    %s10 = scalar_lea.vmem [#allocation0], 48
    %11 = vst [vmem:[%s10] sm:%s3] %v9
    %s12 = scalar_lea.vmem %s0, 10
    %v13 = vld [vmem:[%s12] sm:%s3]
    %s14 = scalar_lea.vmem [#allocation0], 40
    %15 = vst [vmem:[%s14] sm:%s3] %v13
    %s16 = scalar_lea.vmem %s0, 8
    %v17 = vld [vmem:[%s16] sm:%s3]
    %s18 = scalar_lea.vmem [#allocation0], 32
    %19 = vst [vmem:[%s18] sm:%s3] %v17
    %s20 = scalar_lea.vmem %s0, 6
    %v21 = vld [vmem:[%s20] sm:%s3]
    %s22 = scalar_lea.vmem [#allocation0], 24
    %23 = vst [vmem:[%s22] sm:%s3] %v21
    %s24 = scalar_lea.vmem %s0, 4
    %v25 = vld [vmem:[%s24] sm:%s3]
    %s26 = scalar_lea.vmem [#allocation0], 16
    %27 = vst [vmem:[%s26] sm:%s3] %v25
    %s28 = scalar_lea.vmem %s0, 2
    %v29 = vld [vmem:[%s28] sm:%s3]
    %s30 = scalar_lea.vmem [#allocation0], 8
    %31 = vst [vmem:[%s30] sm:%s3] %v29
    %v32 = vld [vmem:[%s0] sm:%s3]
    %33 = vst [vmem:[#allocation0] sm:%s3] %v32
    %v34 = vld [vmem:[#allocation0] sm:$0x3]
    %vm35 = vcmask 244736
    %36 = vst.msk [vmem:[%s1] sm:$0x1] %vm35, %v34
    %s37 = scalar_lea.vmem %s1, 31
    %38 = vst.msk [vmem:[%s37] sm:$0x2] %vm35, %v34
    %s39 = scalar_lea.vmem [#allocation0], 24
    %v40 = vld [vmem:[%s39] sm:$0x3]
    %41 = vrot.lane.b32.xlu0 %v40, 122
    %v42 = vpop.permute.xlu0 %41
    %vm43 = vcmask 244736
    %s44 = scalar_lea.vmem %s1, 13
    %45 = vst.msk [vmem:[%s44] sm:$0x1] %vm43, %v42
    %s46 = scalar_lea.vmem %s1, 44
    %47 = vst.msk [vmem:[%s46] sm:$0x2] %vm43, %v42
    %s48 = scalar_lea.vmem [#allocation0], 48
    %v49 = vld [vmem:[%s48] sm:$0x3]
    %50 = vrot.lane.b32.xlu0 %v49, 116
    %v51 = vpop.permute.xlu0 %50
    %vm52 = vcmask 244736
    %s53 = scalar_lea.vmem %s1, 26
    %54 = vst.msk [vmem:[%s53] sm:$0x1] %vm52, %v51
    %s55 = scalar_lea.vmem %s1, 57
    %56 = vst.msk [vmem:[%s55] sm:$0x2] %vm52, %v51
    %s57 = scalar_lea.vmem [#allocation0], 16
    %v58 = vld [vmem:[%s57] sm:$0x3]
    %59 = vrot.lane.b32.xlu0 %v58, 114
    %v60 = vpop.permute.xlu0 %59
    %vm61 = vcmask 244736
    %s62 = scalar_lea.vmem %s1, 9
    %63 = vst.msk [vmem:[%s62] sm:$0x1] %vm61, %v60
    %s64 = scalar_lea.vmem %s1, 40
    %65 = vst.msk [vmem:[%s64] sm:$0x2] %vm61, %v60
    %s66 = scalar_lea.vmem [#allocation0], 40
    %v67 = vld [vmem:[%s66] sm:$0x3]
    %68 = vrot.lane.b32.xlu0 %v67, 108
    %v69 = vpop.permute.xlu0 %68
    %vm70 = vcmask 244736
    %s71 = scalar_lea.vmem %s1, 22
    %72 = vst.msk [vmem:[%s71] sm:$0x1] %vm70, %v69
    %s73 = scalar_lea.vmem %s1, 53
    %74 = vst.msk [vmem:[%s73] sm:$0x2] %vm70, %v69
    %s75 = scalar_lea.vmem [#allocation0], 8
    %v76 = vld [vmem:[%s75] sm:$0x3]
    %77 = vrot.lane.b32.xlu0 %v76, 106
    %v78 = vpop.permute.xlu0 %77
    %vm79 = vcmask 244736
    %s80 = scalar_lea.vmem %s1, 5
    %81 = vst.msk [vmem:[%s80] sm:$0x1] %vm79, %v78
    %s82 = scalar_lea.vmem %s1, 36
    %83 = vst.msk [vmem:[%s82] sm:$0x2] %vm79, %v78
    %s84 = scalar_lea.vmem [#allocation0], 32
    %v85 = vld [vmem:[%s84] sm:$0x3]
    %86 = vrot.lane.b32.xlu0 %v85, 100
    %v87 = vpop.permute.xlu0 %86
    %vm88 = vcmask 244736
    %s89 = scalar_lea.vmem %s1, 18
    %90 = vst.msk [vmem:[%s89] sm:$0x1] %vm88, %v87
    %s91 = scalar_lea.vmem %s1, 49
    %92 = vst.msk [vmem:[%s91] sm:$0x2] %vm88, %v87
    %v93 = vld [vmem:[#allocation0] sm:$0x3]
    %94 = vrot.lane.b32.xlu0 %v93, 98
    %v95 = vpop.permute.xlu0 %94
    %vm96 = vcmask 244736
    %s97 = scalar_lea.vmem %s1, 1
    %98 = vst.msk [vmem:[%s97] sm:$0x1] %vm96, %v95
    %s99 = scalar_lea.vmem %s1, 32
    %100 = vst.msk [vmem:[%s99] sm:$0x2] %vm96, %v95
    %s101 = scalar_lea.vmem [#allocation0], 24
    %v102 = vld [vmem:[%s101] sm:$0x3]
    %103 = vrot.lane.b32.xlu0 %v102, 92
    %v104 = vpop.permute.xlu0 %103
    %vm105 = vcmask 244736
    %s106 = scalar_lea.vmem %s1, 14
    %107 = vst.msk [vmem:[%s106] sm:$0x1] %vm105, %v104
    %s108 = scalar_lea.vmem %s1, 45
    %109 = vst.msk [vmem:[%s108] sm:$0x2] %vm105, %v104
    %s110 = scalar_lea.vmem [#allocation0], 48
    %v111 = vld [vmem:[%s110] sm:$0x3]
    %112 = vrot.lane.b32.xlu0 %v111, 86
    %v113 = vpop.permute.xlu0 %112
    %vm114 = vcmask 244736
    %s115 = scalar_lea.vmem %s1, 27
    %116 = vst.msk [vmem:[%s115] sm:$0x1] %vm114, %v113
    %s117 = scalar_lea.vmem %s1, 58
    %118 = vst.msk [vmem:[%s117] sm:$0x2] %vm114, %v113
    %s119 = scalar_lea.vmem [#allocation0], 16
    %v120 = vld [vmem:[%s119] sm:$0x3]
    %121 = vrot.lane.b32.xlu0 %v120, 84
    %v122 = vpop.permute.xlu0 %121
    %vm123 = vcmask 244736
    %s124 = scalar_lea.vmem %s1, 10
    %125 = vst.msk [vmem:[%s124] sm:$0x1] %vm123, %v122
    %s126 = scalar_lea.vmem %s1, 41
    %127 = vst.msk [vmem:[%s126] sm:$0x2] %vm123, %v122
    %s128 = scalar_lea.vmem [#allocation0], 40
    %v129 = vld [vmem:[%s128] sm:$0x3]
    %130 = vrot.lane.b32.xlu0 %v129, 78
    %v131 = vpop.permute.xlu0 %130
    %vm132 = vcmask 244736
    %s133 = scalar_lea.vmem %s1, 23
    %134 = vst.msk [vmem:[%s133] sm:$0x1] %vm132, %v131
    %s135 = scalar_lea.vmem %s1, 54
    %136 = vst.msk [vmem:[%s135] sm:$0x2] %vm132, %v131
    %s137 = scalar_lea.vmem [#allocation0], 8
    %v138 = vld [vmem:[%s137] sm:$0x3]
    %139 = vrot.lane.b32.xlu0 %v138, 76
    %v140 = vpop.permute.xlu0 %139
    %vm141 = vcmask 244736
    %s142 = scalar_lea.vmem %s1, 6
    %143 = vst.msk [vmem:[%s142] sm:$0x1] %vm141, %v140
    %s144 = scalar_lea.vmem %s1, 37
    %145 = vst.msk [vmem:[%s144] sm:$0x2] %vm141, %v140
    %s146 = scalar_lea.vmem [#allocation0], 32
    %v147 = vld [vmem:[%s146] sm:$0x3]
    %148 = vrot.lane.b32.xlu0 %v147, 70
    %v149 = vpop.permute.xlu0 %148
    %vm150 = vcmask 244736
    %s151 = scalar_lea.vmem %s1, 19
    %152 = vst.msk [vmem:[%s151] sm:$0x1] %vm150, %v149
    %s153 = scalar_lea.vmem %s1, 50
    %154 = vst.msk [vmem:[%s153] sm:$0x2] %vm150, %v149
    %v155 = vld [vmem:[#allocation0] sm:$0x3]
    %156 = vrot.lane.b32.xlu0 %v155, 68
    %v157 = vpop.permute.xlu0 %156
    %vm158 = vcmask 244736
    %s159 = scalar_lea.vmem %s1, 2
    %160 = vst.msk [vmem:[%s159] sm:$0x1] %vm158, %v157
    %s161 = scalar_lea.vmem %s1, 33
    %162 = vst.msk [vmem:[%s161] sm:$0x2] %vm158, %v157
    %s163 = scalar_lea.vmem [#allocation0], 24
    %v164 = vld [vmem:[%s163] sm:$0x3]
    %165 = vrot.lane.b32.xlu0 %v164, 62
    %v166 = vpop.permute.xlu0 %165
    %vm167 = vcmask 244736
    %s168 = scalar_lea.vmem %s1, 15
    %169 = vst.msk [vmem:[%s168] sm:$0x1] %vm167, %v166
    %s170 = scalar_lea.vmem %s1, 46
    %171 = vst.msk [vmem:[%s170] sm:$0x2] %vm167, %v166
    %s172 = scalar_lea.vmem [#allocation0], 48
    %v173 = vld [vmem:[%s172] sm:$0x3]
    %174 = vrot.lane.b32.xlu0 %v173, 56
    %v175 = vpop.permute.xlu0 %174
    %vm176 = vcmask 244736
    %s177 = scalar_lea.vmem %s1, 28
    %178 = vst.msk [vmem:[%s177] sm:$0x1] %vm176, %v175
    %s179 = scalar_lea.vmem %s1, 59
    %180 = vst.msk [vmem:[%s179] sm:$0x2] %vm176, %v175
    %s181 = scalar_lea.vmem [#allocation0], 16
    %v182 = vld [vmem:[%s181] sm:$0x3]
    %183 = vrot.lane.b32.xlu0 %v182, 54
    %v184 = vpop.permute.xlu0 %183
    %vm185 = vcmask 244736
    %s186 = scalar_lea.vmem %s1, 11
    %187 = vst.msk [vmem:[%s186] sm:$0x1] %vm185, %v184
    %s188 = scalar_lea.vmem %s1, 42
    %189 = vst.msk [vmem:[%s188] sm:$0x2] %vm185, %v184
    %s190 = scalar_lea.vmem [#allocation0], 40
    %v191 = vld [vmem:[%s190] sm:$0x3]
    %192 = vrot.lane.b32.xlu0 %v191, 48
    %v193 = vpop.permute.xlu0 %192
    %vm194 = vcmask 244736
    %s195 = scalar_lea.vmem %s1, 24
    %196 = vst.msk [vmem:[%s195] sm:$0x1] %vm194, %v193
    %s197 = scalar_lea.vmem %s1, 55
    %198 = vst.msk [vmem:[%s197] sm:$0x2] %vm194, %v193
    %s199 = scalar_lea.vmem [#allocation0], 8
    %v200 = vld [vmem:[%s199] sm:$0x3]
    %201 = vrot.lane.b32.xlu0 %v200, 46
    %v202 = vpop.permute.xlu0 %201
    %vm203 = vcmask 244736
    %s204 = scalar_lea.vmem %s1, 7
    %205 = vst.msk [vmem:[%s204] sm:$0x1] %vm203, %v202
    %s206 = scalar_lea.vmem %s1, 38
    %207 = vst.msk [vmem:[%s206] sm:$0x2] %vm203, %v202
    %s208 = scalar_lea.vmem [#allocation0], 32
    %v209 = vld [vmem:[%s208] sm:$0x3]
    %210 = vrot.lane.b32.xlu0 %v209, 40
    %v211 = vpop.permute.xlu0 %210
    %vm212 = vcmask 244736
    %s213 = scalar_lea.vmem %s1, 20
    %214 = vst.msk [vmem:[%s213] sm:$0x1] %vm212, %v211
    %s215 = scalar_lea.vmem %s1, 51
    %216 = vst.msk [vmem:[%s215] sm:$0x2] %vm212, %v211
    %v217 = vld [vmem:[#allocation0] sm:$0x3]
    %218 = vrot.lane.b32.xlu0 %v217, 38
    %v219 = vpop.permute.xlu0 %218
    %vm220 = vcmask 244736
    %s221 = scalar_lea.vmem %s1, 3
    %222 = vst.msk [vmem:[%s221] sm:$0x1] %vm220, %v219
    %s223 = scalar_lea.vmem %s1, 34
    %224 = vst.msk [vmem:[%s223] sm:$0x2] %vm220, %v219
    %s225 = scalar_lea.vmem [#allocation0], 24
    %v226 = vld [vmem:[%s225] sm:$0x3]
    %227 = vrot.lane.b32.xlu0 %v226, 32
    %v228 = vpop.permute.xlu0 %227
    %vm229 = vcmask 244736
    %s230 = scalar_lea.vmem %s1, 16
    %231 = vst.msk [vmem:[%s230] sm:$0x1] %vm229, %v228
    %s232 = scalar_lea.vmem %s1, 47
    %233 = vst.msk [vmem:[%s232] sm:$0x2] %vm229, %v228
    %s234 = scalar_lea.vmem [#allocation0], 48
    %v235 = vld [vmem:[%s234] sm:$0x3]
    %s236 = scalar_lea.vmem [#allocation0], 56
    %v237 = vld [vmem:[%s236] sm:$0x3]
    %vm238 = vcmask 834560
    %v239 = vsel %vm238, %v237, %v235
    %240 = vrot.lane.b32.xlu0 %v239, 26
    %v241 = vpop.permute.xlu0 %240
    %vm242 = vcmask 211968
    %s243 = scalar_lea.vmem %s1, 29
    %244 = vst.msk [vmem:[%s243] sm:$0x1] %vm242, %v241
    %s245 = scalar_lea.vmem %s1, 60
    %246 = vst.msk [vmem:[%s245] sm:$0x2] %vm242, %v241
    %vm247 = vcmask 244944
    %s248 = scalar_lea.vmem %s1, 29
    %249 = vst.msk [vmem:[%s248] sm:$0x1] %vm247, %v241
    %s250 = scalar_lea.vmem %s1, 60
    %251 = vst.msk [vmem:[%s250] sm:$0x2] %vm247, %v241
    %s252 = scalar_lea.vmem [#allocation0], 16
    %v253 = vld [vmem:[%s252] sm:$0x3]
    %s254 = scalar_lea.vmem [#allocation0], 24
    %v255 = vld [vmem:[%s254] sm:$0x3]
    %vm256 = vcmask 850944
    %v257 = vsel %vm256, %v255, %v253
    %258 = vrot.lane.b32.xlu0 %v257, 24
    %v259 = vpop.permute.xlu0 %258
    %vm260 = vcmask 195584
    %s261 = scalar_lea.vmem %s1, 12
    %262 = vst.msk [vmem:[%s261] sm:$0x1] %vm260, %v259
    %s263 = scalar_lea.vmem %s1, 43
    %264 = vst.msk [vmem:[%s263] sm:$0x2] %vm260, %v259
    %vm265 = vcmask 244928
    %s266 = scalar_lea.vmem %s1, 12
    %267 = vst.msk [vmem:[%s266] sm:$0x1] %vm265, %v259
    %s268 = scalar_lea.vmem %s1, 43
    %269 = vst.msk [vmem:[%s268] sm:$0x2] %vm265, %v259
    %s270 = scalar_lea.vmem [#allocation0], 40
    %v271 = vld [vmem:[%s270] sm:$0x3]
    %s272 = scalar_lea.vmem [#allocation0], 48
    %v273 = vld [vmem:[%s272] sm:$0x3]
    %vm274 = vcmask 900096
    %v275 = vsel %vm274, %v273, %v271
    %276 = vrot.lane.b32.xlu0 %v275, 18
    %v277 = vpop.permute.xlu0 %276
    %vm278 = vcmask 146432
    %s279 = scalar_lea.vmem %s1, 25
    %280 = vst.msk [vmem:[%s279] sm:$0x1] %vm278, %v277
    %s281 = scalar_lea.vmem %s1, 56
    %282 = vst.msk [vmem:[%s281] sm:$0x2] %vm278, %v277
    %vm283 = vcmask 244880
    %s284 = scalar_lea.vmem %s1, 25
    %285 = vst.msk [vmem:[%s284] sm:$0x1] %vm283, %v277
    %s286 = scalar_lea.vmem %s1, 56
    %287 = vst.msk [vmem:[%s286] sm:$0x2] %vm283, %v277
    %s288 = scalar_lea.vmem [#allocation0], 8
    %v289 = vld [vmem:[%s288] sm:$0x3]
    %s290 = scalar_lea.vmem [#allocation0], 16
    %v291 = vld [vmem:[%s290] sm:$0x3]
    %vm292 = vcmask 916480
    %v293 = vsel %vm292, %v291, %v289
    %294 = vrot.lane.b32.xlu0 %v293, 16
    %v295 = vpop.permute.xlu0 %294
    %vm296 = vcmask 130048
    %s297 = scalar_lea.vmem %s1, 8
    %298 = vst.msk [vmem:[%s297] sm:$0x1] %vm296, %v295
    %s299 = scalar_lea.vmem %s1, 39
    %300 = vst.msk [vmem:[%s299] sm:$0x2] %vm296, %v295
    %vm301 = vcmask 244864
    %s302 = scalar_lea.vmem %s1, 8
    %303 = vst.msk [vmem:[%s302] sm:$0x1] %vm301, %v295
    %s304 = scalar_lea.vmem %s1, 39
    %305 = vst.msk [vmem:[%s304] sm:$0x2] %vm301, %v295
    %s306 = scalar_lea.vmem [#allocation0], 32
    %v307 = vld [vmem:[%s306] sm:$0x3]
    %s308 = scalar_lea.vmem [#allocation0], 40
    %v309 = vld [vmem:[%s308] sm:$0x3]
    %vm310 = vcmask 965632
    %v311 = vsel %vm310, %v309, %v307
    %312 = vrot.lane.b32.xlu0 %v311, 10
    %v313 = vpop.permute.xlu0 %312
    %vm314 = vcmask 80896
    %s315 = scalar_lea.vmem %s1, 21
    %316 = vst.msk [vmem:[%s315] sm:$0x1] %vm314, %v313
    %s317 = scalar_lea.vmem %s1, 52
    %318 = vst.msk [vmem:[%s317] sm:$0x2] %vm314, %v313
    %vm319 = vcmask 244816
    %s320 = scalar_lea.vmem %s1, 21
    %321 = vst.msk [vmem:[%s320] sm:$0x1] %vm319, %v313
    %s322 = scalar_lea.vmem %s1, 52
    %323 = vst.msk [vmem:[%s322] sm:$0x2] %vm319, %v313
    %v324 = vld [vmem:[#allocation0] sm:$0x3]
    %s325 = scalar_lea.vmem [#allocation0], 8
    %v326 = vld [vmem:[%s325] sm:$0x3]
    %vm327 = vcmask 982016
    %v328 = vsel %vm327, %v326, %v324
    %329 = vrot.lane.b32.xlu0 %v328, 8
    %v330 = vpop.permute.xlu0 %329
    %vm331 = vcmask 64512
    %s332 = scalar_lea.vmem %s1, 4
    %333 = vst.msk [vmem:[%s332] sm:$0x1] %vm331, %v330
    %s334 = scalar_lea.vmem %s1, 35
    %335 = vst.msk [vmem:[%s334] sm:$0x2] %vm331, %v330
    %vm336 = vcmask 244800
    %s337 = scalar_lea.vmem %s1, 4
    %338 = vst.msk [vmem:[%s337] sm:$0x1] %vm336, %v330
    %s339 = scalar_lea.vmem %s1, 35
    %340 = vst.msk [vmem:[%s339] sm:$0x2] %vm336, %v330
    %s341 = scalar_lea.vmem [#allocation0], 24
    %v342 = vld [vmem:[%s341] sm:$0x3]
    %s343 = scalar_lea.vmem [#allocation0], 32
    %v344 = vld [vmem:[%s343] sm:$0x3]
    %vm345 = vcmask 1031168
    %v346 = vsel %vm345, %v344, %v342
    %347 = vrot.lane.b32.xlu0 %v346, 2
    %v348 = vpop.permute.xlu0 %347
    %vm349 = vcmask 15360
    %s350 = scalar_lea.vmem %s1, 17
    %351 = vst.msk [vmem:[%s350] sm:$0x1] %vm349, %v348
    %s352 = scalar_lea.vmem %s1, 48
    %353 = vst.msk [vmem:[%s352] sm:$0x2] %vm349, %v348
    %vm354 = vcmask 244752
    %s355 = scalar_lea.vmem %s1, 17
    %356 = vst.msk [vmem:[%s355] sm:$0x1] %vm354, %v348
    %s357 = scalar_lea.vmem %s1, 48
    %358 = vst.msk [vmem:[%s357] sm:$0x2] %vm354, %v348

// kernel: decoder_forward.3
$region0: #{decoder_forward.3}
  #allocation0 [shape = 'u32[]', space=smem, size = 0x4, offset = 0x4, fixed_abs, tag = 'smem constant byte address 0x4 - core index']
  #allocation1 [shape = 'u32[72,128]{1,0:T(1,128)}', space=vmem, size = 0x9000, scoped, tag = 'internal scratch']
  #allocation2 [shape = 'f32[8,1024]{1,0:T(8,128)}', space=vmem, size = 0x8000, scoped, tag = 'scratch operand']
  %s0 = inlined_call_operand.vmem [shape: f32[2,16,1024], index: 0, kind: input, shape index: {}]
  %s1 = inlined_call_operand.vmem [shape: f32[1,1024], index: 1, kind: input, shape index: {}]
  %s2 = inlined_call_operand.vmem [shape: bf16[72,16], index: 2, kind: input, shape index: {}]
  %s3 = inlined_call_operand.vmem [shape: f32[8,1], index: 3, kind: input, shape index: {}]
  %s4 = inlined_call_operand.vmem [shape: bf16[72,8], index: 4, kind: input, shape index: {}]
  %s5 = inlined_call_operand.vmem [shape: f32[8,1], index: 5, kind: input, shape index: {}]
  %s6 = inlined_call_operand.vmem [shape: bf16[8,16], index: 6, kind: input, shape index: {}]
  %s7 = inlined_call_operand.vmem [shape: bf16[72,8], index: 7, kind: input, shape index: {}]
  %s8 = inlined_call_operand.vmem [shape: f32[8,1], index: 8, kind: input, shape index: {}]
  %s9 = inlined_call_operand.vmem [shape: bf16[72,8], index: 9, kind: input, shape index: {}]
  %s10 = inlined_call_operand.vmem [shape: f32[8,1], index: 10, kind: input, shape index: {}]
  %s11 = inlined_call_operand.vmem [shape: bf16[8,8], index: 11, kind: input, shape index: {}]
  %s12 = inlined_call_operand.vmem [shape: f32[2,1,1024], index: 12, kind: output, shape index: {}]
  %s13 = sld [smem:[#allocation0]]
  $region81: #{decoder_forward.3} parent=0
    _
  %s15 = ssub.s32 1, %s13
  %s16 = scalar_select 0, %s15, %s13
  loop: start=0, step=1, limit=4
  $region2: #{decoder_forward.3} parent=0 // loop_pre_header
    _
  $region3: #{decoder_forward.3} parent=0 // loop_header
    %s18 = sphi 0, %s22
    %p19 = scmp.ge.s32.totalorder %s18, 4
    %s28 = sphi 0, %s30
    %s31 = sphi 0, %s28
    %s32 = sphi 0, %s31
    %s48 = sphi 0, %s32
    %s52 = sphi 0, %s52
    %s54 = sphi 0, %s52
    %s55 = sphi 0, %s54
    %s69 = sphi 0, %s55
    %s73 = sphi 0, %s73
    %s75 = sphi 0, %s73
    %s76 = sphi 0, %s75
    %s90 = sphi 0, %s76
    %s94 = sphi 0, %s94
    %s96 = sphi 0, %s94
    %s97 = sphi 0, %s96
    %s111 = sphi 0, %s97
    %s115 = sphi 0, %s115
    %s117 = sphi 0, %s115
    %s118 = sphi 0, %s117
    %s132 = sphi 0, %s118
    %s136 = sphi 0, %s136
    %s138 = sphi 0, %s136
    %s139 = sphi 0, %s138
    %s153 = sphi 0, %s139
    %s157 = sphi 0, %s157
    %s159 = sphi 0, %s157
    %s160 = sphi 0, %s159
    %s174 = sphi 0, %s160
    %s178 = sphi 0, %s178
    %s180 = sphi 0, %s178
    %s181 = sphi 0, %s180
    %s195 = sphi 0, %s181
    %s199 = sphi 0, %s199
    %s201 = sphi 0, %s199
    %s202 = sphi 0, %s201
    %s216 = sphi 0, %s202
    %s220 = sphi 0, %s220
    %s222 = sphi 0, %s220
    %s223 = sphi 0, %s222
    %s237 = sphi 0, %s223
    %s241 = sphi 0, %s241
    %s243 = sphi 0, %s241
    %s244 = sphi 0, %s243
    %s258 = sphi 0, %s244
    %s262 = sphi 0, %s262
    %s264 = sphi 0, %s262
    %s265 = sphi 0, %s264
    %s279 = sphi 0, %s265
    %s285 = sphi 0, %s287
    %s288 = sphi 0, %s285
    %s289 = sphi 0, %s288
    %s305 = sphi 0, %s289
  $region4: #{decoder_forward.3} parent=0 // loop_header_branch
    %21 = sbr.rel (%p19) target = $region8
  $region5: #{decoder_forward.3} parent=0 // loop_body
    %s23 = ssub.s32 %s18, 1
    %s24 = ssub.s32 %s18, 2
    %s25 = sadd.s32 %s18, 1
    %s26 = ssub.s32 %s18, %s25
    %p27 = scmp.eq.s32.totalorder %s26, 0
    %s29 = sadd.s32 %s28, 1
    %s30 = scalar_select %p27, %s28, %s29
    %p33 = pneg %p27
    %p34 = scmp.eq.s32.totalorder %s18, 1
    %p35 = por %p33, %p34
    %p36 = scmp.ne.s32.totalorder %s28, %s31
    %p37 = scmp.eq.s32.totalorder %s18, 0
    %p38 = por %p36, %p37
    %p39 = scmp.ne.s32.totalorder %s28, %s31
    %p40 = scmp.eq.s32.totalorder %s23, 1
    %p41 = por %p39, %p40
    %p42 = scmp.ne.s32.totalorder %s31, %s32
    %p43 = scmp.eq.s32.totalorder %s23, 0
    %p44 = por %p42, %p43
    %p45 = scmp.ne.s32.totalorder %s31, %s32
    %p46 = scmp.eq.s32.totalorder %s24, 1
    %p47 = por %p45, %p46
    %p49 = scmp.ne.s32.totalorder %s32, %s48
    %p50 = scmp.eq.s32.totalorder %s24, 0
    %p51 = por %p49, %p50
    %s53 = sadd.s32 %s52, 1
    %p56 = scmp.eq.s32.totalorder %s18, 1
    %p57 = scmp.ne.s32.totalorder %s52, %s54
    %p58 = scmp.eq.s32.totalorder %s18, 0
    %p59 = por %p57, %p58
    %p60 = scmp.ne.s32.totalorder %s52, %s54
    %p61 = scmp.eq.s32.totalorder %s23, 1
    %p62 = por %p60, %p61
    %p63 = scmp.ne.s32.totalorder %s54, %s55
    %p64 = scmp.eq.s32.totalorder %s23, 0
    %p65 = por %p63, %p64
    %p66 = scmp.ne.s32.totalorder %s54, %s55
    %p67 = scmp.eq.s32.totalorder %s24, 1
    %p68 = por %p66, %p67
    %p70 = scmp.ne.s32.totalorder %s55, %s69
    %p71 = scmp.eq.s32.totalorder %s24, 0
    %p72 = por %p70, %p71
    %s74 = sadd.s32 %s73, 1
    %p77 = scmp.eq.s32.totalorder %s18, 1
    %p78 = scmp.ne.s32.totalorder %s73, %s75
    %p79 = scmp.eq.s32.totalorder %s18, 0
    %p80 = por %p78, %p79
    %p81 = scmp.ne.s32.totalorder %s73, %s75
    %p82 = scmp.eq.s32.totalorder %s23, 1
    %p83 = por %p81, %p82
    %p84 = scmp.ne.s32.totalorder %s75, %s76
    %p85 = scmp.eq.s32.totalorder %s23, 0
    %p86 = por %p84, %p85
    %p87 = scmp.ne.s32.totalorder %s75, %s76
    %p88 = scmp.eq.s32.totalorder %s24, 1
    %p89 = por %p87, %p88
    %p91 = scmp.ne.s32.totalorder %s76, %s90
    %p92 = scmp.eq.s32.totalorder %s24, 0
    %p93 = por %p91, %p92
    %s95 = sadd.s32 %s94, 1
    %p98 = scmp.eq.s32.totalorder %s18, 1
    %p99 = scmp.ne.s32.totalorder %s94, %s96
    %p100 = scmp.eq.s32.totalorder %s18, 0
    %p101 = por %p99, %p100
    %p102 = scmp.ne.s32.totalorder %s94, %s96
    %p103 = scmp.eq.s32.totalorder %s23, 1
    %p104 = por %p102, %p103
    %p105 = scmp.ne.s32.totalorder %s96, %s97
    %p106 = scmp.eq.s32.totalorder %s23, 0
    %p107 = por %p105, %p106
    %p108 = scmp.ne.s32.totalorder %s96, %s97
    %p109 = scmp.eq.s32.totalorder %s24, 1
    %p110 = por %p108, %p109
    %p112 = scmp.ne.s32.totalorder %s97, %s111
    %p113 = scmp.eq.s32.totalorder %s24, 0
    %p114 = por %p112, %p113
    %s116 = sadd.s32 %s115, 1
    %p119 = scmp.eq.s32.totalorder %s18, 1
    %p120 = scmp.ne.s32.totalorder %s115, %s117
    %p121 = scmp.eq.s32.totalorder %s18, 0
    %p122 = por %p120, %p121
    %p123 = scmp.ne.s32.totalorder %s115, %s117
    %p124 = scmp.eq.s32.totalorder %s23, 1
    %p125 = por %p123, %p124
    %p126 = scmp.ne.s32.totalorder %s117, %s118
    %p127 = scmp.eq.s32.totalorder %s23, 0
    %p128 = por %p126, %p127
    %p129 = scmp.ne.s32.totalorder %s117, %s118
    %p130 = scmp.eq.s32.totalorder %s24, 1
    %p131 = por %p129, %p130
    %p133 = scmp.ne.s32.totalorder %s118, %s132
    %p134 = scmp.eq.s32.totalorder %s24, 0
    %p135 = por %p133, %p134
    %s137 = sadd.s32 %s136, 1
    %p140 = scmp.eq.s32.totalorder %s18, 1
    %p141 = scmp.ne.s32.totalorder %s136, %s138
    %p142 = scmp.eq.s32.totalorder %s18, 0
    %p143 = por %p141, %p142
    %p144 = scmp.ne.s32.totalorder %s136, %s138
    %p145 = scmp.eq.s32.totalorder %s23, 1
    %p146 = por %p144, %p145
    %p147 = scmp.ne.s32.totalorder %s138, %s139
    %p148 = scmp.eq.s32.totalorder %s23, 0
    %p149 = por %p147, %p148
    %p150 = scmp.ne.s32.totalorder %s138, %s139
    %p151 = scmp.eq.s32.totalorder %s24, 1
    %p152 = por %p150, %p151
    %p154 = scmp.ne.s32.totalorder %s139, %s153
    %p155 = scmp.eq.s32.totalorder %s24, 0
    %p156 = por %p154, %p155
    %s158 = sadd.s32 %s157, 1
    %p161 = scmp.eq.s32.totalorder %s18, 1
    %p162 = scmp.ne.s32.totalorder %s157, %s159
    %p163 = scmp.eq.s32.totalorder %s18, 0
    %p164 = por %p162, %p163
    %p165 = scmp.ne.s32.totalorder %s157, %s159
    %p166 = scmp.eq.s32.totalorder %s23, 1
    %p167 = por %p165, %p166
    %p168 = scmp.ne.s32.totalorder %s159, %s160
    %p169 = scmp.eq.s32.totalorder %s23, 0
    %p170 = por %p168, %p169
    %p171 = scmp.ne.s32.totalorder %s159, %s160
    %p172 = scmp.eq.s32.totalorder %s24, 1
    %p173 = por %p171, %p172
    %p175 = scmp.ne.s32.totalorder %s160, %s174
    %p176 = scmp.eq.s32.totalorder %s24, 0
    %p177 = por %p175, %p176
    %s179 = sadd.s32 %s178, 1
    %p182 = scmp.eq.s32.totalorder %s18, 1
    %p183 = scmp.ne.s32.totalorder %s178, %s180
    %p184 = scmp.eq.s32.totalorder %s18, 0
    %p185 = por %p183, %p184
    %p186 = scmp.ne.s32.totalorder %s178, %s180
    %p187 = scmp.eq.s32.totalorder %s23, 1
    %p188 = por %p186, %p187
    %p189 = scmp.ne.s32.totalorder %s180, %s181
    %p190 = scmp.eq.s32.totalorder %s23, 0
    %p191 = por %p189, %p190
    %p192 = scmp.ne.s32.totalorder %s180, %s181
    %p193 = scmp.eq.s32.totalorder %s24, 1
    %p194 = por %p192, %p193
    %p196 = scmp.ne.s32.totalorder %s181, %s195
    %p197 = scmp.eq.s32.totalorder %s24, 0
    %p198 = por %p196, %p197
    %s200 = sadd.s32 %s199, 1
    %p203 = scmp.eq.s32.totalorder %s18, 1
    %p204 = scmp.ne.s32.totalorder %s199, %s201
    %p205 = scmp.eq.s32.totalorder %s18, 0
    %p206 = por %p204, %p205
    %p207 = scmp.ne.s32.totalorder %s199, %s201
    %p208 = scmp.eq.s32.totalorder %s23, 1
    %p209 = por %p207, %p208
    %p210 = scmp.ne.s32.totalorder %s201, %s202
    %p211 = scmp.eq.s32.totalorder %s23, 0
    %p212 = por %p210, %p211
    %p213 = scmp.ne.s32.totalorder %s201, %s202
    %p214 = scmp.eq.s32.totalorder %s24, 1
    %p215 = por %p213, %p214
    %p217 = scmp.ne.s32.totalorder %s202, %s216
    %p218 = scmp.eq.s32.totalorder %s24, 0
    %p219 = por %p217, %p218
    %s221 = sadd.s32 %s220, 1
    %p224 = scmp.eq.s32.totalorder %s18, 1
    %p225 = scmp.ne.s32.totalorder %s220, %s222
    %p226 = scmp.eq.s32.totalorder %s18, 0
    %p227 = por %p225, %p226
    %p228 = scmp.ne.s32.totalorder %s220, %s222
    %p229 = scmp.eq.s32.totalorder %s23, 1
    %p230 = por %p228, %p229
    %p231 = scmp.ne.s32.totalorder %s222, %s223
    %p232 = scmp.eq.s32.totalorder %s23, 0
    %p233 = por %p231, %p232
    %p234 = scmp.ne.s32.totalorder %s222, %s223
    %p235 = scmp.eq.s32.totalorder %s24, 1
    %p236 = por %p234, %p235
    %p238 = scmp.ne.s32.totalorder %s223, %s237
    %p239 = scmp.eq.s32.totalorder %s24, 0
    %p240 = por %p238, %p239
    %s242 = sadd.s32 %s241, 1
    %p245 = scmp.eq.s32.totalorder %s18, 1
    %p246 = scmp.ne.s32.totalorder %s241, %s243
    %p247 = scmp.eq.s32.totalorder %s18, 0
    %p248 = por %p246, %p247
    %p249 = scmp.ne.s32.totalorder %s241, %s243
    %p250 = scmp.eq.s32.totalorder %s23, 1
    %p251 = por %p249, %p250
    %p252 = scmp.ne.s32.totalorder %s243, %s244
    %p253 = scmp.eq.s32.totalorder %s23, 0
    %p254 = por %p252, %p253
    %p255 = scmp.ne.s32.totalorder %s243, %s244
    %p256 = scmp.eq.s32.totalorder %s24, 1
    %p257 = por %p255, %p256
    %p259 = scmp.ne.s32.totalorder %s244, %s258
    %p260 = scmp.eq.s32.totalorder %s24, 0
    %p261 = por %p259, %p260
    %s263 = sadd.s32 %s262, 1
    %p266 = scmp.eq.s32.totalorder %s18, 1
    %p267 = scmp.ne.s32.totalorder %s262, %s264
    %p268 = scmp.eq.s32.totalorder %s18, 0
    %p269 = por %p267, %p268
    %p270 = scmp.ne.s32.totalorder %s262, %s264
    %p271 = scmp.eq.s32.totalorder %s23, 1
    %p272 = por %p270, %p271
    %p273 = scmp.ne.s32.totalorder %s264, %s265
    %p274 = scmp.eq.s32.totalorder %s23, 0
    %p275 = por %p273, %p274
    %p276 = scmp.ne.s32.totalorder %s264, %s265
    %p277 = scmp.eq.s32.totalorder %s24, 1
    %p278 = por %p276, %p277
    %p280 = scmp.ne.s32.totalorder %s265, %s279
    %p281 = scmp.eq.s32.totalorder %s24, 0
    %p282 = por %p280, %p281
    %s283 = ssub.s32 %s18, %s25
    %p284 = scmp.eq.s32.totalorder %s283, 0
    %s286 = sadd.s32 %s285, 1
    %s287 = scalar_select %p284, %s285, %s286
    %p290 = pneg %p284
    %p291 = scmp.eq.s32.totalorder %s18, 1
    %p292 = por %p290, %p291
    %p293 = scmp.ne.s32.totalorder %s285, %s288
    %p294 = scmp.eq.s32.totalorder %s18, 0
    %p295 = por %p293, %p294
    %p296 = scmp.ne.s32.totalorder %s285, %s288
    %p297 = scmp.eq.s32.totalorder %s23, 1
    %p298 = por %p296, %p297
    %p299 = scmp.ne.s32.totalorder %s288, %s289
    %p300 = scmp.eq.s32.totalorder %s23, 0
    %p301 = por %p299, %p300
    %p302 = scmp.ne.s32.totalorder %s288, %s289
    %p303 = scmp.eq.s32.totalorder %s24, 1
    %p304 = por %p302, %p303
    %p306 = scmp.ne.s32.totalorder %s289, %s305
    %p307 = scmp.eq.s32.totalorder %s24, 0
    %p308 = por %p306, %p307
    %p309 = scmp.le.s32.totalorder 1, %s18
    %p310 = scmp.lt.s32.totalorder %s18, 3
    %p311 = pnand %p309, %p310
    %p312 = pneg %p311
    // Predicated region
    $region9: #{decoder_forward.3} parent=5 // pred_check
      _
    $region10: #{decoder_forward.3} parent=5 // pred_check_branch
      %314 = sbr.rel (%p311) target = $region12
    $region11: #{decoder_forward.3} parent=5 // pred_region
      %s315 = ssub.s32 %s18, 1
      // Predicated region
      $region13: #{decoder_forward.3} parent=11 // pred_check
        %p316 = pneg %p65
      $region14: #{decoder_forward.3} parent=11 // pred_check_branch
        %318 = sbr.rel (%p316) target = $region16
      $region15: #{decoder_forward.3} parent=11 // pred_region
        _
      $region16: #{decoder_forward.3} parent=11 // pred_fallthru
        _
      // Predicated region
      $region17: #{decoder_forward.3} parent=11 // pred_check
        %p319 = pneg %p86
      $region18: #{decoder_forward.3} parent=11 // pred_check_branch
        %321 = sbr.rel (%p319) target = $region20
      $region19: #{decoder_forward.3} parent=11 // pred_region
        _
      $region20: #{decoder_forward.3} parent=11 // pred_fallthru
        _
      // Predicated region
      $region21: #{decoder_forward.3} parent=11 // pred_check
        %p322 = pneg %p107
      $region22: #{decoder_forward.3} parent=11 // pred_check_branch
        %324 = sbr.rel (%p322) target = $region24
      $region23: #{decoder_forward.3} parent=11 // pred_region
        _
      $region24: #{decoder_forward.3} parent=11 // pred_fallthru
        _
      // Predicated region
      $region25: #{decoder_forward.3} parent=11 // pred_check
        %p325 = pneg %p128
      $region26: #{decoder_forward.3} parent=11 // pred_check_branch
        %327 = sbr.rel (%p325) target = $region28
      $region27: #{decoder_forward.3} parent=11 // pred_region
        _
      $region28: #{decoder_forward.3} parent=11 // pred_fallthru
        _
      // Predicated region
      $region29: #{decoder_forward.3} parent=11 // pred_check
        %p328 = pneg %p149
      $region30: #{decoder_forward.3} parent=11 // pred_check_branch
        %330 = sbr.rel (%p328) target = $region32
      $region31: #{decoder_forward.3} parent=11 // pred_region
        _
      $region32: #{decoder_forward.3} parent=11 // pred_fallthru
        _
      // Predicated region
      $region33: #{decoder_forward.3} parent=11 // pred_check
        %p331 = pneg %p170
      $region34: #{decoder_forward.3} parent=11 // pred_check_branch
        %333 = sbr.rel (%p331) target = $region36
      $region35: #{decoder_forward.3} parent=11 // pred_region
        _
      $region36: #{decoder_forward.3} parent=11 // pred_fallthru
        _
      // Predicated region
      $region37: #{decoder_forward.3} parent=11 // pred_check
        %p334 = pneg %p191
      $region38: #{decoder_forward.3} parent=11 // pred_check_branch
        %336 = sbr.rel (%p334) target = $region40
      $region39: #{decoder_forward.3} parent=11 // pred_region
        _
      $region40: #{decoder_forward.3} parent=11 // pred_fallthru
        _
      // Predicated region
      $region41: #{decoder_forward.3} parent=11 // pred_check
        %p337 = pneg %p212
      $region42: #{decoder_forward.3} parent=11 // pred_check_branch
        %339 = sbr.rel (%p337) target = $region44
      $region43: #{decoder_forward.3} parent=11 // pred_region
        _
      $region44: #{decoder_forward.3} parent=11 // pred_fallthru
        _
      // Predicated region
      $region45: #{decoder_forward.3} parent=11 // pred_check
        %p340 = pneg %p233
      $region46: #{decoder_forward.3} parent=11 // pred_check_branch
        %342 = sbr.rel (%p340) target = $region48
      $region47: #{decoder_forward.3} parent=11 // pred_region
        _
      $region48: #{decoder_forward.3} parent=11 // pred_fallthru
        _
      // Predicated region
      $region49: #{decoder_forward.3} parent=11 // pred_check
        %p343 = pneg %p254
      $region50: #{decoder_forward.3} parent=11 // pred_check_branch
        %345 = sbr.rel (%p343) target = $region52
      $region51: #{decoder_forward.3} parent=11 // pred_region
        _
      $region52: #{decoder_forward.3} parent=11 // pred_fallthru
        _
      // Predicated region
      $region53: #{decoder_forward.3} parent=11 // pred_check
        %p346 = pneg %p275
      $region54: #{decoder_forward.3} parent=11 // pred_check_branch
        %348 = sbr.rel (%p346) target = $region56
      $region55: #{decoder_forward.3} parent=11 // pred_region
        _
      $region56: #{decoder_forward.3} parent=11 // pred_fallthru
        _
    $region12: #{decoder_forward.3} parent=5 // pred_fallthru
      _
    %p349 = scmp.lt.s32.totalorder %s18, 2
    // Predicated region
    $region57: #{decoder_forward.3} parent=5 // pred_check
      %p350 = pneg %p349
    $region58: #{decoder_forward.3} parent=5 // pred_check_branch
      %352 = sbr.rel (%p350) target = $region60
    $region59: #{decoder_forward.3} parent=5 // pred_region
      // Predicated region
      $region61: #{decoder_forward.3} parent=59 // pred_check
        %p353 = pneg %p38
      $region62: #{decoder_forward.3} parent=59 // pred_check_branch
        %355 = sbr.rel (%p353) target = $region64
      $region63: #{decoder_forward.3} parent=59 // pred_region
        %p356 = scmp.lt.s32.totalorder %s18, 1
        %s357 = scalar_select %p356, %s18, 1
        %s358 = smul.addr %s357, 16
        %s359 = smul.addr %s358, 8
        %s360 = scalar_lea.vmem %s0, %s359
      $region64: #{decoder_forward.3} parent=59 // pred_fallthru
        _
    $region60: #{decoder_forward.3} parent=5 // pred_fallthru
      _
    %p361 = scmp.le.s32.totalorder 1, %s18
    %p362 = scmp.lt.s32.totalorder %s18, 3
    %p363 = pnand %p361, %p362
    %p364 = pneg %p363
    // Predicated region
    $region65: #{decoder_forward.3} parent=5 // pred_check
      _
    $region66: #{decoder_forward.3} parent=5 // pred_check_branch
      %366 = sbr.rel (%p363) target = $region68
    $region67: #{decoder_forward.3} parent=5 // pred_region
      %s367 = ssub.s32 %s18, 1
      %p368 = scmp.lt.s32.totalorder %s23, 1
      %s369 = scalar_select %p368, %s23, 1
      %s370 = smul.addr %s369, 16
      %s371 = smul.addr %s370, 8
      %s372 = scalar_lea.vmem %s0, %s371
      %p373 = pneg %p44
      %p374 = pneg %p41
      %p375 = pneg %p65
      %p376 = pneg %p62
      %p377 = pneg %p86
      %p378 = pneg %p83
      %p379 = pneg %p107
      %p380 = pneg %p104
      %p381 = pneg %p128
      %p382 = pneg %p125
      %p383 = pneg %p149
      %p384 = pneg %p146
      %p385 = pneg %p170
      %p386 = pneg %p167
      %p387 = pneg %p191
      %p388 = pneg %p188
      %p389 = pneg %p212
      %p390 = pneg %p209
      %p391 = pneg %p233
      %p392 = pneg %p230
      %p393 = pneg %p254
      %p394 = pneg %p251
      %p395 = pneg %p275
      %p396 = pneg %p272
      %p397 = pneg %p301
      %p398 = pneg %p298
      %p399 = scmp.lt.s32.totalorder %s23, 1
      %s400 = scalar_select %p399, %s23, 1
      %s401 = smul.addr %s400, 8
      %s402 = scalar_lea.vmem %s12, %s401
      %p403 = scmp.lt.s32.totalorder %s23, 1
      %s404 = scalar_select %p403, %s23, 1
      %s405 = smul.addr %s404, 16
      %s406 = smul.addr %s405, 8
      %s407 = scalar_lea.vmem %s0, %s406
      %p408 = scmp.lt.s32.totalorder %s23, 1
      %s409 = scalar_select %p408, %s23, 1
      %s410 = smul.addr %s409, 8
      %s411 = scalar_lea.vmem %s12, %s410
      %v413 = vld [vmem:[%s407] sm:$0xff]
      %v414 = vld [vmem:[%s407 + $0x8] sm:$0xff]
      %v415 = vld [vmem:[%s407 + $0x10] sm:$0xff]
      %v416 = vld [vmem:[%s407 + $0x18] sm:$0xff]
      %v417 = vld [vmem:[%s407 + $0x20] sm:$0xff]
      %v418 = vld [vmem:[%s407 + $0x28] sm:$0xff]
      %v419 = vld [vmem:[%s407 + $0x30] sm:$0xff]
      %v420 = vld [vmem:[%s407 + $0x38] sm:$0xff]
      %v421 = vld [vmem:[%s407 + $0x40] sm:$0xff]
      %v422 = vld [vmem:[%s407 + $0x48] sm:$0xff]
      %v423 = vld [vmem:[%s407 + $0x50] sm:$0xff]
      %v424 = vld [vmem:[%s407 + $0x58] sm:$0xff]
      %v425 = vld [vmem:[%s407 + $0x60] sm:$0xff]
      %v426 = vld [vmem:[%s407 + $0x68] sm:$0xff]
      %v427 = vld [vmem:[%s407 + $0x70] sm:$0xff]
      %v428 = vld [vmem:[%s407 + $0x78] sm:$0xff]
      %v429 = vpack.c.bf16 %v421, %v413
      %v430 = vpack.c.bf16 %v422, %v414
      %v431 = vpack.c.bf16 %v423, %v415
      %v432 = vpack.c.bf16 %v424, %v416
      %v433 = vpack.c.bf16 %v425, %v417
      %v434 = vpack.c.bf16 %v426, %v418
      %v435 = vpack.c.bf16 %v427, %v419
      %v436 = vpack.c.bf16 %v428, %v420
      %v437 = vld [vmem:[%s2] sm:$0xf]
      %v438 = vld [vmem:[%s2 + $0x4] sm:$0xf]
      %v439 = vld [vmem:[%s2 + $0x8] sm:$0xf]
      %v440 = vld [vmem:[%s2 + $0xc] sm:$0xf]
      %v441 = vld [vmem:[%s2 + $0x10] sm:$0xf]
      %v442 = vld [vmem:[%s2 + $0x14] sm:$0xf]
      %v443 = vld [vmem:[%s2 + $0x18] sm:$0xf]
      %v444 = vld [vmem:[%s2 + $0x1c] sm:$0xf]
      %v445 = vld [vmem:[%s2 + $0x20] sm:$0xf]
      %v455 = vunpack.c.l.b16 %v437
      %v456 = vunpack.c.l.b16 %v438
      %v457 = vunpack.c.l.b16 %v439
      %v458 = vunpack.c.l.b16 %v440
      %v459 = vunpack.c.l.b16 %v441
      %v460 = vunpack.c.l.b16 %v442
      %v461 = vunpack.c.l.b16 %v443
      %v462 = vunpack.c.l.b16 %v444
      %v463 = vunpack.c.l.b16 %v445
      %v464 = vpack.c.b16 %v456, %v455
      %v465 = vpack.c.b16 %v458, %v457
      %v466 = vpack.c.b16 %v460, %v459
      %v467 = vpack.c.b16 %v462, %v461
      %v468 = vpack.c.b16 %v463, %v463
      %vm469 = vcmask 130048
      %v471 = vsel %vm469, %v464, 0
      %v474 = vsel %vm469, %v465, 0
      %v477 = vsel %vm469, %v466, 0
      %v480 = vsel %vm469, %v467, 0
      %v483 = vsel %vm469, %v468, 0
      %485 = vmatpush.bf16.msra.mxu0 0
      %486 = vmatpush.bf16.msra.mxu0 0
      %487 = vmatpush.bf16.msra.mxu0 0
      %488 = vmatpush.bf16.msra.mxu0 0
      %489 = vmatpush.bf16.msra.mxu0 0
      %490 = vmatpush.bf16.msra.mxu0 0
      %491 = vmatpush.bf16.msra.mxu0 0
      %492 = vmatpush.bf16.msra.mxu0 %v429
      %493 = vmatmul.bf16.gmra.mxu0 %v471
      %v494 = vpop.f32.mrf.mxu0
      %v495 = vadd.f32 0.0, %v494
      %v496 = vpop.f32.mrf.mxu0
      %v497 = vadd.f32 0.0, %v496
      %498 = vmatmul.bf16.gmra.mxu0 %v474
      %v499 = vpop.f32.mrf.mxu0
      %v500 = vadd.f32 0.0, %v499
      %v501 = vpop.f32.mrf.mxu0
      %v502 = vadd.f32 0.0, %v501
      %503 = vmatmul.bf16.gmra.mxu0 %v477
      %v504 = vpop.f32.mrf.mxu0
      %v505 = vadd.f32 0.0, %v504
      %v506 = vpop.f32.mrf.mxu0
      %v507 = vadd.f32 0.0, %v506
      %508 = vmatmul.bf16.gmra.mxu0 %v480
      %v509 = vpop.f32.mrf.mxu0
      %v510 = vadd.f32 0.0, %v509
      %v511 = vpop.f32.mrf.mxu0
      %v512 = vadd.f32 0.0, %v511
      %513 = vmatmul.bf16.gmra.mxu0 %v483
      %v514 = vpop.f32.mrf.mxu0
      %v515 = vadd.f32 0.0, %v514
      %v516 = vpop.f32.mrf.mxu0
      %517 = vdwg.mxu0
      %518 = vmatpush.bf16.msra.mxu0 0
      %519 = vmatpush.bf16.msra.mxu0 0
      %520 = vmatpush.bf16.msra.mxu0 0
      %521 = vmatpush.bf16.msra.mxu0 0
      %522 = vmatpush.bf16.msra.mxu0 0
      %523 = vmatpush.bf16.msra.mxu0 0
      %524 = vmatpush.bf16.msra.mxu0 0
      %525 = vmatpush.bf16.msra.mxu0 %v430
      %526 = vmatmul.bf16.gmra.mxu0 %v471
      %v527 = vpop.f32.mrf.mxu0
      %v528 = vadd.f32 0.0, %v527
      %v529 = vpop.f32.mrf.mxu0
      %v530 = vadd.f32 0.0, %v529
      %531 = vmatmul.bf16.gmra.mxu0 %v474
      %v532 = vpop.f32.mrf.mxu0
      %v533 = vadd.f32 0.0, %v532
      %v534 = vpop.f32.mrf.mxu0
      %v535 = vadd.f32 0.0, %v534
      %536 = vmatmul.bf16.gmra.mxu0 %v477
      %v537 = vpop.f32.mrf.mxu0
      %v538 = vadd.f32 0.0, %v537
      %v539 = vpop.f32.mrf.mxu0
      %v540 = vadd.f32 0.0, %v539
      %541 = vmatmul.bf16.gmra.mxu0 %v480
      %v542 = vpop.f32.mrf.mxu0
      %v543 = vadd.f32 0.0, %v542
      %v544 = vpop.f32.mrf.mxu0
      %v545 = vadd.f32 0.0, %v544
      %546 = vmatmul.bf16.gmra.mxu0 %v483
      %v547 = vpop.f32.mrf.mxu0
      %v548 = vadd.f32 0.0, %v547
      %v549 = vpop.f32.mrf.mxu0
      %550 = vdwg.mxu0
      %551 = vmatpush.bf16.msra.mxu0 0
      %552 = vmatpush.bf16.msra.mxu0 0
      %553 = vmatpush.bf16.msra.mxu0 0
      %554 = vmatpush.bf16.msra.mxu0 0
      %555 = vmatpush.bf16.msra.mxu0 0
      %556 = vmatpush.bf16.msra.mxu0 0
      %557 = vmatpush.bf16.msra.mxu0 0
      %558 = vmatpush.bf16.msra.mxu0 %v431
      %559 = vmatmul.bf16.gmra.mxu0 %v471
      %v560 = vpop.f32.mrf.mxu0
      %v561 = vadd.f32 0.0, %v560
      %v562 = vpop.f32.mrf.mxu0
      %v563 = vadd.f32 0.0, %v562
      %564 = vmatmul.bf16.gmra.mxu0 %v474
      %v565 = vpop.f32.mrf.mxu0
      %v566 = vadd.f32 0.0, %v565
      %v567 = vpop.f32.mrf.mxu0
      %v568 = vadd.f32 0.0, %v567
      %569 = vmatmul.bf16.gmra.mxu0 %v477
      %v570 = vpop.f32.mrf.mxu0
      %v571 = vadd.f32 0.0, %v570
      %v572 = vpop.f32.mrf.mxu0
      %v573 = vadd.f32 0.0, %v572
      %574 = vmatmul.bf16.gmra.mxu0 %v480
      %v575 = vpop.f32.mrf.mxu0
      %v576 = vadd.f32 0.0, %v575
      %v577 = vpop.f32.mrf.mxu0
      %v578 = vadd.f32 0.0, %v577
      %579 = vmatmul.bf16.gmra.mxu0 %v483
      %v580 = vpop.f32.mrf.mxu0
      %v581 = vadd.f32 0.0, %v580
      %v582 = vpop.f32.mrf.mxu0
      %583 = vdwg.mxu0
      %584 = vmatpush.bf16.msra.mxu0 0
      %585 = vmatpush.bf16.msra.mxu0 0
      %586 = vmatpush.bf16.msra.mxu0 0
      %587 = vmatpush.bf16.msra.mxu0 0
      %588 = vmatpush.bf16.msra.mxu0 0
      %589 = vmatpush.bf16.msra.mxu0 0
      %590 = vmatpush.bf16.msra.mxu0 0
      %591 = vmatpush.bf16.msra.mxu0 %v432
      %592 = vmatmul.bf16.gmra.mxu0 %v471
      %v593 = vpop.f32.mrf.mxu0
      %v594 = vadd.f32 0.0, %v593
      %v595 = vpop.f32.mrf.mxu0
      %v596 = vadd.f32 0.0, %v595
      %597 = vmatmul.bf16.gmra.mxu0 %v474
      %v598 = vpop.f32.mrf.mxu0
      %v599 = vadd.f32 0.0, %v598
      %v600 = vpop.f32.mrf.mxu0
      %v601 = vadd.f32 0.0, %v600
      %602 = vmatmul.bf16.gmra.mxu0 %v477
      %v603 = vpop.f32.mrf.mxu0
      %v604 = vadd.f32 0.0, %v603
      %v605 = vpop.f32.mrf.mxu0
      %v606 = vadd.f32 0.0, %v605
      %607 = vmatmul.bf16.gmra.mxu0 %v480
      %v608 = vpop.f32.mrf.mxu0
      %v609 = vadd.f32 0.0, %v608
      %v610 = vpop.f32.mrf.mxu0
      %v611 = vadd.f32 0.0, %v610
      %612 = vmatmul.bf16.gmra.mxu0 %v483
      %v613 = vpop.f32.mrf.mxu0
      %v614 = vadd.f32 0.0, %v613
      %v615 = vpop.f32.mrf.mxu0
      %616 = vdwg.mxu0
      %617 = vmatpush.bf16.msra.mxu0 0
      %618 = vmatpush.bf16.msra.mxu0 0
      %619 = vmatpush.bf16.msra.mxu0 0
      %620 = vmatpush.bf16.msra.mxu0 0
      %621 = vmatpush.bf16.msra.mxu0 0
      %622 = vmatpush.bf16.msra.mxu0 0
      %623 = vmatpush.bf16.msra.mxu0 0
      %624 = vmatpush.bf16.msra.mxu0 %v433
      %625 = vmatmul.bf16.gmra.mxu0 %v471
      %v626 = vpop.f32.mrf.mxu0
      %v627 = vadd.f32 0.0, %v626
      %v628 = vpop.f32.mrf.mxu0
      %v629 = vadd.f32 0.0, %v628
      %630 = vmatmul.bf16.gmra.mxu0 %v474
      %v631 = vpop.f32.mrf.mxu0
      %v632 = vadd.f32 0.0, %v631
      %v633 = vpop.f32.mrf.mxu0
      %v634 = vadd.f32 0.0, %v633
      %635 = vmatmul.bf16.gmra.mxu0 %v477
      %v636 = vpop.f32.mrf.mxu0
      %v637 = vadd.f32 0.0, %v636
      %v638 = vpop.f32.mrf.mxu0
      %v639 = vadd.f32 0.0, %v638
      %640 = vmatmul.bf16.gmra.mxu0 %v480
      %v641 = vpop.f32.mrf.mxu0
      %v642 = vadd.f32 0.0, %v641
      %v643 = vpop.f32.mrf.mxu0
      %v644 = vadd.f32 0.0, %v643
      %645 = vmatmul.bf16.gmra.mxu0 %v483
      %v646 = vpop.f32.mrf.mxu0
      %v647 = vadd.f32 0.0, %v646
      %v648 = vpop.f32.mrf.mxu0
      %649 = vdwg.mxu0
      %650 = vmatpush.bf16.msra.mxu0 0
      %651 = vmatpush.bf16.msra.mxu0 0
      %652 = vmatpush.bf16.msra.mxu0 0
      %653 = vmatpush.bf16.msra.mxu0 0
      %654 = vmatpush.bf16.msra.mxu0 0
      %655 = vmatpush.bf16.msra.mxu0 0
      %656 = vmatpush.bf16.msra.mxu0 0
      %657 = vmatpush.bf16.msra.mxu0 %v434
      %658 = vmatmul.bf16.gmra.mxu0 %v471
      %v659 = vpop.f32.mrf.mxu0
      %v660 = vadd.f32 0.0, %v659
      %v661 = vpop.f32.mrf.mxu0
      %v662 = vadd.f32 0.0, %v661
      %663 = vmatmul.bf16.gmra.mxu0 %v474
      %v664 = vpop.f32.mrf.mxu0
      %v665 = vadd.f32 0.0, %v664
      %v666 = vpop.f32.mrf.mxu0
      %v667 = vadd.f32 0.0, %v666
      %668 = vmatmul.bf16.gmra.mxu0 %v477
      %v669 = vpop.f32.mrf.mxu0
      %v670 = vadd.f32 0.0, %v669
      %v671 = vpop.f32.mrf.mxu0
      %v672 = vadd.f32 0.0, %v671
      %673 = vmatmul.bf16.gmra.mxu0 %v480
      %v674 = vpop.f32.mrf.mxu0
      %v675 = vadd.f32 0.0, %v674
      %v676 = vpop.f32.mrf.mxu0
      %v677 = vadd.f32 0.0, %v676
      %678 = vmatmul.bf16.gmra.mxu0 %v483
      %v679 = vpop.f32.mrf.mxu0
      %v680 = vadd.f32 0.0, %v679
      %v681 = vpop.f32.mrf.mxu0
      %682 = vdwg.mxu0
      %683 = vmatpush.bf16.msra.mxu0 0
      %684 = vmatpush.bf16.msra.mxu0 0
      %685 = vmatpush.bf16.msra.mxu0 0
      %686 = vmatpush.bf16.msra.mxu0 0
      %687 = vmatpush.bf16.msra.mxu0 0
      %688 = vmatpush.bf16.msra.mxu0 0
      %689 = vmatpush.bf16.msra.mxu0 0
      %690 = vmatpush.bf16.msra.mxu0 %v435
      %691 = vmatmul.bf16.gmra.mxu0 %v471
      %v692 = vpop.f32.mrf.mxu0
      %v693 = vadd.f32 0.0, %v692
      %v694 = vpop.f32.mrf.mxu0
      %v695 = vadd.f32 0.0, %v694
      %696 = vmatmul.bf16.gmra.mxu0 %v474
      %v697 = vpop.f32.mrf.mxu0
      %v698 = vadd.f32 0.0, %v697
      %v699 = vpop.f32.mrf.mxu0
      %v700 = vadd.f32 0.0, %v699
      %701 = vmatmul.bf16.gmra.mxu0 %v477
      %v702 = vpop.f32.mrf.mxu0
      %v703 = vadd.f32 0.0, %v702
      %v704 = vpop.f32.mrf.mxu0
      %v705 = vadd.f32 0.0, %v704
      %706 = vmatmul.bf16.gmra.mxu0 %v480
      %v707 = vpop.f32.mrf.mxu0
      %v708 = vadd.f32 0.0, %v707
      %v709 = vpop.f32.mrf.mxu0
      %v710 = vadd.f32 0.0, %v709
      %711 = vmatmul.bf16.gmra.mxu0 %v483
      %v712 = vpop.f32.mrf.mxu0
      %v713 = vadd.f32 0.0, %v712
      %v714 = vpop.f32.mrf.mxu0
      %715 = vdwg.mxu0
      %716 = vmatpush.bf16.msra.mxu0 0
      %717 = vmatpush.bf16.msra.mxu0 0
      %718 = vmatpush.bf16.msra.mxu0 0
      %719 = vmatpush.bf16.msra.mxu0 0
      %720 = vmatpush.bf16.msra.mxu0 0
      %721 = vmatpush.bf16.msra.mxu0 0
      %722 = vmatpush.bf16.msra.mxu0 0
      %723 = vmatpush.bf16.msra.mxu0 %v436
      %724 = vmatmul.bf16.gmra.mxu0 %v471
      %v725 = vpop.f32.mrf.mxu0
      %v726 = vadd.f32 0.0, %v725
      %v727 = vpop.f32.mrf.mxu0
      %v728 = vadd.f32 0.0, %v727
      %729 = vmatmul.bf16.gmra.mxu0 %v474
      %v730 = vpop.f32.mrf.mxu0
      %v731 = vadd.f32 0.0, %v730
      %v732 = vpop.f32.mrf.mxu0
      %v733 = vadd.f32 0.0, %v732
      %734 = vmatmul.bf16.gmra.mxu0 %v477
      %v735 = vpop.f32.mrf.mxu0
      %v736 = vadd.f32 0.0, %v735
      %v737 = vpop.f32.mrf.mxu0
      %v738 = vadd.f32 0.0, %v737
      %739 = vmatmul.bf16.gmra.mxu0 %v480
      %v740 = vpop.f32.mrf.mxu0
      %v741 = vadd.f32 0.0, %v740
      %v742 = vpop.f32.mrf.mxu0
      %v743 = vadd.f32 0.0, %v742
      %744 = vmatmul.bf16.gmra.mxu0 %v483
      %v745 = vpop.f32.mrf.mxu0
      %v746 = vadd.f32 0.0, %v745
      %v747 = vpop.f32.mrf.mxu0
      %748 = vdwg.mxu0
      %749 = vrot.lane.b32.xlu0 %v495, 31
      %v750 = vpop.permute.xlu0 %749
      %751 = vrot.lane.b32.xlu0 %v528, 31
      %v752 = vpop.permute.xlu0 %751
      %753 = vrot.lane.b32.xlu0 %v561, 31
      %v754 = vpop.permute.xlu0 %753
      %755 = vrot.lane.b32.xlu0 %v594, 31
      %v756 = vpop.permute.xlu0 %755
      %757 = vrot.lane.b32.xlu0 %v627, 31
      %v758 = vpop.permute.xlu0 %757
      %759 = vrot.lane.b32.xlu0 %v660, 31
      %v760 = vpop.permute.xlu0 %759
      %761 = vrot.lane.b32.xlu0 %v693, 31
      %v762 = vpop.permute.xlu0 %761
      %763 = vrot.lane.b32.xlu0 %v726, 31
      %v764 = vpop.permute.xlu0 %763
      %v765 = vlaneseq
      %v766 = vand.u32 %v765, 127
      %vm767 = vcmp.lt.s32.totalorder %v766, 31
      %v768 = vsel %vm767, %v762, %v764
      %v769 = vsel %vm767, %v760, %v762
      %v770 = vsel %vm767, %v758, %v760
      %v771 = vsel %vm767, %v756, %v758
      %v772 = vsel %vm767, %v754, %v756
      %v773 = vsel %vm767, %v752, %v754
      %v774 = vsel %vm767, %v750, %v752
      %v775 = vsel %vm767, %v764, %v750
      %776 = vrot.lane.b32.xlu0 %v497, 30
      %v777 = vpop.permute.xlu0 %776
      %778 = vrot.lane.b32.xlu0 %v530, 30
      %v779 = vpop.permute.xlu0 %778
      %780 = vrot.lane.b32.xlu0 %v563, 30
      %v781 = vpop.permute.xlu0 %780
      %782 = vrot.lane.b32.xlu0 %v596, 30
      %v783 = vpop.permute.xlu0 %782
      %784 = vrot.lane.b32.xlu0 %v629, 30
      %v785 = vpop.permute.xlu0 %784
      %786 = vrot.lane.b32.xlu0 %v662, 30
      %v787 = vpop.permute.xlu0 %786
      %788 = vrot.lane.b32.xlu0 %v695, 30
      %v789 = vpop.permute.xlu0 %788
      %790 = vrot.lane.b32.xlu0 %v728, 30
      %v791 = vpop.permute.xlu0 %790
      %vm792 = vcmp.lt.s32.totalorder %v766, 30
      %v793 = vsel %vm792, %v789, %v791
      %v794 = vsel %vm792, %v787, %v789
      %v795 = vsel %vm792, %v785, %v787
      %v796 = vsel %vm792, %v783, %v785
      %v797 = vsel %vm792, %v781, %v783
      %v798 = vsel %vm792, %v779, %v781
      %v799 = vsel %vm792, %v777, %v779
      %v800 = vsel %vm792, %v791, %v777
      %v801 = vadd.f32 %v775, %v800
      %v802 = vadd.f32 %v774, %v799
      %v803 = vadd.f32 %v773, %v798
      %v804 = vadd.f32 %v772, %v797
      %v805 = vadd.f32 %v771, %v796
      %v806 = vadd.f32 %v770, %v795
      %v807 = vadd.f32 %v769, %v794
      %v808 = vadd.f32 %v768, %v793
      %809 = vrot.lane.b32.xlu0 %v500, 29
      %v810 = vpop.permute.xlu0 %809
      %811 = vrot.lane.b32.xlu0 %v533, 29
      %v812 = vpop.permute.xlu0 %811
      %813 = vrot.lane.b32.xlu0 %v566, 29
      %v814 = vpop.permute.xlu0 %813
      %815 = vrot.lane.b32.xlu0 %v599, 29
      %v816 = vpop.permute.xlu0 %815
      %817 = vrot.lane.b32.xlu0 %v632, 29
      %v818 = vpop.permute.xlu0 %817
      %819 = vrot.lane.b32.xlu0 %v665, 29
      %v820 = vpop.permute.xlu0 %819
      %821 = vrot.lane.b32.xlu0 %v698, 29
      %v822 = vpop.permute.xlu0 %821
      %823 = vrot.lane.b32.xlu0 %v731, 29
      %v824 = vpop.permute.xlu0 %823
      %vm825 = vcmp.lt.s32.totalorder %v766, 29
      %v826 = vsel %vm825, %v822, %v824
      %v827 = vsel %vm825, %v820, %v822
      %v828 = vsel %vm825, %v818, %v820
      %v829 = vsel %vm825, %v816, %v818
      %v830 = vsel %vm825, %v814, %v816
      %v831 = vsel %vm825, %v812, %v814
      %v832 = vsel %vm825, %v810, %v812
      %v833 = vsel %vm825, %v824, %v810
      %v834 = vadd.f32 %v801, %v833
      %v835 = vadd.f32 %v802, %v832
      %v836 = vadd.f32 %v803, %v831
      %v837 = vadd.f32 %v804, %v830
      %v838 = vadd.f32 %v805, %v829
      %v839 = vadd.f32 %v806, %v828
      %v840 = vadd.f32 %v807, %v827
      %v841 = vadd.f32 %v808, %v826
      %842 = vrot.lane.b32.xlu0 %v502, 1
      %v843 = vpop.permute.xlu0 %842
      %844 = vrot.lane.b32.xlu0 %v535, 1
      %v845 = vpop.permute.xlu0 %844
      %846 = vrot.lane.b32.xlu0 %v568, 1
      %v847 = vpop.permute.xlu0 %846
      %848 = vrot.lane.b32.xlu0 %v601, 1
      %v849 = vpop.permute.xlu0 %848
      %850 = vrot.lane.b32.xlu0 %v634, 1
      %v851 = vpop.permute.xlu0 %850
      %852 = vrot.lane.b32.xlu0 %v667, 1
      %v853 = vpop.permute.xlu0 %852
      %854 = vrot.lane.b32.xlu0 %v700, 1
      %v855 = vpop.permute.xlu0 %854
      %856 = vrot.lane.b32.xlu0 %v733, 1
      %v857 = vpop.permute.xlu0 %856
      %vm858 = vcmp.lt.s32.totalorder %v766, 1
      %v859 = vsel %vm858, %v855, %v857
      %v860 = vsel %vm858, %v853, %v855
      %v861 = vsel %vm858, %v851, %v853
      %v862 = vsel %vm858, %v849, %v851
      %v863 = vsel %vm858, %v847, %v849
      %v864 = vsel %vm858, %v845, %v847
      %v865 = vsel %vm858, %v843, %v845
      %v866 = vsel %vm858, %v857, %v843
      %v867 = vadd.f32 %v834, %v866
      %v868 = vadd.f32 %v835, %v865
      %v869 = vadd.f32 %v836, %v864
      %v870 = vadd.f32 %v837, %v863
      %v871 = vadd.f32 %v838, %v862
      %v872 = vadd.f32 %v839, %v861
      %v873 = vadd.f32 %v840, %v860
      %v874 = vadd.f32 %v841, %v859
      %v875 = vadd.f32 %v867, %v505
      %v876 = vadd.f32 %v868, %v538
      %v877 = vadd.f32 %v869, %v571
      %v878 = vadd.f32 %v870, %v604
      %v879 = vadd.f32 %v871, %v637
      %v880 = vadd.f32 %v872, %v670
      %v881 = vadd.f32 %v873, %v703
      %v882 = vadd.f32 %v874, %v736
      %883 = vrot.lane.b32.xlu0 %v507, 127
      %v884 = vpop.permute.xlu0 %883
      %885 = vrot.lane.b32.xlu0 %v540, 127
      %v886 = vpop.permute.xlu0 %885
      %887 = vrot.lane.b32.xlu0 %v573, 127
      %v888 = vpop.permute.xlu0 %887
      %889 = vrot.lane.b32.xlu0 %v606, 127
      %v890 = vpop.permute.xlu0 %889
      %891 = vrot.lane.b32.xlu0 %v639, 127
      %v892 = vpop.permute.xlu0 %891
      %893 = vrot.lane.b32.xlu0 %v672, 127
      %v894 = vpop.permute.xlu0 %893
      %895 = vrot.lane.b32.xlu0 %v705, 127
      %v896 = vpop.permute.xlu0 %895
      %897 = vrot.lane.b32.xlu0 %v738, 127
      %v898 = vpop.permute.xlu0 %897
      %vm899 = vcmp.lt.s32.totalorder %v766, 127
      %v900 = vsel %vm899, %v896, %v898
      %v901 = vsel %vm899, %v894, %v896
      %v902 = vsel %vm899, %v892, %v894
      %v903 = vsel %vm899, %v890, %v892
      %v904 = vsel %vm899, %v888, %v890
      %v905 = vsel %vm899, %v886, %v888
      %v906 = vsel %vm899, %v884, %v886
      %v907 = vsel %vm899, %v898, %v884
      %v908 = vadd.f32 %v875, %v906
      %v909 = vadd.f32 %v876, %v905
      %v910 = vadd.f32 %v877, %v904
      %v911 = vadd.f32 %v878, %v903
      %v912 = vadd.f32 %v879, %v902
      %v913 = vadd.f32 %v880, %v901
      %v914 = vadd.f32 %v881, %v900
      %v915 = vadd.f32 %v882, %v907
      %916 = vrot.lane.b32.xlu0 %v510, 99
      %v917 = vpop.permute.xlu0 %916
      %918 = vrot.lane.b32.xlu0 %v543, 99
      %v919 = vpop.permute.xlu0 %918
      %920 = vrot.lane.b32.xlu0 %v576, 99
      %v921 = vpop.permute.xlu0 %920
      %922 = vrot.lane.b32.xlu0 %v609, 99
      %v923 = vpop.permute.xlu0 %922
      %924 = vrot.lane.b32.xlu0 %v642, 99
      %v925 = vpop.permute.xlu0 %924
      %926 = vrot.lane.b32.xlu0 %v675, 99
      %v927 = vpop.permute.xlu0 %926
      %928 = vrot.lane.b32.xlu0 %v708, 99
      %v929 = vpop.permute.xlu0 %928
      %930 = vrot.lane.b32.xlu0 %v741, 99
      %v931 = vpop.permute.xlu0 %930
      %vm932 = vcmp.lt.s32.totalorder %v766, 99
      %v933 = vsel %vm932, %v929, %v931
      %v934 = vsel %vm932, %v927, %v929
      %v935 = vsel %vm932, %v925, %v927
      %v936 = vsel %vm932, %v923, %v925
      %v937 = vsel %vm932, %v921, %v923
      %v938 = vsel %vm932, %v919, %v921
      %v939 = vsel %vm932, %v917, %v919
      %v940 = vsel %vm932, %v931, %v917
      %v941 = vadd.f32 %v908, %v939
      %v942 = vadd.f32 %v909, %v938
      %v943 = vadd.f32 %v910, %v937
      %v944 = vadd.f32 %v911, %v936
      %v945 = vadd.f32 %v912, %v935
      %v946 = vadd.f32 %v913, %v934
      %v947 = vadd.f32 %v914, %v933
      %v948 = vadd.f32 %v915, %v940
      %949 = vrot.lane.b32.xlu0 %v512, 98
      %v950 = vpop.permute.xlu0 %949
      %951 = vrot.lane.b32.xlu0 %v545, 98
      %v952 = vpop.permute.xlu0 %951
      %953 = vrot.lane.b32.xlu0 %v578, 98
      %v954 = vpop.permute.xlu0 %953
      %955 = vrot.lane.b32.xlu0 %v611, 98
      %v956 = vpop.permute.xlu0 %955
      %957 = vrot.lane.b32.xlu0 %v644, 98
      %v958 = vpop.permute.xlu0 %957
      %959 = vrot.lane.b32.xlu0 %v677, 98
      %v960 = vpop.permute.xlu0 %959
      %961 = vrot.lane.b32.xlu0 %v710, 98
      %v962 = vpop.permute.xlu0 %961
      %963 = vrot.lane.b32.xlu0 %v743, 98
      %v964 = vpop.permute.xlu0 %963
      %vm965 = vcmp.lt.s32.totalorder %v766, 98
      %v966 = vsel %vm965, %v962, %v964
      %v967 = vsel %vm965, %v960, %v962
      %v968 = vsel %vm965, %v958, %v960
      %v969 = vsel %vm965, %v956, %v958
      %v970 = vsel %vm965, %v954, %v956
      %v971 = vsel %vm965, %v952, %v954
      %v972 = vsel %vm965, %v950, %v952
      %v973 = vsel %vm965, %v964, %v950
      %v974 = vadd.f32 %v941, %v972
      %v975 = vadd.f32 %v942, %v971
      %v976 = vadd.f32 %v943, %v970
      %v977 = vadd.f32 %v944, %v969
      %v978 = vadd.f32 %v945, %v968
      %v979 = vadd.f32 %v946, %v967
      %v980 = vadd.f32 %v947, %v966
      %v981 = vadd.f32 %v948, %v973
      %982 = vrot.lane.b32.xlu0 %v515, 97
      %v983 = vpop.permute.xlu0 %982
      %984 = vrot.lane.b32.xlu0 %v548, 97
      %v985 = vpop.permute.xlu0 %984
      %986 = vrot.lane.b32.xlu0 %v581, 97
      %v987 = vpop.permute.xlu0 %986
      %988 = vrot.lane.b32.xlu0 %v614, 97
      %v989 = vpop.permute.xlu0 %988
      %990 = vrot.lane.b32.xlu0 %v647, 97
      %v991 = vpop.permute.xlu0 %990
      %992 = vrot.lane.b32.xlu0 %v680, 97
      %v993 = vpop.permute.xlu0 %992
      %994 = vrot.lane.b32.xlu0 %v713, 97
      %v995 = vpop.permute.xlu0 %994
      %996 = vrot.lane.b32.xlu0 %v746, 97
      %v997 = vpop.permute.xlu0 %996
      %vm998 = vcmp.lt.s32.totalorder %v766, 97
      %v999 = vsel %vm998, %v995, %v997
      %v1000 = vsel %vm998, %v993, %v995
      %v1001 = vsel %vm998, %v991, %v993
      %v1002 = vsel %vm998, %v989, %v991
      %v1003 = vsel %vm998, %v987, %v989
      %v1004 = vsel %vm998, %v985, %v987
      %v1005 = vsel %vm998, %v983, %v985
      %v1006 = vsel %vm998, %v997, %v983
      %v1007 = vadd.f32 %v974, %v1005
      %v1008 = vadd.f32 %v975, %v1004
      %v1009 = vadd.f32 %v976, %v1003
      %v1010 = vadd.f32 %v977, %v1002
      %v1011 = vadd.f32 %v978, %v1001
      %v1012 = vadd.f32 %v979, %v1000
      %v1013 = vadd.f32 %v980, %v999
      %v1014 = vadd.f32 %v981, %v1006
      %v1015 = vld [vmem:[%s3] sm:$0xff]
      %1017 = vset.pattern.permute.xlu0 0
      %1018 = vperm.xlu0 %1017, %v1015
      %v1019 = vpop.permute.xlu0 %1018
      %v1021 = vadd.f32 %v1007, %v1019
      %v1022 = vadd.f32 %v1008, %v1019
      %v1023 = vadd.f32 %v1009, %v1019
      %v1024 = vadd.f32 %v1010, %v1019
      %v1025 = vadd.f32 %v1011, %v1019
      %v1026 = vadd.f32 %v1012, %v1019
      %v1027 = vadd.f32 %v1013, %v1019
      %v1028 = vadd.f32 %v1014, %v1019
      %v1029 = vmax.f32 %v1021, 0.0
      %v1030 = vmax.f32 %v1022, 0.0
      %v1031 = vmax.f32 %v1023, 0.0
      %v1032 = vmax.f32 %v1024, 0.0
      %v1033 = vmax.f32 %v1025, 0.0
      %v1034 = vmax.f32 %v1026, 0.0
      %v1035 = vmax.f32 %v1027, 0.0
      %v1036 = vmax.f32 %v1028, 0.0
      %v1037 = vld [vmem:[%s1] sm:$0xff]
      %v1039 = vperm.slane %v1037, 0
      %v1040 = vperm.slane %v1037, 1
      %v1041 = vperm.slane %v1037, 2
      %v1042 = vperm.slane %v1037, 3
      %v1043 = vperm.slane %v1037, 4
      %v1044 = vperm.slane %v1037, 5
      %v1045 = vperm.slane %v1037, 6
      %v1046 = vperm.slane %v1037, 7
      %v1055 = vmul.f32 %v1029, %v1039
      %v1056 = vmul.f32 %v1030, %v1040
      %v1057 = vmul.f32 %v1031, %v1041
      %v1058 = vmul.f32 %v1032, %v1042
      %v1059 = vmul.f32 %v1033, %v1043
      %v1060 = vmul.f32 %v1034, %v1044
      %v1061 = vmul.f32 %v1035, %v1045
      %v1062 = vmul.f32 %v1036, %v1046
      %v1063 = vpack.c.bf16 %v1055, %v1055
      %v1064 = vpack.c.bf16 %v1056, %v1056
      %v1065 = vpack.c.bf16 %v1057, %v1057
      %v1066 = vpack.c.bf16 %v1058, %v1058
      %v1067 = vpack.c.bf16 %v1059, %v1059
      %v1068 = vpack.c.bf16 %v1060, %v1060
      %v1069 = vpack.c.bf16 %v1061, %v1061
      %v1070 = vpack.c.bf16 %v1062, %v1062
      %v1071 = vld [vmem:[%s4] sm:$0xf]
      %v1072 = vld [vmem:[%s4 + $0x4] sm:$0xf]
      %v1073 = vld [vmem:[%s4 + $0x8] sm:$0xf]
      %v1074 = vld [vmem:[%s4 + $0xc] sm:$0xf]
      %v1075 = vld [vmem:[%s4 + $0x10] sm:$0xf]
      %v1076 = vld [vmem:[%s4 + $0x14] sm:$0xf]
      %v1077 = vld [vmem:[%s4 + $0x18] sm:$0xf]
      %v1078 = vld [vmem:[%s4 + $0x1c] sm:$0xf]
      %v1079 = vld [vmem:[%s4 + $0x20] sm:$0xf]
      %v1089 = vunpack.c.l.b16 %v1071
      %v1090 = vunpack.c.l.b16 %v1072
      %v1091 = vunpack.c.l.b16 %v1073
      %v1092 = vunpack.c.l.b16 %v1074
      %v1093 = vunpack.c.l.b16 %v1075
      %v1094 = vunpack.c.l.b16 %v1076
      %v1095 = vunpack.c.l.b16 %v1077
      %v1096 = vunpack.c.l.b16 %v1078
      %v1097 = vunpack.c.l.b16 %v1079
      %v1098 = vpack.c.b16 %v1090, %v1089
      %v1099 = vpack.c.b16 %v1092, %v1091
      %v1100 = vpack.c.b16 %v1094, %v1093
      %v1101 = vpack.c.b16 %v1096, %v1095
      %v1102 = vpack.c.b16 %v1097, %v1097
      %vm1103 = vcmask 64512
      %v1105 = vsel %vm1103, %v1098, 0
      %v1108 = vsel %vm1103, %v1099, 0
      %v1111 = vsel %vm1103, %v1100, 0
      %v1114 = vsel %vm1103, %v1101, 0
      %v1117 = vsel %vm1103, %v1102, 0
      %vm1119 = vcmask 1043456
      %v1121 = vsel %vm1119, %v1063, 0
      %v1124 = vsel %vm1119, %v1064, 0
      %v1127 = vsel %vm1119, %v1065, 0
      %v1130 = vsel %vm1119, %v1066, 0
      %v1133 = vsel %vm1119, %v1067, 0
      %v1136 = vsel %vm1119, %v1068, 0
      %v1139 = vsel %vm1119, %v1069, 0
      %v1142 = vsel %vm1119, %v1070, 0
      %1144 = vmatpush.bf16.msra.mxu0 0
      %1145 = vmatpush.bf16.msra.mxu0 0
      %1146 = vmatpush.bf16.msra.mxu0 0
      %1147 = vmatpush.bf16.msra.mxu0 0
      %1148 = vmatpush.bf16.msra.mxu0 0
      %1149 = vmatpush.bf16.msra.mxu0 0
      %1150 = vmatpush.bf16.msra.mxu0 0
      %1151 = vmatpush.bf16.msra.mxu0 %v1121
      %1152 = vmatmul.bf16.gmra.mxu0 %v1105
      %v1153 = vpop.f32.mrf.mxu0
      %v1154 = vadd.f32 0.0, %v1153
      %v1155 = vpop.f32.mrf.mxu0
      %v1156 = vadd.f32 0.0, %v1155
      %1157 = vmatmul.bf16.gmra.mxu0 %v1108
      %v1158 = vpop.f32.mrf.mxu0
      %v1159 = vadd.f32 0.0, %v1158
      %v1160 = vpop.f32.mrf.mxu0
      %v1161 = vadd.f32 0.0, %v1160
      %1162 = vmatmul.bf16.gmra.mxu0 %v1111
      %v1163 = vpop.f32.mrf.mxu0
      %v1164 = vadd.f32 0.0, %v1163
      %v1165 = vpop.f32.mrf.mxu0
      %v1166 = vadd.f32 0.0, %v1165
      %1167 = vmatmul.bf16.gmra.mxu0 %v1114
      %v1168 = vpop.f32.mrf.mxu0
      %v1169 = vadd.f32 0.0, %v1168
      %v1170 = vpop.f32.mrf.mxu0
      %v1171 = vadd.f32 0.0, %v1170
      %1172 = vmatmul.bf16.gmra.mxu0 %v1117
      %v1173 = vpop.f32.mrf.mxu0
      %v1174 = vadd.f32 0.0, %v1173
      %v1175 = vpop.f32.mrf.mxu0
      %1176 = vdwg.mxu0
      %1177 = vmatpush.bf16.msra.mxu0 0
      %1178 = vmatpush.bf16.msra.mxu0 0
      %1179 = vmatpush.bf16.msra.mxu0 0
      %1180 = vmatpush.bf16.msra.mxu0 0
      %1181 = vmatpush.bf16.msra.mxu0 0
      %1182 = vmatpush.bf16.msra.mxu0 0
      %1183 = vmatpush.bf16.msra.mxu0 0
      %1184 = vmatpush.bf16.msra.mxu0 %v1124
      %1185 = vmatmul.bf16.gmra.mxu0 %v1105
      %v1186 = vpop.f32.mrf.mxu0
      %v1187 = vadd.f32 0.0, %v1186
      %v1188 = vpop.f32.mrf.mxu0
      %v1189 = vadd.f32 0.0, %v1188
      %1190 = vmatmul.bf16.gmra.mxu0 %v1108
      %v1191 = vpop.f32.mrf.mxu0
      %v1192 = vadd.f32 0.0, %v1191
      %v1193 = vpop.f32.mrf.mxu0
      %v1194 = vadd.f32 0.0, %v1193
      %1195 = vmatmul.bf16.gmra.mxu0 %v1111
      %v1196 = vpop.f32.mrf.mxu0
      %v1197 = vadd.f32 0.0, %v1196
      %v1198 = vpop.f32.mrf.mxu0
      %v1199 = vadd.f32 0.0, %v1198
      %1200 = vmatmul.bf16.gmra.mxu0 %v1114
      %v1201 = vpop.f32.mrf.mxu0
      %v1202 = vadd.f32 0.0, %v1201
      %v1203 = vpop.f32.mrf.mxu0
      %v1204 = vadd.f32 0.0, %v1203
      %1205 = vmatmul.bf16.gmra.mxu0 %v1117
      %v1206 = vpop.f32.mrf.mxu0
      %v1207 = vadd.f32 0.0, %v1206
      %v1208 = vpop.f32.mrf.mxu0
      %1209 = vdwg.mxu0
      %1210 = vmatpush.bf16.msra.mxu0 0
      %1211 = vmatpush.bf16.msra.mxu0 0
      %1212 = vmatpush.bf16.msra.mxu0 0
      %1213 = vmatpush.bf16.msra.mxu0 0
      %1214 = vmatpush.bf16.msra.mxu0 0
      %1215 = vmatpush.bf16.msra.mxu0 0
      %1216 = vmatpush.bf16.msra.mxu0 0
      %1217 = vmatpush.bf16.msra.mxu0 %v1127
      %1218 = vmatmul.bf16.gmra.mxu0 %v1105
      %v1219 = vpop.f32.mrf.mxu0
      %v1220 = vadd.f32 0.0, %v1219
      %v1221 = vpop.f32.mrf.mxu0
      %v1222 = vadd.f32 0.0, %v1221
      %1223 = vmatmul.bf16.gmra.mxu0 %v1108
      %v1224 = vpop.f32.mrf.mxu0
      %v1225 = vadd.f32 0.0, %v1224
      %v1226 = vpop.f32.mrf.mxu0
      %v1227 = vadd.f32 0.0, %v1226
      %1228 = vmatmul.bf16.gmra.mxu0 %v1111
      %v1229 = vpop.f32.mrf.mxu0
      %v1230 = vadd.f32 0.0, %v1229
      %v1231 = vpop.f32.mrf.mxu0
      %v1232 = vadd.f32 0.0, %v1231
      %1233 = vmatmul.bf16.gmra.mxu0 %v1114
      %v1234 = vpop.f32.mrf.mxu0
      %v1235 = vadd.f32 0.0, %v1234
      %v1236 = vpop.f32.mrf.mxu0
      %v1237 = vadd.f32 0.0, %v1236
      %1238 = vmatmul.bf16.gmra.mxu0 %v1117
      %v1239 = vpop.f32.mrf.mxu0
      %v1240 = vadd.f32 0.0, %v1239
      %v1241 = vpop.f32.mrf.mxu0
      %1242 = vdwg.mxu0
      %1243 = vmatpush.bf16.msra.mxu0 0
      %1244 = vmatpush.bf16.msra.mxu0 0
      %1245 = vmatpush.bf16.msra.mxu0 0
      %1246 = vmatpush.bf16.msra.mxu0 0
      %1247 = vmatpush.bf16.msra.mxu0 0
      %1248 = vmatpush.bf16.msra.mxu0 0
      %1249 = vmatpush.bf16.msra.mxu0 0
      %1250 = vmatpush.bf16.msra.mxu0 %v1130
      %1251 = vmatmul.bf16.gmra.mxu0 %v1105
      %v1252 = vpop.f32.mrf.mxu0
      %v1253 = vadd.f32 0.0, %v1252
      %v1254 = vpop.f32.mrf.mxu0
      %v1255 = vadd.f32 0.0, %v1254
      %1256 = vmatmul.bf16.gmra.mxu0 %v1108
      %v1257 = vpop.f32.mrf.mxu0
      %v1258 = vadd.f32 0.0, %v1257
      %v1259 = vpop.f32.mrf.mxu0
      %v1260 = vadd.f32 0.0, %v1259
      %1261 = vmatmul.bf16.gmra.mxu0 %v1111
      %v1262 = vpop.f32.mrf.mxu0
      %v1263 = vadd.f32 0.0, %v1262
      %v1264 = vpop.f32.mrf.mxu0
      %v1265 = vadd.f32 0.0, %v1264
      %1266 = vmatmul.bf16.gmra.mxu0 %v1114
      %v1267 = vpop.f32.mrf.mxu0
      %v1268 = vadd.f32 0.0, %v1267
      %v1269 = vpop.f32.mrf.mxu0
      %v1270 = vadd.f32 0.0, %v1269
      %1271 = vmatmul.bf16.gmra.mxu0 %v1117
      %v1272 = vpop.f32.mrf.mxu0
      %v1273 = vadd.f32 0.0, %v1272
      %v1274 = vpop.f32.mrf.mxu0
      %1275 = vdwg.mxu0
      %1276 = vmatpush.bf16.msra.mxu0 0
      %1277 = vmatpush.bf16.msra.mxu0 0
      %1278 = vmatpush.bf16.msra.mxu0 0
      %1279 = vmatpush.bf16.msra.mxu0 0
      %1280 = vmatpush.bf16.msra.mxu0 0
      %1281 = vmatpush.bf16.msra.mxu0 0
      %1282 = vmatpush.bf16.msra.mxu0 0
      %1283 = vmatpush.bf16.msra.mxu0 %v1133
      %1284 = vmatmul.bf16.gmra.mxu0 %v1105
      %v1285 = vpop.f32.mrf.mxu0
      %v1286 = vadd.f32 0.0, %v1285
      %v1287 = vpop.f32.mrf.mxu0
      %v1288 = vadd.f32 0.0, %v1287
      %1289 = vmatmul.bf16.gmra.mxu0 %v1108
      %v1290 = vpop.f32.mrf.mxu0
      %v1291 = vadd.f32 0.0, %v1290
      %v1292 = vpop.f32.mrf.mxu0
      %v1293 = vadd.f32 0.0, %v1292
      %1294 = vmatmul.bf16.gmra.mxu0 %v1111
      %v1295 = vpop.f32.mrf.mxu0
      %v1296 = vadd.f32 0.0, %v1295
      %v1297 = vpop.f32.mrf.mxu0
      %v1298 = vadd.f32 0.0, %v1297
      %1299 = vmatmul.bf16.gmra.mxu0 %v1114
      %v1300 = vpop.f32.mrf.mxu0
      %v1301 = vadd.f32 0.0, %v1300
      %v1302 = vpop.f32.mrf.mxu0
      %v1303 = vadd.f32 0.0, %v1302
      %1304 = vmatmul.bf16.gmra.mxu0 %v1117
      %v1305 = vpop.f32.mrf.mxu0
      %v1306 = vadd.f32 0.0, %v1305
      %v1307 = vpop.f32.mrf.mxu0
      %1308 = vdwg.mxu0
      %1309 = vmatpush.bf16.msra.mxu0 0
      %1310 = vmatpush.bf16.msra.mxu0 0
      %1311 = vmatpush.bf16.msra.mxu0 0
      %1312 = vmatpush.bf16.msra.mxu0 0
      %1313 = vmatpush.bf16.msra.mxu0 0
      %1314 = vmatpush.bf16.msra.mxu0 0
      %1315 = vmatpush.bf16.msra.mxu0 0
      %1316 = vmatpush.bf16.msra.mxu0 %v1136
      %1317 = vmatmul.bf16.gmra.mxu0 %v1105
      %v1318 = vpop.f32.mrf.mxu0
      %v1319 = vadd.f32 0.0, %v1318
      %v1320 = vpop.f32.mrf.mxu0
      %v1321 = vadd.f32 0.0, %v1320
      %1322 = vmatmul.bf16.gmra.mxu0 %v1108
      %v1323 = vpop.f32.mrf.mxu0
      %v1324 = vadd.f32 0.0, %v1323
      %v1325 = vpop.f32.mrf.mxu0
      %v1326 = vadd.f32 0.0, %v1325
      %1327 = vmatmul.bf16.gmra.mxu0 %v1111
      %v1328 = vpop.f32.mrf.mxu0
      %v1329 = vadd.f32 0.0, %v1328
      %v1330 = vpop.f32.mrf.mxu0
      %v1331 = vadd.f32 0.0, %v1330
      %1332 = vmatmul.bf16.gmra.mxu0 %v1114
      %v1333 = vpop.f32.mrf.mxu0
      %v1334 = vadd.f32 0.0, %v1333
      %v1335 = vpop.f32.mrf.mxu0
      %v1336 = vadd.f32 0.0, %v1335
      %1337 = vmatmul.bf16.gmra.mxu0 %v1117
      %v1338 = vpop.f32.mrf.mxu0
      %v1339 = vadd.f32 0.0, %v1338
      %v1340 = vpop.f32.mrf.mxu0
      %1341 = vdwg.mxu0
      %1342 = vmatpush.bf16.msra.mxu0 0
      %1343 = vmatpush.bf16.msra.mxu0 0
      %1344 = vmatpush.bf16.msra.mxu0 0
      %1345 = vmatpush.bf16.msra.mxu0 0
      %1346 = vmatpush.bf16.msra.mxu0 0
      %1347 = vmatpush.bf16.msra.mxu0 0
      %1348 = vmatpush.bf16.msra.mxu0 0
      %1349 = vmatpush.bf16.msra.mxu0 %v1139
      %1350 = vmatmul.bf16.gmra.mxu0 %v1105
      %v1351 = vpop.f32.mrf.mxu0
      %v1352 = vadd.f32 0.0, %v1351
      %v1353 = vpop.f32.mrf.mxu0
      %v1354 = vadd.f32 0.0, %v1353
      %1355 = vmatmul.bf16.gmra.mxu0 %v1108
      %v1356 = vpop.f32.mrf.mxu0
      %v1357 = vadd.f32 0.0, %v1356
      %v1358 = vpop.f32.mrf.mxu0
      %v1359 = vadd.f32 0.0, %v1358
      %1360 = vmatmul.bf16.gmra.mxu0 %v1111
      %v1361 = vpop.f32.mrf.mxu0
      %v1362 = vadd.f32 0.0, %v1361
      %v1363 = vpop.f32.mrf.mxu0
      %v1364 = vadd.f32 0.0, %v1363
      %1365 = vmatmul.bf16.gmra.mxu0 %v1114
      %v1366 = vpop.f32.mrf.mxu0
      %v1367 = vadd.f32 0.0, %v1366
      %v1368 = vpop.f32.mrf.mxu0
      %v1369 = vadd.f32 0.0, %v1368
      %1370 = vmatmul.bf16.gmra.mxu0 %v1117
      %v1371 = vpop.f32.mrf.mxu0
      %v1372 = vadd.f32 0.0, %v1371
      %v1373 = vpop.f32.mrf.mxu0
      %1374 = vdwg.mxu0
      %1375 = vmatpush.bf16.msra.mxu0 0
      %1376 = vmatpush.bf16.msra.mxu0 0
      %1377 = vmatpush.bf16.msra.mxu0 0
      %1378 = vmatpush.bf16.msra.mxu0 0
      %1379 = vmatpush.bf16.msra.mxu0 0
      %1380 = vmatpush.bf16.msra.mxu0 0
      %1381 = vmatpush.bf16.msra.mxu0 0
      %1382 = vmatpush.bf16.msra.mxu0 %v1142
      %1383 = vmatmul.bf16.gmra.mxu0 %v1105
      %v1384 = vpop.f32.mrf.mxu0
      %v1385 = vadd.f32 0.0, %v1384
      %v1386 = vpop.f32.mrf.mxu0
      %v1387 = vadd.f32 0.0, %v1386
      %1388 = vmatmul.bf16.gmra.mxu0 %v1108
      %v1389 = vpop.f32.mrf.mxu0
      %v1390 = vadd.f32 0.0, %v1389
      %v1391 = vpop.f32.mrf.mxu0
      %v1392 = vadd.f32 0.0, %v1391
      %1393 = vmatmul.bf16.gmra.mxu0 %v1111
      %v1394 = vpop.f32.mrf.mxu0
      %v1395 = vadd.f32 0.0, %v1394
      %v1396 = vpop.f32.mrf.mxu0
      %v1397 = vadd.f32 0.0, %v1396
      %1398 = vmatmul.bf16.gmra.mxu0 %v1114
      %v1399 = vpop.f32.mrf.mxu0
      %v1400 = vadd.f32 0.0, %v1399
      %v1401 = vpop.f32.mrf.mxu0
      %v1402 = vadd.f32 0.0, %v1401
      %1403 = vmatmul.bf16.gmra.mxu0 %v1117
      %v1404 = vpop.f32.mrf.mxu0
      %v1405 = vadd.f32 0.0, %v1404
      %v1406 = vpop.f32.mrf.mxu0
      %1407 = vdwg.mxu0
      %1408 = vrot.lane.b32.xlu0 %v1154, 31
      %v1409 = vpop.permute.xlu0 %1408
      %1410 = vrot.lane.b32.xlu0 %v1187, 31
      %v1411 = vpop.permute.xlu0 %1410
      %1412 = vrot.lane.b32.xlu0 %v1220, 31
      %v1413 = vpop.permute.xlu0 %1412
      %1414 = vrot.lane.b32.xlu0 %v1253, 31
      %v1415 = vpop.permute.xlu0 %1414
      %1416 = vrot.lane.b32.xlu0 %v1286, 31
      %v1417 = vpop.permute.xlu0 %1416
      %1418 = vrot.lane.b32.xlu0 %v1319, 31
      %v1419 = vpop.permute.xlu0 %1418
      %1420 = vrot.lane.b32.xlu0 %v1352, 31
      %v1421 = vpop.permute.xlu0 %1420
      %1422 = vrot.lane.b32.xlu0 %v1385, 31
      %v1423 = vpop.permute.xlu0 %1422
      %v1424 = vsel %vm767, %v1421, %v1423
      %v1425 = vsel %vm767, %v1419, %v1421
      %v1426 = vsel %vm767, %v1417, %v1419
      %v1427 = vsel %vm767, %v1415, %v1417
      %v1428 = vsel %vm767, %v1413, %v1415
      %v1429 = vsel %vm767, %v1411, %v1413
      %v1430 = vsel %vm767, %v1409, %v1411
      %v1431 = vsel %vm767, %v1423, %v1409
      %1432 = vrot.lane.b32.xlu0 %v1156, 30
      %v1433 = vpop.permute.xlu0 %1432
      %1434 = vrot.lane.b32.xlu0 %v1189, 30
      %v1435 = vpop.permute.xlu0 %1434
      %1436 = vrot.lane.b32.xlu0 %v1222, 30
      %v1437 = vpop.permute.xlu0 %1436
      %1438 = vrot.lane.b32.xlu0 %v1255, 30
      %v1439 = vpop.permute.xlu0 %1438
      %1440 = vrot.lane.b32.xlu0 %v1288, 30
      %v1441 = vpop.permute.xlu0 %1440
      %1442 = vrot.lane.b32.xlu0 %v1321, 30
      %v1443 = vpop.permute.xlu0 %1442
      %1444 = vrot.lane.b32.xlu0 %v1354, 30
      %v1445 = vpop.permute.xlu0 %1444
      %1446 = vrot.lane.b32.xlu0 %v1387, 30
      %v1447 = vpop.permute.xlu0 %1446
      %v1448 = vsel %vm792, %v1445, %v1447
      %v1449 = vsel %vm792, %v1443, %v1445
      %v1450 = vsel %vm792, %v1441, %v1443
      %v1451 = vsel %vm792, %v1439, %v1441
      %v1452 = vsel %vm792, %v1437, %v1439
      %v1453 = vsel %vm792, %v1435, %v1437
      %v1454 = vsel %vm792, %v1433, %v1435
      %v1455 = vsel %vm792, %v1447, %v1433
      %v1456 = vadd.f32 %v1431, %v1455
      %v1457 = vadd.f32 %v1430, %v1454
      %v1458 = vadd.f32 %v1429, %v1453
      %v1459 = vadd.f32 %v1428, %v1452
      %v1460 = vadd.f32 %v1427, %v1451
      %v1461 = vadd.f32 %v1426, %v1450
      %v1462 = vadd.f32 %v1425, %v1449
      %v1463 = vadd.f32 %v1424, %v1448
      %1464 = vrot.lane.b32.xlu0 %v1159, 29
      %v1465 = vpop.permute.xlu0 %1464
      %1466 = vrot.lane.b32.xlu0 %v1192, 29
      %v1467 = vpop.permute.xlu0 %1466
      %1468 = vrot.lane.b32.xlu0 %v1225, 29
      %v1469 = vpop.permute.xlu0 %1468
      %1470 = vrot.lane.b32.xlu0 %v1258, 29
      %v1471 = vpop.permute.xlu0 %1470
      %1472 = vrot.lane.b32.xlu0 %v1291, 29
      %v1473 = vpop.permute.xlu0 %1472
      %1474 = vrot.lane.b32.xlu0 %v1324, 29
      %v1475 = vpop.permute.xlu0 %1474
      %1476 = vrot.lane.b32.xlu0 %v1357, 29
      %v1477 = vpop.permute.xlu0 %1476
      %1478 = vrot.lane.b32.xlu0 %v1390, 29
      %v1479 = vpop.permute.xlu0 %1478
      %v1480 = vsel %vm825, %v1477, %v1479
      %v1481 = vsel %vm825, %v1475, %v1477
      %v1482 = vsel %vm825, %v1473, %v1475
      %v1483 = vsel %vm825, %v1471, %v1473
      %v1484 = vsel %vm825, %v1469, %v1471
      %v1485 = vsel %vm825, %v1467, %v1469
      %v1486 = vsel %vm825, %v1465, %v1467
      %v1487 = vsel %vm825, %v1479, %v1465
      %v1488 = vadd.f32 %v1456, %v1487
      %v1489 = vadd.f32 %v1457, %v1486
      %v1490 = vadd.f32 %v1458, %v1485
      %v1491 = vadd.f32 %v1459, %v1484
      %v1492 = vadd.f32 %v1460, %v1483
      %v1493 = vadd.f32 %v1461, %v1482
      %v1494 = vadd.f32 %v1462, %v1481
      %v1495 = vadd.f32 %v1463, %v1480
      %1496 = vrot.lane.b32.xlu0 %v1161, 1
      %v1497 = vpop.permute.xlu0 %1496
      %1498 = vrot.lane.b32.xlu0 %v1194, 1
      %v1499 = vpop.permute.xlu0 %1498
      %1500 = vrot.lane.b32.xlu0 %v1227, 1
      %v1501 = vpop.permute.xlu0 %1500
      %1502 = vrot.lane.b32.xlu0 %v1260, 1
      %v1503 = vpop.permute.xlu0 %1502
      %1504 = vrot.lane.b32.xlu0 %v1293, 1
      %v1505 = vpop.permute.xlu0 %1504
      %1506 = vrot.lane.b32.xlu0 %v1326, 1
      %v1507 = vpop.permute.xlu0 %1506
      %1508 = vrot.lane.b32.xlu0 %v1359, 1
      %v1509 = vpop.permute.xlu0 %1508
      %1510 = vrot.lane.b32.xlu0 %v1392, 1
      %v1511 = vpop.permute.xlu0 %1510
      %v1512 = vsel %vm858, %v1509, %v1511
      %v1513 = vsel %vm858, %v1507, %v1509
      %v1514 = vsel %vm858, %v1505, %v1507
      %v1515 = vsel %vm858, %v1503, %v1505
      %v1516 = vsel %vm858, %v1501, %v1503
      %v1517 = vsel %vm858, %v1499, %v1501
      %v1518 = vsel %vm858, %v1497, %v1499
      %v1519 = vsel %vm858, %v1511, %v1497
      %v1520 = vadd.f32 %v1488, %v1519
      %v1521 = vadd.f32 %v1489, %v1518
      %v1522 = vadd.f32 %v1490, %v1517
      %v1523 = vadd.f32 %v1491, %v1516
      %v1524 = vadd.f32 %v1492, %v1515
      %v1525 = vadd.f32 %v1493, %v1514
      %v1526 = vadd.f32 %v1494, %v1513
      %v1527 = vadd.f32 %v1495, %v1512
      %v1528 = vadd.f32 %v1520, %v1164
      %v1529 = vadd.f32 %v1521, %v1197
      %v1530 = vadd.f32 %v1522, %v1230
      %v1531 = vadd.f32 %v1523, %v1263
      %v1532 = vadd.f32 %v1524, %v1296
      %v1533 = vadd.f32 %v1525, %v1329
      %v1534 = vadd.f32 %v1526, %v1362
      %v1535 = vadd.f32 %v1527, %v1395
      %1536 = vrot.lane.b32.xlu0 %v1166, 127
      %v1537 = vpop.permute.xlu0 %1536
      %1538 = vrot.lane.b32.xlu0 %v1199, 127
      %v1539 = vpop.permute.xlu0 %1538
      %1540 = vrot.lane.b32.xlu0 %v1232, 127
      %v1541 = vpop.permute.xlu0 %1540
      %1542 = vrot.lane.b32.xlu0 %v1265, 127
      %v1543 = vpop.permute.xlu0 %1542
      %1544 = vrot.lane.b32.xlu0 %v1298, 127
      %v1545 = vpop.permute.xlu0 %1544
      %1546 = vrot.lane.b32.xlu0 %v1331, 127
      %v1547 = vpop.permute.xlu0 %1546
      %1548 = vrot.lane.b32.xlu0 %v1364, 127
      %v1549 = vpop.permute.xlu0 %1548
      %1550 = vrot.lane.b32.xlu0 %v1397, 127
      %v1551 = vpop.permute.xlu0 %1550
      %v1552 = vsel %vm899, %v1549, %v1551
      %v1553 = vsel %vm899, %v1547, %v1549
      %v1554 = vsel %vm899, %v1545, %v1547
      %v1555 = vsel %vm899, %v1543, %v1545
      %v1556 = vsel %vm899, %v1541, %v1543
      %v1557 = vsel %vm899, %v1539, %v1541
      %v1558 = vsel %vm899, %v1537, %v1539
      %v1559 = vsel %vm899, %v1551, %v1537
      %v1560 = vadd.f32 %v1528, %v1558
      %v1561 = vadd.f32 %v1529, %v1557
      %v1562 = vadd.f32 %v1530, %v1556
      %v1563 = vadd.f32 %v1531, %v1555
      %v1564 = vadd.f32 %v1532, %v1554
      %v1565 = vadd.f32 %v1533, %v1553
      %v1566 = vadd.f32 %v1534, %v1552
      %v1567 = vadd.f32 %v1535, %v1559
      %1568 = vrot.lane.b32.xlu0 %v1169, 99
      %v1569 = vpop.permute.xlu0 %1568
      %1570 = vrot.lane.b32.xlu0 %v1202, 99
      %v1571 = vpop.permute.xlu0 %1570
      %1572 = vrot.lane.b32.xlu0 %v1235, 99
      %v1573 = vpop.permute.xlu0 %1572
      %1574 = vrot.lane.b32.xlu0 %v1268, 99
      %v1575 = vpop.permute.xlu0 %1574
      %1576 = vrot.lane.b32.xlu0 %v1301, 99
      %v1577 = vpop.permute.xlu0 %1576
      %1578 = vrot.lane.b32.xlu0 %v1334, 99
      %v1579 = vpop.permute.xlu0 %1578
      %1580 = vrot.lane.b32.xlu0 %v1367, 99
      %v1581 = vpop.permute.xlu0 %1580
      %1582 = vrot.lane.b32.xlu0 %v1400, 99
      %v1583 = vpop.permute.xlu0 %1582
      %v1584 = vsel %vm932, %v1581, %v1583
      %v1585 = vsel %vm932, %v1579, %v1581
      %v1586 = vsel %vm932, %v1577, %v1579
      %v1587 = vsel %vm932, %v1575, %v1577
      %v1588 = vsel %vm932, %v1573, %v1575
      %v1589 = vsel %vm932, %v1571, %v1573
      %v1590 = vsel %vm932, %v1569, %v1571
      %v1591 = vsel %vm932, %v1583, %v1569
      %v1592 = vadd.f32 %v1560, %v1590
      %v1593 = vadd.f32 %v1561, %v1589
      %v1594 = vadd.f32 %v1562, %v1588
      %v1595 = vadd.f32 %v1563, %v1587
      %v1596 = vadd.f32 %v1564, %v1586
      %v1597 = vadd.f32 %v1565, %v1585
      %v1598 = vadd.f32 %v1566, %v1584
      %v1599 = vadd.f32 %v1567, %v1591
      %1600 = vrot.lane.b32.xlu0 %v1171, 98
      %v1601 = vpop.permute.xlu0 %1600
      %1602 = vrot.lane.b32.xlu0 %v1204, 98
      %v1603 = vpop.permute.xlu0 %1602
      %1604 = vrot.lane.b32.xlu0 %v1237, 98
      %v1605 = vpop.permute.xlu0 %1604
      %1606 = vrot.lane.b32.xlu0 %v1270, 98
      %v1607 = vpop.permute.xlu0 %1606
      %1608 = vrot.lane.b32.xlu0 %v1303, 98
      %v1609 = vpop.permute.xlu0 %1608
      %1610 = vrot.lane.b32.xlu0 %v1336, 98
      %v1611 = vpop.permute.xlu0 %1610
      %1612 = vrot.lane.b32.xlu0 %v1369, 98
      %v1613 = vpop.permute.xlu0 %1612
      %1614 = vrot.lane.b32.xlu0 %v1402, 98
      %v1615 = vpop.permute.xlu0 %1614
      %v1616 = vsel %vm965, %v1613, %v1615
      %v1617 = vsel %vm965, %v1611, %v1613
      %v1618 = vsel %vm965, %v1609, %v1611
      %v1619 = vsel %vm965, %v1607, %v1609
      %v1620 = vsel %vm965, %v1605, %v1607
      %v1621 = vsel %vm965, %v1603, %v1605
      %v1622 = vsel %vm965, %v1601, %v1603
      %v1623 = vsel %vm965, %v1615, %v1601
      %v1624 = vadd.f32 %v1592, %v1622
      %v1625 = vadd.f32 %v1593, %v1621
      %v1626 = vadd.f32 %v1594, %v1620
      %v1627 = vadd.f32 %v1595, %v1619
      %v1628 = vadd.f32 %v1596, %v1618
      %v1629 = vadd.f32 %v1597, %v1617
      %v1630 = vadd.f32 %v1598, %v1616
      %v1631 = vadd.f32 %v1599, %v1623
      %1632 = vrot.lane.b32.xlu0 %v1174, 97
      %v1633 = vpop.permute.xlu0 %1632
      %1634 = vrot.lane.b32.xlu0 %v1207, 97
      %v1635 = vpop.permute.xlu0 %1634
      %1636 = vrot.lane.b32.xlu0 %v1240, 97
      %v1637 = vpop.permute.xlu0 %1636
      %1638 = vrot.lane.b32.xlu0 %v1273, 97
      %v1639 = vpop.permute.xlu0 %1638
      %1640 = vrot.lane.b32.xlu0 %v1306, 97
      %v1641 = vpop.permute.xlu0 %1640
      %1642 = vrot.lane.b32.xlu0 %v1339, 97
      %v1643 = vpop.permute.xlu0 %1642
      %1644 = vrot.lane.b32.xlu0 %v1372, 97
      %v1645 = vpop.permute.xlu0 %1644
      %1646 = vrot.lane.b32.xlu0 %v1405, 97
      %v1647 = vpop.permute.xlu0 %1646
      %v1648 = vsel %vm998, %v1645, %v1647
      %v1649 = vsel %vm998, %v1643, %v1645
      %v1650 = vsel %vm998, %v1641, %v1643
      %v1651 = vsel %vm998, %v1639, %v1641
      %v1652 = vsel %vm998, %v1637, %v1639
      %v1653 = vsel %vm998, %v1635, %v1637
      %v1654 = vsel %vm998, %v1633, %v1635
      %v1655 = vsel %vm998, %v1647, %v1633
      %v1656 = vadd.f32 %v1624, %v1654
      %v1657 = vadd.f32 %v1625, %v1653
      %v1658 = vadd.f32 %v1626, %v1652
      %v1659 = vadd.f32 %v1627, %v1651
      %v1660 = vadd.f32 %v1628, %v1650
      %v1661 = vadd.f32 %v1629, %v1649
      %v1662 = vadd.f32 %v1630, %v1648
      %v1663 = vadd.f32 %v1631, %v1655
      %v1664 = vld [vmem:[%s6] sm:$0xf]
      %v1666 = vsel %vm469, %v1664, 0
      %1668 = vmatpush.bf16.msra.mxu0 0
      %1669 = vmatpush.bf16.msra.mxu0 0
      %1670 = vmatpush.bf16.msra.mxu0 0
      %1671 = vmatpush.bf16.msra.mxu0 0
      %1672 = vmatpush.bf16.msra.mxu0 0
      %1673 = vmatpush.bf16.msra.mxu0 0
      %1674 = vmatpush.bf16.msra.mxu0 0
      %1675 = vmatpush.bf16.msra.mxu0 %v429
      %1676 = vmatmul.bf16.gmra.mxu0 %v1666
      %v1677 = vpop.f32.mrf.mxu0
      %v1678 = vadd.f32 0.0, %v1677
      %v1679 = vpop.f32.mrf.mxu0
      %1680 = vdwg.mxu0
      %1681 = vmatpush.bf16.msra.mxu0 0
      %1682 = vmatpush.bf16.msra.mxu0 0
      %1683 = vmatpush.bf16.msra.mxu0 0
      %1684 = vmatpush.bf16.msra.mxu0 0
      %1685 = vmatpush.bf16.msra.mxu0 0
      %1686 = vmatpush.bf16.msra.mxu0 0
      %1687 = vmatpush.bf16.msra.mxu0 0
      %1688 = vmatpush.bf16.msra.mxu0 %v430
      %1689 = vmatmul.bf16.gmra.mxu0 %v1666
      %v1690 = vpop.f32.mrf.mxu0
      %v1691 = vadd.f32 0.0, %v1690
      %v1692 = vpop.f32.mrf.mxu0
      %1693 = vdwg.mxu0
      %1694 = vmatpush.bf16.msra.mxu0 0
      %1695 = vmatpush.bf16.msra.mxu0 0
      %1696 = vmatpush.bf16.msra.mxu0 0
      %1697 = vmatpush.bf16.msra.mxu0 0
      %1698 = vmatpush.bf16.msra.mxu0 0
      %1699 = vmatpush.bf16.msra.mxu0 0
      %1700 = vmatpush.bf16.msra.mxu0 0
      %1701 = vmatpush.bf16.msra.mxu0 %v431
      %1702 = vmatmul.bf16.gmra.mxu0 %v1666
      %v1703 = vpop.f32.mrf.mxu0
      %v1704 = vadd.f32 0.0, %v1703
      %v1705 = vpop.f32.mrf.mxu0
      %1706 = vdwg.mxu0
      %1707 = vmatpush.bf16.msra.mxu0 0
      %1708 = vmatpush.bf16.msra.mxu0 0
      %1709 = vmatpush.bf16.msra.mxu0 0
      %1710 = vmatpush.bf16.msra.mxu0 0
      %1711 = vmatpush.bf16.msra.mxu0 0
      %1712 = vmatpush.bf16.msra.mxu0 0
      %1713 = vmatpush.bf16.msra.mxu0 0
      %1714 = vmatpush.bf16.msra.mxu0 %v432
      %1715 = vmatmul.bf16.gmra.mxu0 %v1666
      %v1716 = vpop.f32.mrf.mxu0
      %v1717 = vadd.f32 0.0, %v1716
      %v1718 = vpop.f32.mrf.mxu0
      %1719 = vdwg.mxu0
      %1720 = vmatpush.bf16.msra.mxu0 0
      %1721 = vmatpush.bf16.msra.mxu0 0
      %1722 = vmatpush.bf16.msra.mxu0 0
      %1723 = vmatpush.bf16.msra.mxu0 0
      %1724 = vmatpush.bf16.msra.mxu0 0
      %1725 = vmatpush.bf16.msra.mxu0 0
      %1726 = vmatpush.bf16.msra.mxu0 0
      %1727 = vmatpush.bf16.msra.mxu0 %v433
      %1728 = vmatmul.bf16.gmra.mxu0 %v1666
      %v1729 = vpop.f32.mrf.mxu0
      %v1730 = vadd.f32 0.0, %v1729
      %v1731 = vpop.f32.mrf.mxu0
      %1732 = vdwg.mxu0
      %1733 = vmatpush.bf16.msra.mxu0 0
      %1734 = vmatpush.bf16.msra.mxu0 0
      %1735 = vmatpush.bf16.msra.mxu0 0
      %1736 = vmatpush.bf16.msra.mxu0 0
      %1737 = vmatpush.bf16.msra.mxu0 0
      %1738 = vmatpush.bf16.msra.mxu0 0
      %1739 = vmatpush.bf16.msra.mxu0 0
      %1740 = vmatpush.bf16.msra.mxu0 %v434
      %1741 = vmatmul.bf16.gmra.mxu0 %v1666
      %v1742 = vpop.f32.mrf.mxu0
      %v1743 = vadd.f32 0.0, %v1742
      %v1744 = vpop.f32.mrf.mxu0
      %1745 = vdwg.mxu0
      %1746 = vmatpush.bf16.msra.mxu0 0
      %1747 = vmatpush.bf16.msra.mxu0 0
      %1748 = vmatpush.bf16.msra.mxu0 0
      %1749 = vmatpush.bf16.msra.mxu0 0
      %1750 = vmatpush.bf16.msra.mxu0 0
      %1751 = vmatpush.bf16.msra.mxu0 0
      %1752 = vmatpush.bf16.msra.mxu0 0
      %1753 = vmatpush.bf16.msra.mxu0 %v435
      %1754 = vmatmul.bf16.gmra.mxu0 %v1666
      %v1755 = vpop.f32.mrf.mxu0
      %v1756 = vadd.f32 0.0, %v1755
      %v1757 = vpop.f32.mrf.mxu0
      %1758 = vdwg.mxu0
      %1759 = vmatpush.bf16.msra.mxu0 0
      %1760 = vmatpush.bf16.msra.mxu0 0
      %1761 = vmatpush.bf16.msra.mxu0 0
      %1762 = vmatpush.bf16.msra.mxu0 0
      %1763 = vmatpush.bf16.msra.mxu0 0
      %1764 = vmatpush.bf16.msra.mxu0 0
      %1765 = vmatpush.bf16.msra.mxu0 0
      %1766 = vmatpush.bf16.msra.mxu0 %v436
      %1767 = vmatmul.bf16.gmra.mxu0 %v1666
      %v1768 = vpop.f32.mrf.mxu0
      %v1769 = vadd.f32 0.0, %v1768
      %v1770 = vpop.f32.mrf.mxu0
      %1771 = vdwg.mxu0
      %v1772 = vadd.f32 %v1656, %v1678
      %v1773 = vadd.f32 %v1657, %v1691
      %v1774 = vadd.f32 %v1658, %v1704
      %v1775 = vadd.f32 %v1659, %v1717
      %v1776 = vadd.f32 %v1660, %v1730
      %v1777 = vadd.f32 %v1661, %v1743
      %v1778 = vadd.f32 %v1662, %v1756
      %v1779 = vadd.f32 %v1663, %v1769
      %v1780 = vld [vmem:[%s5] sm:$0xff]
      %1782 = vset.pattern.permute.xlu0 0
      %1783 = vperm.xlu0 %1782, %v1780
      %v1784 = vpop.permute.xlu0 %1783
      %v1786 = vadd.f32 %v1772, %v1784
      %v1787 = vadd.f32 %v1773, %v1784
      %v1788 = vadd.f32 %v1774, %v1784
      %v1789 = vadd.f32 %v1775, %v1784
      %v1790 = vadd.f32 %v1776, %v1784
      %v1791 = vadd.f32 %v1777, %v1784
      %v1792 = vadd.f32 %v1778, %v1784
      %v1793 = vadd.f32 %v1779, %v1784
      %v1794 = vmax.f32 %v1786, 0.0
      %v1795 = vmax.f32 %v1787, 0.0
      %v1796 = vmax.f32 %v1788, 0.0
      %v1797 = vmax.f32 %v1789, 0.0
      %v1798 = vmax.f32 %v1790, 0.0
      %v1799 = vmax.f32 %v1791, 0.0
      %v1800 = vmax.f32 %v1792, 0.0
      %v1801 = vmax.f32 %v1793, 0.0
      %v1802 = vmul.f32 %v1794, %v1039
      %v1803 = vmul.f32 %v1795, %v1040
      %v1804 = vmul.f32 %v1796, %v1041
      %v1805 = vmul.f32 %v1797, %v1042
      %v1806 = vmul.f32 %v1798, %v1043
      %v1807 = vmul.f32 %v1799, %v1044
      %v1808 = vmul.f32 %v1800, %v1045
      %v1809 = vmul.f32 %v1801, %v1046
      %1810 = vst [vmem:[#allocation2] sm:$0xff] %v1802
      %1811 = vst [vmem:[#allocation2 + $0x8] sm:$0xff] %v1803
      %1812 = vst [vmem:[#allocation2 + $0x10] sm:$0xff] %v1804
      %1813 = vst [vmem:[#allocation2 + $0x18] sm:$0xff] %v1805
      %1814 = vst [vmem:[#allocation2 + $0x20] sm:$0xff] %v1806
      %1815 = vst [vmem:[#allocation2 + $0x28] sm:$0xff] %v1807
      %1816 = vst [vmem:[#allocation2 + $0x30] sm:$0xff] %v1808
      %1817 = vst [vmem:[#allocation2 + $0x38] sm:$0xff] %v1809
      %v1818 = vld [vmem:[#allocation2] sm:$0xff]
      %v1819 = vld [vmem:[#allocation2 + $0x8] sm:$0xff]
      %v1820 = vld [vmem:[#allocation2 + $0x10] sm:$0xff]
      %v1821 = vld [vmem:[#allocation2 + $0x18] sm:$0xff]
      %v1822 = vld [vmem:[#allocation2 + $0x20] sm:$0xff]
      %v1823 = vld [vmem:[#allocation2 + $0x28] sm:$0xff]
      %v1824 = vld [vmem:[#allocation2 + $0x30] sm:$0xff]
      %v1825 = vld [vmem:[#allocation2 + $0x38] sm:$0xff]
      %v1826 = vpack.c.bf16 %v1818, %v1818
      %v1827 = vpack.c.bf16 %v1819, %v1819
      %v1828 = vpack.c.bf16 %v1820, %v1820
      %v1829 = vpack.c.bf16 %v1821, %v1821
      %v1830 = vpack.c.bf16 %v1822, %v1822
      %v1831 = vpack.c.bf16 %v1823, %v1823
      %v1832 = vpack.c.bf16 %v1824, %v1824
      %v1833 = vpack.c.bf16 %v1825, %v1825
      %v1834 = vld [vmem:[%s7] sm:$0xf]
      %v1835 = vld [vmem:[%s7 + $0x4] sm:$0xf]
      %v1836 = vld [vmem:[%s7 + $0x8] sm:$0xf]
      %v1837 = vld [vmem:[%s7 + $0xc] sm:$0xf]
      %v1838 = vld [vmem:[%s7 + $0x10] sm:$0xf]
      %v1839 = vld [vmem:[%s7 + $0x14] sm:$0xf]
      %v1840 = vld [vmem:[%s7 + $0x18] sm:$0xf]
      %v1841 = vld [vmem:[%s7 + $0x1c] sm:$0xf]
      %v1842 = vld [vmem:[%s7 + $0x20] sm:$0xf]
      %v1852 = vunpack.c.l.b16 %v1834
      %v1853 = vunpack.c.l.b16 %v1835
      %v1854 = vunpack.c.l.b16 %v1836
      %v1855 = vunpack.c.l.b16 %v1837
      %v1856 = vunpack.c.l.b16 %v1838
      %v1857 = vunpack.c.l.b16 %v1839
      %v1858 = vunpack.c.l.b16 %v1840
      %v1859 = vunpack.c.l.b16 %v1841
      %v1860 = vunpack.c.l.b16 %v1842
      %v1861 = vpack.c.b16 %v1853, %v1852
      %v1862 = vpack.c.b16 %v1855, %v1854
      %v1863 = vpack.c.b16 %v1857, %v1856
      %v1864 = vpack.c.b16 %v1859, %v1858
      %v1865 = vpack.c.b16 %v1860, %v1860
      %v1867 = vsel %vm1103, %v1861, 0
      %v1870 = vsel %vm1103, %v1862, 0
      %v1873 = vsel %vm1103, %v1863, 0
      %v1876 = vsel %vm1103, %v1864, 0
      %v1879 = vsel %vm1103, %v1865, 0
      %v1882 = vsel %vm1119, %v1826, 0
      %v1885 = vsel %vm1119, %v1827, 0
      %v1888 = vsel %vm1119, %v1828, 0
      %v1891 = vsel %vm1119, %v1829, 0
      %v1894 = vsel %vm1119, %v1830, 0
      %v1897 = vsel %vm1119, %v1831, 0
      %v1900 = vsel %vm1119, %v1832, 0
      %v1903 = vsel %vm1119, %v1833, 0
      %1905 = vmatpush.bf16.msra.mxu0 0
      %1906 = vmatpush.bf16.msra.mxu0 0
      %1907 = vmatpush.bf16.msra.mxu0 0
      %1908 = vmatpush.bf16.msra.mxu0 0
      %1909 = vmatpush.bf16.msra.mxu0 0
      %1910 = vmatpush.bf16.msra.mxu0 0
      %1911 = vmatpush.bf16.msra.mxu0 0
      %1912 = vmatpush.bf16.msra.mxu0 %v1882
      %1913 = vmatmul.bf16.gmra.mxu0 %v1867
      %v1914 = vpop.f32.mrf.mxu0
      %v1915 = vadd.f32 0.0, %v1914
      %v1916 = vpop.f32.mrf.mxu0
      %v1917 = vadd.f32 0.0, %v1916
      %1918 = vmatmul.bf16.gmra.mxu0 %v1870
      %v1919 = vpop.f32.mrf.mxu0
      %v1920 = vadd.f32 0.0, %v1919
      %v1921 = vpop.f32.mrf.mxu0
      %v1922 = vadd.f32 0.0, %v1921
      %1923 = vmatmul.bf16.gmra.mxu0 %v1873
      %v1924 = vpop.f32.mrf.mxu0
      %v1925 = vadd.f32 0.0, %v1924
      %v1926 = vpop.f32.mrf.mxu0
      %v1927 = vadd.f32 0.0, %v1926
      %1928 = vmatmul.bf16.gmra.mxu0 %v1876
      %v1929 = vpop.f32.mrf.mxu0
      %v1930 = vadd.f32 0.0, %v1929
      %v1931 = vpop.f32.mrf.mxu0
      %v1932 = vadd.f32 0.0, %v1931
      %1933 = vmatmul.bf16.gmra.mxu0 %v1879
      %v1934 = vpop.f32.mrf.mxu0
      %v1935 = vadd.f32 0.0, %v1934
      %v1936 = vpop.f32.mrf.mxu0
      %1937 = vdwg.mxu0
      %1938 = vmatpush.bf16.msra.mxu0 0
      %1939 = vmatpush.bf16.msra.mxu0 0
      %1940 = vmatpush.bf16.msra.mxu0 0
      %1941 = vmatpush.bf16.msra.mxu0 0
      %1942 = vmatpush.bf16.msra.mxu0 0
      %1943 = vmatpush.bf16.msra.mxu0 0
      %1944 = vmatpush.bf16.msra.mxu0 0
      %1945 = vmatpush.bf16.msra.mxu0 %v1885
      %1946 = vmatmul.bf16.gmra.mxu0 %v1867
      %v1947 = vpop.f32.mrf.mxu0
      %v1948 = vadd.f32 0.0, %v1947
      %v1949 = vpop.f32.mrf.mxu0
      %v1950 = vadd.f32 0.0, %v1949
      %1951 = vmatmul.bf16.gmra.mxu0 %v1870
      %v1952 = vpop.f32.mrf.mxu0
      %v1953 = vadd.f32 0.0, %v1952
      %v1954 = vpop.f32.mrf.mxu0
      %v1955 = vadd.f32 0.0, %v1954
      %1956 = vmatmul.bf16.gmra.mxu0 %v1873
      %v1957 = vpop.f32.mrf.mxu0
      %v1958 = vadd.f32 0.0, %v1957
      %v1959 = vpop.f32.mrf.mxu0
      %v1960 = vadd.f32 0.0, %v1959
      %1961 = vmatmul.bf16.gmra.mxu0 %v1876
      %v1962 = vpop.f32.mrf.mxu0
      %v1963 = vadd.f32 0.0, %v1962
      %v1964 = vpop.f32.mrf.mxu0
      %v1965 = vadd.f32 0.0, %v1964
      %1966 = vmatmul.bf16.gmra.mxu0 %v1879
      %v1967 = vpop.f32.mrf.mxu0
      %v1968 = vadd.f32 0.0, %v1967
      %v1969 = vpop.f32.mrf.mxu0
      %1970 = vdwg.mxu0
      %1971 = vmatpush.bf16.msra.mxu0 0
      %1972 = vmatpush.bf16.msra.mxu0 0
      %1973 = vmatpush.bf16.msra.mxu0 0
      %1974 = vmatpush.bf16.msra.mxu0 0
      %1975 = vmatpush.bf16.msra.mxu0 0
      %1976 = vmatpush.bf16.msra.mxu0 0
      %1977 = vmatpush.bf16.msra.mxu0 0
      %1978 = vmatpush.bf16.msra.mxu0 %v1888
      %1979 = vmatmul.bf16.gmra.mxu0 %v1867
      %v1980 = vpop.f32.mrf.mxu0
      %v1981 = vadd.f32 0.0, %v1980
      %v1982 = vpop.f32.mrf.mxu0
      %v1983 = vadd.f32 0.0, %v1982
      %1984 = vmatmul.bf16.gmra.mxu0 %v1870
      %v1985 = vpop.f32.mrf.mxu0
      %v1986 = vadd.f32 0.0, %v1985
      %v1987 = vpop.f32.mrf.mxu0
      %v1988 = vadd.f32 0.0, %v1987
      %1989 = vmatmul.bf16.gmra.mxu0 %v1873
      %v1990 = vpop.f32.mrf.mxu0
      %v1991 = vadd.f32 0.0, %v1990
      %v1992 = vpop.f32.mrf.mxu0
      %v1993 = vadd.f32 0.0, %v1992
      %1994 = vmatmul.bf16.gmra.mxu0 %v1876
      %v1995 = vpop.f32.mrf.mxu0
      %v1996 = vadd.f32 0.0, %v1995
      %v1997 = vpop.f32.mrf.mxu0
      %v1998 = vadd.f32 0.0, %v1997
      %1999 = vmatmul.bf16.gmra.mxu0 %v1879
      %v2000 = vpop.f32.mrf.mxu0
      %v2001 = vadd.f32 0.0, %v2000
      %v2002 = vpop.f32.mrf.mxu0
      %2003 = vdwg.mxu0
      %2004 = vmatpush.bf16.msra.mxu0 0
      %2005 = vmatpush.bf16.msra.mxu0 0
      %2006 = vmatpush.bf16.msra.mxu0 0
      %2007 = vmatpush.bf16.msra.mxu0 0
      %2008 = vmatpush.bf16.msra.mxu0 0
      %2009 = vmatpush.bf16.msra.mxu0 0
      %2010 = vmatpush.bf16.msra.mxu0 0
      %2011 = vmatpush.bf16.msra.mxu0 %v1891
      %2012 = vmatmul.bf16.gmra.mxu0 %v1867
      %v2013 = vpop.f32.mrf.mxu0
      %v2014 = vadd.f32 0.0, %v2013
      %v2015 = vpop.f32.mrf.mxu0
      %v2016 = vadd.f32 0.0, %v2015
      %2017 = vmatmul.bf16.gmra.mxu0 %v1870
      %v2018 = vpop.f32.mrf.mxu0
      %v2019 = vadd.f32 0.0, %v2018
      %v2020 = vpop.f32.mrf.mxu0
      %v2021 = vadd.f32 0.0, %v2020
      %2022 = vmatmul.bf16.gmra.mxu0 %v1873
      %v2023 = vpop.f32.mrf.mxu0
      %v2024 = vadd.f32 0.0, %v2023
      %v2025 = vpop.f32.mrf.mxu0
      %v2026 = vadd.f32 0.0, %v2025
      %2027 = vmatmul.bf16.gmra.mxu0 %v1876
      %v2028 = vpop.f32.mrf.mxu0
      %v2029 = vadd.f32 0.0, %v2028
      %v2030 = vpop.f32.mrf.mxu0
      %v2031 = vadd.f32 0.0, %v2030
      %2032 = vmatmul.bf16.gmra.mxu0 %v1879
      %v2033 = vpop.f32.mrf.mxu0
      %v2034 = vadd.f32 0.0, %v2033
      %v2035 = vpop.f32.mrf.mxu0
      %2036 = vdwg.mxu0
      %2037 = vmatpush.bf16.msra.mxu0 0
      %2038 = vmatpush.bf16.msra.mxu0 0
      %2039 = vmatpush.bf16.msra.mxu0 0
      %2040 = vmatpush.bf16.msra.mxu0 0
      %2041 = vmatpush.bf16.msra.mxu0 0
      %2042 = vmatpush.bf16.msra.mxu0 0
      %2043 = vmatpush.bf16.msra.mxu0 0
      %2044 = vmatpush.bf16.msra.mxu0 %v1894
      %2045 = vmatmul.bf16.gmra.mxu0 %v1867
      %v2046 = vpop.f32.mrf.mxu0
      %v2047 = vadd.f32 0.0, %v2046
      %v2048 = vpop.f32.mrf.mxu0
      %v2049 = vadd.f32 0.0, %v2048
      %2050 = vmatmul.bf16.gmra.mxu0 %v1870
      %v2051 = vpop.f32.mrf.mxu0
      %v2052 = vadd.f32 0.0, %v2051
      %v2053 = vpop.f32.mrf.mxu0
      %v2054 = vadd.f32 0.0, %v2053
      %2055 = vmatmul.bf16.gmra.mxu0 %v1873
      %v2056 = vpop.f32.mrf.mxu0
      %v2057 = vadd.f32 0.0, %v2056
      %v2058 = vpop.f32.mrf.mxu0
      %v2059 = vadd.f32 0.0, %v2058
      %2060 = vmatmul.bf16.gmra.mxu0 %v1876
      %v2061 = vpop.f32.mrf.mxu0
      %v2062 = vadd.f32 0.0, %v2061
      %v2063 = vpop.f32.mrf.mxu0
      %v2064 = vadd.f32 0.0, %v2063
      %2065 = vmatmul.bf16.gmra.mxu0 %v1879
      %v2066 = vpop.f32.mrf.mxu0
      %v2067 = vadd.f32 0.0, %v2066
      %v2068 = vpop.f32.mrf.mxu0
      %2069 = vdwg.mxu0
      %2070 = vmatpush.bf16.msra.mxu0 0
      %2071 = vmatpush.bf16.msra.mxu0 0
      %2072 = vmatpush.bf16.msra.mxu0 0
      %2073 = vmatpush.bf16.msra.mxu0 0
      %2074 = vmatpush.bf16.msra.mxu0 0
      %2075 = vmatpush.bf16.msra.mxu0 0
      %2076 = vmatpush.bf16.msra.mxu0 0
      %2077 = vmatpush.bf16.msra.mxu0 %v1897
      %2078 = vmatmul.bf16.gmra.mxu0 %v1867
      %v2079 = vpop.f32.mrf.mxu0
      %v2080 = vadd.f32 0.0, %v2079
      %v2081 = vpop.f32.mrf.mxu0
      %v2082 = vadd.f32 0.0, %v2081
      %2083 = vmatmul.bf16.gmra.mxu0 %v1870
      %v2084 = vpop.f32.mrf.mxu0
      %v2085 = vadd.f32 0.0, %v2084
      %v2086 = vpop.f32.mrf.mxu0
      %v2087 = vadd.f32 0.0, %v2086
      %2088 = vmatmul.bf16.gmra.mxu0 %v1873
      %v2089 = vpop.f32.mrf.mxu0
      %v2090 = vadd.f32 0.0, %v2089
      %v2091 = vpop.f32.mrf.mxu0
      %v2092 = vadd.f32 0.0, %v2091
      %2093 = vmatmul.bf16.gmra.mxu0 %v1876
      %v2094 = vpop.f32.mrf.mxu0
      %v2095 = vadd.f32 0.0, %v2094
      %v2096 = vpop.f32.mrf.mxu0
      %v2097 = vadd.f32 0.0, %v2096
      %2098 = vmatmul.bf16.gmra.mxu0 %v1879
      %v2099 = vpop.f32.mrf.mxu0
      %v2100 = vadd.f32 0.0, %v2099
      %v2101 = vpop.f32.mrf.mxu0
      %2102 = vdwg.mxu0
      %2103 = vmatpush.bf16.msra.mxu0 0
      %2104 = vmatpush.bf16.msra.mxu0 0
      %2105 = vmatpush.bf16.msra.mxu0 0
      %2106 = vmatpush.bf16.msra.mxu0 0
      %2107 = vmatpush.bf16.msra.mxu0 0
      %2108 = vmatpush.bf16.msra.mxu0 0
      %2109 = vmatpush.bf16.msra.mxu0 0
      %2110 = vmatpush.bf16.msra.mxu0 %v1900
      %2111 = vmatmul.bf16.gmra.mxu0 %v1867
      %v2112 = vpop.f32.mrf.mxu0
      %v2113 = vadd.f32 0.0, %v2112
      %v2114 = vpop.f32.mrf.mxu0
      %v2115 = vadd.f32 0.0, %v2114
      %2116 = vmatmul.bf16.gmra.mxu0 %v1870
      %v2117 = vpop.f32.mrf.mxu0
      %v2118 = vadd.f32 0.0, %v2117
      %v2119 = vpop.f32.mrf.mxu0
      %v2120 = vadd.f32 0.0, %v2119
      %2121 = vmatmul.bf16.gmra.mxu0 %v1873
      %v2122 = vpop.f32.mrf.mxu0
      %v2123 = vadd.f32 0.0, %v2122
      %v2124 = vpop.f32.mrf.mxu0
      %v2125 = vadd.f32 0.0, %v2124
      %2126 = vmatmul.bf16.gmra.mxu0 %v1876
      %v2127 = vpop.f32.mrf.mxu0
      %v2128 = vadd.f32 0.0, %v2127
      %v2129 = vpop.f32.mrf.mxu0
      %v2130 = vadd.f32 0.0, %v2129
      %2131 = vmatmul.bf16.gmra.mxu0 %v1879
      %v2132 = vpop.f32.mrf.mxu0
      %v2133 = vadd.f32 0.0, %v2132
      %v2134 = vpop.f32.mrf.mxu0
      %2135 = vdwg.mxu0
      %2136 = vmatpush.bf16.msra.mxu0 0
      %2137 = vmatpush.bf16.msra.mxu0 0
      %2138 = vmatpush.bf16.msra.mxu0 0
      %2139 = vmatpush.bf16.msra.mxu0 0
      %2140 = vmatpush.bf16.msra.mxu0 0
      %2141 = vmatpush.bf16.msra.mxu0 0
      %2142 = vmatpush.bf16.msra.mxu0 0
      %2143 = vmatpush.bf16.msra.mxu0 %v1903
      %2144 = vmatmul.bf16.gmra.mxu0 %v1867
      %v2145 = vpop.f32.mrf.mxu0
      %v2146 = vadd.f32 0.0, %v2145
      %v2147 = vpop.f32.mrf.mxu0
      %v2148 = vadd.f32 0.0, %v2147
      %2149 = vmatmul.bf16.gmra.mxu0 %v1870
      %v2150 = vpop.f32.mrf.mxu0
      %v2151 = vadd.f32 0.0, %v2150
      %v2152 = vpop.f32.mrf.mxu0
      %v2153 = vadd.f32 0.0, %v2152
      %2154 = vmatmul.bf16.gmra.mxu0 %v1873
      %v2155 = vpop.f32.mrf.mxu0
      %v2156 = vadd.f32 0.0, %v2155
      %v2157 = vpop.f32.mrf.mxu0
      %v2158 = vadd.f32 0.0, %v2157
      %2159 = vmatmul.bf16.gmra.mxu0 %v1876
      %v2160 = vpop.f32.mrf.mxu0
      %v2161 = vadd.f32 0.0, %v2160
      %v2162 = vpop.f32.mrf.mxu0
      %v2163 = vadd.f32 0.0, %v2162
      %2164 = vmatmul.bf16.gmra.mxu0 %v1879
      %v2165 = vpop.f32.mrf.mxu0
      %v2166 = vadd.f32 0.0, %v2165
      %v2167 = vpop.f32.mrf.mxu0
      %2168 = vdwg.mxu0
      %2169 = vrot.lane.b32.xlu0 %v1915, 31
      %v2170 = vpop.permute.xlu0 %2169
      %2171 = vrot.lane.b32.xlu0 %v1948, 31
      %v2172 = vpop.permute.xlu0 %2171
      %2173 = vrot.lane.b32.xlu0 %v1981, 31
      %v2174 = vpop.permute.xlu0 %2173
      %2175 = vrot.lane.b32.xlu0 %v2014, 31
      %v2176 = vpop.permute.xlu0 %2175
      %2177 = vrot.lane.b32.xlu0 %v2047, 31
      %v2178 = vpop.permute.xlu0 %2177
      %2179 = vrot.lane.b32.xlu0 %v2080, 31
      %v2180 = vpop.permute.xlu0 %2179
      %2181 = vrot.lane.b32.xlu0 %v2113, 31
      %v2182 = vpop.permute.xlu0 %2181
      %2183 = vrot.lane.b32.xlu0 %v2146, 31
      %v2184 = vpop.permute.xlu0 %2183
      %v2185 = vsel %vm767, %v2182, %v2184
      %v2186 = vsel %vm767, %v2180, %v2182
      %v2187 = vsel %vm767, %v2178, %v2180
      %v2188 = vsel %vm767, %v2176, %v2178
      %v2189 = vsel %vm767, %v2174, %v2176
      %v2190 = vsel %vm767, %v2172, %v2174
      %v2191 = vsel %vm767, %v2170, %v2172
      %v2192 = vsel %vm767, %v2184, %v2170
      %2193 = vrot.lane.b32.xlu0 %v1917, 30
      %v2194 = vpop.permute.xlu0 %2193
      %2195 = vrot.lane.b32.xlu0 %v1950, 30
      %v2196 = vpop.permute.xlu0 %2195
      %2197 = vrot.lane.b32.xlu0 %v1983, 30
      %v2198 = vpop.permute.xlu0 %2197
      %2199 = vrot.lane.b32.xlu0 %v2016, 30
      %v2200 = vpop.permute.xlu0 %2199
      %2201 = vrot.lane.b32.xlu0 %v2049, 30
      %v2202 = vpop.permute.xlu0 %2201
      %2203 = vrot.lane.b32.xlu0 %v2082, 30
      %v2204 = vpop.permute.xlu0 %2203
      %2205 = vrot.lane.b32.xlu0 %v2115, 30
      %v2206 = vpop.permute.xlu0 %2205
      %2207 = vrot.lane.b32.xlu0 %v2148, 30
      %v2208 = vpop.permute.xlu0 %2207
      %v2209 = vsel %vm792, %v2206, %v2208
      %v2210 = vsel %vm792, %v2204, %v2206
      %v2211 = vsel %vm792, %v2202, %v2204
      %v2212 = vsel %vm792, %v2200, %v2202
      %v2213 = vsel %vm792, %v2198, %v2200
      %v2214 = vsel %vm792, %v2196, %v2198
      %v2215 = vsel %vm792, %v2194, %v2196
      %v2216 = vsel %vm792, %v2208, %v2194
      %v2217 = vadd.f32 %v2192, %v2216
      %v2218 = vadd.f32 %v2191, %v2215
      %v2219 = vadd.f32 %v2190, %v2214
      %v2220 = vadd.f32 %v2189, %v2213
      %v2221 = vadd.f32 %v2188, %v2212
      %v2222 = vadd.f32 %v2187, %v2211
      %v2223 = vadd.f32 %v2186, %v2210
      %v2224 = vadd.f32 %v2185, %v2209
      %2225 = vrot.lane.b32.xlu0 %v1920, 29
      %v2226 = vpop.permute.xlu0 %2225
      %2227 = vrot.lane.b32.xlu0 %v1953, 29
      %v2228 = vpop.permute.xlu0 %2227
      %2229 = vrot.lane.b32.xlu0 %v1986, 29
      %v2230 = vpop.permute.xlu0 %2229
      %2231 = vrot.lane.b32.xlu0 %v2019, 29
      %v2232 = vpop.permute.xlu0 %2231
      %2233 = vrot.lane.b32.xlu0 %v2052, 29
      %v2234 = vpop.permute.xlu0 %2233
      %2235 = vrot.lane.b32.xlu0 %v2085, 29
      %v2236 = vpop.permute.xlu0 %2235
      %2237 = vrot.lane.b32.xlu0 %v2118, 29
      %v2238 = vpop.permute.xlu0 %2237
      %2239 = vrot.lane.b32.xlu0 %v2151, 29
      %v2240 = vpop.permute.xlu0 %2239
      %v2241 = vsel %vm825, %v2238, %v2240
      %v2242 = vsel %vm825, %v2236, %v2238
      %v2243 = vsel %vm825, %v2234, %v2236
      %v2244 = vsel %vm825, %v2232, %v2234
      %v2245 = vsel %vm825, %v2230, %v2232
      %v2246 = vsel %vm825, %v2228, %v2230
      %v2247 = vsel %vm825, %v2226, %v2228
      %v2248 = vsel %vm825, %v2240, %v2226
      %v2249 = vadd.f32 %v2217, %v2248
      %v2250 = vadd.f32 %v2218, %v2247
      %v2251 = vadd.f32 %v2219, %v2246
      %v2252 = vadd.f32 %v2220, %v2245
      %v2253 = vadd.f32 %v2221, %v2244
      %v2254 = vadd.f32 %v2222, %v2243
      %v2255 = vadd.f32 %v2223, %v2242
      %v2256 = vadd.f32 %v2224, %v2241
      %2257 = vrot.lane.b32.xlu0 %v1922, 1
      %v2258 = vpop.permute.xlu0 %2257
      %2259 = vrot.lane.b32.xlu0 %v1955, 1
      %v2260 = vpop.permute.xlu0 %2259
      %2261 = vrot.lane.b32.xlu0 %v1988, 1
      %v2262 = vpop.permute.xlu0 %2261
      %2263 = vrot.lane.b32.xlu0 %v2021, 1
      %v2264 = vpop.permute.xlu0 %2263
      %2265 = vrot.lane.b32.xlu0 %v2054, 1
      %v2266 = vpop.permute.xlu0 %2265
      %2267 = vrot.lane.b32.xlu0 %v2087, 1
      %v2268 = vpop.permute.xlu0 %2267
      %2269 = vrot.lane.b32.xlu0 %v2120, 1
      %v2270 = vpop.permute.xlu0 %2269
      %2271 = vrot.lane.b32.xlu0 %v2153, 1
      %v2272 = vpop.permute.xlu0 %2271
      %v2273 = vsel %vm858, %v2270, %v2272
      %v2274 = vsel %vm858, %v2268, %v2270
      %v2275 = vsel %vm858, %v2266, %v2268
      %v2276 = vsel %vm858, %v2264, %v2266
      %v2277 = vsel %vm858, %v2262, %v2264
      %v2278 = vsel %vm858, %v2260, %v2262
      %v2279 = vsel %vm858, %v2258, %v2260
      %v2280 = vsel %vm858, %v2272, %v2258
      %v2281 = vadd.f32 %v2249, %v2280
      %v2282 = vadd.f32 %v2250, %v2279
      %v2283 = vadd.f32 %v2251, %v2278
      %v2284 = vadd.f32 %v2252, %v2277
      %v2285 = vadd.f32 %v2253, %v2276
      %v2286 = vadd.f32 %v2254, %v2275
      %v2287 = vadd.f32 %v2255, %v2274
      %v2288 = vadd.f32 %v2256, %v2273
      %v2289 = vadd.f32 %v2281, %v1925
      %v2290 = vadd.f32 %v2282, %v1958
      %v2291 = vadd.f32 %v2283, %v1991
      %v2292 = vadd.f32 %v2284, %v2024
      %v2293 = vadd.f32 %v2285, %v2057
      %v2294 = vadd.f32 %v2286, %v2090
      %v2295 = vadd.f32 %v2287, %v2123
      %v2296 = vadd.f32 %v2288, %v2156
      %2297 = vrot.lane.b32.xlu0 %v1927, 127
      %v2298 = vpop.permute.xlu0 %2297
      %2299 = vrot.lane.b32.xlu0 %v1960, 127
      %v2300 = vpop.permute.xlu0 %2299
      %2301 = vrot.lane.b32.xlu0 %v1993, 127
      %v2302 = vpop.permute.xlu0 %2301
      %2303 = vrot.lane.b32.xlu0 %v2026, 127
      %v2304 = vpop.permute.xlu0 %2303
      %2305 = vrot.lane.b32.xlu0 %v2059, 127
      %v2306 = vpop.permute.xlu0 %2305
      %2307 = vrot.lane.b32.xlu0 %v2092, 127
      %v2308 = vpop.permute.xlu0 %2307
      %2309 = vrot.lane.b32.xlu0 %v2125, 127
      %v2310 = vpop.permute.xlu0 %2309
      %2311 = vrot.lane.b32.xlu0 %v2158, 127
      %v2312 = vpop.permute.xlu0 %2311
      %v2313 = vsel %vm899, %v2310, %v2312
      %v2314 = vsel %vm899, %v2308, %v2310
      %v2315 = vsel %vm899, %v2306, %v2308
      %v2316 = vsel %vm899, %v2304, %v2306
      %v2317 = vsel %vm899, %v2302, %v2304
      %v2318 = vsel %vm899, %v2300, %v2302
      %v2319 = vsel %vm899, %v2298, %v2300
      %v2320 = vsel %vm899, %v2312, %v2298
      %v2321 = vadd.f32 %v2289, %v2319
      %v2322 = vadd.f32 %v2290, %v2318
      %v2323 = vadd.f32 %v2291, %v2317
      %v2324 = vadd.f32 %v2292, %v2316
      %v2325 = vadd.f32 %v2293, %v2315
      %v2326 = vadd.f32 %v2294, %v2314
      %v2327 = vadd.f32 %v2295, %v2313
      %v2328 = vadd.f32 %v2296, %v2320
      %2329 = vrot.lane.b32.xlu0 %v1930, 99
      %v2330 = vpop.permute.xlu0 %2329
      %2331 = vrot.lane.b32.xlu0 %v1963, 99
      %v2332 = vpop.permute.xlu0 %2331
      %2333 = vrot.lane.b32.xlu0 %v1996, 99
      %v2334 = vpop.permute.xlu0 %2333
      %2335 = vrot.lane.b32.xlu0 %v2029, 99
      %v2336 = vpop.permute.xlu0 %2335
      %2337 = vrot.lane.b32.xlu0 %v2062, 99
      %v2338 = vpop.permute.xlu0 %2337
      %2339 = vrot.lane.b32.xlu0 %v2095, 99
      %v2340 = vpop.permute.xlu0 %2339
      %2341 = vrot.lane.b32.xlu0 %v2128, 99
      %v2342 = vpop.permute.xlu0 %2341
      %2343 = vrot.lane.b32.xlu0 %v2161, 99
      %v2344 = vpop.permute.xlu0 %2343
      %v2345 = vsel %vm932, %v2342, %v2344
      %v2346 = vsel %vm932, %v2340, %v2342
      %v2347 = vsel %vm932, %v2338, %v2340
      %v2348 = vsel %vm932, %v2336, %v2338
      %v2349 = vsel %vm932, %v2334, %v2336
      %v2350 = vsel %vm932, %v2332, %v2334
      %v2351 = vsel %vm932, %v2330, %v2332
      %v2352 = vsel %vm932, %v2344, %v2330
      %v2353 = vadd.f32 %v2321, %v2351
      %v2354 = vadd.f32 %v2322, %v2350
      %v2355 = vadd.f32 %v2323, %v2349
      %v2356 = vadd.f32 %v2324, %v2348
      %v2357 = vadd.f32 %v2325, %v2347
      %v2358 = vadd.f32 %v2326, %v2346
      %v2359 = vadd.f32 %v2327, %v2345
      %v2360 = vadd.f32 %v2328, %v2352
      %2361 = vrot.lane.b32.xlu0 %v1932, 98
      %v2362 = vpop.permute.xlu0 %2361
      %2363 = vrot.lane.b32.xlu0 %v1965, 98
      %v2364 = vpop.permute.xlu0 %2363
      %2365 = vrot.lane.b32.xlu0 %v1998, 98
      %v2366 = vpop.permute.xlu0 %2365
      %2367 = vrot.lane.b32.xlu0 %v2031, 98
      %v2368 = vpop.permute.xlu0 %2367
      %2369 = vrot.lane.b32.xlu0 %v2064, 98
      %v2370 = vpop.permute.xlu0 %2369
      %2371 = vrot.lane.b32.xlu0 %v2097, 98
      %v2372 = vpop.permute.xlu0 %2371
      %2373 = vrot.lane.b32.xlu0 %v2130, 98
      %v2374 = vpop.permute.xlu0 %2373
      %2375 = vrot.lane.b32.xlu0 %v2163, 98
      %v2376 = vpop.permute.xlu0 %2375
      %v2377 = vsel %vm965, %v2374, %v2376
      %v2378 = vsel %vm965, %v2372, %v2374
      %v2379 = vsel %vm965, %v2370, %v2372
      %v2380 = vsel %vm965, %v2368, %v2370
      %v2381 = vsel %vm965, %v2366, %v2368
      %v2382 = vsel %vm965, %v2364, %v2366
      %v2383 = vsel %vm965, %v2362, %v2364
      %v2384 = vsel %vm965, %v2376, %v2362
      %v2385 = vadd.f32 %v2353, %v2383
      %v2386 = vadd.f32 %v2354, %v2382
      %v2387 = vadd.f32 %v2355, %v2381
      %v2388 = vadd.f32 %v2356, %v2380
      %v2389 = vadd.f32 %v2357, %v2379
      %v2390 = vadd.f32 %v2358, %v2378
      %v2391 = vadd.f32 %v2359, %v2377
      %v2392 = vadd.f32 %v2360, %v2384
      %2393 = vrot.lane.b32.xlu0 %v1935, 97
      %v2394 = vpop.permute.xlu0 %2393
      %2395 = vrot.lane.b32.xlu0 %v1968, 97
      %v2396 = vpop.permute.xlu0 %2395
      %2397 = vrot.lane.b32.xlu0 %v2001, 97
      %v2398 = vpop.permute.xlu0 %2397
      %2399 = vrot.lane.b32.xlu0 %v2034, 97
      %v2400 = vpop.permute.xlu0 %2399
      %2401 = vrot.lane.b32.xlu0 %v2067, 97
      %v2402 = vpop.permute.xlu0 %2401
      %2403 = vrot.lane.b32.xlu0 %v2100, 97
      %v2404 = vpop.permute.xlu0 %2403
      %2405 = vrot.lane.b32.xlu0 %v2133, 97
      %v2406 = vpop.permute.xlu0 %2405
      %2407 = vrot.lane.b32.xlu0 %v2166, 97
      %v2408 = vpop.permute.xlu0 %2407
      %v2409 = vsel %vm998, %v2406, %v2408
      %v2410 = vsel %vm998, %v2404, %v2406
      %v2411 = vsel %vm998, %v2402, %v2404
      %v2412 = vsel %vm998, %v2400, %v2402
      %v2413 = vsel %vm998, %v2398, %v2400
      %v2414 = vsel %vm998, %v2396, %v2398
      %v2415 = vsel %vm998, %v2394, %v2396
      %v2416 = vsel %vm998, %v2408, %v2394
      %v2417 = vadd.f32 %v2385, %v2415
      %v2418 = vadd.f32 %v2386, %v2414
      %v2419 = vadd.f32 %v2387, %v2413
      %v2420 = vadd.f32 %v2388, %v2412
      %v2421 = vadd.f32 %v2389, %v2411
      %v2422 = vadd.f32 %v2390, %v2410
      %v2423 = vadd.f32 %v2391, %v2409
      %v2424 = vadd.f32 %v2392, %v2416
      %v2425 = vld [vmem:[%s8] sm:$0xff]
      %2427 = vset.pattern.permute.xlu0 0
      %2428 = vperm.xlu0 %2427, %v2425
      %v2429 = vpop.permute.xlu0 %2428
      %v2431 = vadd.f32 %v2417, %v2429
      %v2432 = vadd.f32 %v2418, %v2429
      %v2433 = vadd.f32 %v2419, %v2429
      %v2434 = vadd.f32 %v2420, %v2429
      %v2435 = vadd.f32 %v2421, %v2429
      %v2436 = vadd.f32 %v2422, %v2429
      %v2437 = vadd.f32 %v2423, %v2429
      %v2438 = vadd.f32 %v2424, %v2429
      %v2439 = vmax.f32 %v2431, 0.0
      %v2440 = vmax.f32 %v2432, 0.0
      %v2441 = vmax.f32 %v2433, 0.0
      %v2442 = vmax.f32 %v2434, 0.0
      %v2443 = vmax.f32 %v2435, 0.0
      %v2444 = vmax.f32 %v2436, 0.0
      %v2445 = vmax.f32 %v2437, 0.0
      %v2446 = vmax.f32 %v2438, 0.0
      %v2447 = vld [vmem:[%s1] sm:$0xff]
      %v2449 = vperm.slane %v2447, 0
      %v2450 = vperm.slane %v2447, 1
      %v2451 = vperm.slane %v2447, 2
      %v2452 = vperm.slane %v2447, 3
      %v2453 = vperm.slane %v2447, 4
      %v2454 = vperm.slane %v2447, 5
      %v2455 = vperm.slane %v2447, 6
      %v2456 = vperm.slane %v2447, 7
      %v2465 = vmul.f32 %v2439, %v2449
      %v2466 = vmul.f32 %v2440, %v2450
      %v2467 = vmul.f32 %v2441, %v2451
      %v2468 = vmul.f32 %v2442, %v2452
      %v2469 = vmul.f32 %v2443, %v2453
      %v2470 = vmul.f32 %v2444, %v2454
      %v2471 = vmul.f32 %v2445, %v2455
      %v2472 = vmul.f32 %v2446, %v2456
      %v2473 = vpack.c.bf16 %v2465, %v2465
      %v2474 = vpack.c.bf16 %v2466, %v2466
      %v2475 = vpack.c.bf16 %v2467, %v2467
      %v2476 = vpack.c.bf16 %v2468, %v2468
      %v2477 = vpack.c.bf16 %v2469, %v2469
      %v2478 = vpack.c.bf16 %v2470, %v2470
      %v2479 = vpack.c.bf16 %v2471, %v2471
      %v2480 = vpack.c.bf16 %v2472, %v2472
      %v2481 = vld [vmem:[%s9] sm:$0xf]
      %v2482 = vld [vmem:[%s9 + $0x4] sm:$0xf]
      %v2483 = vld [vmem:[%s9 + $0x8] sm:$0xf]
      %v2484 = vld [vmem:[%s9 + $0xc] sm:$0xf]
      %v2485 = vld [vmem:[%s9 + $0x10] sm:$0xf]
      %v2486 = vld [vmem:[%s9 + $0x14] sm:$0xf]
      %v2487 = vld [vmem:[%s9 + $0x18] sm:$0xf]
      %v2488 = vld [vmem:[%s9 + $0x1c] sm:$0xf]
      %v2489 = vld [vmem:[%s9 + $0x20] sm:$0xf]
      %v2499 = vunpack.c.l.b16 %v2481
      %v2500 = vunpack.c.l.b16 %v2482
      %v2501 = vunpack.c.l.b16 %v2483
      %v2502 = vunpack.c.l.b16 %v2484
      %v2503 = vunpack.c.l.b16 %v2485
      %v2504 = vunpack.c.l.b16 %v2486
      %v2505 = vunpack.c.l.b16 %v2487
      %v2506 = vunpack.c.l.b16 %v2488
      %v2507 = vunpack.c.l.b16 %v2489
      %v2508 = vpack.c.b16 %v2500, %v2499
      %v2509 = vpack.c.b16 %v2502, %v2501
      %v2510 = vpack.c.b16 %v2504, %v2503
      %v2511 = vpack.c.b16 %v2506, %v2505
      %v2512 = vpack.c.b16 %v2507, %v2507
      %v2514 = vsel %vm1103, %v2508, 0
      %v2517 = vsel %vm1103, %v2509, 0
      %v2520 = vsel %vm1103, %v2510, 0
      %v2523 = vsel %vm1103, %v2511, 0
      %v2526 = vsel %vm1103, %v2512, 0
      %v2529 = vsel %vm1119, %v2473, 0
      %v2532 = vsel %vm1119, %v2474, 0
      %v2535 = vsel %vm1119, %v2475, 0
      %v2538 = vsel %vm1119, %v2476, 0
      %v2541 = vsel %vm1119, %v2477, 0
      %v2544 = vsel %vm1119, %v2478, 0
      %v2547 = vsel %vm1119, %v2479, 0
      %v2550 = vsel %vm1119, %v2480, 0
      %2552 = vmatpush.bf16.msra.mxu0 0
      %2553 = vmatpush.bf16.msra.mxu0 0
      %2554 = vmatpush.bf16.msra.mxu0 0
      %2555 = vmatpush.bf16.msra.mxu0 0
      %2556 = vmatpush.bf16.msra.mxu0 0
      %2557 = vmatpush.bf16.msra.mxu0 0
      %2558 = vmatpush.bf16.msra.mxu0 0
      %2559 = vmatpush.bf16.msra.mxu0 %v2529
      %2560 = vmatmul.bf16.gmra.mxu0 %v2514
      %v2561 = vpop.f32.mrf.mxu0
      %v2562 = vadd.f32 0.0, %v2561
      %v2563 = vpop.f32.mrf.mxu0
      %v2564 = vadd.f32 0.0, %v2563
      %2565 = vmatmul.bf16.gmra.mxu0 %v2517
      %v2566 = vpop.f32.mrf.mxu0
      %v2567 = vadd.f32 0.0, %v2566
      %v2568 = vpop.f32.mrf.mxu0
      %v2569 = vadd.f32 0.0, %v2568
      %2570 = vmatmul.bf16.gmra.mxu0 %v2520
      %v2571 = vpop.f32.mrf.mxu0
      %v2572 = vadd.f32 0.0, %v2571
      %v2573 = vpop.f32.mrf.mxu0
      %v2574 = vadd.f32 0.0, %v2573
      %2575 = vmatmul.bf16.gmra.mxu0 %v2523
      %v2576 = vpop.f32.mrf.mxu0
      %v2577 = vadd.f32 0.0, %v2576
      %v2578 = vpop.f32.mrf.mxu0
      %v2579 = vadd.f32 0.0, %v2578
      %2580 = vmatmul.bf16.gmra.mxu0 %v2526
      %v2581 = vpop.f32.mrf.mxu0
      %v2582 = vadd.f32 0.0, %v2581
      %v2583 = vpop.f32.mrf.mxu0
      %2584 = vdwg.mxu0
      %2585 = vmatpush.bf16.msra.mxu0 0
      %2586 = vmatpush.bf16.msra.mxu0 0
      %2587 = vmatpush.bf16.msra.mxu0 0
      %2588 = vmatpush.bf16.msra.mxu0 0
      %2589 = vmatpush.bf16.msra.mxu0 0
      %2590 = vmatpush.bf16.msra.mxu0 0
      %2591 = vmatpush.bf16.msra.mxu0 0
      %2592 = vmatpush.bf16.msra.mxu0 %v2532
      %2593 = vmatmul.bf16.gmra.mxu0 %v2514
      %v2594 = vpop.f32.mrf.mxu0
      %v2595 = vadd.f32 0.0, %v2594
      %v2596 = vpop.f32.mrf.mxu0
      %v2597 = vadd.f32 0.0, %v2596
      %2598 = vmatmul.bf16.gmra.mxu0 %v2517
      %v2599 = vpop.f32.mrf.mxu0
      %v2600 = vadd.f32 0.0, %v2599
      %v2601 = vpop.f32.mrf.mxu0
      %v2602 = vadd.f32 0.0, %v2601
      %2603 = vmatmul.bf16.gmra.mxu0 %v2520
      %v2604 = vpop.f32.mrf.mxu0
      %v2605 = vadd.f32 0.0, %v2604
      %v2606 = vpop.f32.mrf.mxu0
      %v2607 = vadd.f32 0.0, %v2606
      %2608 = vmatmul.bf16.gmra.mxu0 %v2523
      %v2609 = vpop.f32.mrf.mxu0
      %v2610 = vadd.f32 0.0, %v2609
      %v2611 = vpop.f32.mrf.mxu0
      %v2612 = vadd.f32 0.0, %v2611
      %2613 = vmatmul.bf16.gmra.mxu0 %v2526
      %v2614 = vpop.f32.mrf.mxu0
      %v2615 = vadd.f32 0.0, %v2614
      %v2616 = vpop.f32.mrf.mxu0
      %2617 = vdwg.mxu0
      %2618 = vmatpush.bf16.msra.mxu0 0
      %2619 = vmatpush.bf16.msra.mxu0 0
      %2620 = vmatpush.bf16.msra.mxu0 0
      %2621 = vmatpush.bf16.msra.mxu0 0
      %2622 = vmatpush.bf16.msra.mxu0 0
      %2623 = vmatpush.bf16.msra.mxu0 0
      %2624 = vmatpush.bf16.msra.mxu0 0
      %2625 = vmatpush.bf16.msra.mxu0 %v2535
      %2626 = vmatmul.bf16.gmra.mxu0 %v2514
      %v2627 = vpop.f32.mrf.mxu0
      %v2628 = vadd.f32 0.0, %v2627
      %v2629 = vpop.f32.mrf.mxu0
      %v2630 = vadd.f32 0.0, %v2629
      %2631 = vmatmul.bf16.gmra.mxu0 %v2517
      %v2632 = vpop.f32.mrf.mxu0
      %v2633 = vadd.f32 0.0, %v2632
      %v2634 = vpop.f32.mrf.mxu0
      %v2635 = vadd.f32 0.0, %v2634
      %2636 = vmatmul.bf16.gmra.mxu0 %v2520
      %v2637 = vpop.f32.mrf.mxu0
      %v2638 = vadd.f32 0.0, %v2637
      %v2639 = vpop.f32.mrf.mxu0
      %v2640 = vadd.f32 0.0, %v2639
      %2641 = vmatmul.bf16.gmra.mxu0 %v2523
      %v2642 = vpop.f32.mrf.mxu0
      %v2643 = vadd.f32 0.0, %v2642
      %v2644 = vpop.f32.mrf.mxu0
      %v2645 = vadd.f32 0.0, %v2644
      %2646 = vmatmul.bf16.gmra.mxu0 %v2526
      %v2647 = vpop.f32.mrf.mxu0
      %v2648 = vadd.f32 0.0, %v2647
      %v2649 = vpop.f32.mrf.mxu0
      %2650 = vdwg.mxu0
      %2651 = vmatpush.bf16.msra.mxu0 0
      %2652 = vmatpush.bf16.msra.mxu0 0
      %2653 = vmatpush.bf16.msra.mxu0 0
      %2654 = vmatpush.bf16.msra.mxu0 0
      %2655 = vmatpush.bf16.msra.mxu0 0
      %2656 = vmatpush.bf16.msra.mxu0 0
      %2657 = vmatpush.bf16.msra.mxu0 0
      %2658 = vmatpush.bf16.msra.mxu0 %v2538
      %2659 = vmatmul.bf16.gmra.mxu0 %v2514
      %v2660 = vpop.f32.mrf.mxu0
      %v2661 = vadd.f32 0.0, %v2660
      %v2662 = vpop.f32.mrf.mxu0
      %v2663 = vadd.f32 0.0, %v2662
      %2664 = vmatmul.bf16.gmra.mxu0 %v2517
      %v2665 = vpop.f32.mrf.mxu0
      %v2666 = vadd.f32 0.0, %v2665
      %v2667 = vpop.f32.mrf.mxu0
      %v2668 = vadd.f32 0.0, %v2667
      %2669 = vmatmul.bf16.gmra.mxu0 %v2520
      %v2670 = vpop.f32.mrf.mxu0
      %v2671 = vadd.f32 0.0, %v2670
      %v2672 = vpop.f32.mrf.mxu0
      %v2673 = vadd.f32 0.0, %v2672
      %2674 = vmatmul.bf16.gmra.mxu0 %v2523
      %v2675 = vpop.f32.mrf.mxu0
      %v2676 = vadd.f32 0.0, %v2675
      %v2677 = vpop.f32.mrf.mxu0
      %v2678 = vadd.f32 0.0, %v2677
      %2679 = vmatmul.bf16.gmra.mxu0 %v2526
      %v2680 = vpop.f32.mrf.mxu0
      %v2681 = vadd.f32 0.0, %v2680
      %v2682 = vpop.f32.mrf.mxu0
      %2683 = vdwg.mxu0
      %2684 = vmatpush.bf16.msra.mxu0 0
      %2685 = vmatpush.bf16.msra.mxu0 0
      %2686 = vmatpush.bf16.msra.mxu0 0
      %2687 = vmatpush.bf16.msra.mxu0 0
      %2688 = vmatpush.bf16.msra.mxu0 0
      %2689 = vmatpush.bf16.msra.mxu0 0
      %2690 = vmatpush.bf16.msra.mxu0 0
      %2691 = vmatpush.bf16.msra.mxu0 %v2541
      %2692 = vmatmul.bf16.gmra.mxu0 %v2514
      %v2693 = vpop.f32.mrf.mxu0
      %v2694 = vadd.f32 0.0, %v2693
      %v2695 = vpop.f32.mrf.mxu0
      %v2696 = vadd.f32 0.0, %v2695
      %2697 = vmatmul.bf16.gmra.mxu0 %v2517
      %v2698 = vpop.f32.mrf.mxu0
      %v2699 = vadd.f32 0.0, %v2698
      %v2700 = vpop.f32.mrf.mxu0
      %v2701 = vadd.f32 0.0, %v2700
      %2702 = vmatmul.bf16.gmra.mxu0 %v2520
      %v2703 = vpop.f32.mrf.mxu0
      %v2704 = vadd.f32 0.0, %v2703
      %v2705 = vpop.f32.mrf.mxu0
      %v2706 = vadd.f32 0.0, %v2705
      %2707 = vmatmul.bf16.gmra.mxu0 %v2523
      %v2708 = vpop.f32.mrf.mxu0
      %v2709 = vadd.f32 0.0, %v2708
      %v2710 = vpop.f32.mrf.mxu0
      %v2711 = vadd.f32 0.0, %v2710
      %2712 = vmatmul.bf16.gmra.mxu0 %v2526
      %v2713 = vpop.f32.mrf.mxu0
      %v2714 = vadd.f32 0.0, %v2713
      %v2715 = vpop.f32.mrf.mxu0
      %2716 = vdwg.mxu0
      %2717 = vmatpush.bf16.msra.mxu0 0
      %2718 = vmatpush.bf16.msra.mxu0 0
      %2719 = vmatpush.bf16.msra.mxu0 0
      %2720 = vmatpush.bf16.msra.mxu0 0
      %2721 = vmatpush.bf16.msra.mxu0 0
      %2722 = vmatpush.bf16.msra.mxu0 0
      %2723 = vmatpush.bf16.msra.mxu0 0
      %2724 = vmatpush.bf16.msra.mxu0 %v2544
      %2725 = vmatmul.bf16.gmra.mxu0 %v2514
      %v2726 = vpop.f32.mrf.mxu0
      %v2727 = vadd.f32 0.0, %v2726
      %v2728 = vpop.f32.mrf.mxu0
      %v2729 = vadd.f32 0.0, %v2728
      %2730 = vmatmul.bf16.gmra.mxu0 %v2517
      %v2731 = vpop.f32.mrf.mxu0
      %v2732 = vadd.f32 0.0, %v2731
      %v2733 = vpop.f32.mrf.mxu0
      %v2734 = vadd.f32 0.0, %v2733
      %2735 = vmatmul.bf16.gmra.mxu0 %v2520
      %v2736 = vpop.f32.mrf.mxu0
      %v2737 = vadd.f32 0.0, %v2736
      %v2738 = vpop.f32.mrf.mxu0
      %v2739 = vadd.f32 0.0, %v2738
      %2740 = vmatmul.bf16.gmra.mxu0 %v2523
      %v2741 = vpop.f32.mrf.mxu0
      %v2742 = vadd.f32 0.0, %v2741
      %v2743 = vpop.f32.mrf.mxu0
      %v2744 = vadd.f32 0.0, %v2743
      %2745 = vmatmul.bf16.gmra.mxu0 %v2526
      %v2746 = vpop.f32.mrf.mxu0
      %v2747 = vadd.f32 0.0, %v2746
      %v2748 = vpop.f32.mrf.mxu0
      %2749 = vdwg.mxu0
      %2750 = vmatpush.bf16.msra.mxu0 0
      %2751 = vmatpush.bf16.msra.mxu0 0
      %2752 = vmatpush.bf16.msra.mxu0 0
      %2753 = vmatpush.bf16.msra.mxu0 0
      %2754 = vmatpush.bf16.msra.mxu0 0
      %2755 = vmatpush.bf16.msra.mxu0 0
      %2756 = vmatpush.bf16.msra.mxu0 0
      %2757 = vmatpush.bf16.msra.mxu0 %v2547
      %2758 = vmatmul.bf16.gmra.mxu0 %v2514
      %v2759 = vpop.f32.mrf.mxu0
      %v2760 = vadd.f32 0.0, %v2759
      %v2761 = vpop.f32.mrf.mxu0
      %v2762 = vadd.f32 0.0, %v2761
      %2763 = vmatmul.bf16.gmra.mxu0 %v2517
      %v2764 = vpop.f32.mrf.mxu0
      %v2765 = vadd.f32 0.0, %v2764
      %v2766 = vpop.f32.mrf.mxu0
      %v2767 = vadd.f32 0.0, %v2766
      %2768 = vmatmul.bf16.gmra.mxu0 %v2520
      %v2769 = vpop.f32.mrf.mxu0
      %v2770 = vadd.f32 0.0, %v2769
      %v2771 = vpop.f32.mrf.mxu0
      %v2772 = vadd.f32 0.0, %v2771
      %2773 = vmatmul.bf16.gmra.mxu0 %v2523
      %v2774 = vpop.f32.mrf.mxu0
      %v2775 = vadd.f32 0.0, %v2774
      %v2776 = vpop.f32.mrf.mxu0
      %v2777 = vadd.f32 0.0, %v2776
      %2778 = vmatmul.bf16.gmra.mxu0 %v2526
      %v2779 = vpop.f32.mrf.mxu0
      %v2780 = vadd.f32 0.0, %v2779
      %v2781 = vpop.f32.mrf.mxu0
      %2782 = vdwg.mxu0
      %2783 = vmatpush.bf16.msra.mxu0 0
      %2784 = vmatpush.bf16.msra.mxu0 0
      %2785 = vmatpush.bf16.msra.mxu0 0
      %2786 = vmatpush.bf16.msra.mxu0 0
      %2787 = vmatpush.bf16.msra.mxu0 0
      %2788 = vmatpush.bf16.msra.mxu0 0
      %2789 = vmatpush.bf16.msra.mxu0 0
      %2790 = vmatpush.bf16.msra.mxu0 %v2550
      %2791 = vmatmul.bf16.gmra.mxu0 %v2514
      %v2792 = vpop.f32.mrf.mxu0
      %v2793 = vadd.f32 0.0, %v2792
      %v2794 = vpop.f32.mrf.mxu0
      %v2795 = vadd.f32 0.0, %v2794
      %2796 = vmatmul.bf16.gmra.mxu0 %v2517
      %v2797 = vpop.f32.mrf.mxu0
      %v2798 = vadd.f32 0.0, %v2797
      %v2799 = vpop.f32.mrf.mxu0
      %v2800 = vadd.f32 0.0, %v2799
      %2801 = vmatmul.bf16.gmra.mxu0 %v2520
      %v2802 = vpop.f32.mrf.mxu0
      %v2803 = vadd.f32 0.0, %v2802
      %v2804 = vpop.f32.mrf.mxu0
      %v2805 = vadd.f32 0.0, %v2804
      %2806 = vmatmul.bf16.gmra.mxu0 %v2523
      %v2807 = vpop.f32.mrf.mxu0
      %v2808 = vadd.f32 0.0, %v2807
      %v2809 = vpop.f32.mrf.mxu0
      %v2810 = vadd.f32 0.0, %v2809
      %2811 = vmatmul.bf16.gmra.mxu0 %v2526
      %v2812 = vpop.f32.mrf.mxu0
      %v2813 = vadd.f32 0.0, %v2812
      %v2814 = vpop.f32.mrf.mxu0
      %2815 = vdwg.mxu0
      %2816 = vrot.lane.b32.xlu0 %v2562, 31
      %v2817 = vpop.permute.xlu0 %2816
      %2818 = vrot.lane.b32.xlu0 %v2595, 31
      %v2819 = vpop.permute.xlu0 %2818
      %2820 = vrot.lane.b32.xlu0 %v2628, 31
      %v2821 = vpop.permute.xlu0 %2820
      %2822 = vrot.lane.b32.xlu0 %v2661, 31
      %v2823 = vpop.permute.xlu0 %2822
      %2824 = vrot.lane.b32.xlu0 %v2694, 31
      %v2825 = vpop.permute.xlu0 %2824
      %2826 = vrot.lane.b32.xlu0 %v2727, 31
      %v2827 = vpop.permute.xlu0 %2826
      %2828 = vrot.lane.b32.xlu0 %v2760, 31
      %v2829 = vpop.permute.xlu0 %2828
      %2830 = vrot.lane.b32.xlu0 %v2793, 31
      %v2831 = vpop.permute.xlu0 %2830
      %v2832 = vsel %vm767, %v2829, %v2831
      %v2833 = vsel %vm767, %v2827, %v2829
      %v2834 = vsel %vm767, %v2825, %v2827
      %v2835 = vsel %vm767, %v2823, %v2825
      %v2836 = vsel %vm767, %v2821, %v2823
      %v2837 = vsel %vm767, %v2819, %v2821
      %v2838 = vsel %vm767, %v2817, %v2819
      %v2839 = vsel %vm767, %v2831, %v2817
      %2840 = vrot.lane.b32.xlu0 %v2564, 30
      %v2841 = vpop.permute.xlu0 %2840
      %2842 = vrot.lane.b32.xlu0 %v2597, 30
      %v2843 = vpop.permute.xlu0 %2842
      %2844 = vrot.lane.b32.xlu0 %v2630, 30
      %v2845 = vpop.permute.xlu0 %2844
      %2846 = vrot.lane.b32.xlu0 %v2663, 30
      %v2847 = vpop.permute.xlu0 %2846
      %2848 = vrot.lane.b32.xlu0 %v2696, 30
      %v2849 = vpop.permute.xlu0 %2848
      %2850 = vrot.lane.b32.xlu0 %v2729, 30
      %v2851 = vpop.permute.xlu0 %2850
      %2852 = vrot.lane.b32.xlu0 %v2762, 30
      %v2853 = vpop.permute.xlu0 %2852
      %2854 = vrot.lane.b32.xlu0 %v2795, 30
      %v2855 = vpop.permute.xlu0 %2854
      %v2856 = vsel %vm792, %v2853, %v2855
      %v2857 = vsel %vm792, %v2851, %v2853
      %v2858 = vsel %vm792, %v2849, %v2851
      %v2859 = vsel %vm792, %v2847, %v2849
      %v2860 = vsel %vm792, %v2845, %v2847
      %v2861 = vsel %vm792, %v2843, %v2845
      %v2862 = vsel %vm792, %v2841, %v2843
      %v2863 = vsel %vm792, %v2855, %v2841
      %v2864 = vadd.f32 %v2839, %v2863
      %v2865 = vadd.f32 %v2838, %v2862
      %v2866 = vadd.f32 %v2837, %v2861
      %v2867 = vadd.f32 %v2836, %v2860
      %v2868 = vadd.f32 %v2835, %v2859
      %v2869 = vadd.f32 %v2834, %v2858
      %v2870 = vadd.f32 %v2833, %v2857
      %v2871 = vadd.f32 %v2832, %v2856
      %2872 = vrot.lane.b32.xlu0 %v2567, 29
      %v2873 = vpop.permute.xlu0 %2872
      %2874 = vrot.lane.b32.xlu0 %v2600, 29
      %v2875 = vpop.permute.xlu0 %2874
      %2876 = vrot.lane.b32.xlu0 %v2633, 29
      %v2877 = vpop.permute.xlu0 %2876
      %2878 = vrot.lane.b32.xlu0 %v2666, 29
      %v2879 = vpop.permute.xlu0 %2878
      %2880 = vrot.lane.b32.xlu0 %v2699, 29
      %v2881 = vpop.permute.xlu0 %2880
      %2882 = vrot.lane.b32.xlu0 %v2732, 29
      %v2883 = vpop.permute.xlu0 %2882
      %2884 = vrot.lane.b32.xlu0 %v2765, 29
      %v2885 = vpop.permute.xlu0 %2884
      %2886 = vrot.lane.b32.xlu0 %v2798, 29
      %v2887 = vpop.permute.xlu0 %2886
      %v2888 = vsel %vm825, %v2885, %v2887
      %v2889 = vsel %vm825, %v2883, %v2885
      %v2890 = vsel %vm825, %v2881, %v2883
      %v2891 = vsel %vm825, %v2879, %v2881
      %v2892 = vsel %vm825, %v2877, %v2879
      %v2893 = vsel %vm825, %v2875, %v2877
      %v2894 = vsel %vm825, %v2873, %v2875
      %v2895 = vsel %vm825, %v2887, %v2873
      %v2896 = vadd.f32 %v2864, %v2895
      %v2897 = vadd.f32 %v2865, %v2894
      %v2898 = vadd.f32 %v2866, %v2893
      %v2899 = vadd.f32 %v2867, %v2892
      %v2900 = vadd.f32 %v2868, %v2891
      %v2901 = vadd.f32 %v2869, %v2890
      %v2902 = vadd.f32 %v2870, %v2889
      %v2903 = vadd.f32 %v2871, %v2888
      %2904 = vrot.lane.b32.xlu0 %v2569, 1
      %v2905 = vpop.permute.xlu0 %2904
      %2906 = vrot.lane.b32.xlu0 %v2602, 1
      %v2907 = vpop.permute.xlu0 %2906
      %2908 = vrot.lane.b32.xlu0 %v2635, 1
      %v2909 = vpop.permute.xlu0 %2908
      %2910 = vrot.lane.b32.xlu0 %v2668, 1
      %v2911 = vpop.permute.xlu0 %2910
      %2912 = vrot.lane.b32.xlu0 %v2701, 1
      %v2913 = vpop.permute.xlu0 %2912
      %2914 = vrot.lane.b32.xlu0 %v2734, 1
      %v2915 = vpop.permute.xlu0 %2914
      %2916 = vrot.lane.b32.xlu0 %v2767, 1
      %v2917 = vpop.permute.xlu0 %2916
      %2918 = vrot.lane.b32.xlu0 %v2800, 1
      %v2919 = vpop.permute.xlu0 %2918
      %v2920 = vsel %vm858, %v2917, %v2919
      %v2921 = vsel %vm858, %v2915, %v2917
      %v2922 = vsel %vm858, %v2913, %v2915
      %v2923 = vsel %vm858, %v2911, %v2913
      %v2924 = vsel %vm858, %v2909, %v2911
      %v2925 = vsel %vm858, %v2907, %v2909
      %v2926 = vsel %vm858, %v2905, %v2907
      %v2927 = vsel %vm858, %v2919, %v2905
      %v2928 = vadd.f32 %v2896, %v2927
      %v2929 = vadd.f32 %v2897, %v2926
      %v2930 = vadd.f32 %v2898, %v2925
      %v2931 = vadd.f32 %v2899, %v2924
      %v2932 = vadd.f32 %v2900, %v2923
      %v2933 = vadd.f32 %v2901, %v2922
      %v2934 = vadd.f32 %v2902, %v2921
      %v2935 = vadd.f32 %v2903, %v2920
      %v2936 = vadd.f32 %v2928, %v2572
      %v2937 = vadd.f32 %v2929, %v2605
      %v2938 = vadd.f32 %v2930, %v2638
      %v2939 = vadd.f32 %v2931, %v2671
      %v2940 = vadd.f32 %v2932, %v2704
      %v2941 = vadd.f32 %v2933, %v2737
      %v2942 = vadd.f32 %v2934, %v2770
      %v2943 = vadd.f32 %v2935, %v2803
      %2944 = vrot.lane.b32.xlu0 %v2574, 127
      %v2945 = vpop.permute.xlu0 %2944
      %2946 = vrot.lane.b32.xlu0 %v2607, 127
      %v2947 = vpop.permute.xlu0 %2946
      %2948 = vrot.lane.b32.xlu0 %v2640, 127
      %v2949 = vpop.permute.xlu0 %2948
      %2950 = vrot.lane.b32.xlu0 %v2673, 127
      %v2951 = vpop.permute.xlu0 %2950
      %2952 = vrot.lane.b32.xlu0 %v2706, 127
      %v2953 = vpop.permute.xlu0 %2952
      %2954 = vrot.lane.b32.xlu0 %v2739, 127
      %v2955 = vpop.permute.xlu0 %2954
      %2956 = vrot.lane.b32.xlu0 %v2772, 127
      %v2957 = vpop.permute.xlu0 %2956
      %2958 = vrot.lane.b32.xlu0 %v2805, 127
      %v2959 = vpop.permute.xlu0 %2958
      %v2960 = vsel %vm899, %v2957, %v2959
      %v2961 = vsel %vm899, %v2955, %v2957
      %v2962 = vsel %vm899, %v2953, %v2955
      %v2963 = vsel %vm899, %v2951, %v2953
      %v2964 = vsel %vm899, %v2949, %v2951
      %v2965 = vsel %vm899, %v2947, %v2949
      %v2966 = vsel %vm899, %v2945, %v2947
      %v2967 = vsel %vm899, %v2959, %v2945
      %v2968 = vadd.f32 %v2936, %v2966
      %v2969 = vadd.f32 %v2937, %v2965
      %v2970 = vadd.f32 %v2938, %v2964
      %v2971 = vadd.f32 %v2939, %v2963
      %v2972 = vadd.f32 %v2940, %v2962
      %v2973 = vadd.f32 %v2941, %v2961
      %v2974 = vadd.f32 %v2942, %v2960
      %v2975 = vadd.f32 %v2943, %v2967
      %2976 = vrot.lane.b32.xlu0 %v2577, 99
      %v2977 = vpop.permute.xlu0 %2976
      %2978 = vrot.lane.b32.xlu0 %v2610, 99
      %v2979 = vpop.permute.xlu0 %2978
      %2980 = vrot.lane.b32.xlu0 %v2643, 99
      %v2981 = vpop.permute.xlu0 %2980
      %2982 = vrot.lane.b32.xlu0 %v2676, 99
      %v2983 = vpop.permute.xlu0 %2982
      %2984 = vrot.lane.b32.xlu0 %v2709, 99
      %v2985 = vpop.permute.xlu0 %2984
      %2986 = vrot.lane.b32.xlu0 %v2742, 99
      %v2987 = vpop.permute.xlu0 %2986
      %2988 = vrot.lane.b32.xlu0 %v2775, 99
      %v2989 = vpop.permute.xlu0 %2988
      %2990 = vrot.lane.b32.xlu0 %v2808, 99
      %v2991 = vpop.permute.xlu0 %2990
      %v2992 = vsel %vm932, %v2989, %v2991
      %v2993 = vsel %vm932, %v2987, %v2989
      %v2994 = vsel %vm932, %v2985, %v2987
      %v2995 = vsel %vm932, %v2983, %v2985
      %v2996 = vsel %vm932, %v2981, %v2983
      %v2997 = vsel %vm932, %v2979, %v2981
      %v2998 = vsel %vm932, %v2977, %v2979
      %v2999 = vsel %vm932, %v2991, %v2977
      %v3000 = vadd.f32 %v2968, %v2998
      %v3001 = vadd.f32 %v2969, %v2997
      %v3002 = vadd.f32 %v2970, %v2996
      %v3003 = vadd.f32 %v2971, %v2995
      %v3004 = vadd.f32 %v2972, %v2994
      %v3005 = vadd.f32 %v2973, %v2993
      %v3006 = vadd.f32 %v2974, %v2992
      %v3007 = vadd.f32 %v2975, %v2999
      %3008 = vrot.lane.b32.xlu0 %v2579, 98
      %v3009 = vpop.permute.xlu0 %3008
      %3010 = vrot.lane.b32.xlu0 %v2612, 98
      %v3011 = vpop.permute.xlu0 %3010
      %3012 = vrot.lane.b32.xlu0 %v2645, 98
      %v3013 = vpop.permute.xlu0 %3012
      %3014 = vrot.lane.b32.xlu0 %v2678, 98
      %v3015 = vpop.permute.xlu0 %3014
      %3016 = vrot.lane.b32.xlu0 %v2711, 98
      %v3017 = vpop.permute.xlu0 %3016
      %3018 = vrot.lane.b32.xlu0 %v2744, 98
      %v3019 = vpop.permute.xlu0 %3018
      %3020 = vrot.lane.b32.xlu0 %v2777, 98
      %v3021 = vpop.permute.xlu0 %3020
      %3022 = vrot.lane.b32.xlu0 %v2810, 98
      %v3023 = vpop.permute.xlu0 %3022
      %v3024 = vsel %vm965, %v3021, %v3023
      %v3025 = vsel %vm965, %v3019, %v3021
      %v3026 = vsel %vm965, %v3017, %v3019
      %v3027 = vsel %vm965, %v3015, %v3017
      %v3028 = vsel %vm965, %v3013, %v3015
      %v3029 = vsel %vm965, %v3011, %v3013
      %v3030 = vsel %vm965, %v3009, %v3011
      %v3031 = vsel %vm965, %v3023, %v3009
      %v3032 = vadd.f32 %v3000, %v3030
      %v3033 = vadd.f32 %v3001, %v3029
      %v3034 = vadd.f32 %v3002, %v3028
      %v3035 = vadd.f32 %v3003, %v3027
      %v3036 = vadd.f32 %v3004, %v3026
      %v3037 = vadd.f32 %v3005, %v3025
      %v3038 = vadd.f32 %v3006, %v3024
      %v3039 = vadd.f32 %v3007, %v3031
      %3040 = vrot.lane.b32.xlu0 %v2582, 97
      %v3041 = vpop.permute.xlu0 %3040
      %3042 = vrot.lane.b32.xlu0 %v2615, 97
      %v3043 = vpop.permute.xlu0 %3042
      %3044 = vrot.lane.b32.xlu0 %v2648, 97
      %v3045 = vpop.permute.xlu0 %3044
      %3046 = vrot.lane.b32.xlu0 %v2681, 97
      %v3047 = vpop.permute.xlu0 %3046
      %3048 = vrot.lane.b32.xlu0 %v2714, 97
      %v3049 = vpop.permute.xlu0 %3048
      %3050 = vrot.lane.b32.xlu0 %v2747, 97
      %v3051 = vpop.permute.xlu0 %3050
      %3052 = vrot.lane.b32.xlu0 %v2780, 97
      %v3053 = vpop.permute.xlu0 %3052
      %3054 = vrot.lane.b32.xlu0 %v2813, 97
      %v3055 = vpop.permute.xlu0 %3054
      %v3056 = vsel %vm998, %v3053, %v3055
      %v3057 = vsel %vm998, %v3051, %v3053
      %v3058 = vsel %vm998, %v3049, %v3051
      %v3059 = vsel %vm998, %v3047, %v3049
      %v3060 = vsel %vm998, %v3045, %v3047
      %v3061 = vsel %vm998, %v3043, %v3045
      %v3062 = vsel %vm998, %v3041, %v3043
      %v3063 = vsel %vm998, %v3055, %v3041
      %v3064 = vadd.f32 %v3032, %v3062
      %v3065 = vadd.f32 %v3033, %v3061
      %v3066 = vadd.f32 %v3034, %v3060
      %v3067 = vadd.f32 %v3035, %v3059
      %v3068 = vadd.f32 %v3036, %v3058
      %v3069 = vadd.f32 %v3037, %v3057
      %v3070 = vadd.f32 %v3038, %v3056
      %v3071 = vadd.f32 %v3039, %v3063
      %v3072 = vld [vmem:[%s11] sm:$0xf]
      %v3074 = vsel %vm1103, %v3072, 0
      %3076 = vmatpush.bf16.msra.mxu0 0
      %3077 = vmatpush.bf16.msra.mxu0 0
      %3078 = vmatpush.bf16.msra.mxu0 0
      %3079 = vmatpush.bf16.msra.mxu0 0
      %3080 = vmatpush.bf16.msra.mxu0 0
      %3081 = vmatpush.bf16.msra.mxu0 0
      %3082 = vmatpush.bf16.msra.mxu0 0
      %3083 = vmatpush.bf16.msra.mxu0 %v1882
      %3084 = vmatmul.bf16.gmra.mxu0 %v3074
      %v3085 = vpop.f32.mrf.mxu0
      %v3086 = vadd.f32 0.0, %v3085
      %v3087 = vpop.f32.mrf.mxu0
      %3088 = vdwg.mxu0
      %3089 = vmatpush.bf16.msra.mxu0 0
      %3090 = vmatpush.bf16.msra.mxu0 0
      %3091 = vmatpush.bf16.msra.mxu0 0
      %3092 = vmatpush.bf16.msra.mxu0 0
      %3093 = vmatpush.bf16.msra.mxu0 0
      %3094 = vmatpush.bf16.msra.mxu0 0
      %3095 = vmatpush.bf16.msra.mxu0 0
      %3096 = vmatpush.bf16.msra.mxu0 %v1885
      %3097 = vmatmul.bf16.gmra.mxu0 %v3074
      %v3098 = vpop.f32.mrf.mxu0
      %v3099 = vadd.f32 0.0, %v3098
      %v3100 = vpop.f32.mrf.mxu0
      %3101 = vdwg.mxu0
      %3102 = vmatpush.bf16.msra.mxu0 0
      %3103 = vmatpush.bf16.msra.mxu0 0
      %3104 = vmatpush.bf16.msra.mxu0 0
      %3105 = vmatpush.bf16.msra.mxu0 0
      %3106 = vmatpush.bf16.msra.mxu0 0
      %3107 = vmatpush.bf16.msra.mxu0 0
      %3108 = vmatpush.bf16.msra.mxu0 0
      %3109 = vmatpush.bf16.msra.mxu0 %v1888
      %3110 = vmatmul.bf16.gmra.mxu0 %v3074
      %v3111 = vpop.f32.mrf.mxu0
      %v3112 = vadd.f32 0.0, %v3111
      %v3113 = vpop.f32.mrf.mxu0
      %3114 = vdwg.mxu0
      %3115 = vmatpush.bf16.msra.mxu0 0
      %3116 = vmatpush.bf16.msra.mxu0 0
      %3117 = vmatpush.bf16.msra.mxu0 0
      %3118 = vmatpush.bf16.msra.mxu0 0
      %3119 = vmatpush.bf16.msra.mxu0 0
      %3120 = vmatpush.bf16.msra.mxu0 0
      %3121 = vmatpush.bf16.msra.mxu0 0
      %3122 = vmatpush.bf16.msra.mxu0 %v1891
      %3123 = vmatmul.bf16.gmra.mxu0 %v3074
      %v3124 = vpop.f32.mrf.mxu0
      %v3125 = vadd.f32 0.0, %v3124
      %v3126 = vpop.f32.mrf.mxu0
      %3127 = vdwg.mxu0
      %3128 = vmatpush.bf16.msra.mxu0 0
      %3129 = vmatpush.bf16.msra.mxu0 0
      %3130 = vmatpush.bf16.msra.mxu0 0
      %3131 = vmatpush.bf16.msra.mxu0 0
      %3132 = vmatpush.bf16.msra.mxu0 0
      %3133 = vmatpush.bf16.msra.mxu0 0
      %3134 = vmatpush.bf16.msra.mxu0 0
      %3135 = vmatpush.bf16.msra.mxu0 %v1894
      %3136 = vmatmul.bf16.gmra.mxu0 %v3074
      %v3137 = vpop.f32.mrf.mxu0
      %v3138 = vadd.f32 0.0, %v3137
      %v3139 = vpop.f32.mrf.mxu0
      %3140 = vdwg.mxu0
      %3141 = vmatpush.bf16.msra.mxu0 0
      %3142 = vmatpush.bf16.msra.mxu0 0
      %3143 = vmatpush.bf16.msra.mxu0 0
      %3144 = vmatpush.bf16.msra.mxu0 0
      %3145 = vmatpush.bf16.msra.mxu0 0
      %3146 = vmatpush.bf16.msra.mxu0 0
      %3147 = vmatpush.bf16.msra.mxu0 0
      %3148 = vmatpush.bf16.msra.mxu0 %v1897
      %3149 = vmatmul.bf16.gmra.mxu0 %v3074
      %v3150 = vpop.f32.mrf.mxu0
      %v3151 = vadd.f32 0.0, %v3150
      %v3152 = vpop.f32.mrf.mxu0
      %3153 = vdwg.mxu0
      %3154 = vmatpush.bf16.msra.mxu0 0
      %3155 = vmatpush.bf16.msra.mxu0 0
      %3156 = vmatpush.bf16.msra.mxu0 0
      %3157 = vmatpush.bf16.msra.mxu0 0
      %3158 = vmatpush.bf16.msra.mxu0 0
      %3159 = vmatpush.bf16.msra.mxu0 0
      %3160 = vmatpush.bf16.msra.mxu0 0
      %3161 = vmatpush.bf16.msra.mxu0 %v1900
      %3162 = vmatmul.bf16.gmra.mxu0 %v3074
      %v3163 = vpop.f32.mrf.mxu0
      %v3164 = vadd.f32 0.0, %v3163
      %v3165 = vpop.f32.mrf.mxu0
      %3166 = vdwg.mxu0
      %3167 = vmatpush.bf16.msra.mxu0 0
      %3168 = vmatpush.bf16.msra.mxu0 0
      %3169 = vmatpush.bf16.msra.mxu0 0
      %3170 = vmatpush.bf16.msra.mxu0 0
      %3171 = vmatpush.bf16.msra.mxu0 0
      %3172 = vmatpush.bf16.msra.mxu0 0
      %3173 = vmatpush.bf16.msra.mxu0 0
      %3174 = vmatpush.bf16.msra.mxu0 %v1903
      %3175 = vmatmul.bf16.gmra.mxu0 %v3074
      %v3176 = vpop.f32.mrf.mxu0
      %v3177 = vadd.f32 0.0, %v3176
      %v3178 = vpop.f32.mrf.mxu0
      %3179 = vdwg.mxu0
      %v3180 = vadd.f32 %v3064, %v3086
      %v3181 = vadd.f32 %v3065, %v3099
      %v3182 = vadd.f32 %v3066, %v3112
      %v3183 = vadd.f32 %v3067, %v3125
      %v3184 = vadd.f32 %v3068, %v3138
      %v3185 = vadd.f32 %v3069, %v3151
      %v3186 = vadd.f32 %v3070, %v3164
      %v3187 = vadd.f32 %v3071, %v3177
      %v3188 = vld [vmem:[%s10] sm:$0xff]
      %3190 = vset.pattern.permute.xlu0 0
      %3191 = vperm.xlu0 %3190, %v3188
      %v3192 = vpop.permute.xlu0 %3191
      %v3194 = vadd.f32 %v3180, %v3192
      %v3195 = vadd.f32 %v3181, %v3192
      %v3196 = vadd.f32 %v3182, %v3192
      %v3197 = vadd.f32 %v3183, %v3192
      %v3198 = vadd.f32 %v3184, %v3192
      %v3199 = vadd.f32 %v3185, %v3192
      %v3200 = vadd.f32 %v3186, %v3192
      %v3201 = vadd.f32 %v3187, %v3192
      %v3202 = vmax.f32 %v3194, 0.0
      %v3203 = vmax.f32 %v3195, 0.0
      %v3204 = vmax.f32 %v3196, 0.0
      %v3205 = vmax.f32 %v3197, 0.0
      %v3206 = vmax.f32 %v3198, 0.0
      %v3207 = vmax.f32 %v3199, 0.0
      %v3208 = vmax.f32 %v3200, 0.0
      %v3209 = vmax.f32 %v3201, 0.0
      %v3210 = vmul.f32 %v3202, %v2449
      %v3211 = vmul.f32 %v3203, %v2450
      %v3212 = vmul.f32 %v3204, %v2451
      %v3213 = vmul.f32 %v3205, %v2452
      %v3214 = vmul.f32 %v3206, %v2453
      %v3215 = vmul.f32 %v3207, %v2454
      %v3216 = vmul.f32 %v3208, %v2455
      %v3217 = vmul.f32 %v3209, %v2456
      %v3226 = vrot.slane %v3211, 7
      %v3227 = vrot.slane %v3212, 6
      %v3228 = vrot.slane %v3213, 5
      %v3229 = vrot.slane %v3214, 4
      %v3230 = vrot.slane %v3215, 3
      %v3231 = vrot.slane %v3216, 2
      %v3232 = vrot.slane %v3217, 1
      %vm3233 = vcmask 1040384
      %v3234 = vsel %vm3233, %v3210, %v3226
      %vm3235 = vcmask 1042434
      %v3236 = vsel %vm3235, %v3227, %v3228
      %vm3237 = vcmask 1041408
      %v3238 = vsel %vm3237, %v3234, %v3236
      %vm3239 = vcmask 1044484
      %v3240 = vsel %vm3239, %v3229, %v3230
      %vm3241 = vcmask 1046534
      %v3242 = vsel %vm3241, %v3231, %v3232
      %vm3243 = vcmask 1045508
      %v3244 = vsel %vm3243, %v3240, %v3242
      %v3245 = vsel %vm1119, %v3238, %v3244
      %3247 = vst [vmem:[%s411] sm:$0xff] %v3245
      %p3248 = scmp.lt.s32.totalorder %s23, 1
      %s3249 = scalar_select %p3248, %s23, 1
      %s3250 = smul.addr %s3249, 8
      %s3251 = scalar_lea.vmem %s12, %s3250
      // Predicated region
      $region69: #{decoder_forward.3} parent=67 // pred_check
        %p3252 = pneg %p298
      $region70: #{decoder_forward.3} parent=67 // pred_check_branch
        %3254 = sbr.rel (%p3252) target = $region72
      $region71: #{decoder_forward.3} parent=67 // pred_region
        _
      $region72: #{decoder_forward.3} parent=67 // pred_fallthru
        _
    $region68: #{decoder_forward.3} parent=5 // pred_fallthru
      _
    %p3255 = scmp.le.s32.totalorder 2, %s18
    // Predicated region
    $region73: #{decoder_forward.3} parent=5 // pred_check
      %p3256 = pneg %p3255
    $region74: #{decoder_forward.3} parent=5 // pred_check_branch
      %3258 = sbr.rel (%p3256) target = $region76
    $region75: #{decoder_forward.3} parent=5 // pred_region
      %s3259 = ssub.s32 %s18, 2
      // Predicated region
      $region77: #{decoder_forward.3} parent=75 // pred_check
        %p3260 = pneg %p304
      $region78: #{decoder_forward.3} parent=75 // pred_check_branch
        %3262 = sbr.rel (%p3260) target = $region80
      $region79: #{decoder_forward.3} parent=75 // pred_region
        %p3263 = scmp.lt.s32.totalorder %s24, 1
        %s3264 = scalar_select %p3263, %s24, 1
        %s3265 = smul.addr %s3264, 8
        %s3266 = scalar_lea.vmem %s12, %s3265
      $region80: #{decoder_forward.3} parent=75 // pred_fallthru
        _
    $region76: #{decoder_forward.3} parent=5 // pred_fallthru
      _
  $region6: #{decoder_forward.3} parent=0 // loop_footer
    %s22 = sadd.s32 1, %s18
  $region7: #{decoder_forward.3} parent=0 // loop_footer_branch
    %17 = sbr.rel target = $region3
  $region8: #{decoder_forward.3} parent=0 // loop_exit
    _

// kernel: decoder_forward.2
$region0: #{decoder_forward.2}
  #allocation0 [shape = 'u32[]', space=smem, size = 0x4, offset = 0x4, fixed_abs, tag = 'smem constant byte address 0x4 - core index']
  #allocation1 [shape = 'u32[72,128]{1,0:T(1,128)}', space=vmem, size = 0x9000, scoped, tag = 'internal scratch']
  %s0 = inlined_call_operand.hbm [shape: f32[2,128], index: 0, kind: input, shape index: {}]
  %s1 = inlined_call_operand.hbm [shape: bf16[128,16384], index: 1, kind: input, shape index: {}]
  %s2 = inlined_call_operand.hbm [shape: f32[1,16384], index: 2, kind: input, shape index: {}]
  %s3 = inlined_call_operand.vmem [shape: f32[2,16384], index: 3, kind: output, shape index: {}]
  %s4 = sld [smem:[#allocation0]]
  $region57: #{decoder_forward.2} parent=0
    _
  %s6 = ssub.s32 1, %s4
  %s7 = scalar_select 0, %s6, %s4
  $region1: #{decoder_forward.2} parent=0
    #allocation2 [shape = 'u8[1024]{0}', space=vmem, size = 0x400, scoped, tag = 'input window, operand 0, single buffered']
    #allocation3 [shape = 's32[2]{0}', space=sflag, size = 0x8, scoped, tag = 'scoped memory for decoder_forward.2']
    #allocation4 [shape = 'u8[4194304]{0}', space=vmem, size = 0x400000, scoped, tag = 'input window, operand 1']
    #allocation5 [shape = 's32[2]{0}', space=sflag, size = 0x8, scoped, tag = 'scoped memory for decoder_forward.2']
    #allocation6 [shape = 'u8[65536]{0}', space=vmem, size = 0x10000, scoped, tag = 'input window, operand 2']
    %8 = vsyncpa [#allocation3], 0
    %9 = vsyncpa [#allocation5], 0
    %s10 = scalar_lea.sflag [#allocation5], 1
    %11 = vsyncpa %s10, 0
    loop: start=0, step=1, limit=4
    $region2: #{decoder_forward.2} parent=1 // loop_pre_header
      _
    $region3: #{decoder_forward.2} parent=1 // loop_header
      %s13 = sphi 0, %s17
      %p14 = scmp.ge.s32.totalorder %s13, 4
      %s21 = sphi 0, %s21
      %s23 = sphi 0, %s21
      %s24 = sphi 0, %s23
      %s38 = sphi 0, %s24
      %s44 = sphi 0, %s46
      %s47 = sphi 0, %s44
      %s48 = sphi 0, %s47
      %s64 = sphi 0, %s48
      %s70 = sphi 0, %s72
      %s73 = sphi 0, %s70
      %s74 = sphi 0, %s73
      %s90 = sphi 0, %s74
      %s96 = sphi 0, %s98
      %s99 = sphi 0, %s96
      %s100 = sphi 0, %s99
      %s116 = sphi 0, %s100
    $region4: #{decoder_forward.2} parent=1 // loop_header_branch
      %16 = sbr.rel (%p14) target = $region8
    $region5: #{decoder_forward.2} parent=1 // loop_body
      %s18 = ssub.s32 %s13, 1
      %s19 = ssub.s32 %s13, 2
      %s20 = sadd.s32 %s13, 1
      %s22 = sadd.s32 %s21, 1
      %p25 = scmp.eq.s32.totalorder %s13, 1
      %p26 = scmp.ne.s32.totalorder %s21, %s23
      %p27 = scmp.eq.s32.totalorder %s13, 0
      %p28 = por %p26, %p27
      %p29 = scmp.ne.s32.totalorder %s21, %s23
      %p30 = scmp.eq.s32.totalorder %s18, 1
      %p31 = por %p29, %p30
      %p32 = scmp.ne.s32.totalorder %s23, %s24
      %p33 = scmp.eq.s32.totalorder %s18, 0
      %p34 = por %p32, %p33
      %p35 = scmp.ne.s32.totalorder %s23, %s24
      %p36 = scmp.eq.s32.totalorder %s19, 1
      %p37 = por %p35, %p36
      %p39 = scmp.ne.s32.totalorder %s24, %s38
      %p40 = scmp.eq.s32.totalorder %s19, 0
      %p41 = por %p39, %p40
      %s42 = ssub.s32 %s13, %s20
      %p43 = scmp.eq.s32.totalorder %s42, 0
      %s45 = sadd.s32 %s44, 1
      %s46 = scalar_select %p43, %s44, %s45
      %p49 = pneg %p43
      %p50 = scmp.eq.s32.totalorder %s13, 1
      %p51 = por %p49, %p50
      %p52 = scmp.ne.s32.totalorder %s44, %s47
      %p53 = scmp.eq.s32.totalorder %s13, 0
      %p54 = por %p52, %p53
      %p55 = scmp.ne.s32.totalorder %s44, %s47
      %p56 = scmp.eq.s32.totalorder %s18, 1
      %p57 = por %p55, %p56
      %p58 = scmp.ne.s32.totalorder %s47, %s48
      %p59 = scmp.eq.s32.totalorder %s18, 0
      %p60 = por %p58, %p59
      %p61 = scmp.ne.s32.totalorder %s47, %s48
      %p62 = scmp.eq.s32.totalorder %s19, 1
      %p63 = por %p61, %p62
      %p65 = scmp.ne.s32.totalorder %s48, %s64
      %p66 = scmp.eq.s32.totalorder %s19, 0
      %p67 = por %p65, %p66
      %s68 = ssub.s32 %s13, %s20
      %p69 = scmp.eq.s32.totalorder %s68, 0
      %s71 = sadd.s32 %s70, 1
      %s72 = scalar_select %p69, %s70, %s71
      %p75 = pneg %p69
      %p76 = scmp.eq.s32.totalorder %s13, 1
      %p77 = por %p75, %p76
      %p78 = scmp.ne.s32.totalorder %s70, %s73
      %p79 = scmp.eq.s32.totalorder %s13, 0
      %p80 = por %p78, %p79
      %p81 = scmp.ne.s32.totalorder %s70, %s73
      %p82 = scmp.eq.s32.totalorder %s18, 1
      %p83 = por %p81, %p82
      %p84 = scmp.ne.s32.totalorder %s73, %s74
      %p85 = scmp.eq.s32.totalorder %s18, 0
      %p86 = por %p84, %p85
      %p87 = scmp.ne.s32.totalorder %s73, %s74
      %p88 = scmp.eq.s32.totalorder %s19, 1
      %p89 = por %p87, %p88
      %p91 = scmp.ne.s32.totalorder %s74, %s90
      %p92 = scmp.eq.s32.totalorder %s19, 0
      %p93 = por %p91, %p92
      %s94 = ssub.s32 %s13, %s20
      %p95 = scmp.eq.s32.totalorder %s94, 0
      %s97 = sadd.s32 %s96, 1
      %s98 = scalar_select %p95, %s96, %s97
      %p101 = pneg %p95
      %p102 = scmp.eq.s32.totalorder %s13, 1
      %p103 = por %p101, %p102
      %p104 = scmp.ne.s32.totalorder %s96, %s99
      %p105 = scmp.eq.s32.totalorder %s13, 0
      %p106 = por %p104, %p105
      %p107 = scmp.ne.s32.totalorder %s96, %s99
      %p108 = scmp.eq.s32.totalorder %s18, 1
      %p109 = por %p107, %p108
      %p110 = scmp.ne.s32.totalorder %s99, %s100
      %p111 = scmp.eq.s32.totalorder %s18, 0
      %p112 = por %p110, %p111
      %p113 = scmp.ne.s32.totalorder %s99, %s100
      %p114 = scmp.eq.s32.totalorder %s19, 1
      %p115 = por %p113, %p114
      %p117 = scmp.ne.s32.totalorder %s100, %s116
      %p118 = scmp.eq.s32.totalorder %s19, 0
      %p119 = por %p117, %p118
      %p120 = scmp.le.s32.totalorder 1, %s13
      %p121 = scmp.lt.s32.totalorder %s13, 3
      %p122 = pnand %p120, %p121
      %p123 = pneg %p122
      // Predicated region
      $region9: #{decoder_forward.2} parent=5 // pred_check
        _
      $region10: #{decoder_forward.2} parent=5 // pred_check_branch
        %125 = sbr.rel (%p122) target = $region12
      $region11: #{decoder_forward.2} parent=5 // pred_region
        %s126 = ssub.s32 %s13, 1
        // Predicated region
        $region13: #{decoder_forward.2} parent=11 // pred_check
          %p127 = pneg %p34
        $region14: #{decoder_forward.2} parent=11 // pred_check_branch
          %129 = sbr.rel (%p127) target = $region16
        $region15: #{decoder_forward.2} parent=11 // pred_region
          %131 = vsyncadd [#allocation3], 0
          %s133 = sshll.u32 %s0, 4
          %s134 = int_to_ptr.hbm [resolvable:$true] %s133
          %s135 = sshll.u32 [#allocation2], 4
          %s136 = int_to_ptr.vmem [resolvable:$true] %s135
          %138 = dma.hbm_to_vmem [thread:$0]  %s134, 32, %s136, [#allocation3]
        $region16: #{decoder_forward.2} parent=11 // pred_fallthru
          _
      $region12: #{decoder_forward.2} parent=5 // pred_fallthru
        _
      %p139 = scmp.lt.s32.totalorder %s13, 2
      // Predicated region
      $region17: #{decoder_forward.2} parent=5 // pred_check
        %p140 = pneg %p139
      $region18: #{decoder_forward.2} parent=5 // pred_check_branch
        %142 = sbr.rel (%p140) target = $region20
      $region19: #{decoder_forward.2} parent=5 // pred_region
        // Predicated region
        $region21: #{decoder_forward.2} parent=19 // pred_check
          %p143 = pneg %p54
        $region22: #{decoder_forward.2} parent=19 // pred_check_branch
          %145 = sbr.rel (%p143) target = $region24
        $region23: #{decoder_forward.2} parent=19 // pred_region
          %s146 = sand.u32 %s13, 1
          %s147 = scalar_lea.sflag [#allocation5], %s146
          %s148 = sand.u32 %s44, 1
          %s149 = smul.addr %s148, 4096
          %s150 = scalar_lea.vmem [#allocation4], %s149
          %s151 = smul.u32 64, %s13
          %153 = vsyncadd %s147, 0
          %s154 = smul.addr %s151, 4
          %s155 = scalar_lea.hbm %s1, %s154
          %s156 = sshll.u32 %s155, 4
          %s157 = int_to_ptr.hbm [resolvable:$true] %s156
          %s158 = sshll.u32 %s150, 4
          %s159 = int_to_ptr.vmem [resolvable:$true] %s158
          %164 = dma.hbm_to_vmem [thread:$0]  %s157, 65536, %s159, %s147, 8192, 4096, 256
        $region24: #{decoder_forward.2} parent=19 // pred_fallthru
          _
        // Predicated region
        $region25: #{decoder_forward.2} parent=19 // pred_check
          %p165 = pneg %p80
        $region26: #{decoder_forward.2} parent=19 // pred_check_branch
          %167 = sbr.rel (%p165) target = $region28
        $region27: #{decoder_forward.2} parent=19 // pred_region
          %s168 = sand.u32 %s13, 1
          %s169 = scalar_lea.sflag [#allocation5], %s168
          %s170 = sand.u32 %s70, 1
          %s171 = smul.addr %s170, 64
          %s172 = scalar_lea.vmem [#allocation6], %s171
          %s173 = smul.u32 64, %s13
          %175 = vsyncadd %s169, 0
          %s176 = scalar_lea.hbm %s2, %s173
          %s178 = sshll.u32 %s176, 4
          %s179 = int_to_ptr.hbm [resolvable:$true] %s178
          %s180 = sshll.u32 %s172, 4
          %s181 = int_to_ptr.vmem [resolvable:$true] %s180
          %183 = dma.hbm_to_vmem [thread:$0]  %s179, 1024, %s181, %s169
        $region28: #{decoder_forward.2} parent=19 // pred_fallthru
          _
      $region20: #{decoder_forward.2} parent=5 // pred_fallthru
        _
      %p184 = scmp.le.s32.totalorder 1, %s13
      %p185 = scmp.lt.s32.totalorder %s13, 3
      %p186 = pnand %p184, %p185
      %p187 = pneg %p186
      // Predicated region
      $region29: #{decoder_forward.2} parent=5 // pred_check
        _
      $region30: #{decoder_forward.2} parent=5 // pred_check_branch
        %189 = sbr.rel (%p186) target = $region32
      $region31: #{decoder_forward.2} parent=5 // pred_region
        %s190 = ssub.s32 %s13, 1
        // Predicated region
        $region33: #{decoder_forward.2} parent=31 // pred_check
          %p191 = pneg %p34
        $region34: #{decoder_forward.2} parent=31 // pred_check_branch
          %193 = sbr.rel (%p191) target = $region36
        $region35: #{decoder_forward.2} parent=31 // pred_region
          %195 = dma.done [#allocation3], 32
        $region36: #{decoder_forward.2} parent=31 // pred_fallthru
          _
        %s196 = sand.u32 %s18, 1
        %s197 = scalar_lea.sflag [#allocation5], %s196
        %s198 = sand.u32 %s47, 1
        %s199 = smul.addr %s198, 4096
        %s200 = scalar_lea.vmem [#allocation4], %s199
        // Predicated region
        $region37: #{decoder_forward.2} parent=31 // pred_check
          %p201 = pneg %p60
        $region38: #{decoder_forward.2} parent=31 // pred_check_branch
          %203 = sbr.rel (%p201) target = $region40
        $region39: #{decoder_forward.2} parent=31 // pred_region
          %205 = dma.done %s197, 65536
        $region40: #{decoder_forward.2} parent=31 // pred_fallthru
          _
        %s206 = sand.u32 %s18, 1
        %s207 = scalar_lea.sflag [#allocation5], %s206
        %s208 = sand.u32 %s73, 1
        %s209 = smul.addr %s208, 64
        %s210 = scalar_lea.vmem [#allocation6], %s209
        // Predicated region
        $region41: #{decoder_forward.2} parent=31 // pred_check
          %p211 = pneg %p86
        $region42: #{decoder_forward.2} parent=31 // pred_check_branch
          %213 = sbr.rel (%p211) target = $region44
        $region43: #{decoder_forward.2} parent=31 // pred_region
          %215 = dma.done %s207, 1024
        $region44: #{decoder_forward.2} parent=31 // pred_fallthru
          _
        %p216 = pneg %p34
        %p217 = pneg %p31
        %s218 = sand.u32 %s18, 1
        %s219 = scalar_lea.sflag [#allocation5], %s218
        %s220 = sand.u32 %s47, 1
        %s221 = smul.addr %s220, 4096
        %s222 = scalar_lea.vmem [#allocation4], %s221
        %p223 = pneg %p60
        %p224 = pneg %p57
        %s225 = sand.u32 %s18, 1
        %s226 = scalar_lea.sflag [#allocation5], %s225
        %s227 = sand.u32 %s73, 1
        %s228 = smul.addr %s227, 64
        %s229 = scalar_lea.vmem [#allocation6], %s228
        %p230 = pneg %p86
        %p231 = pneg %p83
        %p232 = pneg %p112
        %p233 = pneg %p109
        %s234 = smul.u32 64, %s18
        %p235 = scmp.lt.s32.totalorder %s234, 127
        %s236 = scalar_select %p235, %s234, 127
        %s237 = smul.addr %s236, 2
        %s238 = scalar_lea.vmem %s3, %s237
        %s239 = smul.u32 64, %s18
        %s240 = smul.u32 64, %s18
        %s241 = smul.u32 64, %s18
        %p242 = scmp.lt.s32.totalorder %s241, 127
        %s243 = scalar_select %p242, %s241, 127
        %s244 = smul.addr %s243, 2
        %s245 = scalar_lea.vmem %s3, %s244
        %s246 = smul.u32 64, %s18
        %v247 = vld [vmem:[#allocation2] sm:$0x3]
        %v248 = vpack.c.bf16 %v247, %v247
        %v249 = vld [vmem:[%s200] sm:$0xff]
        %v250 = vld [vmem:[%s200 + $0x8] sm:$0xff]
        %v251 = vld [vmem:[%s200 + $0x10] sm:$0xff]
        %v252 = vld [vmem:[%s200 + $0x18] sm:$0xff]
        %v253 = vld [vmem:[%s200 + $0x20] sm:$0xff]
        %v254 = vld [vmem:[%s200 + $0x28] sm:$0xff]
        %v255 = vld [vmem:[%s200 + $0x30] sm:$0xff]
        %v256 = vld [vmem:[%s200 + $0x38] sm:$0xff]
        %v257 = vld [vmem:[%s200 + $0x40] sm:$0xff]
        %v258 = vld [vmem:[%s200 + $0x48] sm:$0xff]
        %v259 = vld [vmem:[%s200 + $0x50] sm:$0xff]
        %v260 = vld [vmem:[%s200 + $0x58] sm:$0xff]
        %v261 = vld [vmem:[%s200 + $0x60] sm:$0xff]
        %v262 = vld [vmem:[%s200 + $0x68] sm:$0xff]
        %v263 = vld [vmem:[%s200 + $0x70] sm:$0xff]
        %v264 = vld [vmem:[%s200 + $0x78] sm:$0xff]
        %v265 = vld [vmem:[%s200 + $0x80] sm:$0xff]
        %v266 = vld [vmem:[%s200 + $0x88] sm:$0xff]
        %v267 = vld [vmem:[%s200 + $0x90] sm:$0xff]
        %v268 = vld [vmem:[%s200 + $0x98] sm:$0xff]
        %v269 = vld [vmem:[%s200 + $0xa0] sm:$0xff]
        %v270 = vld [vmem:[%s200 + $0xa8] sm:$0xff]
        %v271 = vld [vmem:[%s200 + $0xb0] sm:$0xff]
        %v272 = vld [vmem:[%s200 + $0xb8] sm:$0xff]
        %v273 = vld [vmem:[%s200 + $0xc0] sm:$0xff]
        %v274 = vld [vmem:[%s200 + $0xc8] sm:$0xff]
        %v275 = vld [vmem:[%s200 + $0xd0] sm:$0xff]
        %v276 = vld [vmem:[%s200 + $0xd8] sm:$0xff]
        %v277 = vld [vmem:[%s200 + $0xe0] sm:$0xff]
        %v278 = vld [vmem:[%s200 + $0xe8] sm:$0xff]
        %v279 = vld [vmem:[%s200 + $0xf0] sm:$0xff]
        %v280 = vld [vmem:[%s200 + $0xf8] sm:$0xff]
        %v281 = vld [vmem:[%s200 + $0x100] sm:$0xff]
        %v282 = vld [vmem:[%s200 + $0x108] sm:$0xff]
        %v283 = vld [vmem:[%s200 + $0x110] sm:$0xff]
        %v284 = vld [vmem:[%s200 + $0x118] sm:$0xff]
        %v285 = vld [vmem:[%s200 + $0x120] sm:$0xff]
        %v286 = vld [vmem:[%s200 + $0x128] sm:$0xff]
        %v287 = vld [vmem:[%s200 + $0x130] sm:$0xff]
        %v288 = vld [vmem:[%s200 + $0x138] sm:$0xff]
        %v289 = vld [vmem:[%s200 + $0x140] sm:$0xff]
        %v290 = vld [vmem:[%s200 + $0x148] sm:$0xff]
        %v291 = vld [vmem:[%s200 + $0x150] sm:$0xff]
        %v292 = vld [vmem:[%s200 + $0x158] sm:$0xff]
        %v293 = vld [vmem:[%s200 + $0x160] sm:$0xff]
        %v294 = vld [vmem:[%s200 + $0x168] sm:$0xff]
        %v295 = vld [vmem:[%s200 + $0x170] sm:$0xff]
        %v296 = vld [vmem:[%s200 + $0x178] sm:$0xff]
        %v297 = vld [vmem:[%s200 + $0x180] sm:$0xff]
        %v298 = vld [vmem:[%s200 + $0x188] sm:$0xff]
        %v299 = vld [vmem:[%s200 + $0x190] sm:$0xff]
        %v300 = vld [vmem:[%s200 + $0x198] sm:$0xff]
        %v301 = vld [vmem:[%s200 + $0x1a0] sm:$0xff]
        %v302 = vld [vmem:[%s200 + $0x1a8] sm:$0xff]
        %v303 = vld [vmem:[%s200 + $0x1b0] sm:$0xff]
        %v304 = vld [vmem:[%s200 + $0x1b8] sm:$0xff]
        %v305 = vld [vmem:[%s200 + $0x1c0] sm:$0xff]
        %v306 = vld [vmem:[%s200 + $0x1c8] sm:$0xff]
        %v307 = vld [vmem:[%s200 + $0x1d0] sm:$0xff]
        %v308 = vld [vmem:[%s200 + $0x1d8] sm:$0xff]
        %v309 = vld [vmem:[%s200 + $0x1e0] sm:$0xff]
        %v310 = vld [vmem:[%s200 + $0x1e8] sm:$0xff]
        %v311 = vld [vmem:[%s200 + $0x1f0] sm:$0xff]
        %v312 = vld [vmem:[%s200 + $0x1f8] sm:$0xff]
        %v313 = vld [vmem:[%s200 + $0x200] sm:$0xff]
        %v314 = vld [vmem:[%s200 + $0x208] sm:$0xff]
        %v315 = vld [vmem:[%s200 + $0x210] sm:$0xff]
        %v316 = vld [vmem:[%s200 + $0x218] sm:$0xff]
        %v317 = vld [vmem:[%s200 + $0x220] sm:$0xff]
        %v318 = vld [vmem:[%s200 + $0x228] sm:$0xff]
        %v319 = vld [vmem:[%s200 + $0x230] sm:$0xff]
        %v320 = vld [vmem:[%s200 + $0x238] sm:$0xff]
        %v321 = vld [vmem:[%s200 + $0x240] sm:$0xff]
        %v322 = vld [vmem:[%s200 + $0x248] sm:$0xff]
        %v323 = vld [vmem:[%s200 + $0x250] sm:$0xff]
        %v324 = vld [vmem:[%s200 + $0x258] sm:$0xff]
        %v325 = vld [vmem:[%s200 + $0x260] sm:$0xff]
        %v326 = vld [vmem:[%s200 + $0x268] sm:$0xff]
        %v327 = vld [vmem:[%s200 + $0x270] sm:$0xff]
        %v328 = vld [vmem:[%s200 + $0x278] sm:$0xff]
        %v329 = vld [vmem:[%s200 + $0x280] sm:$0xff]
        %v330 = vld [vmem:[%s200 + $0x288] sm:$0xff]
        %v331 = vld [vmem:[%s200 + $0x290] sm:$0xff]
        %v332 = vld [vmem:[%s200 + $0x298] sm:$0xff]
        %v333 = vld [vmem:[%s200 + $0x2a0] sm:$0xff]
        %v334 = vld [vmem:[%s200 + $0x2a8] sm:$0xff]
        %v335 = vld [vmem:[%s200 + $0x2b0] sm:$0xff]
        %v336 = vld [vmem:[%s200 + $0x2b8] sm:$0xff]
        %v337 = vld [vmem:[%s200 + $0x2c0] sm:$0xff]
        %v338 = vld [vmem:[%s200 + $0x2c8] sm:$0xff]
        %v339 = vld [vmem:[%s200 + $0x2d0] sm:$0xff]
        %v340 = vld [vmem:[%s200 + $0x2d8] sm:$0xff]
        %v341 = vld [vmem:[%s200 + $0x2e0] sm:$0xff]
        %v342 = vld [vmem:[%s200 + $0x2e8] sm:$0xff]
        %v343 = vld [vmem:[%s200 + $0x2f0] sm:$0xff]
        %v344 = vld [vmem:[%s200 + $0x2f8] sm:$0xff]
        %v345 = vld [vmem:[%s200 + $0x300] sm:$0xff]
        %v346 = vld [vmem:[%s200 + $0x308] sm:$0xff]
        %v347 = vld [vmem:[%s200 + $0x310] sm:$0xff]
        %v348 = vld [vmem:[%s200 + $0x318] sm:$0xff]
        %v349 = vld [vmem:[%s200 + $0x320] sm:$0xff]
        %v350 = vld [vmem:[%s200 + $0x328] sm:$0xff]
        %v351 = vld [vmem:[%s200 + $0x330] sm:$0xff]
        %v352 = vld [vmem:[%s200 + $0x338] sm:$0xff]
        %v353 = vld [vmem:[%s200 + $0x340] sm:$0xff]
        %v354 = vld [vmem:[%s200 + $0x348] sm:$0xff]
        %v355 = vld [vmem:[%s200 + $0x350] sm:$0xff]
        %v356 = vld [vmem:[%s200 + $0x358] sm:$0xff]
        %v357 = vld [vmem:[%s200 + $0x360] sm:$0xff]
        %v358 = vld [vmem:[%s200 + $0x368] sm:$0xff]
        %v359 = vld [vmem:[%s200 + $0x370] sm:$0xff]
        %v360 = vld [vmem:[%s200 + $0x378] sm:$0xff]
        %v361 = vld [vmem:[%s200 + $0x380] sm:$0xff]
        %v362 = vld [vmem:[%s200 + $0x388] sm:$0xff]
        %v363 = vld [vmem:[%s200 + $0x390] sm:$0xff]
        %v364 = vld [vmem:[%s200 + $0x398] sm:$0xff]
        %v365 = vld [vmem:[%s200 + $0x3a0] sm:$0xff]
        %v366 = vld [vmem:[%s200 + $0x3a8] sm:$0xff]
        %v367 = vld [vmem:[%s200 + $0x3b0] sm:$0xff]
        %v368 = vld [vmem:[%s200 + $0x3b8] sm:$0xff]
        %v369 = vld [vmem:[%s200 + $0x3c0] sm:$0xff]
        %v370 = vld [vmem:[%s200 + $0x3c8] sm:$0xff]
        %v371 = vld [vmem:[%s200 + $0x3d0] sm:$0xff]
        %v372 = vld [vmem:[%s200 + $0x3d8] sm:$0xff]
        %v373 = vld [vmem:[%s200 + $0x3e0] sm:$0xff]
        %v374 = vld [vmem:[%s200 + $0x3e8] sm:$0xff]
        %v375 = vld [vmem:[%s200 + $0x3f0] sm:$0xff]
        %v376 = vld [vmem:[%s200 + $0x3f8] sm:$0xff]
        %v377 = vld [vmem:[%s200 + $0x400] sm:$0xff]
        %v378 = vld [vmem:[%s200 + $0x408] sm:$0xff]
        %v379 = vld [vmem:[%s200 + $0x410] sm:$0xff]
        %v380 = vld [vmem:[%s200 + $0x418] sm:$0xff]
        %v381 = vld [vmem:[%s200 + $0x420] sm:$0xff]
        %v382 = vld [vmem:[%s200 + $0x428] sm:$0xff]
        %v383 = vld [vmem:[%s200 + $0x430] sm:$0xff]
        %v384 = vld [vmem:[%s200 + $0x438] sm:$0xff]
        %v385 = vld [vmem:[%s200 + $0x440] sm:$0xff]
        %v386 = vld [vmem:[%s200 + $0x448] sm:$0xff]
        %v387 = vld [vmem:[%s200 + $0x450] sm:$0xff]
        %v388 = vld [vmem:[%s200 + $0x458] sm:$0xff]
        %v389 = vld [vmem:[%s200 + $0x460] sm:$0xff]
        %v390 = vld [vmem:[%s200 + $0x468] sm:$0xff]
        %v391 = vld [vmem:[%s200 + $0x470] sm:$0xff]
        %v392 = vld [vmem:[%s200 + $0x478] sm:$0xff]
        %v393 = vld [vmem:[%s200 + $0x480] sm:$0xff]
        %v394 = vld [vmem:[%s200 + $0x488] sm:$0xff]
        %v395 = vld [vmem:[%s200 + $0x490] sm:$0xff]
        %v396 = vld [vmem:[%s200 + $0x498] sm:$0xff]
        %v397 = vld [vmem:[%s200 + $0x4a0] sm:$0xff]
        %v398 = vld [vmem:[%s200 + $0x4a8] sm:$0xff]
        %v399 = vld [vmem:[%s200 + $0x4b0] sm:$0xff]
        %v400 = vld [vmem:[%s200 + $0x4b8] sm:$0xff]
        %v401 = vld [vmem:[%s200 + $0x4c0] sm:$0xff]
        %v402 = vld [vmem:[%s200 + $0x4c8] sm:$0xff]
        %v403 = vld [vmem:[%s200 + $0x4d0] sm:$0xff]
        %v404 = vld [vmem:[%s200 + $0x4d8] sm:$0xff]
        %v405 = vld [vmem:[%s200 + $0x4e0] sm:$0xff]
        %v406 = vld [vmem:[%s200 + $0x4e8] sm:$0xff]
        %v407 = vld [vmem:[%s200 + $0x4f0] sm:$0xff]
        %v408 = vld [vmem:[%s200 + $0x4f8] sm:$0xff]
        %v409 = vld [vmem:[%s200 + $0x500] sm:$0xff]
        %v410 = vld [vmem:[%s200 + $0x508] sm:$0xff]
        %v411 = vld [vmem:[%s200 + $0x510] sm:$0xff]
        %v412 = vld [vmem:[%s200 + $0x518] sm:$0xff]
        %v413 = vld [vmem:[%s200 + $0x520] sm:$0xff]
        %v414 = vld [vmem:[%s200 + $0x528] sm:$0xff]
        %v415 = vld [vmem:[%s200 + $0x530] sm:$0xff]
        %v416 = vld [vmem:[%s200 + $0x538] sm:$0xff]
        %v417 = vld [vmem:[%s200 + $0x540] sm:$0xff]
        %v418 = vld [vmem:[%s200 + $0x548] sm:$0xff]
        %v419 = vld [vmem:[%s200 + $0x550] sm:$0xff]
        %v420 = vld [vmem:[%s200 + $0x558] sm:$0xff]
        %v421 = vld [vmem:[%s200 + $0x560] sm:$0xff]
        %v422 = vld [vmem:[%s200 + $0x568] sm:$0xff]
        %v423 = vld [vmem:[%s200 + $0x570] sm:$0xff]
        %v424 = vld [vmem:[%s200 + $0x578] sm:$0xff]
        %v425 = vld [vmem:[%s200 + $0x580] sm:$0xff]
        %v426 = vld [vmem:[%s200 + $0x588] sm:$0xff]
        %v427 = vld [vmem:[%s200 + $0x590] sm:$0xff]
        %v428 = vld [vmem:[%s200 + $0x598] sm:$0xff]
        %v429 = vld [vmem:[%s200 + $0x5a0] sm:$0xff]
        %v430 = vld [vmem:[%s200 + $0x5a8] sm:$0xff]
        %v431 = vld [vmem:[%s200 + $0x5b0] sm:$0xff]
        %v432 = vld [vmem:[%s200 + $0x5b8] sm:$0xff]
        %v433 = vld [vmem:[%s200 + $0x5c0] sm:$0xff]
        %v434 = vld [vmem:[%s200 + $0x5c8] sm:$0xff]
        %v435 = vld [vmem:[%s200 + $0x5d0] sm:$0xff]
        %v436 = vld [vmem:[%s200 + $0x5d8] sm:$0xff]
        %v437 = vld [vmem:[%s200 + $0x5e0] sm:$0xff]
        %v438 = vld [vmem:[%s200 + $0x5e8] sm:$0xff]
        %v439 = vld [vmem:[%s200 + $0x5f0] sm:$0xff]
        %v440 = vld [vmem:[%s200 + $0x5f8] sm:$0xff]
        %v441 = vld [vmem:[%s200 + $0x600] sm:$0xff]
        %v442 = vld [vmem:[%s200 + $0x608] sm:$0xff]
        %v443 = vld [vmem:[%s200 + $0x610] sm:$0xff]
        %v444 = vld [vmem:[%s200 + $0x618] sm:$0xff]
        %v445 = vld [vmem:[%s200 + $0x620] sm:$0xff]
        %v446 = vld [vmem:[%s200 + $0x628] sm:$0xff]
        %v447 = vld [vmem:[%s200 + $0x630] sm:$0xff]
        %v448 = vld [vmem:[%s200 + $0x638] sm:$0xff]
        %v449 = vld [vmem:[%s200 + $0x640] sm:$0xff]
        %v450 = vld [vmem:[%s200 + $0x648] sm:$0xff]
        %v451 = vld [vmem:[%s200 + $0x650] sm:$0xff]
        %v452 = vld [vmem:[%s200 + $0x658] sm:$0xff]
        %v453 = vld [vmem:[%s200 + $0x660] sm:$0xff]
        %v454 = vld [vmem:[%s200 + $0x668] sm:$0xff]
        %v455 = vld [vmem:[%s200 + $0x670] sm:$0xff]
        %v456 = vld [vmem:[%s200 + $0x678] sm:$0xff]
        %v457 = vld [vmem:[%s200 + $0x680] sm:$0xff]
        %v458 = vld [vmem:[%s200 + $0x688] sm:$0xff]
        %v459 = vld [vmem:[%s200 + $0x690] sm:$0xff]
        %v460 = vld [vmem:[%s200 + $0x698] sm:$0xff]
        %v461 = vld [vmem:[%s200 + $0x6a0] sm:$0xff]
        %v462 = vld [vmem:[%s200 + $0x6a8] sm:$0xff]
        %v463 = vld [vmem:[%s200 + $0x6b0] sm:$0xff]
        %v464 = vld [vmem:[%s200 + $0x6b8] sm:$0xff]
        %v465 = vld [vmem:[%s200 + $0x6c0] sm:$0xff]
        %v466 = vld [vmem:[%s200 + $0x6c8] sm:$0xff]
        %v467 = vld [vmem:[%s200 + $0x6d0] sm:$0xff]
        %v468 = vld [vmem:[%s200 + $0x6d8] sm:$0xff]
        %v469 = vld [vmem:[%s200 + $0x6e0] sm:$0xff]
        %v470 = vld [vmem:[%s200 + $0x6e8] sm:$0xff]
        %v471 = vld [vmem:[%s200 + $0x6f0] sm:$0xff]
        %v472 = vld [vmem:[%s200 + $0x6f8] sm:$0xff]
        %v473 = vld [vmem:[%s200 + $0x700] sm:$0xff]
        %v474 = vld [vmem:[%s200 + $0x708] sm:$0xff]
        %v475 = vld [vmem:[%s200 + $0x710] sm:$0xff]
        %v476 = vld [vmem:[%s200 + $0x718] sm:$0xff]
        %v477 = vld [vmem:[%s200 + $0x720] sm:$0xff]
        %v478 = vld [vmem:[%s200 + $0x728] sm:$0xff]
        %v479 = vld [vmem:[%s200 + $0x730] sm:$0xff]
        %v480 = vld [vmem:[%s200 + $0x738] sm:$0xff]
        %v481 = vld [vmem:[%s200 + $0x740] sm:$0xff]
        %v482 = vld [vmem:[%s200 + $0x748] sm:$0xff]
        %v483 = vld [vmem:[%s200 + $0x750] sm:$0xff]
        %v484 = vld [vmem:[%s200 + $0x758] sm:$0xff]
        %v485 = vld [vmem:[%s200 + $0x760] sm:$0xff]
        %v486 = vld [vmem:[%s200 + $0x768] sm:$0xff]
        %v487 = vld [vmem:[%s200 + $0x770] sm:$0xff]
        %v488 = vld [vmem:[%s200 + $0x778] sm:$0xff]
        %v489 = vld [vmem:[%s200 + $0x780] sm:$0xff]
        %v490 = vld [vmem:[%s200 + $0x788] sm:$0xff]
        %v491 = vld [vmem:[%s200 + $0x790] sm:$0xff]
        %v492 = vld [vmem:[%s200 + $0x798] sm:$0xff]
        %v493 = vld [vmem:[%s200 + $0x7a0] sm:$0xff]
        %v494 = vld [vmem:[%s200 + $0x7a8] sm:$0xff]
        %v495 = vld [vmem:[%s200 + $0x7b0] sm:$0xff]
        %v496 = vld [vmem:[%s200 + $0x7b8] sm:$0xff]
        %v497 = vld [vmem:[%s200 + $0x7c0] sm:$0xff]
        %v498 = vld [vmem:[%s200 + $0x7c8] sm:$0xff]
        %v499 = vld [vmem:[%s200 + $0x7d0] sm:$0xff]
        %v500 = vld [vmem:[%s200 + $0x7d8] sm:$0xff]
        %v501 = vld [vmem:[%s200 + $0x7e0] sm:$0xff]
        %v502 = vld [vmem:[%s200 + $0x7e8] sm:$0xff]
        %v503 = vld [vmem:[%s200 + $0x7f0] sm:$0xff]
        %v504 = vld [vmem:[%s200 + $0x7f8] sm:$0xff]
        %v505 = vld [vmem:[%s200 + $0x800] sm:$0xff]
        %v506 = vld [vmem:[%s200 + $0x808] sm:$0xff]
        %v507 = vld [vmem:[%s200 + $0x810] sm:$0xff]
        %v508 = vld [vmem:[%s200 + $0x818] sm:$0xff]
        %v509 = vld [vmem:[%s200 + $0x820] sm:$0xff]
        %v510 = vld [vmem:[%s200 + $0x828] sm:$0xff]
        %v511 = vld [vmem:[%s200 + $0x830] sm:$0xff]
        %v512 = vld [vmem:[%s200 + $0x838] sm:$0xff]
        %v513 = vld [vmem:[%s200 + $0x840] sm:$0xff]
        %v514 = vld [vmem:[%s200 + $0x848] sm:$0xff]
        %v515 = vld [vmem:[%s200 + $0x850] sm:$0xff]
        %v516 = vld [vmem:[%s200 + $0x858] sm:$0xff]
        %v517 = vld [vmem:[%s200 + $0x860] sm:$0xff]
        %v518 = vld [vmem:[%s200 + $0x868] sm:$0xff]
        %v519 = vld [vmem:[%s200 + $0x870] sm:$0xff]
        %v520 = vld [vmem:[%s200 + $0x878] sm:$0xff]
        %v521 = vld [vmem:[%s200 + $0x880] sm:$0xff]
        %v522 = vld [vmem:[%s200 + $0x888] sm:$0xff]
        %v523 = vld [vmem:[%s200 + $0x890] sm:$0xff]
        %v524 = vld [vmem:[%s200 + $0x898] sm:$0xff]
        %v525 = vld [vmem:[%s200 + $0x8a0] sm:$0xff]
        %v526 = vld [vmem:[%s200 + $0x8a8] sm:$0xff]
        %v527 = vld [vmem:[%s200 + $0x8b0] sm:$0xff]
        %v528 = vld [vmem:[%s200 + $0x8b8] sm:$0xff]
        %v529 = vld [vmem:[%s200 + $0x8c0] sm:$0xff]
        %v530 = vld [vmem:[%s200 + $0x8c8] sm:$0xff]
        %v531 = vld [vmem:[%s200 + $0x8d0] sm:$0xff]
        %v532 = vld [vmem:[%s200 + $0x8d8] sm:$0xff]
        %v533 = vld [vmem:[%s200 + $0x8e0] sm:$0xff]
        %v534 = vld [vmem:[%s200 + $0x8e8] sm:$0xff]
        %v535 = vld [vmem:[%s200 + $0x8f0] sm:$0xff]
        %v536 = vld [vmem:[%s200 + $0x8f8] sm:$0xff]
        %v537 = vld [vmem:[%s200 + $0x900] sm:$0xff]
        %v538 = vld [vmem:[%s200 + $0x908] sm:$0xff]
        %v539 = vld [vmem:[%s200 + $0x910] sm:$0xff]
        %v540 = vld [vmem:[%s200 + $0x918] sm:$0xff]
        %v541 = vld [vmem:[%s200 + $0x920] sm:$0xff]
        %v542 = vld [vmem:[%s200 + $0x928] sm:$0xff]
        %v543 = vld [vmem:[%s200 + $0x930] sm:$0xff]
        %v544 = vld [vmem:[%s200 + $0x938] sm:$0xff]
        %v545 = vld [vmem:[%s200 + $0x940] sm:$0xff]
        %v546 = vld [vmem:[%s200 + $0x948] sm:$0xff]
        %v547 = vld [vmem:[%s200 + $0x950] sm:$0xff]
        %v548 = vld [vmem:[%s200 + $0x958] sm:$0xff]
        %v549 = vld [vmem:[%s200 + $0x960] sm:$0xff]
        %v550 = vld [vmem:[%s200 + $0x968] sm:$0xff]
        %v551 = vld [vmem:[%s200 + $0x970] sm:$0xff]
        %v552 = vld [vmem:[%s200 + $0x978] sm:$0xff]
        %v553 = vld [vmem:[%s200 + $0x980] sm:$0xff]
        %v554 = vld [vmem:[%s200 + $0x988] sm:$0xff]
        %v555 = vld [vmem:[%s200 + $0x990] sm:$0xff]
        %v556 = vld [vmem:[%s200 + $0x998] sm:$0xff]
        %v557 = vld [vmem:[%s200 + $0x9a0] sm:$0xff]
        %v558 = vld [vmem:[%s200 + $0x9a8] sm:$0xff]
        %v559 = vld [vmem:[%s200 + $0x9b0] sm:$0xff]
        %v560 = vld [vmem:[%s200 + $0x9b8] sm:$0xff]
        %v561 = vld [vmem:[%s200 + $0x9c0] sm:$0xff]
        %v562 = vld [vmem:[%s200 + $0x9c8] sm:$0xff]
        %v563 = vld [vmem:[%s200 + $0x9d0] sm:$0xff]
        %v564 = vld [vmem:[%s200 + $0x9d8] sm:$0xff]
        %v565 = vld [vmem:[%s200 + $0x9e0] sm:$0xff]
        %v566 = vld [vmem:[%s200 + $0x9e8] sm:$0xff]
        %v567 = vld [vmem:[%s200 + $0x9f0] sm:$0xff]
        %v568 = vld [vmem:[%s200 + $0x9f8] sm:$0xff]
        %v569 = vld [vmem:[%s200 + $0xa00] sm:$0xff]
        %v570 = vld [vmem:[%s200 + $0xa08] sm:$0xff]
        %v571 = vld [vmem:[%s200 + $0xa10] sm:$0xff]
        %v572 = vld [vmem:[%s200 + $0xa18] sm:$0xff]
        %v573 = vld [vmem:[%s200 + $0xa20] sm:$0xff]
        %v574 = vld [vmem:[%s200 + $0xa28] sm:$0xff]
        %v575 = vld [vmem:[%s200 + $0xa30] sm:$0xff]
        %v576 = vld [vmem:[%s200 + $0xa38] sm:$0xff]
        %v577 = vld [vmem:[%s200 + $0xa40] sm:$0xff]
        %v578 = vld [vmem:[%s200 + $0xa48] sm:$0xff]
        %v579 = vld [vmem:[%s200 + $0xa50] sm:$0xff]
        %v580 = vld [vmem:[%s200 + $0xa58] sm:$0xff]
        %v581 = vld [vmem:[%s200 + $0xa60] sm:$0xff]
        %v582 = vld [vmem:[%s200 + $0xa68] sm:$0xff]
        %v583 = vld [vmem:[%s200 + $0xa70] sm:$0xff]
        %v584 = vld [vmem:[%s200 + $0xa78] sm:$0xff]
        %v585 = vld [vmem:[%s200 + $0xa80] sm:$0xff]
        %v586 = vld [vmem:[%s200 + $0xa88] sm:$0xff]
        %v587 = vld [vmem:[%s200 + $0xa90] sm:$0xff]
        %v588 = vld [vmem:[%s200 + $0xa98] sm:$0xff]
        %v589 = vld [vmem:[%s200 + $0xaa0] sm:$0xff]
        %v590 = vld [vmem:[%s200 + $0xaa8] sm:$0xff]
        %v591 = vld [vmem:[%s200 + $0xab0] sm:$0xff]
        %v592 = vld [vmem:[%s200 + $0xab8] sm:$0xff]
        %v593 = vld [vmem:[%s200 + $0xac0] sm:$0xff]
        %v594 = vld [vmem:[%s200 + $0xac8] sm:$0xff]
        %v595 = vld [vmem:[%s200 + $0xad0] sm:$0xff]
        %v596 = vld [vmem:[%s200 + $0xad8] sm:$0xff]
        %v597 = vld [vmem:[%s200 + $0xae0] sm:$0xff]
        %v598 = vld [vmem:[%s200 + $0xae8] sm:$0xff]
        %v599 = vld [vmem:[%s200 + $0xaf0] sm:$0xff]
        %v600 = vld [vmem:[%s200 + $0xaf8] sm:$0xff]
        %v601 = vld [vmem:[%s200 + $0xb00] sm:$0xff]
        %v602 = vld [vmem:[%s200 + $0xb08] sm:$0xff]
        %v603 = vld [vmem:[%s200 + $0xb10] sm:$0xff]
        %v604 = vld [vmem:[%s200 + $0xb18] sm:$0xff]
        %v605 = vld [vmem:[%s200 + $0xb20] sm:$0xff]
        %v606 = vld [vmem:[%s200 + $0xb28] sm:$0xff]
        %v607 = vld [vmem:[%s200 + $0xb30] sm:$0xff]
        %v608 = vld [vmem:[%s200 + $0xb38] sm:$0xff]
        %v609 = vld [vmem:[%s200 + $0xb40] sm:$0xff]
        %v610 = vld [vmem:[%s200 + $0xb48] sm:$0xff]
        %v611 = vld [vmem:[%s200 + $0xb50] sm:$0xff]
        %v612 = vld [vmem:[%s200 + $0xb58] sm:$0xff]
        %v613 = vld [vmem:[%s200 + $0xb60] sm:$0xff]
        %v614 = vld [vmem:[%s200 + $0xb68] sm:$0xff]
        %v615 = vld [vmem:[%s200 + $0xb70] sm:$0xff]
        %v616 = vld [vmem:[%s200 + $0xb78] sm:$0xff]
        %v617 = vld [vmem:[%s200 + $0xb80] sm:$0xff]
        %v618 = vld [vmem:[%s200 + $0xb88] sm:$0xff]
        %v619 = vld [vmem:[%s200 + $0xb90] sm:$0xff]
        %v620 = vld [vmem:[%s200 + $0xb98] sm:$0xff]
        %v621 = vld [vmem:[%s200 + $0xba0] sm:$0xff]
        %v622 = vld [vmem:[%s200 + $0xba8] sm:$0xff]
        %v623 = vld [vmem:[%s200 + $0xbb0] sm:$0xff]
        %v624 = vld [vmem:[%s200 + $0xbb8] sm:$0xff]
        %v625 = vld [vmem:[%s200 + $0xbc0] sm:$0xff]
        %v626 = vld [vmem:[%s200 + $0xbc8] sm:$0xff]
        %v627 = vld [vmem:[%s200 + $0xbd0] sm:$0xff]
        %v628 = vld [vmem:[%s200 + $0xbd8] sm:$0xff]
        %v629 = vld [vmem:[%s200 + $0xbe0] sm:$0xff]
        %v630 = vld [vmem:[%s200 + $0xbe8] sm:$0xff]
        %v631 = vld [vmem:[%s200 + $0xbf0] sm:$0xff]
        %v632 = vld [vmem:[%s200 + $0xbf8] sm:$0xff]
        %v633 = vld [vmem:[%s200 + $0xc00] sm:$0xff]
        %v634 = vld [vmem:[%s200 + $0xc08] sm:$0xff]
        %v635 = vld [vmem:[%s200 + $0xc10] sm:$0xff]
        %v636 = vld [vmem:[%s200 + $0xc18] sm:$0xff]
        %v637 = vld [vmem:[%s200 + $0xc20] sm:$0xff]
        %v638 = vld [vmem:[%s200 + $0xc28] sm:$0xff]
        %v639 = vld [vmem:[%s200 + $0xc30] sm:$0xff]
        %v640 = vld [vmem:[%s200 + $0xc38] sm:$0xff]
        %v641 = vld [vmem:[%s200 + $0xc40] sm:$0xff]
        %v642 = vld [vmem:[%s200 + $0xc48] sm:$0xff]
        %v643 = vld [vmem:[%s200 + $0xc50] sm:$0xff]
        %v644 = vld [vmem:[%s200 + $0xc58] sm:$0xff]
        %v645 = vld [vmem:[%s200 + $0xc60] sm:$0xff]
        %v646 = vld [vmem:[%s200 + $0xc68] sm:$0xff]
        %v647 = vld [vmem:[%s200 + $0xc70] sm:$0xff]
        %v648 = vld [vmem:[%s200 + $0xc78] sm:$0xff]
        %v649 = vld [vmem:[%s200 + $0xc80] sm:$0xff]
        %v650 = vld [vmem:[%s200 + $0xc88] sm:$0xff]
        %v651 = vld [vmem:[%s200 + $0xc90] sm:$0xff]
        %v652 = vld [vmem:[%s200 + $0xc98] sm:$0xff]
        %v653 = vld [vmem:[%s200 + $0xca0] sm:$0xff]
        %v654 = vld [vmem:[%s200 + $0xca8] sm:$0xff]
        %v655 = vld [vmem:[%s200 + $0xcb0] sm:$0xff]
        %v656 = vld [vmem:[%s200 + $0xcb8] sm:$0xff]
        %v657 = vld [vmem:[%s200 + $0xcc0] sm:$0xff]
        %v658 = vld [vmem:[%s200 + $0xcc8] sm:$0xff]
        %v659 = vld [vmem:[%s200 + $0xcd0] sm:$0xff]
        %v660 = vld [vmem:[%s200 + $0xcd8] sm:$0xff]
        %v661 = vld [vmem:[%s200 + $0xce0] sm:$0xff]
        %v662 = vld [vmem:[%s200 + $0xce8] sm:$0xff]
        %v663 = vld [vmem:[%s200 + $0xcf0] sm:$0xff]
        %v664 = vld [vmem:[%s200 + $0xcf8] sm:$0xff]
        %v665 = vld [vmem:[%s200 + $0xd00] sm:$0xff]
        %v666 = vld [vmem:[%s200 + $0xd08] sm:$0xff]
        %v667 = vld [vmem:[%s200 + $0xd10] sm:$0xff]
        %v668 = vld [vmem:[%s200 + $0xd18] sm:$0xff]
        %v669 = vld [vmem:[%s200 + $0xd20] sm:$0xff]
        %v670 = vld [vmem:[%s200 + $0xd28] sm:$0xff]
        %v671 = vld [vmem:[%s200 + $0xd30] sm:$0xff]
        %v672 = vld [vmem:[%s200 + $0xd38] sm:$0xff]
        %v673 = vld [vmem:[%s200 + $0xd40] sm:$0xff]
        %v674 = vld [vmem:[%s200 + $0xd48] sm:$0xff]
        %v675 = vld [vmem:[%s200 + $0xd50] sm:$0xff]
        %v676 = vld [vmem:[%s200 + $0xd58] sm:$0xff]
        %v677 = vld [vmem:[%s200 + $0xd60] sm:$0xff]
        %v678 = vld [vmem:[%s200 + $0xd68] sm:$0xff]
        %v679 = vld [vmem:[%s200 + $0xd70] sm:$0xff]
        %v680 = vld [vmem:[%s200 + $0xd78] sm:$0xff]
        %v681 = vld [vmem:[%s200 + $0xd80] sm:$0xff]
        %v682 = vld [vmem:[%s200 + $0xd88] sm:$0xff]
        %v683 = vld [vmem:[%s200 + $0xd90] sm:$0xff]
        %v684 = vld [vmem:[%s200 + $0xd98] sm:$0xff]
        %v685 = vld [vmem:[%s200 + $0xda0] sm:$0xff]
        %v686 = vld [vmem:[%s200 + $0xda8] sm:$0xff]
        %v687 = vld [vmem:[%s200 + $0xdb0] sm:$0xff]
        %v688 = vld [vmem:[%s200 + $0xdb8] sm:$0xff]
        %v689 = vld [vmem:[%s200 + $0xdc0] sm:$0xff]
        %v690 = vld [vmem:[%s200 + $0xdc8] sm:$0xff]
        %v691 = vld [vmem:[%s200 + $0xdd0] sm:$0xff]
        %v692 = vld [vmem:[%s200 + $0xdd8] sm:$0xff]
        %v693 = vld [vmem:[%s200 + $0xde0] sm:$0xff]
        %v694 = vld [vmem:[%s200 + $0xde8] sm:$0xff]
        %v695 = vld [vmem:[%s200 + $0xdf0] sm:$0xff]
        %v696 = vld [vmem:[%s200 + $0xdf8] sm:$0xff]
        %v697 = vld [vmem:[%s200 + $0xe00] sm:$0xff]
        %v698 = vld [vmem:[%s200 + $0xe08] sm:$0xff]
        %v699 = vld [vmem:[%s200 + $0xe10] sm:$0xff]
        %v700 = vld [vmem:[%s200 + $0xe18] sm:$0xff]
        %v701 = vld [vmem:[%s200 + $0xe20] sm:$0xff]
        %v702 = vld [vmem:[%s200 + $0xe28] sm:$0xff]
        %v703 = vld [vmem:[%s200 + $0xe30] sm:$0xff]
        %v704 = vld [vmem:[%s200 + $0xe38] sm:$0xff]
        %v705 = vld [vmem:[%s200 + $0xe40] sm:$0xff]
        %v706 = vld [vmem:[%s200 + $0xe48] sm:$0xff]
        %v707 = vld [vmem:[%s200 + $0xe50] sm:$0xff]
        %v708 = vld [vmem:[%s200 + $0xe58] sm:$0xff]
        %v709 = vld [vmem:[%s200 + $0xe60] sm:$0xff]
        %v710 = vld [vmem:[%s200 + $0xe68] sm:$0xff]
        %v711 = vld [vmem:[%s200 + $0xe70] sm:$0xff]
        %v712 = vld [vmem:[%s200 + $0xe78] sm:$0xff]
        %v713 = vld [vmem:[%s200 + $0xe80] sm:$0xff]
        %v714 = vld [vmem:[%s200 + $0xe88] sm:$0xff]
        %v715 = vld [vmem:[%s200 + $0xe90] sm:$0xff]
        %v716 = vld [vmem:[%s200 + $0xe98] sm:$0xff]
        %v717 = vld [vmem:[%s200 + $0xea0] sm:$0xff]
        %v718 = vld [vmem:[%s200 + $0xea8] sm:$0xff]
        %v719 = vld [vmem:[%s200 + $0xeb0] sm:$0xff]
        %v720 = vld [vmem:[%s200 + $0xeb8] sm:$0xff]
        %v721 = vld [vmem:[%s200 + $0xec0] sm:$0xff]
        %v722 = vld [vmem:[%s200 + $0xec8] sm:$0xff]
        %v723 = vld [vmem:[%s200 + $0xed0] sm:$0xff]
        %v724 = vld [vmem:[%s200 + $0xed8] sm:$0xff]
        %v725 = vld [vmem:[%s200 + $0xee0] sm:$0xff]
        %v726 = vld [vmem:[%s200 + $0xee8] sm:$0xff]
        %v727 = vld [vmem:[%s200 + $0xef0] sm:$0xff]
        %v728 = vld [vmem:[%s200 + $0xef8] sm:$0xff]
        %v729 = vld [vmem:[%s200 + $0xf00] sm:$0xff]
        %v730 = vld [vmem:[%s200 + $0xf08] sm:$0xff]
        %v731 = vld [vmem:[%s200 + $0xf10] sm:$0xff]
        %v732 = vld [vmem:[%s200 + $0xf18] sm:$0xff]
        %v733 = vld [vmem:[%s200 + $0xf20] sm:$0xff]
        %v734 = vld [vmem:[%s200 + $0xf28] sm:$0xff]
        %v735 = vld [vmem:[%s200 + $0xf30] sm:$0xff]
        %v736 = vld [vmem:[%s200 + $0xf38] sm:$0xff]
        %v737 = vld [vmem:[%s200 + $0xf40] sm:$0xff]
        %v738 = vld [vmem:[%s200 + $0xf48] sm:$0xff]
        %v739 = vld [vmem:[%s200 + $0xf50] sm:$0xff]
        %v740 = vld [vmem:[%s200 + $0xf58] sm:$0xff]
        %v741 = vld [vmem:[%s200 + $0xf60] sm:$0xff]
        %v742 = vld [vmem:[%s200 + $0xf68] sm:$0xff]
        %v743 = vld [vmem:[%s200 + $0xf70] sm:$0xff]
        %v744 = vld [vmem:[%s200 + $0xf78] sm:$0xff]
        %v745 = vld [vmem:[%s200 + $0xf80] sm:$0xff]
        %v746 = vld [vmem:[%s200 + $0xf88] sm:$0xff]
        %v747 = vld [vmem:[%s200 + $0xf90] sm:$0xff]
        %v748 = vld [vmem:[%s200 + $0xf98] sm:$0xff]
        %v749 = vld [vmem:[%s200 + $0xfa0] sm:$0xff]
        %v750 = vld [vmem:[%s200 + $0xfa8] sm:$0xff]
        %v751 = vld [vmem:[%s200 + $0xfb0] sm:$0xff]
        %v752 = vld [vmem:[%s200 + $0xfb8] sm:$0xff]
        %v753 = vld [vmem:[%s200 + $0xfc0] sm:$0xff]
        %v754 = vld [vmem:[%s200 + $0xfc8] sm:$0xff]
        %v755 = vld [vmem:[%s200 + $0xfd0] sm:$0xff]
        %v756 = vld [vmem:[%s200 + $0xfd8] sm:$0xff]
        %v757 = vld [vmem:[%s200 + $0xfe0] sm:$0xff]
        %v758 = vld [vmem:[%s200 + $0xfe8] sm:$0xff]
        %v759 = vld [vmem:[%s200 + $0xff0] sm:$0xff]
        %v760 = vld [vmem:[%s200 + $0xff8] sm:$0xff]
        %v761 = vld [vmem:[%s210] sm:$0xff]
        %v762 = vld [vmem:[%s210 + $0x8] sm:$0xff]
        %v763 = vld [vmem:[%s210 + $0x10] sm:$0xff]
        %v764 = vld [vmem:[%s210 + $0x18] sm:$0xff]
        %v765 = vld [vmem:[%s210 + $0x20] sm:$0xff]
        %v766 = vld [vmem:[%s210 + $0x28] sm:$0xff]
        %v767 = vld [vmem:[%s210 + $0x30] sm:$0xff]
        %v768 = vld [vmem:[%s210 + $0x38] sm:$0xff]
        %v777 = vperm.slane %v761, 0
        %v778 = vperm.slane %v761, 1
        %v779 = vperm.slane %v761, 2
        %v780 = vperm.slane %v761, 3
        %v781 = vperm.slane %v761, 4
        %v782 = vperm.slane %v761, 5
        %v783 = vperm.slane %v761, 6
        %v784 = vperm.slane %v761, 7
        %v785 = vperm.slane %v762, 0
        %v786 = vperm.slane %v762, 1
        %v787 = vperm.slane %v762, 2
        %v788 = vperm.slane %v762, 3
        %v789 = vperm.slane %v762, 4
        %v790 = vperm.slane %v762, 5
        %v791 = vperm.slane %v762, 6
        %v792 = vperm.slane %v762, 7
        %v793 = vperm.slane %v763, 0
        %v794 = vperm.slane %v763, 1
        %v795 = vperm.slane %v763, 2
        %v796 = vperm.slane %v763, 3
        %v797 = vperm.slane %v763, 4
        %v798 = vperm.slane %v763, 5
        %v799 = vperm.slane %v763, 6
        %v800 = vperm.slane %v763, 7
        %v801 = vperm.slane %v764, 0
        %v802 = vperm.slane %v764, 1
        %v803 = vperm.slane %v764, 2
        %v804 = vperm.slane %v764, 3
        %v805 = vperm.slane %v764, 4
        %v806 = vperm.slane %v764, 5
        %v807 = vperm.slane %v764, 6
        %v808 = vperm.slane %v764, 7
        %v809 = vperm.slane %v765, 0
        %v810 = vperm.slane %v765, 1
        %v811 = vperm.slane %v765, 2
        %v812 = vperm.slane %v765, 3
        %v813 = vperm.slane %v765, 4
        %v814 = vperm.slane %v765, 5
        %v815 = vperm.slane %v765, 6
        %v816 = vperm.slane %v765, 7
        %v817 = vperm.slane %v766, 0
        %v818 = vperm.slane %v766, 1
        %v819 = vperm.slane %v766, 2
        %v820 = vperm.slane %v766, 3
        %v821 = vperm.slane %v766, 4
        %v822 = vperm.slane %v766, 5
        %v823 = vperm.slane %v766, 6
        %v824 = vperm.slane %v766, 7
        %v825 = vperm.slane %v767, 0
        %v826 = vperm.slane %v767, 1
        %v827 = vperm.slane %v767, 2
        %v828 = vperm.slane %v767, 3
        %v829 = vperm.slane %v767, 4
        %v830 = vperm.slane %v767, 5
        %v831 = vperm.slane %v767, 6
        %v832 = vperm.slane %v767, 7
        %v833 = vperm.slane %v768, 0
        %v834 = vperm.slane %v768, 1
        %v835 = vperm.slane %v768, 2
        %v836 = vperm.slane %v768, 3
        %v837 = vperm.slane %v768, 4
        %v838 = vperm.slane %v768, 5
        %v839 = vperm.slane %v768, 6
        %v840 = vperm.slane %v768, 7
        %v1417 = vunpack.c.l.b16 %v249
        %v1418 = vunpack.c.h.b16 %v249
        %v1419 = vunpack.c.l.b16 %v250
        %v1420 = vunpack.c.h.b16 %v250
        %v1421 = vunpack.c.l.b16 %v251
        %v1422 = vunpack.c.h.b16 %v251
        %v1423 = vunpack.c.l.b16 %v252
        %v1424 = vunpack.c.h.b16 %v252
        %v1425 = vunpack.c.l.b16 %v253
        %v1426 = vunpack.c.h.b16 %v253
        %v1427 = vunpack.c.l.b16 %v254
        %v1428 = vunpack.c.h.b16 %v254
        %v1429 = vunpack.c.l.b16 %v255
        %v1430 = vunpack.c.h.b16 %v255
        %v1431 = vunpack.c.l.b16 %v256
        %v1432 = vunpack.c.h.b16 %v256
        %v1433 = vunpack.c.l.b16 %v257
        %v1434 = vunpack.c.h.b16 %v257
        %v1435 = vunpack.c.l.b16 %v258
        %v1436 = vunpack.c.h.b16 %v258
        %v1437 = vunpack.c.l.b16 %v259
        %v1438 = vunpack.c.h.b16 %v259
        %v1439 = vunpack.c.l.b16 %v260
        %v1440 = vunpack.c.h.b16 %v260
        %v1441 = vunpack.c.l.b16 %v261
        %v1442 = vunpack.c.h.b16 %v261
        %v1443 = vunpack.c.l.b16 %v262
        %v1444 = vunpack.c.h.b16 %v262
        %v1445 = vunpack.c.l.b16 %v263
        %v1446 = vunpack.c.h.b16 %v263
        %v1447 = vunpack.c.l.b16 %v264
        %v1448 = vunpack.c.h.b16 %v264
        %v1449 = vunpack.c.l.b16 %v265
        %v1450 = vunpack.c.h.b16 %v265
        %v1451 = vunpack.c.l.b16 %v266
        %v1452 = vunpack.c.h.b16 %v266
        %v1453 = vunpack.c.l.b16 %v267
        %v1454 = vunpack.c.h.b16 %v267
        %v1455 = vunpack.c.l.b16 %v268
        %v1456 = vunpack.c.h.b16 %v268
        %v1457 = vunpack.c.l.b16 %v269
        %v1458 = vunpack.c.h.b16 %v269
        %v1459 = vunpack.c.l.b16 %v270
        %v1460 = vunpack.c.h.b16 %v270
        %v1461 = vunpack.c.l.b16 %v271
        %v1462 = vunpack.c.h.b16 %v271
        %v1463 = vunpack.c.l.b16 %v272
        %v1464 = vunpack.c.h.b16 %v272
        %v1465 = vunpack.c.l.b16 %v273
        %v1466 = vunpack.c.h.b16 %v273
        %v1467 = vunpack.c.l.b16 %v274
        %v1468 = vunpack.c.h.b16 %v274
        %v1469 = vunpack.c.l.b16 %v275
        %v1470 = vunpack.c.h.b16 %v275
        %v1471 = vunpack.c.l.b16 %v276
        %v1472 = vunpack.c.h.b16 %v276
        %v1473 = vunpack.c.l.b16 %v277
        %v1474 = vunpack.c.h.b16 %v277
        %v1475 = vunpack.c.l.b16 %v278
        %v1476 = vunpack.c.h.b16 %v278
        %v1477 = vunpack.c.l.b16 %v279
        %v1478 = vunpack.c.h.b16 %v279
        %v1479 = vunpack.c.l.b16 %v280
        %v1480 = vunpack.c.h.b16 %v280
        %v1481 = vunpack.c.l.b16 %v281
        %v1482 = vunpack.c.h.b16 %v281
        %v1483 = vunpack.c.l.b16 %v282
        %v1484 = vunpack.c.h.b16 %v282
        %v1485 = vunpack.c.l.b16 %v283
        %v1486 = vunpack.c.h.b16 %v283
        %v1487 = vunpack.c.l.b16 %v284
        %v1488 = vunpack.c.h.b16 %v284
        %v1489 = vunpack.c.l.b16 %v285
        %v1490 = vunpack.c.h.b16 %v285
        %v1491 = vunpack.c.l.b16 %v286
        %v1492 = vunpack.c.h.b16 %v286
        %v1493 = vunpack.c.l.b16 %v287
        %v1494 = vunpack.c.h.b16 %v287
        %v1495 = vunpack.c.l.b16 %v288
        %v1496 = vunpack.c.h.b16 %v288
        %v1497 = vunpack.c.l.b16 %v289
        %v1498 = vunpack.c.h.b16 %v289
        %v1499 = vunpack.c.l.b16 %v290
        %v1500 = vunpack.c.h.b16 %v290
        %v1501 = vunpack.c.l.b16 %v291
        %v1502 = vunpack.c.h.b16 %v291
        %v1503 = vunpack.c.l.b16 %v292
        %v1504 = vunpack.c.h.b16 %v292
        %v1505 = vunpack.c.l.b16 %v293
        %v1506 = vunpack.c.h.b16 %v293
        %v1507 = vunpack.c.l.b16 %v294
        %v1508 = vunpack.c.h.b16 %v294
        %v1509 = vunpack.c.l.b16 %v295
        %v1510 = vunpack.c.h.b16 %v295
        %v1511 = vunpack.c.l.b16 %v296
        %v1512 = vunpack.c.h.b16 %v296
        %v1513 = vunpack.c.l.b16 %v297
        %v1514 = vunpack.c.h.b16 %v297
        %v1515 = vunpack.c.l.b16 %v298
        %v1516 = vunpack.c.h.b16 %v298
        %v1517 = vunpack.c.l.b16 %v299
        %v1518 = vunpack.c.h.b16 %v299
        %v1519 = vunpack.c.l.b16 %v300
        %v1520 = vunpack.c.h.b16 %v300
        %v1521 = vunpack.c.l.b16 %v301
        %v1522 = vunpack.c.h.b16 %v301
        %v1523 = vunpack.c.l.b16 %v302
        %v1524 = vunpack.c.h.b16 %v302
        %v1525 = vunpack.c.l.b16 %v303
        %v1526 = vunpack.c.h.b16 %v303
        %v1527 = vunpack.c.l.b16 %v304
        %v1528 = vunpack.c.h.b16 %v304
        %v1529 = vunpack.c.l.b16 %v305
        %v1530 = vunpack.c.h.b16 %v305
        %v1531 = vunpack.c.l.b16 %v306
        %v1532 = vunpack.c.h.b16 %v306
        %v1533 = vunpack.c.l.b16 %v307
        %v1534 = vunpack.c.h.b16 %v307
        %v1535 = vunpack.c.l.b16 %v308
        %v1536 = vunpack.c.h.b16 %v308
        %v1537 = vunpack.c.l.b16 %v309
        %v1538 = vunpack.c.h.b16 %v309
        %v1539 = vunpack.c.l.b16 %v310
        %v1540 = vunpack.c.h.b16 %v310
        %v1541 = vunpack.c.l.b16 %v311
        %v1542 = vunpack.c.h.b16 %v311
        %v1543 = vunpack.c.l.b16 %v312
        %v1544 = vunpack.c.h.b16 %v312
        %v1545 = vunpack.c.l.b16 %v313
        %v1546 = vunpack.c.h.b16 %v313
        %v1547 = vunpack.c.l.b16 %v314
        %v1548 = vunpack.c.h.b16 %v314
        %v1549 = vunpack.c.l.b16 %v315
        %v1550 = vunpack.c.h.b16 %v315
        %v1551 = vunpack.c.l.b16 %v316
        %v1552 = vunpack.c.h.b16 %v316
        %v1553 = vunpack.c.l.b16 %v317
        %v1554 = vunpack.c.h.b16 %v317
        %v1555 = vunpack.c.l.b16 %v318
        %v1556 = vunpack.c.h.b16 %v318
        %v1557 = vunpack.c.l.b16 %v319
        %v1558 = vunpack.c.h.b16 %v319
        %v1559 = vunpack.c.l.b16 %v320
        %v1560 = vunpack.c.h.b16 %v320
        %v1561 = vunpack.c.l.b16 %v321
        %v1562 = vunpack.c.h.b16 %v321
        %v1563 = vunpack.c.l.b16 %v322
        %v1564 = vunpack.c.h.b16 %v322
        %v1565 = vunpack.c.l.b16 %v323
        %v1566 = vunpack.c.h.b16 %v323
        %v1567 = vunpack.c.l.b16 %v324
        %v1568 = vunpack.c.h.b16 %v324
        %v1569 = vunpack.c.l.b16 %v325
        %v1570 = vunpack.c.h.b16 %v325
        %v1571 = vunpack.c.l.b16 %v326
        %v1572 = vunpack.c.h.b16 %v326
        %v1573 = vunpack.c.l.b16 %v327
        %v1574 = vunpack.c.h.b16 %v327
        %v1575 = vunpack.c.l.b16 %v328
        %v1576 = vunpack.c.h.b16 %v328
        %v1577 = vunpack.c.l.b16 %v329
        %v1578 = vunpack.c.h.b16 %v329
        %v1579 = vunpack.c.l.b16 %v330
        %v1580 = vunpack.c.h.b16 %v330
        %v1581 = vunpack.c.l.b16 %v331
        %v1582 = vunpack.c.h.b16 %v331
        %v1583 = vunpack.c.l.b16 %v332
        %v1584 = vunpack.c.h.b16 %v332
        %v1585 = vunpack.c.l.b16 %v333
        %v1586 = vunpack.c.h.b16 %v333
        %v1587 = vunpack.c.l.b16 %v334
        %v1588 = vunpack.c.h.b16 %v334
        %v1589 = vunpack.c.l.b16 %v335
        %v1590 = vunpack.c.h.b16 %v335
        %v1591 = vunpack.c.l.b16 %v336
        %v1592 = vunpack.c.h.b16 %v336
        %v1593 = vunpack.c.l.b16 %v337
        %v1594 = vunpack.c.h.b16 %v337
        %v1595 = vunpack.c.l.b16 %v338
        %v1596 = vunpack.c.h.b16 %v338
        %v1597 = vunpack.c.l.b16 %v339
        %v1598 = vunpack.c.h.b16 %v339
        %v1599 = vunpack.c.l.b16 %v340
        %v1600 = vunpack.c.h.b16 %v340
        %v1601 = vunpack.c.l.b16 %v341
        %v1602 = vunpack.c.h.b16 %v341
        %v1603 = vunpack.c.l.b16 %v342
        %v1604 = vunpack.c.h.b16 %v342
        %v1605 = vunpack.c.l.b16 %v343
        %v1606 = vunpack.c.h.b16 %v343
        %v1607 = vunpack.c.l.b16 %v344
        %v1608 = vunpack.c.h.b16 %v344
        %v1609 = vunpack.c.l.b16 %v345
        %v1610 = vunpack.c.h.b16 %v345
        %v1611 = vunpack.c.l.b16 %v346
        %v1612 = vunpack.c.h.b16 %v346
        %v1613 = vunpack.c.l.b16 %v347
        %v1614 = vunpack.c.h.b16 %v347
        %v1615 = vunpack.c.l.b16 %v348
        %v1616 = vunpack.c.h.b16 %v348
        %v1617 = vunpack.c.l.b16 %v349
        %v1618 = vunpack.c.h.b16 %v349
        %v1619 = vunpack.c.l.b16 %v350
        %v1620 = vunpack.c.h.b16 %v350
        %v1621 = vunpack.c.l.b16 %v351
        %v1622 = vunpack.c.h.b16 %v351
        %v1623 = vunpack.c.l.b16 %v352
        %v1624 = vunpack.c.h.b16 %v352
        %v1625 = vunpack.c.l.b16 %v353
        %v1626 = vunpack.c.h.b16 %v353
        %v1627 = vunpack.c.l.b16 %v354
        %v1628 = vunpack.c.h.b16 %v354
        %v1629 = vunpack.c.l.b16 %v355
        %v1630 = vunpack.c.h.b16 %v355
        %v1631 = vunpack.c.l.b16 %v356
        %v1632 = vunpack.c.h.b16 %v356
        %v1633 = vunpack.c.l.b16 %v357
        %v1634 = vunpack.c.h.b16 %v357
        %v1635 = vunpack.c.l.b16 %v358
        %v1636 = vunpack.c.h.b16 %v358
        %v1637 = vunpack.c.l.b16 %v359
        %v1638 = vunpack.c.h.b16 %v359
        %v1639 = vunpack.c.l.b16 %v360
        %v1640 = vunpack.c.h.b16 %v360
        %v1641 = vunpack.c.l.b16 %v361
        %v1642 = vunpack.c.h.b16 %v361
        %v1643 = vunpack.c.l.b16 %v362
        %v1644 = vunpack.c.h.b16 %v362
        %v1645 = vunpack.c.l.b16 %v363
        %v1646 = vunpack.c.h.b16 %v363
        %v1647 = vunpack.c.l.b16 %v364
        %v1648 = vunpack.c.h.b16 %v364
        %v1649 = vunpack.c.l.b16 %v365
        %v1650 = vunpack.c.h.b16 %v365
        %v1651 = vunpack.c.l.b16 %v366
        %v1652 = vunpack.c.h.b16 %v366
        %v1653 = vunpack.c.l.b16 %v367
        %v1654 = vunpack.c.h.b16 %v367
        %v1655 = vunpack.c.l.b16 %v368
        %v1656 = vunpack.c.h.b16 %v368
        %v1657 = vunpack.c.l.b16 %v369
        %v1658 = vunpack.c.h.b16 %v369
        %v1659 = vunpack.c.l.b16 %v370
        %v1660 = vunpack.c.h.b16 %v370
        %v1661 = vunpack.c.l.b16 %v371
        %v1662 = vunpack.c.h.b16 %v371
        %v1663 = vunpack.c.l.b16 %v372
        %v1664 = vunpack.c.h.b16 %v372
        %v1665 = vunpack.c.l.b16 %v373
        %v1666 = vunpack.c.h.b16 %v373
        %v1667 = vunpack.c.l.b16 %v374
        %v1668 = vunpack.c.h.b16 %v374
        %v1669 = vunpack.c.l.b16 %v375
        %v1670 = vunpack.c.h.b16 %v375
        %v1671 = vunpack.c.l.b16 %v376
        %v1672 = vunpack.c.h.b16 %v376
        %v1673 = vunpack.c.l.b16 %v377
        %v1674 = vunpack.c.h.b16 %v377
        %v1675 = vunpack.c.l.b16 %v378
        %v1676 = vunpack.c.h.b16 %v378
        %v1677 = vunpack.c.l.b16 %v379
        %v1678 = vunpack.c.h.b16 %v379
        %v1679 = vunpack.c.l.b16 %v380
        %v1680 = vunpack.c.h.b16 %v380
        %v1681 = vunpack.c.l.b16 %v381
        %v1682 = vunpack.c.h.b16 %v381
        %v1683 = vunpack.c.l.b16 %v382
        %v1684 = vunpack.c.h.b16 %v382
        %v1685 = vunpack.c.l.b16 %v383
        %v1686 = vunpack.c.h.b16 %v383
        %v1687 = vunpack.c.l.b16 %v384
        %v1688 = vunpack.c.h.b16 %v384
        %v1689 = vunpack.c.l.b16 %v385
        %v1690 = vunpack.c.h.b16 %v385
        %v1691 = vunpack.c.l.b16 %v386
        %v1692 = vunpack.c.h.b16 %v386
        %v1693 = vunpack.c.l.b16 %v387
        %v1694 = vunpack.c.h.b16 %v387
        %v1695 = vunpack.c.l.b16 %v388
        %v1696 = vunpack.c.h.b16 %v388
        %v1697 = vunpack.c.l.b16 %v389
        %v1698 = vunpack.c.h.b16 %v389
        %v1699 = vunpack.c.l.b16 %v390
        %v1700 = vunpack.c.h.b16 %v390
        %v1701 = vunpack.c.l.b16 %v391
        %v1702 = vunpack.c.h.b16 %v391
        %v1703 = vunpack.c.l.b16 %v392
        %v1704 = vunpack.c.h.b16 %v392
        %v1705 = vunpack.c.l.b16 %v393
        %v1706 = vunpack.c.h.b16 %v393
        %v1707 = vunpack.c.l.b16 %v394
        %v1708 = vunpack.c.h.b16 %v394
        %v1709 = vunpack.c.l.b16 %v395
        %v1710 = vunpack.c.h.b16 %v395
        %v1711 = vunpack.c.l.b16 %v396
        %v1712 = vunpack.c.h.b16 %v396
        %v1713 = vunpack.c.l.b16 %v397
        %v1714 = vunpack.c.h.b16 %v397
        %v1715 = vunpack.c.l.b16 %v398
        %v1716 = vunpack.c.h.b16 %v398
        %v1717 = vunpack.c.l.b16 %v399
        %v1718 = vunpack.c.h.b16 %v399
        %v1719 = vunpack.c.l.b16 %v400
        %v1720 = vunpack.c.h.b16 %v400
        %v1721 = vunpack.c.l.b16 %v401
        %v1722 = vunpack.c.h.b16 %v401
        %v1723 = vunpack.c.l.b16 %v402
        %v1724 = vunpack.c.h.b16 %v402
        %v1725 = vunpack.c.l.b16 %v403
        %v1726 = vunpack.c.h.b16 %v403
        %v1727 = vunpack.c.l.b16 %v404
        %v1728 = vunpack.c.h.b16 %v404
        %v1729 = vunpack.c.l.b16 %v405
        %v1730 = vunpack.c.h.b16 %v405
        %v1731 = vunpack.c.l.b16 %v406
        %v1732 = vunpack.c.h.b16 %v406
        %v1733 = vunpack.c.l.b16 %v407
        %v1734 = vunpack.c.h.b16 %v407
        %v1735 = vunpack.c.l.b16 %v408
        %v1736 = vunpack.c.h.b16 %v408
        %v1737 = vunpack.c.l.b16 %v409
        %v1738 = vunpack.c.h.b16 %v409
        %v1739 = vunpack.c.l.b16 %v410
        %v1740 = vunpack.c.h.b16 %v410
        %v1741 = vunpack.c.l.b16 %v411
        %v1742 = vunpack.c.h.b16 %v411
        %v1743 = vunpack.c.l.b16 %v412
        %v1744 = vunpack.c.h.b16 %v412
        %v1745 = vunpack.c.l.b16 %v413
        %v1746 = vunpack.c.h.b16 %v413
        %v1747 = vunpack.c.l.b16 %v414
        %v1748 = vunpack.c.h.b16 %v414
        %v1749 = vunpack.c.l.b16 %v415
        %v1750 = vunpack.c.h.b16 %v415
        %v1751 = vunpack.c.l.b16 %v416
        %v1752 = vunpack.c.h.b16 %v416
        %v1753 = vunpack.c.l.b16 %v417
        %v1754 = vunpack.c.h.b16 %v417
        %v1755 = vunpack.c.l.b16 %v418
        %v1756 = vunpack.c.h.b16 %v418
        %v1757 = vunpack.c.l.b16 %v419
        %v1758 = vunpack.c.h.b16 %v419
        %v1759 = vunpack.c.l.b16 %v420
        %v1760 = vunpack.c.h.b16 %v420
        %v1761 = vunpack.c.l.b16 %v421
        %v1762 = vunpack.c.h.b16 %v421
        %v1763 = vunpack.c.l.b16 %v422
        %v1764 = vunpack.c.h.b16 %v422
        %v1765 = vunpack.c.l.b16 %v423
        %v1766 = vunpack.c.h.b16 %v423
        %v1767 = vunpack.c.l.b16 %v424
        %v1768 = vunpack.c.h.b16 %v424
        %v1769 = vunpack.c.l.b16 %v425
        %v1770 = vunpack.c.h.b16 %v425
        %v1771 = vunpack.c.l.b16 %v426
        %v1772 = vunpack.c.h.b16 %v426
        %v1773 = vunpack.c.l.b16 %v427
        %v1774 = vunpack.c.h.b16 %v427
        %v1775 = vunpack.c.l.b16 %v428
        %v1776 = vunpack.c.h.b16 %v428
        %v1777 = vunpack.c.l.b16 %v429
        %v1778 = vunpack.c.h.b16 %v429
        %v1779 = vunpack.c.l.b16 %v430
        %v1780 = vunpack.c.h.b16 %v430
        %v1781 = vunpack.c.l.b16 %v431
        %v1782 = vunpack.c.h.b16 %v431
        %v1783 = vunpack.c.l.b16 %v432
        %v1784 = vunpack.c.h.b16 %v432
        %v1785 = vunpack.c.l.b16 %v433
        %v1786 = vunpack.c.h.b16 %v433
        %v1787 = vunpack.c.l.b16 %v434
        %v1788 = vunpack.c.h.b16 %v434
        %v1789 = vunpack.c.l.b16 %v435
        %v1790 = vunpack.c.h.b16 %v435
        %v1791 = vunpack.c.l.b16 %v436
        %v1792 = vunpack.c.h.b16 %v436
        %v1793 = vunpack.c.l.b16 %v437
        %v1794 = vunpack.c.h.b16 %v437
        %v1795 = vunpack.c.l.b16 %v438
        %v1796 = vunpack.c.h.b16 %v438
        %v1797 = vunpack.c.l.b16 %v439
        %v1798 = vunpack.c.h.b16 %v439
        %v1799 = vunpack.c.l.b16 %v440
        %v1800 = vunpack.c.h.b16 %v440
        %v1801 = vunpack.c.l.b16 %v441
        %v1802 = vunpack.c.h.b16 %v441
        %v1803 = vunpack.c.l.b16 %v442
        %v1804 = vunpack.c.h.b16 %v442
        %v1805 = vunpack.c.l.b16 %v443
        %v1806 = vunpack.c.h.b16 %v443
        %v1807 = vunpack.c.l.b16 %v444
        %v1808 = vunpack.c.h.b16 %v444
        %v1809 = vunpack.c.l.b16 %v445
        %v1810 = vunpack.c.h.b16 %v445
        %v1811 = vunpack.c.l.b16 %v446
        %v1812 = vunpack.c.h.b16 %v446
        %v1813 = vunpack.c.l.b16 %v447
        %v1814 = vunpack.c.h.b16 %v447
        %v1815 = vunpack.c.l.b16 %v448
        %v1816 = vunpack.c.h.b16 %v448
        %v1817 = vunpack.c.l.b16 %v449
        %v1818 = vunpack.c.h.b16 %v449
        %v1819 = vunpack.c.l.b16 %v450
        %v1820 = vunpack.c.h.b16 %v450
        %v1821 = vunpack.c.l.b16 %v451
        %v1822 = vunpack.c.h.b16 %v451
        %v1823 = vunpack.c.l.b16 %v452
        %v1824 = vunpack.c.h.b16 %v452
        %v1825 = vunpack.c.l.b16 %v453
        %v1826 = vunpack.c.h.b16 %v453
        %v1827 = vunpack.c.l.b16 %v454
        %v1828 = vunpack.c.h.b16 %v454
        %v1829 = vunpack.c.l.b16 %v455
        %v1830 = vunpack.c.h.b16 %v455
        %v1831 = vunpack.c.l.b16 %v456
        %v1832 = vunpack.c.h.b16 %v456
        %v1833 = vunpack.c.l.b16 %v457
        %v1834 = vunpack.c.h.b16 %v457
        %v1835 = vunpack.c.l.b16 %v458
        %v1836 = vunpack.c.h.b16 %v458
        %v1837 = vunpack.c.l.b16 %v459
        %v1838 = vunpack.c.h.b16 %v459
        %v1839 = vunpack.c.l.b16 %v460
        %v1840 = vunpack.c.h.b16 %v460
        %v1841 = vunpack.c.l.b16 %v461
        %v1842 = vunpack.c.h.b16 %v461
        %v1843 = vunpack.c.l.b16 %v462
        %v1844 = vunpack.c.h.b16 %v462
        %v1845 = vunpack.c.l.b16 %v463
        %v1846 = vunpack.c.h.b16 %v463
        %v1847 = vunpack.c.l.b16 %v464
        %v1848 = vunpack.c.h.b16 %v464
        %v1849 = vunpack.c.l.b16 %v465
        %v1850 = vunpack.c.h.b16 %v465
        %v1851 = vunpack.c.l.b16 %v466
        %v1852 = vunpack.c.h.b16 %v466
        %v1853 = vunpack.c.l.b16 %v467
        %v1854 = vunpack.c.h.b16 %v467
        %v1855 = vunpack.c.l.b16 %v468
        %v1856 = vunpack.c.h.b16 %v468
        %v1857 = vunpack.c.l.b16 %v469
        %v1858 = vunpack.c.h.b16 %v469
        %v1859 = vunpack.c.l.b16 %v470
        %v1860 = vunpack.c.h.b16 %v470
        %v1861 = vunpack.c.l.b16 %v471
        %v1862 = vunpack.c.h.b16 %v471
        %v1863 = vunpack.c.l.b16 %v472
        %v1864 = vunpack.c.h.b16 %v472
        %v1865 = vunpack.c.l.b16 %v473
        %v1866 = vunpack.c.h.b16 %v473
        %v1867 = vunpack.c.l.b16 %v474
        %v1868 = vunpack.c.h.b16 %v474
        %v1869 = vunpack.c.l.b16 %v475
        %v1870 = vunpack.c.h.b16 %v475
        %v1871 = vunpack.c.l.b16 %v476
        %v1872 = vunpack.c.h.b16 %v476
        %v1873 = vunpack.c.l.b16 %v477
        %v1874 = vunpack.c.h.b16 %v477
        %v1875 = vunpack.c.l.b16 %v478
        %v1876 = vunpack.c.h.b16 %v478
        %v1877 = vunpack.c.l.b16 %v479
        %v1878 = vunpack.c.h.b16 %v479
        %v1879 = vunpack.c.l.b16 %v480
        %v1880 = vunpack.c.h.b16 %v480
        %v1881 = vunpack.c.l.b16 %v481
        %v1882 = vunpack.c.h.b16 %v481
        %v1883 = vunpack.c.l.b16 %v482
        %v1884 = vunpack.c.h.b16 %v482
        %v1885 = vunpack.c.l.b16 %v483
        %v1886 = vunpack.c.h.b16 %v483
        %v1887 = vunpack.c.l.b16 %v484
        %v1888 = vunpack.c.h.b16 %v484
        %v1889 = vunpack.c.l.b16 %v485
        %v1890 = vunpack.c.h.b16 %v485
        %v1891 = vunpack.c.l.b16 %v486
        %v1892 = vunpack.c.h.b16 %v486
        %v1893 = vunpack.c.l.b16 %v487
        %v1894 = vunpack.c.h.b16 %v487
        %v1895 = vunpack.c.l.b16 %v488
        %v1896 = vunpack.c.h.b16 %v488
        %v1897 = vunpack.c.l.b16 %v489
        %v1898 = vunpack.c.h.b16 %v489
        %v1899 = vunpack.c.l.b16 %v490
        %v1900 = vunpack.c.h.b16 %v490
        %v1901 = vunpack.c.l.b16 %v491
        %v1902 = vunpack.c.h.b16 %v491
        %v1903 = vunpack.c.l.b16 %v492
        %v1904 = vunpack.c.h.b16 %v492
        %v1905 = vunpack.c.l.b16 %v493
        %v1906 = vunpack.c.h.b16 %v493
        %v1907 = vunpack.c.l.b16 %v494
        %v1908 = vunpack.c.h.b16 %v494
        %v1909 = vunpack.c.l.b16 %v495
        %v1910 = vunpack.c.h.b16 %v495
        %v1911 = vunpack.c.l.b16 %v496
        %v1912 = vunpack.c.h.b16 %v496
        %v1913 = vunpack.c.l.b16 %v497
        %v1914 = vunpack.c.h.b16 %v497
        %v1915 = vunpack.c.l.b16 %v498
        %v1916 = vunpack.c.h.b16 %v498
        %v1917 = vunpack.c.l.b16 %v499
        %v1918 = vunpack.c.h.b16 %v499
        %v1919 = vunpack.c.l.b16 %v500
        %v1920 = vunpack.c.h.b16 %v500
        %v1921 = vunpack.c.l.b16 %v501
        %v1922 = vunpack.c.h.b16 %v501
        %v1923 = vunpack.c.l.b16 %v502
        %v1924 = vunpack.c.h.b16 %v502
        %v1925 = vunpack.c.l.b16 %v503
        %v1926 = vunpack.c.h.b16 %v503
        %v1927 = vunpack.c.l.b16 %v504
        %v1928 = vunpack.c.h.b16 %v504
        %v1929 = vunpack.c.l.b16 %v505
        %v1930 = vunpack.c.h.b16 %v505
        %v1931 = vunpack.c.l.b16 %v506
        %v1932 = vunpack.c.h.b16 %v506
        %v1933 = vunpack.c.l.b16 %v507
        %v1934 = vunpack.c.h.b16 %v507
        %v1935 = vunpack.c.l.b16 %v508
        %v1936 = vunpack.c.h.b16 %v508
        %v1937 = vunpack.c.l.b16 %v509
        %v1938 = vunpack.c.h.b16 %v509
        %v1939 = vunpack.c.l.b16 %v510
        %v1940 = vunpack.c.h.b16 %v510
        %v1941 = vunpack.c.l.b16 %v511
        %v1942 = vunpack.c.h.b16 %v511
        %v1943 = vunpack.c.l.b16 %v512
        %v1944 = vunpack.c.h.b16 %v512
        %v1945 = vunpack.c.l.b16 %v513
        %v1946 = vunpack.c.h.b16 %v513
        %v1947 = vunpack.c.l.b16 %v514
        %v1948 = vunpack.c.h.b16 %v514
        %v1949 = vunpack.c.l.b16 %v515
        %v1950 = vunpack.c.h.b16 %v515
        %v1951 = vunpack.c.l.b16 %v516
        %v1952 = vunpack.c.h.b16 %v516
        %v1953 = vunpack.c.l.b16 %v517
        %v1954 = vunpack.c.h.b16 %v517
        %v1955 = vunpack.c.l.b16 %v518
        %v1956 = vunpack.c.h.b16 %v518
        %v1957 = vunpack.c.l.b16 %v519
        %v1958 = vunpack.c.h.b16 %v519
        %v1959 = vunpack.c.l.b16 %v520
        %v1960 = vunpack.c.h.b16 %v520
        %v1961 = vunpack.c.l.b16 %v521
        %v1962 = vunpack.c.h.b16 %v521
        %v1963 = vunpack.c.l.b16 %v522
        %v1964 = vunpack.c.h.b16 %v522
        %v1965 = vunpack.c.l.b16 %v523
        %v1966 = vunpack.c.h.b16 %v523
        %v1967 = vunpack.c.l.b16 %v524
        %v1968 = vunpack.c.h.b16 %v524
        %v1969 = vunpack.c.l.b16 %v525
        %v1970 = vunpack.c.h.b16 %v525
        %v1971 = vunpack.c.l.b16 %v526
        %v1972 = vunpack.c.h.b16 %v526
        %v1973 = vunpack.c.l.b16 %v527
        %v1974 = vunpack.c.h.b16 %v527
        %v1975 = vunpack.c.l.b16 %v528
        %v1976 = vunpack.c.h.b16 %v528
        %v1977 = vunpack.c.l.b16 %v529
        %v1978 = vunpack.c.h.b16 %v529
        %v1979 = vunpack.c.l.b16 %v530
        %v1980 = vunpack.c.h.b16 %v530
        %v1981 = vunpack.c.l.b16 %v531
        %v1982 = vunpack.c.h.b16 %v531
        %v1983 = vunpack.c.l.b16 %v532
        %v1984 = vunpack.c.h.b16 %v532
        %v1985 = vunpack.c.l.b16 %v533
        %v1986 = vunpack.c.h.b16 %v533
        %v1987 = vunpack.c.l.b16 %v534
        %v1988 = vunpack.c.h.b16 %v534
        %v1989 = vunpack.c.l.b16 %v535
        %v1990 = vunpack.c.h.b16 %v535
        %v1991 = vunpack.c.l.b16 %v536
        %v1992 = vunpack.c.h.b16 %v536
        %v1993 = vunpack.c.l.b16 %v537
        %v1994 = vunpack.c.h.b16 %v537
        %v1995 = vunpack.c.l.b16 %v538
        %v1996 = vunpack.c.h.b16 %v538
        %v1997 = vunpack.c.l.b16 %v539
        %v1998 = vunpack.c.h.b16 %v539
        %v1999 = vunpack.c.l.b16 %v540
        %v2000 = vunpack.c.h.b16 %v540
        %v2001 = vunpack.c.l.b16 %v541
        %v2002 = vunpack.c.h.b16 %v541
        %v2003 = vunpack.c.l.b16 %v542
        %v2004 = vunpack.c.h.b16 %v542
        %v2005 = vunpack.c.l.b16 %v543
        %v2006 = vunpack.c.h.b16 %v543
        %v2007 = vunpack.c.l.b16 %v544
        %v2008 = vunpack.c.h.b16 %v544
        %v2009 = vunpack.c.l.b16 %v545
        %v2010 = vunpack.c.h.b16 %v545
        %v2011 = vunpack.c.l.b16 %v546
        %v2012 = vunpack.c.h.b16 %v546
        %v2013 = vunpack.c.l.b16 %v547
        %v2014 = vunpack.c.h.b16 %v547
        %v2015 = vunpack.c.l.b16 %v548
        %v2016 = vunpack.c.h.b16 %v548
        %v2017 = vunpack.c.l.b16 %v549
        %v2018 = vunpack.c.h.b16 %v549
        %v2019 = vunpack.c.l.b16 %v550
        %v2020 = vunpack.c.h.b16 %v550
        %v2021 = vunpack.c.l.b16 %v551
        %v2022 = vunpack.c.h.b16 %v551
        %v2023 = vunpack.c.l.b16 %v552
        %v2024 = vunpack.c.h.b16 %v552
        %v2025 = vunpack.c.l.b16 %v553
        %v2026 = vunpack.c.h.b16 %v553
        %v2027 = vunpack.c.l.b16 %v554
        %v2028 = vunpack.c.h.b16 %v554
        %v2029 = vunpack.c.l.b16 %v555
        %v2030 = vunpack.c.h.b16 %v555
        %v2031 = vunpack.c.l.b16 %v556
        %v2032 = vunpack.c.h.b16 %v556
        %v2033 = vunpack.c.l.b16 %v557
        %v2034 = vunpack.c.h.b16 %v557
        %v2035 = vunpack.c.l.b16 %v558
        %v2036 = vunpack.c.h.b16 %v558
        %v2037 = vunpack.c.l.b16 %v559
        %v2038 = vunpack.c.h.b16 %v559
        %v2039 = vunpack.c.l.b16 %v560
        %v2040 = vunpack.c.h.b16 %v560
        %v2041 = vunpack.c.l.b16 %v561
        %v2042 = vunpack.c.h.b16 %v561
        %v2043 = vunpack.c.l.b16 %v562
        %v2044 = vunpack.c.h.b16 %v562
        %v2045 = vunpack.c.l.b16 %v563
        %v2046 = vunpack.c.h.b16 %v563
        %v2047 = vunpack.c.l.b16 %v564
        %v2048 = vunpack.c.h.b16 %v564
        %v2049 = vunpack.c.l.b16 %v565
        %v2050 = vunpack.c.h.b16 %v565
        %v2051 = vunpack.c.l.b16 %v566
        %v2052 = vunpack.c.h.b16 %v566
        %v2053 = vunpack.c.l.b16 %v567
        %v2054 = vunpack.c.h.b16 %v567
        %v2055 = vunpack.c.l.b16 %v568
        %v2056 = vunpack.c.h.b16 %v568
        %v2057 = vunpack.c.l.b16 %v569
        %v2058 = vunpack.c.h.b16 %v569
        %v2059 = vunpack.c.l.b16 %v570
        %v2060 = vunpack.c.h.b16 %v570
        %v2061 = vunpack.c.l.b16 %v571
        %v2062 = vunpack.c.h.b16 %v571
        %v2063 = vunpack.c.l.b16 %v572
        %v2064 = vunpack.c.h.b16 %v572
        %v2065 = vunpack.c.l.b16 %v573
        %v2066 = vunpack.c.h.b16 %v573
        %v2067 = vunpack.c.l.b16 %v574
        %v2068 = vunpack.c.h.b16 %v574
        %v2069 = vunpack.c.l.b16 %v575
        %v2070 = vunpack.c.h.b16 %v575
        %v2071 = vunpack.c.l.b16 %v576
        %v2072 = vunpack.c.h.b16 %v576
        %v2073 = vunpack.c.l.b16 %v577
        %v2074 = vunpack.c.h.b16 %v577
        %v2075 = vunpack.c.l.b16 %v578
        %v2076 = vunpack.c.h.b16 %v578
        %v2077 = vunpack.c.l.b16 %v579
        %v2078 = vunpack.c.h.b16 %v579
        %v2079 = vunpack.c.l.b16 %v580
        %v2080 = vunpack.c.h.b16 %v580
        %v2081 = vunpack.c.l.b16 %v581
        %v2082 = vunpack.c.h.b16 %v581
        %v2083 = vunpack.c.l.b16 %v582
        %v2084 = vunpack.c.h.b16 %v582
        %v2085 = vunpack.c.l.b16 %v583
        %v2086 = vunpack.c.h.b16 %v583
        %v2087 = vunpack.c.l.b16 %v584
        %v2088 = vunpack.c.h.b16 %v584
        %v2089 = vunpack.c.l.b16 %v585
        %v2090 = vunpack.c.h.b16 %v585
        %v2091 = vunpack.c.l.b16 %v586
        %v2092 = vunpack.c.h.b16 %v586
        %v2093 = vunpack.c.l.b16 %v587
        %v2094 = vunpack.c.h.b16 %v587
        %v2095 = vunpack.c.l.b16 %v588
        %v2096 = vunpack.c.h.b16 %v588
        %v2097 = vunpack.c.l.b16 %v589
        %v2098 = vunpack.c.h.b16 %v589
        %v2099 = vunpack.c.l.b16 %v590
        %v2100 = vunpack.c.h.b16 %v590
        %v2101 = vunpack.c.l.b16 %v591
        %v2102 = vunpack.c.h.b16 %v591
        %v2103 = vunpack.c.l.b16 %v592
        %v2104 = vunpack.c.h.b16 %v592
        %v2105 = vunpack.c.l.b16 %v593
        %v2106 = vunpack.c.h.b16 %v593
        %v2107 = vunpack.c.l.b16 %v594
        %v2108 = vunpack.c.h.b16 %v594
        %v2109 = vunpack.c.l.b16 %v595
        %v2110 = vunpack.c.h.b16 %v595
        %v2111 = vunpack.c.l.b16 %v596
        %v2112 = vunpack.c.h.b16 %v596
        %v2113 = vunpack.c.l.b16 %v597
        %v2114 = vunpack.c.h.b16 %v597
        %v2115 = vunpack.c.l.b16 %v598
        %v2116 = vunpack.c.h.b16 %v598
        %v2117 = vunpack.c.l.b16 %v599
        %v2118 = vunpack.c.h.b16 %v599
        %v2119 = vunpack.c.l.b16 %v600
        %v2120 = vunpack.c.h.b16 %v600
        %v2121 = vunpack.c.l.b16 %v601
        %v2122 = vunpack.c.h.b16 %v601
        %v2123 = vunpack.c.l.b16 %v602
        %v2124 = vunpack.c.h.b16 %v602
        %v2125 = vunpack.c.l.b16 %v603
        %v2126 = vunpack.c.h.b16 %v603
        %v2127 = vunpack.c.l.b16 %v604
        %v2128 = vunpack.c.h.b16 %v604
        %v2129 = vunpack.c.l.b16 %v605
        %v2130 = vunpack.c.h.b16 %v605
        %v2131 = vunpack.c.l.b16 %v606
        %v2132 = vunpack.c.h.b16 %v606
        %v2133 = vunpack.c.l.b16 %v607
        %v2134 = vunpack.c.h.b16 %v607
        %v2135 = vunpack.c.l.b16 %v608
        %v2136 = vunpack.c.h.b16 %v608
        %v2137 = vunpack.c.l.b16 %v609
        %v2138 = vunpack.c.h.b16 %v609
        %v2139 = vunpack.c.l.b16 %v610
        %v2140 = vunpack.c.h.b16 %v610
        %v2141 = vunpack.c.l.b16 %v611
        %v2142 = vunpack.c.h.b16 %v611
        %v2143 = vunpack.c.l.b16 %v612
        %v2144 = vunpack.c.h.b16 %v612
        %v2145 = vunpack.c.l.b16 %v613
        %v2146 = vunpack.c.h.b16 %v613
        %v2147 = vunpack.c.l.b16 %v614
        %v2148 = vunpack.c.h.b16 %v614
        %v2149 = vunpack.c.l.b16 %v615
        %v2150 = vunpack.c.h.b16 %v615
        %v2151 = vunpack.c.l.b16 %v616
        %v2152 = vunpack.c.h.b16 %v616
        %v2153 = vunpack.c.l.b16 %v617
        %v2154 = vunpack.c.h.b16 %v617
        %v2155 = vunpack.c.l.b16 %v618
        %v2156 = vunpack.c.h.b16 %v618
        %v2157 = vunpack.c.l.b16 %v619
        %v2158 = vunpack.c.h.b16 %v619
        %v2159 = vunpack.c.l.b16 %v620
        %v2160 = vunpack.c.h.b16 %v620
        %v2161 = vunpack.c.l.b16 %v621
        %v2162 = vunpack.c.h.b16 %v621
        %v2163 = vunpack.c.l.b16 %v622
        %v2164 = vunpack.c.h.b16 %v622
        %v2165 = vunpack.c.l.b16 %v623
        %v2166 = vunpack.c.h.b16 %v623
        %v2167 = vunpack.c.l.b16 %v624
        %v2168 = vunpack.c.h.b16 %v624
        %v2169 = vunpack.c.l.b16 %v625
        %v2170 = vunpack.c.h.b16 %v625
        %v2171 = vunpack.c.l.b16 %v626
        %v2172 = vunpack.c.h.b16 %v626
        %v2173 = vunpack.c.l.b16 %v627
        %v2174 = vunpack.c.h.b16 %v627
        %v2175 = vunpack.c.l.b16 %v628
        %v2176 = vunpack.c.h.b16 %v628
        %v2177 = vunpack.c.l.b16 %v629
        %v2178 = vunpack.c.h.b16 %v629
        %v2179 = vunpack.c.l.b16 %v630
        %v2180 = vunpack.c.h.b16 %v630
        %v2181 = vunpack.c.l.b16 %v631
        %v2182 = vunpack.c.h.b16 %v631
        %v2183 = vunpack.c.l.b16 %v632
        %v2184 = vunpack.c.h.b16 %v632
        %v2185 = vunpack.c.l.b16 %v633
        %v2186 = vunpack.c.h.b16 %v633
        %v2187 = vunpack.c.l.b16 %v634
        %v2188 = vunpack.c.h.b16 %v634
        %v2189 = vunpack.c.l.b16 %v635
        %v2190 = vunpack.c.h.b16 %v635
        %v2191 = vunpack.c.l.b16 %v636
        %v2192 = vunpack.c.h.b16 %v636
        %v2193 = vunpack.c.l.b16 %v637
        %v2194 = vunpack.c.h.b16 %v637
        %v2195 = vunpack.c.l.b16 %v638
        %v2196 = vunpack.c.h.b16 %v638
        %v2197 = vunpack.c.l.b16 %v639
        %v2198 = vunpack.c.h.b16 %v639
        %v2199 = vunpack.c.l.b16 %v640
        %v2200 = vunpack.c.h.b16 %v640
        %v2201 = vunpack.c.l.b16 %v641
        %v2202 = vunpack.c.h.b16 %v641
        %v2203 = vunpack.c.l.b16 %v642
        %v2204 = vunpack.c.h.b16 %v642
        %v2205 = vunpack.c.l.b16 %v643
        %v2206 = vunpack.c.h.b16 %v643
        %v2207 = vunpack.c.l.b16 %v644
        %v2208 = vunpack.c.h.b16 %v644
        %v2209 = vunpack.c.l.b16 %v645
        %v2210 = vunpack.c.h.b16 %v645
        %v2211 = vunpack.c.l.b16 %v646
        %v2212 = vunpack.c.h.b16 %v646
        %v2213 = vunpack.c.l.b16 %v647
        %v2214 = vunpack.c.h.b16 %v647
        %v2215 = vunpack.c.l.b16 %v648
        %v2216 = vunpack.c.h.b16 %v648
        %v2217 = vunpack.c.l.b16 %v649
        %v2218 = vunpack.c.h.b16 %v649
        %v2219 = vunpack.c.l.b16 %v650
        %v2220 = vunpack.c.h.b16 %v650
        %v2221 = vunpack.c.l.b16 %v651
        %v2222 = vunpack.c.h.b16 %v651
        %v2223 = vunpack.c.l.b16 %v652
        %v2224 = vunpack.c.h.b16 %v652
        %v2225 = vunpack.c.l.b16 %v653
        %v2226 = vunpack.c.h.b16 %v653
        %v2227 = vunpack.c.l.b16 %v654
        %v2228 = vunpack.c.h.b16 %v654
        %v2229 = vunpack.c.l.b16 %v655
        %v2230 = vunpack.c.h.b16 %v655
        %v2231 = vunpack.c.l.b16 %v656
        %v2232 = vunpack.c.h.b16 %v656
        %v2233 = vunpack.c.l.b16 %v657
        %v2234 = vunpack.c.h.b16 %v657
        %v2235 = vunpack.c.l.b16 %v658
        %v2236 = vunpack.c.h.b16 %v658
        %v2237 = vunpack.c.l.b16 %v659
        %v2238 = vunpack.c.h.b16 %v659
        %v2239 = vunpack.c.l.b16 %v660
        %v2240 = vunpack.c.h.b16 %v660
        %v2241 = vunpack.c.l.b16 %v661
        %v2242 = vunpack.c.h.b16 %v661
        %v2243 = vunpack.c.l.b16 %v662
        %v2244 = vunpack.c.h.b16 %v662
        %v2245 = vunpack.c.l.b16 %v663
        %v2246 = vunpack.c.h.b16 %v663
        %v2247 = vunpack.c.l.b16 %v664
        %v2248 = vunpack.c.h.b16 %v664
        %v2249 = vunpack.c.l.b16 %v665
        %v2250 = vunpack.c.h.b16 %v665
        %v2251 = vunpack.c.l.b16 %v666
        %v2252 = vunpack.c.h.b16 %v666
        %v2253 = vunpack.c.l.b16 %v667
        %v2254 = vunpack.c.h.b16 %v667
        %v2255 = vunpack.c.l.b16 %v668
        %v2256 = vunpack.c.h.b16 %v668
        %v2257 = vunpack.c.l.b16 %v669
        %v2258 = vunpack.c.h.b16 %v669
        %v2259 = vunpack.c.l.b16 %v670
        %v2260 = vunpack.c.h.b16 %v670
        %v2261 = vunpack.c.l.b16 %v671
        %v2262 = vunpack.c.h.b16 %v671
        %v2263 = vunpack.c.l.b16 %v672
        %v2264 = vunpack.c.h.b16 %v672
        %v2265 = vunpack.c.l.b16 %v673
        %v2266 = vunpack.c.h.b16 %v673
        %v2267 = vunpack.c.l.b16 %v674
        %v2268 = vunpack.c.h.b16 %v674
        %v2269 = vunpack.c.l.b16 %v675
        %v2270 = vunpack.c.h.b16 %v675
        %v2271 = vunpack.c.l.b16 %v676
        %v2272 = vunpack.c.h.b16 %v676
        %v2273 = vunpack.c.l.b16 %v677
        %v2274 = vunpack.c.h.b16 %v677
        %v2275 = vunpack.c.l.b16 %v678
        %v2276 = vunpack.c.h.b16 %v678
        %v2277 = vunpack.c.l.b16 %v679
        %v2278 = vunpack.c.h.b16 %v679
        %v2279 = vunpack.c.l.b16 %v680
        %v2280 = vunpack.c.h.b16 %v680
        %v2281 = vunpack.c.l.b16 %v681
        %v2282 = vunpack.c.h.b16 %v681
        %v2283 = vunpack.c.l.b16 %v682
        %v2284 = vunpack.c.h.b16 %v682
        %v2285 = vunpack.c.l.b16 %v683
        %v2286 = vunpack.c.h.b16 %v683
        %v2287 = vunpack.c.l.b16 %v684
        %v2288 = vunpack.c.h.b16 %v684
        %v2289 = vunpack.c.l.b16 %v685
        %v2290 = vunpack.c.h.b16 %v685
        %v2291 = vunpack.c.l.b16 %v686
        %v2292 = vunpack.c.h.b16 %v686
        %v2293 = vunpack.c.l.b16 %v687
        %v2294 = vunpack.c.h.b16 %v687
        %v2295 = vunpack.c.l.b16 %v688
        %v2296 = vunpack.c.h.b16 %v688
        %v2297 = vunpack.c.l.b16 %v689
        %v2298 = vunpack.c.h.b16 %v689
        %v2299 = vunpack.c.l.b16 %v690
        %v2300 = vunpack.c.h.b16 %v690
        %v2301 = vunpack.c.l.b16 %v691
        %v2302 = vunpack.c.h.b16 %v691
        %v2303 = vunpack.c.l.b16 %v692
        %v2304 = vunpack.c.h.b16 %v692
        %v2305 = vunpack.c.l.b16 %v693
        %v2306 = vunpack.c.h.b16 %v693
        %v2307 = vunpack.c.l.b16 %v694
        %v2308 = vunpack.c.h.b16 %v694
        %v2309 = vunpack.c.l.b16 %v695
        %v2310 = vunpack.c.h.b16 %v695
        %v2311 = vunpack.c.l.b16 %v696
        %v2312 = vunpack.c.h.b16 %v696
        %v2313 = vunpack.c.l.b16 %v697
        %v2314 = vunpack.c.h.b16 %v697
        %v2315 = vunpack.c.l.b16 %v698
        %v2316 = vunpack.c.h.b16 %v698
        %v2317 = vunpack.c.l.b16 %v699
        %v2318 = vunpack.c.h.b16 %v699
        %v2319 = vunpack.c.l.b16 %v700
        %v2320 = vunpack.c.h.b16 %v700
        %v2321 = vunpack.c.l.b16 %v701
        %v2322 = vunpack.c.h.b16 %v701
        %v2323 = vunpack.c.l.b16 %v702
        %v2324 = vunpack.c.h.b16 %v702
        %v2325 = vunpack.c.l.b16 %v703
        %v2326 = vunpack.c.h.b16 %v703
        %v2327 = vunpack.c.l.b16 %v704
        %v2328 = vunpack.c.h.b16 %v704
        %v2329 = vunpack.c.l.b16 %v705
        %v2330 = vunpack.c.h.b16 %v705
        %v2331 = vunpack.c.l.b16 %v706
        %v2332 = vunpack.c.h.b16 %v706
        %v2333 = vunpack.c.l.b16 %v707
        %v2334 = vunpack.c.h.b16 %v707
        %v2335 = vunpack.c.l.b16 %v708
        %v2336 = vunpack.c.h.b16 %v708
        %v2337 = vunpack.c.l.b16 %v709
        %v2338 = vunpack.c.h.b16 %v709
        %v2339 = vunpack.c.l.b16 %v710
        %v2340 = vunpack.c.h.b16 %v710
        %v2341 = vunpack.c.l.b16 %v711
        %v2342 = vunpack.c.h.b16 %v711
        %v2343 = vunpack.c.l.b16 %v712
        %v2344 = vunpack.c.h.b16 %v712
        %v2345 = vunpack.c.l.b16 %v713
        %v2346 = vunpack.c.h.b16 %v713
        %v2347 = vunpack.c.l.b16 %v714
        %v2348 = vunpack.c.h.b16 %v714
        %v2349 = vunpack.c.l.b16 %v715
        %v2350 = vunpack.c.h.b16 %v715
        %v2351 = vunpack.c.l.b16 %v716
        %v2352 = vunpack.c.h.b16 %v716
        %v2353 = vunpack.c.l.b16 %v717
        %v2354 = vunpack.c.h.b16 %v717
        %v2355 = vunpack.c.l.b16 %v718
        %v2356 = vunpack.c.h.b16 %v718
        %v2357 = vunpack.c.l.b16 %v719
        %v2358 = vunpack.c.h.b16 %v719
        %v2359 = vunpack.c.l.b16 %v720
        %v2360 = vunpack.c.h.b16 %v720
        %v2361 = vunpack.c.l.b16 %v721
        %v2362 = vunpack.c.h.b16 %v721
        %v2363 = vunpack.c.l.b16 %v722
        %v2364 = vunpack.c.h.b16 %v722
        %v2365 = vunpack.c.l.b16 %v723
        %v2366 = vunpack.c.h.b16 %v723
        %v2367 = vunpack.c.l.b16 %v724
        %v2368 = vunpack.c.h.b16 %v724
        %v2369 = vunpack.c.l.b16 %v725
        %v2370 = vunpack.c.h.b16 %v725
        %v2371 = vunpack.c.l.b16 %v726
        %v2372 = vunpack.c.h.b16 %v726
        %v2373 = vunpack.c.l.b16 %v727
        %v2374 = vunpack.c.h.b16 %v727
        %v2375 = vunpack.c.l.b16 %v728
        %v2376 = vunpack.c.h.b16 %v728
        %v2377 = vunpack.c.l.b16 %v729
        %v2378 = vunpack.c.h.b16 %v729
        %v2379 = vunpack.c.l.b16 %v730
        %v2380 = vunpack.c.h.b16 %v730
        %v2381 = vunpack.c.l.b16 %v731
        %v2382 = vunpack.c.h.b16 %v731
        %v2383 = vunpack.c.l.b16 %v732
        %v2384 = vunpack.c.h.b16 %v732
        %v2385 = vunpack.c.l.b16 %v733
        %v2386 = vunpack.c.h.b16 %v733
        %v2387 = vunpack.c.l.b16 %v734
        %v2388 = vunpack.c.h.b16 %v734
        %v2389 = vunpack.c.l.b16 %v735
        %v2390 = vunpack.c.h.b16 %v735
        %v2391 = vunpack.c.l.b16 %v736
        %v2392 = vunpack.c.h.b16 %v736
        %v2393 = vunpack.c.l.b16 %v737
        %v2394 = vunpack.c.h.b16 %v737
        %v2395 = vunpack.c.l.b16 %v738
        %v2396 = vunpack.c.h.b16 %v738
        %v2397 = vunpack.c.l.b16 %v739
        %v2398 = vunpack.c.h.b16 %v739
        %v2399 = vunpack.c.l.b16 %v740
        %v2400 = vunpack.c.h.b16 %v740
        %v2401 = vunpack.c.l.b16 %v741
        %v2402 = vunpack.c.h.b16 %v741
        %v2403 = vunpack.c.l.b16 %v742
        %v2404 = vunpack.c.h.b16 %v742
        %v2405 = vunpack.c.l.b16 %v743
        %v2406 = vunpack.c.h.b16 %v743
        %v2407 = vunpack.c.l.b16 %v744
        %v2408 = vunpack.c.h.b16 %v744
        %v2409 = vunpack.c.l.b16 %v745
        %v2410 = vunpack.c.h.b16 %v745
        %v2411 = vunpack.c.l.b16 %v746
        %v2412 = vunpack.c.h.b16 %v746
        %v2413 = vunpack.c.l.b16 %v747
        %v2414 = vunpack.c.h.b16 %v747
        %v2415 = vunpack.c.l.b16 %v748
        %v2416 = vunpack.c.h.b16 %v748
        %v2417 = vunpack.c.l.b16 %v749
        %v2418 = vunpack.c.h.b16 %v749
        %v2419 = vunpack.c.l.b16 %v750
        %v2420 = vunpack.c.h.b16 %v750
        %v2421 = vunpack.c.l.b16 %v751
        %v2422 = vunpack.c.h.b16 %v751
        %v2423 = vunpack.c.l.b16 %v752
        %v2424 = vunpack.c.h.b16 %v752
        %v2425 = vunpack.c.l.b16 %v753
        %v2426 = vunpack.c.h.b16 %v753
        %v2427 = vunpack.c.l.b16 %v754
        %v2428 = vunpack.c.h.b16 %v754
        %v2429 = vunpack.c.l.b16 %v755
        %v2430 = vunpack.c.h.b16 %v755
        %v2431 = vunpack.c.l.b16 %v756
        %v2432 = vunpack.c.h.b16 %v756
        %v2433 = vunpack.c.l.b16 %v757
        %v2434 = vunpack.c.h.b16 %v757
        %v2435 = vunpack.c.l.b16 %v758
        %v2436 = vunpack.c.h.b16 %v758
        %v2437 = vunpack.c.l.b16 %v759
        %v2438 = vunpack.c.h.b16 %v759
        %v2439 = vunpack.c.l.b16 %v760
        %v2440 = vunpack.c.h.b16 %v760
        %v2441 = vpack.c.b16 %v1481, %v1417
        %v2442 = vpack.c.b16 %v1482, %v1418
        %v2443 = vpack.c.b16 %v1483, %v1419
        %v2444 = vpack.c.b16 %v1484, %v1420
        %v2445 = vpack.c.b16 %v1485, %v1421
        %v2446 = vpack.c.b16 %v1486, %v1422
        %v2447 = vpack.c.b16 %v1487, %v1423
        %v2448 = vpack.c.b16 %v1488, %v1424
        %v2449 = vpack.c.b16 %v1489, %v1425
        %v2450 = vpack.c.b16 %v1490, %v1426
        %v2451 = vpack.c.b16 %v1491, %v1427
        %v2452 = vpack.c.b16 %v1492, %v1428
        %v2453 = vpack.c.b16 %v1493, %v1429
        %v2454 = vpack.c.b16 %v1494, %v1430
        %v2455 = vpack.c.b16 %v1495, %v1431
        %v2456 = vpack.c.b16 %v1496, %v1432
        %v2457 = vpack.c.b16 %v1497, %v1433
        %v2458 = vpack.c.b16 %v1498, %v1434
        %v2459 = vpack.c.b16 %v1499, %v1435
        %v2460 = vpack.c.b16 %v1500, %v1436
        %v2461 = vpack.c.b16 %v1501, %v1437
        %v2462 = vpack.c.b16 %v1502, %v1438
        %v2463 = vpack.c.b16 %v1503, %v1439
        %v2464 = vpack.c.b16 %v1504, %v1440
        %v2465 = vpack.c.b16 %v1505, %v1441
        %v2466 = vpack.c.b16 %v1506, %v1442
        %v2467 = vpack.c.b16 %v1507, %v1443
        %v2468 = vpack.c.b16 %v1508, %v1444
        %v2469 = vpack.c.b16 %v1509, %v1445
        %v2470 = vpack.c.b16 %v1510, %v1446
        %v2471 = vpack.c.b16 %v1511, %v1447
        %v2472 = vpack.c.b16 %v1512, %v1448
        %v2473 = vpack.c.b16 %v1513, %v1449
        %v2474 = vpack.c.b16 %v1514, %v1450
        %v2475 = vpack.c.b16 %v1515, %v1451
        %v2476 = vpack.c.b16 %v1516, %v1452
        %v2477 = vpack.c.b16 %v1517, %v1453
        %v2478 = vpack.c.b16 %v1518, %v1454
        %v2479 = vpack.c.b16 %v1519, %v1455
        %v2480 = vpack.c.b16 %v1520, %v1456
        %v2481 = vpack.c.b16 %v1521, %v1457
        %v2482 = vpack.c.b16 %v1522, %v1458
        %v2483 = vpack.c.b16 %v1523, %v1459
        %v2484 = vpack.c.b16 %v1524, %v1460
        %v2485 = vpack.c.b16 %v1525, %v1461
        %v2486 = vpack.c.b16 %v1526, %v1462
        %v2487 = vpack.c.b16 %v1527, %v1463
        %v2488 = vpack.c.b16 %v1528, %v1464
        %v2489 = vpack.c.b16 %v1529, %v1465
        %v2490 = vpack.c.b16 %v1530, %v1466
        %v2491 = vpack.c.b16 %v1531, %v1467
        %v2492 = vpack.c.b16 %v1532, %v1468
        %v2493 = vpack.c.b16 %v1533, %v1469
        %v2494 = vpack.c.b16 %v1534, %v1470
        %v2495 = vpack.c.b16 %v1535, %v1471
        %v2496 = vpack.c.b16 %v1536, %v1472
        %v2497 = vpack.c.b16 %v1537, %v1473
        %v2498 = vpack.c.b16 %v1538, %v1474
        %v2499 = vpack.c.b16 %v1539, %v1475
        %v2500 = vpack.c.b16 %v1540, %v1476
        %v2501 = vpack.c.b16 %v1541, %v1477
        %v2502 = vpack.c.b16 %v1542, %v1478
        %v2503 = vpack.c.b16 %v1543, %v1479
        %v2504 = vpack.c.b16 %v1544, %v1480
        %v2505 = vpack.c.b16 %v1609, %v1545
        %v2506 = vpack.c.b16 %v1610, %v1546
        %v2507 = vpack.c.b16 %v1611, %v1547
        %v2508 = vpack.c.b16 %v1612, %v1548
        %v2509 = vpack.c.b16 %v1613, %v1549
        %v2510 = vpack.c.b16 %v1614, %v1550
        %v2511 = vpack.c.b16 %v1615, %v1551
        %v2512 = vpack.c.b16 %v1616, %v1552
        %v2513 = vpack.c.b16 %v1617, %v1553
        %v2514 = vpack.c.b16 %v1618, %v1554
        %v2515 = vpack.c.b16 %v1619, %v1555
        %v2516 = vpack.c.b16 %v1620, %v1556
        %v2517 = vpack.c.b16 %v1621, %v1557
        %v2518 = vpack.c.b16 %v1622, %v1558
        %v2519 = vpack.c.b16 %v1623, %v1559
        %v2520 = vpack.c.b16 %v1624, %v1560
        %v2521 = vpack.c.b16 %v1625, %v1561
        %v2522 = vpack.c.b16 %v1626, %v1562
        %v2523 = vpack.c.b16 %v1627, %v1563
        %v2524 = vpack.c.b16 %v1628, %v1564
        %v2525 = vpack.c.b16 %v1629, %v1565
        %v2526 = vpack.c.b16 %v1630, %v1566
        %v2527 = vpack.c.b16 %v1631, %v1567
        %v2528 = vpack.c.b16 %v1632, %v1568
        %v2529 = vpack.c.b16 %v1633, %v1569
        %v2530 = vpack.c.b16 %v1634, %v1570
        %v2531 = vpack.c.b16 %v1635, %v1571
        %v2532 = vpack.c.b16 %v1636, %v1572
        %v2533 = vpack.c.b16 %v1637, %v1573
        %v2534 = vpack.c.b16 %v1638, %v1574
        %v2535 = vpack.c.b16 %v1639, %v1575
        %v2536 = vpack.c.b16 %v1640, %v1576
        %v2537 = vpack.c.b16 %v1641, %v1577
        %v2538 = vpack.c.b16 %v1642, %v1578
        %v2539 = vpack.c.b16 %v1643, %v1579
        %v2540 = vpack.c.b16 %v1644, %v1580
        %v2541 = vpack.c.b16 %v1645, %v1581
        %v2542 = vpack.c.b16 %v1646, %v1582
        %v2543 = vpack.c.b16 %v1647, %v1583
        %v2544 = vpack.c.b16 %v1648, %v1584
        %v2545 = vpack.c.b16 %v1649, %v1585
        %v2546 = vpack.c.b16 %v1650, %v1586
        %v2547 = vpack.c.b16 %v1651, %v1587
        %v2548 = vpack.c.b16 %v1652, %v1588
        %v2549 = vpack.c.b16 %v1653, %v1589
        %v2550 = vpack.c.b16 %v1654, %v1590
        %v2551 = vpack.c.b16 %v1655, %v1591
        %v2552 = vpack.c.b16 %v1656, %v1592
        %v2553 = vpack.c.b16 %v1657, %v1593
        %v2554 = vpack.c.b16 %v1658, %v1594
        %v2555 = vpack.c.b16 %v1659, %v1595
        %v2556 = vpack.c.b16 %v1660, %v1596
        %v2557 = vpack.c.b16 %v1661, %v1597
        %v2558 = vpack.c.b16 %v1662, %v1598
        %v2559 = vpack.c.b16 %v1663, %v1599
        %v2560 = vpack.c.b16 %v1664, %v1600
        %v2561 = vpack.c.b16 %v1665, %v1601
        %v2562 = vpack.c.b16 %v1666, %v1602
        %v2563 = vpack.c.b16 %v1667, %v1603
        %v2564 = vpack.c.b16 %v1668, %v1604
        %v2565 = vpack.c.b16 %v1669, %v1605
        %v2566 = vpack.c.b16 %v1670, %v1606
        %v2567 = vpack.c.b16 %v1671, %v1607
        %v2568 = vpack.c.b16 %v1672, %v1608
        %v2569 = vpack.c.b16 %v1737, %v1673
        %v2570 = vpack.c.b16 %v1738, %v1674
        %v2571 = vpack.c.b16 %v1739, %v1675
        %v2572 = vpack.c.b16 %v1740, %v1676
        %v2573 = vpack.c.b16 %v1741, %v1677
        %v2574 = vpack.c.b16 %v1742, %v1678
        %v2575 = vpack.c.b16 %v1743, %v1679
        %v2576 = vpack.c.b16 %v1744, %v1680
        %v2577 = vpack.c.b16 %v1745, %v1681
        %v2578 = vpack.c.b16 %v1746, %v1682
        %v2579 = vpack.c.b16 %v1747, %v1683
        %v2580 = vpack.c.b16 %v1748, %v1684
        %v2581 = vpack.c.b16 %v1749, %v1685
        %v2582 = vpack.c.b16 %v1750, %v1686
        %v2583 = vpack.c.b16 %v1751, %v1687
        %v2584 = vpack.c.b16 %v1752, %v1688
        %v2585 = vpack.c.b16 %v1753, %v1689
        %v2586 = vpack.c.b16 %v1754, %v1690
        %v2587 = vpack.c.b16 %v1755, %v1691
        %v2588 = vpack.c.b16 %v1756, %v1692
        %v2589 = vpack.c.b16 %v1757, %v1693
        %v2590 = vpack.c.b16 %v1758, %v1694
        %v2591 = vpack.c.b16 %v1759, %v1695
        %v2592 = vpack.c.b16 %v1760, %v1696
        %v2593 = vpack.c.b16 %v1761, %v1697
        %v2594 = vpack.c.b16 %v1762, %v1698
        %v2595 = vpack.c.b16 %v1763, %v1699
        %v2596 = vpack.c.b16 %v1764, %v1700
        %v2597 = vpack.c.b16 %v1765, %v1701
        %v2598 = vpack.c.b16 %v1766, %v1702
        %v2599 = vpack.c.b16 %v1767, %v1703
        %v2600 = vpack.c.b16 %v1768, %v1704
        %v2601 = vpack.c.b16 %v1769, %v1705
        %v2602 = vpack.c.b16 %v1770, %v1706
        %v2603 = vpack.c.b16 %v1771, %v1707
        %v2604 = vpack.c.b16 %v1772, %v1708
        %v2605 = vpack.c.b16 %v1773, %v1709
        %v2606 = vpack.c.b16 %v1774, %v1710
        %v2607 = vpack.c.b16 %v1775, %v1711
        %v2608 = vpack.c.b16 %v1776, %v1712
        %v2609 = vpack.c.b16 %v1777, %v1713
        %v2610 = vpack.c.b16 %v1778, %v1714
        %v2611 = vpack.c.b16 %v1779, %v1715
        %v2612 = vpack.c.b16 %v1780, %v1716
        %v2613 = vpack.c.b16 %v1781, %v1717
        %v2614 = vpack.c.b16 %v1782, %v1718
        %v2615 = vpack.c.b16 %v1783, %v1719
        %v2616 = vpack.c.b16 %v1784, %v1720
        %v2617 = vpack.c.b16 %v1785, %v1721
        %v2618 = vpack.c.b16 %v1786, %v1722
        %v2619 = vpack.c.b16 %v1787, %v1723
        %v2620 = vpack.c.b16 %v1788, %v1724
        %v2621 = vpack.c.b16 %v1789, %v1725
        %v2622 = vpack.c.b16 %v1790, %v1726
        %v2623 = vpack.c.b16 %v1791, %v1727
        %v2624 = vpack.c.b16 %v1792, %v1728
        %v2625 = vpack.c.b16 %v1793, %v1729
        %v2626 = vpack.c.b16 %v1794, %v1730
        %v2627 = vpack.c.b16 %v1795, %v1731
        %v2628 = vpack.c.b16 %v1796, %v1732
        %v2629 = vpack.c.b16 %v1797, %v1733
        %v2630 = vpack.c.b16 %v1798, %v1734
        %v2631 = vpack.c.b16 %v1799, %v1735
        %v2632 = vpack.c.b16 %v1800, %v1736
        %v2633 = vpack.c.b16 %v1865, %v1801
        %v2634 = vpack.c.b16 %v1866, %v1802
        %v2635 = vpack.c.b16 %v1867, %v1803
        %v2636 = vpack.c.b16 %v1868, %v1804
        %v2637 = vpack.c.b16 %v1869, %v1805
        %v2638 = vpack.c.b16 %v1870, %v1806
        %v2639 = vpack.c.b16 %v1871, %v1807
        %v2640 = vpack.c.b16 %v1872, %v1808
        %v2641 = vpack.c.b16 %v1873, %v1809
        %v2642 = vpack.c.b16 %v1874, %v1810
        %v2643 = vpack.c.b16 %v1875, %v1811
        %v2644 = vpack.c.b16 %v1876, %v1812
        %v2645 = vpack.c.b16 %v1877, %v1813
        %v2646 = vpack.c.b16 %v1878, %v1814
        %v2647 = vpack.c.b16 %v1879, %v1815
        %v2648 = vpack.c.b16 %v1880, %v1816
        %v2649 = vpack.c.b16 %v1881, %v1817
        %v2650 = vpack.c.b16 %v1882, %v1818
        %v2651 = vpack.c.b16 %v1883, %v1819
        %v2652 = vpack.c.b16 %v1884, %v1820
        %v2653 = vpack.c.b16 %v1885, %v1821
        %v2654 = vpack.c.b16 %v1886, %v1822
        %v2655 = vpack.c.b16 %v1887, %v1823
        %v2656 = vpack.c.b16 %v1888, %v1824
        %v2657 = vpack.c.b16 %v1889, %v1825
        %v2658 = vpack.c.b16 %v1890, %v1826
        %v2659 = vpack.c.b16 %v1891, %v1827
        %v2660 = vpack.c.b16 %v1892, %v1828
        %v2661 = vpack.c.b16 %v1893, %v1829
        %v2662 = vpack.c.b16 %v1894, %v1830
        %v2663 = vpack.c.b16 %v1895, %v1831
        %v2664 = vpack.c.b16 %v1896, %v1832
        %v2665 = vpack.c.b16 %v1897, %v1833
        %v2666 = vpack.c.b16 %v1898, %v1834
        %v2667 = vpack.c.b16 %v1899, %v1835
        %v2668 = vpack.c.b16 %v1900, %v1836
        %v2669 = vpack.c.b16 %v1901, %v1837
        %v2670 = vpack.c.b16 %v1902, %v1838
        %v2671 = vpack.c.b16 %v1903, %v1839
        %v2672 = vpack.c.b16 %v1904, %v1840
        %v2673 = vpack.c.b16 %v1905, %v1841
        %v2674 = vpack.c.b16 %v1906, %v1842
        %v2675 = vpack.c.b16 %v1907, %v1843
        %v2676 = vpack.c.b16 %v1908, %v1844
        %v2677 = vpack.c.b16 %v1909, %v1845
        %v2678 = vpack.c.b16 %v1910, %v1846
        %v2679 = vpack.c.b16 %v1911, %v1847
        %v2680 = vpack.c.b16 %v1912, %v1848
        %v2681 = vpack.c.b16 %v1913, %v1849
        %v2682 = vpack.c.b16 %v1914, %v1850
        %v2683 = vpack.c.b16 %v1915, %v1851
        %v2684 = vpack.c.b16 %v1916, %v1852
        %v2685 = vpack.c.b16 %v1917, %v1853
        %v2686 = vpack.c.b16 %v1918, %v1854
        %v2687 = vpack.c.b16 %v1919, %v1855
        %v2688 = vpack.c.b16 %v1920, %v1856
        %v2689 = vpack.c.b16 %v1921, %v1857
        %v2690 = vpack.c.b16 %v1922, %v1858
        %v2691 = vpack.c.b16 %v1923, %v1859
        %v2692 = vpack.c.b16 %v1924, %v1860
        %v2693 = vpack.c.b16 %v1925, %v1861
        %v2694 = vpack.c.b16 %v1926, %v1862
        %v2695 = vpack.c.b16 %v1927, %v1863
        %v2696 = vpack.c.b16 %v1928, %v1864
        %v2697 = vpack.c.b16 %v1993, %v1929
        %v2698 = vpack.c.b16 %v1994, %v1930
        %v2699 = vpack.c.b16 %v1995, %v1931
        %v2700 = vpack.c.b16 %v1996, %v1932
        %v2701 = vpack.c.b16 %v1997, %v1933
        %v2702 = vpack.c.b16 %v1998, %v1934
        %v2703 = vpack.c.b16 %v1999, %v1935
        %v2704 = vpack.c.b16 %v2000, %v1936
        %v2705 = vpack.c.b16 %v2001, %v1937
        %v2706 = vpack.c.b16 %v2002, %v1938
        %v2707 = vpack.c.b16 %v2003, %v1939
        %v2708 = vpack.c.b16 %v2004, %v1940
        %v2709 = vpack.c.b16 %v2005, %v1941
        %v2710 = vpack.c.b16 %v2006, %v1942
        %v2711 = vpack.c.b16 %v2007, %v1943
        %v2712 = vpack.c.b16 %v2008, %v1944
        %v2713 = vpack.c.b16 %v2009, %v1945
        %v2714 = vpack.c.b16 %v2010, %v1946
        %v2715 = vpack.c.b16 %v2011, %v1947
        %v2716 = vpack.c.b16 %v2012, %v1948
        %v2717 = vpack.c.b16 %v2013, %v1949
        %v2718 = vpack.c.b16 %v2014, %v1950
        %v2719 = vpack.c.b16 %v2015, %v1951
        %v2720 = vpack.c.b16 %v2016, %v1952
        %v2721 = vpack.c.b16 %v2017, %v1953
        %v2722 = vpack.c.b16 %v2018, %v1954
        %v2723 = vpack.c.b16 %v2019, %v1955
        %v2724 = vpack.c.b16 %v2020, %v1956
        %v2725 = vpack.c.b16 %v2021, %v1957
        %v2726 = vpack.c.b16 %v2022, %v1958
        %v2727 = vpack.c.b16 %v2023, %v1959
        %v2728 = vpack.c.b16 %v2024, %v1960
        %v2729 = vpack.c.b16 %v2025, %v1961
        %v2730 = vpack.c.b16 %v2026, %v1962
        %v2731 = vpack.c.b16 %v2027, %v1963
        %v2732 = vpack.c.b16 %v2028, %v1964
        %v2733 = vpack.c.b16 %v2029, %v1965
        %v2734 = vpack.c.b16 %v2030, %v1966
        %v2735 = vpack.c.b16 %v2031, %v1967
        %v2736 = vpack.c.b16 %v2032, %v1968
        %v2737 = vpack.c.b16 %v2033, %v1969
        %v2738 = vpack.c.b16 %v2034, %v1970
        %v2739 = vpack.c.b16 %v2035, %v1971
        %v2740 = vpack.c.b16 %v2036, %v1972
        %v2741 = vpack.c.b16 %v2037, %v1973
        %v2742 = vpack.c.b16 %v2038, %v1974
        %v2743 = vpack.c.b16 %v2039, %v1975
        %v2744 = vpack.c.b16 %v2040, %v1976
        %v2745 = vpack.c.b16 %v2041, %v1977
        %v2746 = vpack.c.b16 %v2042, %v1978
        %v2747 = vpack.c.b16 %v2043, %v1979
        %v2748 = vpack.c.b16 %v2044, %v1980
        %v2749 = vpack.c.b16 %v2045, %v1981
        %v2750 = vpack.c.b16 %v2046, %v1982
        %v2751 = vpack.c.b16 %v2047, %v1983
        %v2752 = vpack.c.b16 %v2048, %v1984
        %v2753 = vpack.c.b16 %v2049, %v1985
        %v2754 = vpack.c.b16 %v2050, %v1986
        %v2755 = vpack.c.b16 %v2051, %v1987
        %v2756 = vpack.c.b16 %v2052, %v1988
        %v2757 = vpack.c.b16 %v2053, %v1989
        %v2758 = vpack.c.b16 %v2054, %v1990
        %v2759 = vpack.c.b16 %v2055, %v1991
        %v2760 = vpack.c.b16 %v2056, %v1992
        %v2761 = vpack.c.b16 %v2121, %v2057
        %v2762 = vpack.c.b16 %v2122, %v2058
        %v2763 = vpack.c.b16 %v2123, %v2059
        %v2764 = vpack.c.b16 %v2124, %v2060
        %v2765 = vpack.c.b16 %v2125, %v2061
        %v2766 = vpack.c.b16 %v2126, %v2062
        %v2767 = vpack.c.b16 %v2127, %v2063
        %v2768 = vpack.c.b16 %v2128, %v2064
        %v2769 = vpack.c.b16 %v2129, %v2065
        %v2770 = vpack.c.b16 %v2130, %v2066
        %v2771 = vpack.c.b16 %v2131, %v2067
        %v2772 = vpack.c.b16 %v2132, %v2068
        %v2773 = vpack.c.b16 %v2133, %v2069
        %v2774 = vpack.c.b16 %v2134, %v2070
        %v2775 = vpack.c.b16 %v2135, %v2071
        %v2776 = vpack.c.b16 %v2136, %v2072
        %v2777 = vpack.c.b16 %v2137, %v2073
        %v2778 = vpack.c.b16 %v2138, %v2074
        %v2779 = vpack.c.b16 %v2139, %v2075
        %v2780 = vpack.c.b16 %v2140, %v2076
        %v2781 = vpack.c.b16 %v2141, %v2077
        %v2782 = vpack.c.b16 %v2142, %v2078
        %v2783 = vpack.c.b16 %v2143, %v2079
        %v2784 = vpack.c.b16 %v2144, %v2080
        %v2785 = vpack.c.b16 %v2145, %v2081
        %v2786 = vpack.c.b16 %v2146, %v2082
        %v2787 = vpack.c.b16 %v2147, %v2083
        %v2788 = vpack.c.b16 %v2148, %v2084
        %v2789 = vpack.c.b16 %v2149, %v2085
        %v2790 = vpack.c.b16 %v2150, %v2086
        %v2791 = vpack.c.b16 %v2151, %v2087
        %v2792 = vpack.c.b16 %v2152, %v2088
        %v2793 = vpack.c.b16 %v2153, %v2089
        %v2794 = vpack.c.b16 %v2154, %v2090
        %v2795 = vpack.c.b16 %v2155, %v2091
        %v2796 = vpack.c.b16 %v2156, %v2092
        %v2797 = vpack.c.b16 %v2157, %v2093
        %v2798 = vpack.c.b16 %v2158, %v2094
        %v2799 = vpack.c.b16 %v2159, %v2095
        %v2800 = vpack.c.b16 %v2160, %v2096
        %v2801 = vpack.c.b16 %v2161, %v2097
        %v2802 = vpack.c.b16 %v2162, %v2098
        %v2803 = vpack.c.b16 %v2163, %v2099
        %v2804 = vpack.c.b16 %v2164, %v2100
        %v2805 = vpack.c.b16 %v2165, %v2101
        %v2806 = vpack.c.b16 %v2166, %v2102
        %v2807 = vpack.c.b16 %v2167, %v2103
        %v2808 = vpack.c.b16 %v2168, %v2104
        %v2809 = vpack.c.b16 %v2169, %v2105
        %v2810 = vpack.c.b16 %v2170, %v2106
        %v2811 = vpack.c.b16 %v2171, %v2107
        %v2812 = vpack.c.b16 %v2172, %v2108
        %v2813 = vpack.c.b16 %v2173, %v2109
        %v2814 = vpack.c.b16 %v2174, %v2110
        %v2815 = vpack.c.b16 %v2175, %v2111
        %v2816 = vpack.c.b16 %v2176, %v2112
        %v2817 = vpack.c.b16 %v2177, %v2113
        %v2818 = vpack.c.b16 %v2178, %v2114
        %v2819 = vpack.c.b16 %v2179, %v2115
        %v2820 = vpack.c.b16 %v2180, %v2116
        %v2821 = vpack.c.b16 %v2181, %v2117
        %v2822 = vpack.c.b16 %v2182, %v2118
        %v2823 = vpack.c.b16 %v2183, %v2119
        %v2824 = vpack.c.b16 %v2184, %v2120
        %v2825 = vpack.c.b16 %v2249, %v2185
        %v2826 = vpack.c.b16 %v2250, %v2186
        %v2827 = vpack.c.b16 %v2251, %v2187
        %v2828 = vpack.c.b16 %v2252, %v2188
        %v2829 = vpack.c.b16 %v2253, %v2189
        %v2830 = vpack.c.b16 %v2254, %v2190
        %v2831 = vpack.c.b16 %v2255, %v2191
        %v2832 = vpack.c.b16 %v2256, %v2192
        %v2833 = vpack.c.b16 %v2257, %v2193
        %v2834 = vpack.c.b16 %v2258, %v2194
        %v2835 = vpack.c.b16 %v2259, %v2195
        %v2836 = vpack.c.b16 %v2260, %v2196
        %v2837 = vpack.c.b16 %v2261, %v2197
        %v2838 = vpack.c.b16 %v2262, %v2198
        %v2839 = vpack.c.b16 %v2263, %v2199
        %v2840 = vpack.c.b16 %v2264, %v2200
        %v2841 = vpack.c.b16 %v2265, %v2201
        %v2842 = vpack.c.b16 %v2266, %v2202
        %v2843 = vpack.c.b16 %v2267, %v2203
        %v2844 = vpack.c.b16 %v2268, %v2204
        %v2845 = vpack.c.b16 %v2269, %v2205
        %v2846 = vpack.c.b16 %v2270, %v2206
        %v2847 = vpack.c.b16 %v2271, %v2207
        %v2848 = vpack.c.b16 %v2272, %v2208
        %v2849 = vpack.c.b16 %v2273, %v2209
        %v2850 = vpack.c.b16 %v2274, %v2210
        %v2851 = vpack.c.b16 %v2275, %v2211
        %v2852 = vpack.c.b16 %v2276, %v2212
        %v2853 = vpack.c.b16 %v2277, %v2213
        %v2854 = vpack.c.b16 %v2278, %v2214
        %v2855 = vpack.c.b16 %v2279, %v2215
        %v2856 = vpack.c.b16 %v2280, %v2216
        %v2857 = vpack.c.b16 %v2281, %v2217
        %v2858 = vpack.c.b16 %v2282, %v2218
        %v2859 = vpack.c.b16 %v2283, %v2219
        %v2860 = vpack.c.b16 %v2284, %v2220
        %v2861 = vpack.c.b16 %v2285, %v2221
        %v2862 = vpack.c.b16 %v2286, %v2222
        %v2863 = vpack.c.b16 %v2287, %v2223
        %v2864 = vpack.c.b16 %v2288, %v2224
        %v2865 = vpack.c.b16 %v2289, %v2225
        %v2866 = vpack.c.b16 %v2290, %v2226
        %v2867 = vpack.c.b16 %v2291, %v2227
        %v2868 = vpack.c.b16 %v2292, %v2228
        %v2869 = vpack.c.b16 %v2293, %v2229
        %v2870 = vpack.c.b16 %v2294, %v2230
        %v2871 = vpack.c.b16 %v2295, %v2231
        %v2872 = vpack.c.b16 %v2296, %v2232
        %v2873 = vpack.c.b16 %v2297, %v2233
        %v2874 = vpack.c.b16 %v2298, %v2234
        %v2875 = vpack.c.b16 %v2299, %v2235
        %v2876 = vpack.c.b16 %v2300, %v2236
        %v2877 = vpack.c.b16 %v2301, %v2237
        %v2878 = vpack.c.b16 %v2302, %v2238
        %v2879 = vpack.c.b16 %v2303, %v2239
        %v2880 = vpack.c.b16 %v2304, %v2240
        %v2881 = vpack.c.b16 %v2305, %v2241
        %v2882 = vpack.c.b16 %v2306, %v2242
        %v2883 = vpack.c.b16 %v2307, %v2243
        %v2884 = vpack.c.b16 %v2308, %v2244
        %v2885 = vpack.c.b16 %v2309, %v2245
        %v2886 = vpack.c.b16 %v2310, %v2246
        %v2887 = vpack.c.b16 %v2311, %v2247
        %v2888 = vpack.c.b16 %v2312, %v2248
        %v2889 = vpack.c.b16 %v2377, %v2313
        %v2890 = vpack.c.b16 %v2378, %v2314
        %v2891 = vpack.c.b16 %v2379, %v2315
        %v2892 = vpack.c.b16 %v2380, %v2316
        %v2893 = vpack.c.b16 %v2381, %v2317
        %v2894 = vpack.c.b16 %v2382, %v2318
        %v2895 = vpack.c.b16 %v2383, %v2319
        %v2896 = vpack.c.b16 %v2384, %v2320
        %v2897 = vpack.c.b16 %v2385, %v2321
        %v2898 = vpack.c.b16 %v2386, %v2322
        %v2899 = vpack.c.b16 %v2387, %v2323
        %v2900 = vpack.c.b16 %v2388, %v2324
        %v2901 = vpack.c.b16 %v2389, %v2325
        %v2902 = vpack.c.b16 %v2390, %v2326
        %v2903 = vpack.c.b16 %v2391, %v2327
        %v2904 = vpack.c.b16 %v2392, %v2328
        %v2905 = vpack.c.b16 %v2393, %v2329
        %v2906 = vpack.c.b16 %v2394, %v2330
        %v2907 = vpack.c.b16 %v2395, %v2331
        %v2908 = vpack.c.b16 %v2396, %v2332
        %v2909 = vpack.c.b16 %v2397, %v2333
        %v2910 = vpack.c.b16 %v2398, %v2334
        %v2911 = vpack.c.b16 %v2399, %v2335
        %v2912 = vpack.c.b16 %v2400, %v2336
        %v2913 = vpack.c.b16 %v2401, %v2337
        %v2914 = vpack.c.b16 %v2402, %v2338
        %v2915 = vpack.c.b16 %v2403, %v2339
        %v2916 = vpack.c.b16 %v2404, %v2340
        %v2917 = vpack.c.b16 %v2405, %v2341
        %v2918 = vpack.c.b16 %v2406, %v2342
        %v2919 = vpack.c.b16 %v2407, %v2343
        %v2920 = vpack.c.b16 %v2408, %v2344
        %v2921 = vpack.c.b16 %v2409, %v2345
        %v2922 = vpack.c.b16 %v2410, %v2346
        %v2923 = vpack.c.b16 %v2411, %v2347
        %v2924 = vpack.c.b16 %v2412, %v2348
        %v2925 = vpack.c.b16 %v2413, %v2349
        %v2926 = vpack.c.b16 %v2414, %v2350
        %v2927 = vpack.c.b16 %v2415, %v2351
        %v2928 = vpack.c.b16 %v2416, %v2352
        %v2929 = vpack.c.b16 %v2417, %v2353
        %v2930 = vpack.c.b16 %v2418, %v2354
        %v2931 = vpack.c.b16 %v2419, %v2355
        %v2932 = vpack.c.b16 %v2420, %v2356
        %v2933 = vpack.c.b16 %v2421, %v2357
        %v2934 = vpack.c.b16 %v2422, %v2358
        %v2935 = vpack.c.b16 %v2423, %v2359
        %v2936 = vpack.c.b16 %v2424, %v2360
        %v2937 = vpack.c.b16 %v2425, %v2361
        %v2938 = vpack.c.b16 %v2426, %v2362
        %v2939 = vpack.c.b16 %v2427, %v2363
        %v2940 = vpack.c.b16 %v2428, %v2364
        %v2941 = vpack.c.b16 %v2429, %v2365
        %v2942 = vpack.c.b16 %v2430, %v2366
        %v2943 = vpack.c.b16 %v2431, %v2367
        %v2944 = vpack.c.b16 %v2432, %v2368
        %v2945 = vpack.c.b16 %v2433, %v2369
        %v2946 = vpack.c.b16 %v2434, %v2370
        %v2947 = vpack.c.b16 %v2435, %v2371
        %v2948 = vpack.c.b16 %v2436, %v2372
        %v2949 = vpack.c.b16 %v2437, %v2373
        %v2950 = vpack.c.b16 %v2438, %v2374
        %v2951 = vpack.c.b16 %v2439, %v2375
        %v2952 = vpack.c.b16 %v2440, %v2376
        %3465 = vmatpush.bf16.msra.mxu0 %v2889
        %3466 = vmatpush.bf16.msra.mxu0 %v2825
        %3467 = vmatpush.bf16.msra.mxu0 %v2761
        %3468 = vmatpush.bf16.msra.mxu0 %v2697
        %3469 = vmatpush.bf16.msra.mxu0 %v2633
        %3470 = vmatpush.bf16.msra.mxu0 %v2569
        %3471 = vmatpush.bf16.msra.mxu0 %v2505
        %3472 = vmatpush.bf16.msra.mxu0 %v2441
        %3473 = vmatmul.bf16.gmra.mxu0 %v248
        %v3474 = vpop.f32.mrf.mxu0
        %v3475 = vadd.f32 %v777, %v3474
        %v3476 = vpop.f32.mrf.mxu0
        %3477 = vdwg.mxu0
        %3478 = vmatpush.bf16.msra.mxu0 %v2890
        %3479 = vmatpush.bf16.msra.mxu0 %v2826
        %3480 = vmatpush.bf16.msra.mxu0 %v2762
        %3481 = vmatpush.bf16.msra.mxu0 %v2698
        %3482 = vmatpush.bf16.msra.mxu0 %v2634
        %3483 = vmatpush.bf16.msra.mxu0 %v2570
        %3484 = vmatpush.bf16.msra.mxu0 %v2506
        %3485 = vmatpush.bf16.msra.mxu0 %v2442
        %3486 = vmatmul.bf16.gmra.mxu0 %v248
        %v3487 = vpop.f32.mrf.mxu0
        %v3488 = vadd.f32 %v778, %v3487
        %v3489 = vpop.f32.mrf.mxu0
        %3490 = vdwg.mxu0
        %3491 = vmatpush.bf16.msra.mxu0 %v2891
        %3492 = vmatpush.bf16.msra.mxu0 %v2827
        %3493 = vmatpush.bf16.msra.mxu0 %v2763
        %3494 = vmatpush.bf16.msra.mxu0 %v2699
        %3495 = vmatpush.bf16.msra.mxu0 %v2635
        %3496 = vmatpush.bf16.msra.mxu0 %v2571
        %3497 = vmatpush.bf16.msra.mxu0 %v2507
        %3498 = vmatpush.bf16.msra.mxu0 %v2443
        %3499 = vmatmul.bf16.gmra.mxu0 %v248
        %v3500 = vpop.f32.mrf.mxu0
        %v3501 = vadd.f32 %v779, %v3500
        %v3502 = vpop.f32.mrf.mxu0
        %3503 = vdwg.mxu0
        %3504 = vmatpush.bf16.msra.mxu0 %v2892
        %3505 = vmatpush.bf16.msra.mxu0 %v2828
        %3506 = vmatpush.bf16.msra.mxu0 %v2764
        %3507 = vmatpush.bf16.msra.mxu0 %v2700
        %3508 = vmatpush.bf16.msra.mxu0 %v2636
        %3509 = vmatpush.bf16.msra.mxu0 %v2572
        %3510 = vmatpush.bf16.msra.mxu0 %v2508
        %3511 = vmatpush.bf16.msra.mxu0 %v2444
        %3512 = vmatmul.bf16.gmra.mxu0 %v248
        %v3513 = vpop.f32.mrf.mxu0
        %v3514 = vadd.f32 %v780, %v3513
        %v3515 = vpop.f32.mrf.mxu0
        %3516 = vdwg.mxu0
        %3517 = vmatpush.bf16.msra.mxu0 %v2893
        %3518 = vmatpush.bf16.msra.mxu0 %v2829
        %3519 = vmatpush.bf16.msra.mxu0 %v2765
        %3520 = vmatpush.bf16.msra.mxu0 %v2701
        %3521 = vmatpush.bf16.msra.mxu0 %v2637
        %3522 = vmatpush.bf16.msra.mxu0 %v2573
        %3523 = vmatpush.bf16.msra.mxu0 %v2509
        %3524 = vmatpush.bf16.msra.mxu0 %v2445
        %3525 = vmatmul.bf16.gmra.mxu0 %v248
        %v3526 = vpop.f32.mrf.mxu0
        %v3527 = vadd.f32 %v781, %v3526
        %v3528 = vpop.f32.mrf.mxu0
        %3529 = vdwg.mxu0
        %3530 = vmatpush.bf16.msra.mxu0 %v2894
        %3531 = vmatpush.bf16.msra.mxu0 %v2830
        %3532 = vmatpush.bf16.msra.mxu0 %v2766
        %3533 = vmatpush.bf16.msra.mxu0 %v2702
        %3534 = vmatpush.bf16.msra.mxu0 %v2638
        %3535 = vmatpush.bf16.msra.mxu0 %v2574
        %3536 = vmatpush.bf16.msra.mxu0 %v2510
        %3537 = vmatpush.bf16.msra.mxu0 %v2446
        %3538 = vmatmul.bf16.gmra.mxu0 %v248
        %v3539 = vpop.f32.mrf.mxu0
        %v3540 = vadd.f32 %v782, %v3539
        %v3541 = vpop.f32.mrf.mxu0
        %3542 = vdwg.mxu0
        %3543 = vmatpush.bf16.msra.mxu0 %v2895
        %3544 = vmatpush.bf16.msra.mxu0 %v2831
        %3545 = vmatpush.bf16.msra.mxu0 %v2767
        %3546 = vmatpush.bf16.msra.mxu0 %v2703
        %3547 = vmatpush.bf16.msra.mxu0 %v2639
        %3548 = vmatpush.bf16.msra.mxu0 %v2575
        %3549 = vmatpush.bf16.msra.mxu0 %v2511
        %3550 = vmatpush.bf16.msra.mxu0 %v2447
        %3551 = vmatmul.bf16.gmra.mxu0 %v248
        %v3552 = vpop.f32.mrf.mxu0
        %v3553 = vadd.f32 %v783, %v3552
        %v3554 = vpop.f32.mrf.mxu0
        %3555 = vdwg.mxu0
        %3556 = vmatpush.bf16.msra.mxu0 %v2896
        %3557 = vmatpush.bf16.msra.mxu0 %v2832
        %3558 = vmatpush.bf16.msra.mxu0 %v2768
        %3559 = vmatpush.bf16.msra.mxu0 %v2704
        %3560 = vmatpush.bf16.msra.mxu0 %v2640
        %3561 = vmatpush.bf16.msra.mxu0 %v2576
        %3562 = vmatpush.bf16.msra.mxu0 %v2512
        %3563 = vmatpush.bf16.msra.mxu0 %v2448
        %3564 = vmatmul.bf16.gmra.mxu0 %v248
        %v3565 = vpop.f32.mrf.mxu0
        %v3566 = vadd.f32 %v784, %v3565
        %v3567 = vpop.f32.mrf.mxu0
        %3568 = vdwg.mxu0
        %3569 = vmatpush.bf16.msra.mxu0 %v2897
        %3570 = vmatpush.bf16.msra.mxu0 %v2833
        %3571 = vmatpush.bf16.msra.mxu0 %v2769
        %3572 = vmatpush.bf16.msra.mxu0 %v2705
        %3573 = vmatpush.bf16.msra.mxu0 %v2641
        %3574 = vmatpush.bf16.msra.mxu0 %v2577
        %3575 = vmatpush.bf16.msra.mxu0 %v2513
        %3576 = vmatpush.bf16.msra.mxu0 %v2449
        %3577 = vmatmul.bf16.gmra.mxu0 %v248
        %v3578 = vpop.f32.mrf.mxu0
        %v3579 = vadd.f32 %v785, %v3578
        %v3580 = vpop.f32.mrf.mxu0
        %3581 = vdwg.mxu0
        %3582 = vmatpush.bf16.msra.mxu0 %v2898
        %3583 = vmatpush.bf16.msra.mxu0 %v2834
        %3584 = vmatpush.bf16.msra.mxu0 %v2770
        %3585 = vmatpush.bf16.msra.mxu0 %v2706
        %3586 = vmatpush.bf16.msra.mxu0 %v2642
        %3587 = vmatpush.bf16.msra.mxu0 %v2578
        %3588 = vmatpush.bf16.msra.mxu0 %v2514
        %3589 = vmatpush.bf16.msra.mxu0 %v2450
        %3590 = vmatmul.bf16.gmra.mxu0 %v248
        %v3591 = vpop.f32.mrf.mxu0
        %v3592 = vadd.f32 %v786, %v3591
        %v3593 = vpop.f32.mrf.mxu0
        %3594 = vdwg.mxu0
        %3595 = vmatpush.bf16.msra.mxu0 %v2899
        %3596 = vmatpush.bf16.msra.mxu0 %v2835
        %3597 = vmatpush.bf16.msra.mxu0 %v2771
        %3598 = vmatpush.bf16.msra.mxu0 %v2707
        %3599 = vmatpush.bf16.msra.mxu0 %v2643
        %3600 = vmatpush.bf16.msra.mxu0 %v2579
        %3601 = vmatpush.bf16.msra.mxu0 %v2515
        %3602 = vmatpush.bf16.msra.mxu0 %v2451
        %3603 = vmatmul.bf16.gmra.mxu0 %v248
        %v3604 = vpop.f32.mrf.mxu0
        %v3605 = vadd.f32 %v787, %v3604
        %v3606 = vpop.f32.mrf.mxu0
        %3607 = vdwg.mxu0
        %3608 = vmatpush.bf16.msra.mxu0 %v2900
        %3609 = vmatpush.bf16.msra.mxu0 %v2836
        %3610 = vmatpush.bf16.msra.mxu0 %v2772
        %3611 = vmatpush.bf16.msra.mxu0 %v2708
        %3612 = vmatpush.bf16.msra.mxu0 %v2644
        %3613 = vmatpush.bf16.msra.mxu0 %v2580
        %3614 = vmatpush.bf16.msra.mxu0 %v2516
        %3615 = vmatpush.bf16.msra.mxu0 %v2452
        %3616 = vmatmul.bf16.gmra.mxu0 %v248
        %v3617 = vpop.f32.mrf.mxu0
        %v3618 = vadd.f32 %v788, %v3617
        %v3619 = vpop.f32.mrf.mxu0
        %3620 = vdwg.mxu0
        %3621 = vmatpush.bf16.msra.mxu0 %v2901
        %3622 = vmatpush.bf16.msra.mxu0 %v2837
        %3623 = vmatpush.bf16.msra.mxu0 %v2773
        %3624 = vmatpush.bf16.msra.mxu0 %v2709
        %3625 = vmatpush.bf16.msra.mxu0 %v2645
        %3626 = vmatpush.bf16.msra.mxu0 %v2581
        %3627 = vmatpush.bf16.msra.mxu0 %v2517
        %3628 = vmatpush.bf16.msra.mxu0 %v2453
        %3629 = vmatmul.bf16.gmra.mxu0 %v248
        %v3630 = vpop.f32.mrf.mxu0
        %v3631 = vadd.f32 %v789, %v3630
        %v3632 = vpop.f32.mrf.mxu0
        %3633 = vdwg.mxu0
        %3634 = vmatpush.bf16.msra.mxu0 %v2902
        %3635 = vmatpush.bf16.msra.mxu0 %v2838
        %3636 = vmatpush.bf16.msra.mxu0 %v2774
        %3637 = vmatpush.bf16.msra.mxu0 %v2710
        %3638 = vmatpush.bf16.msra.mxu0 %v2646
        %3639 = vmatpush.bf16.msra.mxu0 %v2582
        %3640 = vmatpush.bf16.msra.mxu0 %v2518
        %3641 = vmatpush.bf16.msra.mxu0 %v2454
        %3642 = vmatmul.bf16.gmra.mxu0 %v248
        %v3643 = vpop.f32.mrf.mxu0
        %v3644 = vadd.f32 %v790, %v3643
        %v3645 = vpop.f32.mrf.mxu0
        %3646 = vdwg.mxu0
        %3647 = vmatpush.bf16.msra.mxu0 %v2903
        %3648 = vmatpush.bf16.msra.mxu0 %v2839
        %3649 = vmatpush.bf16.msra.mxu0 %v2775
        %3650 = vmatpush.bf16.msra.mxu0 %v2711
        %3651 = vmatpush.bf16.msra.mxu0 %v2647
        %3652 = vmatpush.bf16.msra.mxu0 %v2583
        %3653 = vmatpush.bf16.msra.mxu0 %v2519
        %3654 = vmatpush.bf16.msra.mxu0 %v2455
        %3655 = vmatmul.bf16.gmra.mxu0 %v248
        %v3656 = vpop.f32.mrf.mxu0
        %v3657 = vadd.f32 %v791, %v3656
        %v3658 = vpop.f32.mrf.mxu0
        %3659 = vdwg.mxu0
        %3660 = vmatpush.bf16.msra.mxu0 %v2904
        %3661 = vmatpush.bf16.msra.mxu0 %v2840
        %3662 = vmatpush.bf16.msra.mxu0 %v2776
        %3663 = vmatpush.bf16.msra.mxu0 %v2712
        %3664 = vmatpush.bf16.msra.mxu0 %v2648
        %3665 = vmatpush.bf16.msra.mxu0 %v2584
        %3666 = vmatpush.bf16.msra.mxu0 %v2520
        %3667 = vmatpush.bf16.msra.mxu0 %v2456
        %3668 = vmatmul.bf16.gmra.mxu0 %v248
        %v3669 = vpop.f32.mrf.mxu0
        %v3670 = vadd.f32 %v792, %v3669
        %v3671 = vpop.f32.mrf.mxu0
        %3672 = vdwg.mxu0
        %3673 = vmatpush.bf16.msra.mxu0 %v2905
        %3674 = vmatpush.bf16.msra.mxu0 %v2841
        %3675 = vmatpush.bf16.msra.mxu0 %v2777
        %3676 = vmatpush.bf16.msra.mxu0 %v2713
        %3677 = vmatpush.bf16.msra.mxu0 %v2649
        %3678 = vmatpush.bf16.msra.mxu0 %v2585
        %3679 = vmatpush.bf16.msra.mxu0 %v2521
        %3680 = vmatpush.bf16.msra.mxu0 %v2457
        %3681 = vmatmul.bf16.gmra.mxu0 %v248
        %v3682 = vpop.f32.mrf.mxu0
        %v3683 = vadd.f32 %v793, %v3682
        %v3684 = vpop.f32.mrf.mxu0
        %3685 = vdwg.mxu0
        %3686 = vmatpush.bf16.msra.mxu0 %v2906
        %3687 = vmatpush.bf16.msra.mxu0 %v2842
        %3688 = vmatpush.bf16.msra.mxu0 %v2778
        %3689 = vmatpush.bf16.msra.mxu0 %v2714
        %3690 = vmatpush.bf16.msra.mxu0 %v2650
        %3691 = vmatpush.bf16.msra.mxu0 %v2586
        %3692 = vmatpush.bf16.msra.mxu0 %v2522
        %3693 = vmatpush.bf16.msra.mxu0 %v2458
        %3694 = vmatmul.bf16.gmra.mxu0 %v248
        %v3695 = vpop.f32.mrf.mxu0
        %v3696 = vadd.f32 %v794, %v3695
        %v3697 = vpop.f32.mrf.mxu0
        %3698 = vdwg.mxu0
        %3699 = vmatpush.bf16.msra.mxu0 %v2907
        %3700 = vmatpush.bf16.msra.mxu0 %v2843
        %3701 = vmatpush.bf16.msra.mxu0 %v2779
        %3702 = vmatpush.bf16.msra.mxu0 %v2715
        %3703 = vmatpush.bf16.msra.mxu0 %v2651
        %3704 = vmatpush.bf16.msra.mxu0 %v2587
        %3705 = vmatpush.bf16.msra.mxu0 %v2523
        %3706 = vmatpush.bf16.msra.mxu0 %v2459
        %3707 = vmatmul.bf16.gmra.mxu0 %v248
        %v3708 = vpop.f32.mrf.mxu0
        %v3709 = vadd.f32 %v795, %v3708
        %v3710 = vpop.f32.mrf.mxu0
        %3711 = vdwg.mxu0
        %3712 = vmatpush.bf16.msra.mxu0 %v2908
        %3713 = vmatpush.bf16.msra.mxu0 %v2844
        %3714 = vmatpush.bf16.msra.mxu0 %v2780
        %3715 = vmatpush.bf16.msra.mxu0 %v2716
        %3716 = vmatpush.bf16.msra.mxu0 %v2652
        %3717 = vmatpush.bf16.msra.mxu0 %v2588
        %3718 = vmatpush.bf16.msra.mxu0 %v2524
        %3719 = vmatpush.bf16.msra.mxu0 %v2460
        %3720 = vmatmul.bf16.gmra.mxu0 %v248
        %v3721 = vpop.f32.mrf.mxu0
        %v3722 = vadd.f32 %v796, %v3721
        %v3723 = vpop.f32.mrf.mxu0
        %3724 = vdwg.mxu0
        %3725 = vmatpush.bf16.msra.mxu0 %v2909
        %3726 = vmatpush.bf16.msra.mxu0 %v2845
        %3727 = vmatpush.bf16.msra.mxu0 %v2781
        %3728 = vmatpush.bf16.msra.mxu0 %v2717
        %3729 = vmatpush.bf16.msra.mxu0 %v2653
        %3730 = vmatpush.bf16.msra.mxu0 %v2589
        %3731 = vmatpush.bf16.msra.mxu0 %v2525
        %3732 = vmatpush.bf16.msra.mxu0 %v2461
        %3733 = vmatmul.bf16.gmra.mxu0 %v248
        %v3734 = vpop.f32.mrf.mxu0
        %v3735 = vadd.f32 %v797, %v3734
        %v3736 = vpop.f32.mrf.mxu0
        %3737 = vdwg.mxu0
        %3738 = vmatpush.bf16.msra.mxu0 %v2910
        %3739 = vmatpush.bf16.msra.mxu0 %v2846
        %3740 = vmatpush.bf16.msra.mxu0 %v2782
        %3741 = vmatpush.bf16.msra.mxu0 %v2718
        %3742 = vmatpush.bf16.msra.mxu0 %v2654
        %3743 = vmatpush.bf16.msra.mxu0 %v2590
        %3744 = vmatpush.bf16.msra.mxu0 %v2526
        %3745 = vmatpush.bf16.msra.mxu0 %v2462
        %3746 = vmatmul.bf16.gmra.mxu0 %v248
        %v3747 = vpop.f32.mrf.mxu0
        %v3748 = vadd.f32 %v798, %v3747
        %v3749 = vpop.f32.mrf.mxu0
        %3750 = vdwg.mxu0
        %3751 = vmatpush.bf16.msra.mxu0 %v2911
        %3752 = vmatpush.bf16.msra.mxu0 %v2847
        %3753 = vmatpush.bf16.msra.mxu0 %v2783
        %3754 = vmatpush.bf16.msra.mxu0 %v2719
        %3755 = vmatpush.bf16.msra.mxu0 %v2655
        %3756 = vmatpush.bf16.msra.mxu0 %v2591
        %3757 = vmatpush.bf16.msra.mxu0 %v2527
        %3758 = vmatpush.bf16.msra.mxu0 %v2463
        %3759 = vmatmul.bf16.gmra.mxu0 %v248
        %v3760 = vpop.f32.mrf.mxu0
        %v3761 = vadd.f32 %v799, %v3760
        %v3762 = vpop.f32.mrf.mxu0
        %3763 = vdwg.mxu0
        %3764 = vmatpush.bf16.msra.mxu0 %v2912
        %3765 = vmatpush.bf16.msra.mxu0 %v2848
        %3766 = vmatpush.bf16.msra.mxu0 %v2784
        %3767 = vmatpush.bf16.msra.mxu0 %v2720
        %3768 = vmatpush.bf16.msra.mxu0 %v2656
        %3769 = vmatpush.bf16.msra.mxu0 %v2592
        %3770 = vmatpush.bf16.msra.mxu0 %v2528
        %3771 = vmatpush.bf16.msra.mxu0 %v2464
        %3772 = vmatmul.bf16.gmra.mxu0 %v248
        %v3773 = vpop.f32.mrf.mxu0
        %v3774 = vadd.f32 %v800, %v3773
        %v3775 = vpop.f32.mrf.mxu0
        %3776 = vdwg.mxu0
        %3777 = vmatpush.bf16.msra.mxu0 %v2913
        %3778 = vmatpush.bf16.msra.mxu0 %v2849
        %3779 = vmatpush.bf16.msra.mxu0 %v2785
        %3780 = vmatpush.bf16.msra.mxu0 %v2721
        %3781 = vmatpush.bf16.msra.mxu0 %v2657
        %3782 = vmatpush.bf16.msra.mxu0 %v2593
        %3783 = vmatpush.bf16.msra.mxu0 %v2529
        %3784 = vmatpush.bf16.msra.mxu0 %v2465
        %3785 = vmatmul.bf16.gmra.mxu0 %v248
        %v3786 = vpop.f32.mrf.mxu0
        %v3787 = vadd.f32 %v801, %v3786
        %v3788 = vpop.f32.mrf.mxu0
        %3789 = vdwg.mxu0
        %3790 = vmatpush.bf16.msra.mxu0 %v2914
        %3791 = vmatpush.bf16.msra.mxu0 %v2850
        %3792 = vmatpush.bf16.msra.mxu0 %v2786
        %3793 = vmatpush.bf16.msra.mxu0 %v2722
        %3794 = vmatpush.bf16.msra.mxu0 %v2658
        %3795 = vmatpush.bf16.msra.mxu0 %v2594
        %3796 = vmatpush.bf16.msra.mxu0 %v2530
        %3797 = vmatpush.bf16.msra.mxu0 %v2466
        %3798 = vmatmul.bf16.gmra.mxu0 %v248
        %v3799 = vpop.f32.mrf.mxu0
        %v3800 = vadd.f32 %v802, %v3799
        %v3801 = vpop.f32.mrf.mxu0
        %3802 = vdwg.mxu0
        %3803 = vmatpush.bf16.msra.mxu0 %v2915
        %3804 = vmatpush.bf16.msra.mxu0 %v2851
        %3805 = vmatpush.bf16.msra.mxu0 %v2787
        %3806 = vmatpush.bf16.msra.mxu0 %v2723
        %3807 = vmatpush.bf16.msra.mxu0 %v2659
        %3808 = vmatpush.bf16.msra.mxu0 %v2595
        %3809 = vmatpush.bf16.msra.mxu0 %v2531
        %3810 = vmatpush.bf16.msra.mxu0 %v2467
        %3811 = vmatmul.bf16.gmra.mxu0 %v248
        %v3812 = vpop.f32.mrf.mxu0
        %v3813 = vadd.f32 %v803, %v3812
        %v3814 = vpop.f32.mrf.mxu0
        %3815 = vdwg.mxu0
        %3816 = vmatpush.bf16.msra.mxu0 %v2916
        %3817 = vmatpush.bf16.msra.mxu0 %v2852
        %3818 = vmatpush.bf16.msra.mxu0 %v2788
        %3819 = vmatpush.bf16.msra.mxu0 %v2724
        %3820 = vmatpush.bf16.msra.mxu0 %v2660
        %3821 = vmatpush.bf16.msra.mxu0 %v2596
        %3822 = vmatpush.bf16.msra.mxu0 %v2532
        %3823 = vmatpush.bf16.msra.mxu0 %v2468
        %3824 = vmatmul.bf16.gmra.mxu0 %v248
        %v3825 = vpop.f32.mrf.mxu0
        %v3826 = vadd.f32 %v804, %v3825
        %v3827 = vpop.f32.mrf.mxu0
        %3828 = vdwg.mxu0
        %3829 = vmatpush.bf16.msra.mxu0 %v2917
        %3830 = vmatpush.bf16.msra.mxu0 %v2853
        %3831 = vmatpush.bf16.msra.mxu0 %v2789
        %3832 = vmatpush.bf16.msra.mxu0 %v2725
        %3833 = vmatpush.bf16.msra.mxu0 %v2661
        %3834 = vmatpush.bf16.msra.mxu0 %v2597
        %3835 = vmatpush.bf16.msra.mxu0 %v2533
        %3836 = vmatpush.bf16.msra.mxu0 %v2469
        %3837 = vmatmul.bf16.gmra.mxu0 %v248
        %v3838 = vpop.f32.mrf.mxu0
        %v3839 = vadd.f32 %v805, %v3838
        %v3840 = vpop.f32.mrf.mxu0
        %3841 = vdwg.mxu0
        %3842 = vmatpush.bf16.msra.mxu0 %v2918
        %3843 = vmatpush.bf16.msra.mxu0 %v2854
        %3844 = vmatpush.bf16.msra.mxu0 %v2790
        %3845 = vmatpush.bf16.msra.mxu0 %v2726
        %3846 = vmatpush.bf16.msra.mxu0 %v2662
        %3847 = vmatpush.bf16.msra.mxu0 %v2598
        %3848 = vmatpush.bf16.msra.mxu0 %v2534
        %3849 = vmatpush.bf16.msra.mxu0 %v2470
        %3850 = vmatmul.bf16.gmra.mxu0 %v248
        %v3851 = vpop.f32.mrf.mxu0
        %v3852 = vadd.f32 %v806, %v3851
        %v3853 = vpop.f32.mrf.mxu0
        %3854 = vdwg.mxu0
        %3855 = vmatpush.bf16.msra.mxu0 %v2919
        %3856 = vmatpush.bf16.msra.mxu0 %v2855
        %3857 = vmatpush.bf16.msra.mxu0 %v2791
        %3858 = vmatpush.bf16.msra.mxu0 %v2727
        %3859 = vmatpush.bf16.msra.mxu0 %v2663
        %3860 = vmatpush.bf16.msra.mxu0 %v2599
        %3861 = vmatpush.bf16.msra.mxu0 %v2535
        %3862 = vmatpush.bf16.msra.mxu0 %v2471
        %3863 = vmatmul.bf16.gmra.mxu0 %v248
        %v3864 = vpop.f32.mrf.mxu0
        %v3865 = vadd.f32 %v807, %v3864
        %v3866 = vpop.f32.mrf.mxu0
        %3867 = vdwg.mxu0
        %3868 = vmatpush.bf16.msra.mxu0 %v2920
        %3869 = vmatpush.bf16.msra.mxu0 %v2856
        %3870 = vmatpush.bf16.msra.mxu0 %v2792
        %3871 = vmatpush.bf16.msra.mxu0 %v2728
        %3872 = vmatpush.bf16.msra.mxu0 %v2664
        %3873 = vmatpush.bf16.msra.mxu0 %v2600
        %3874 = vmatpush.bf16.msra.mxu0 %v2536
        %3875 = vmatpush.bf16.msra.mxu0 %v2472
        %3876 = vmatmul.bf16.gmra.mxu0 %v248
        %v3877 = vpop.f32.mrf.mxu0
        %v3878 = vadd.f32 %v808, %v3877
        %v3879 = vpop.f32.mrf.mxu0
        %3880 = vdwg.mxu0
        %3881 = vmatpush.bf16.msra.mxu0 %v2921
        %3882 = vmatpush.bf16.msra.mxu0 %v2857
        %3883 = vmatpush.bf16.msra.mxu0 %v2793
        %3884 = vmatpush.bf16.msra.mxu0 %v2729
        %3885 = vmatpush.bf16.msra.mxu0 %v2665
        %3886 = vmatpush.bf16.msra.mxu0 %v2601
        %3887 = vmatpush.bf16.msra.mxu0 %v2537
        %3888 = vmatpush.bf16.msra.mxu0 %v2473
        %3889 = vmatmul.bf16.gmra.mxu0 %v248
        %v3890 = vpop.f32.mrf.mxu0
        %v3891 = vadd.f32 %v809, %v3890
        %v3892 = vpop.f32.mrf.mxu0
        %3893 = vdwg.mxu0
        %3894 = vmatpush.bf16.msra.mxu0 %v2922
        %3895 = vmatpush.bf16.msra.mxu0 %v2858
        %3896 = vmatpush.bf16.msra.mxu0 %v2794
        %3897 = vmatpush.bf16.msra.mxu0 %v2730
        %3898 = vmatpush.bf16.msra.mxu0 %v2666
        %3899 = vmatpush.bf16.msra.mxu0 %v2602
        %3900 = vmatpush.bf16.msra.mxu0 %v2538
        %3901 = vmatpush.bf16.msra.mxu0 %v2474
        %3902 = vmatmul.bf16.gmra.mxu0 %v248
        %v3903 = vpop.f32.mrf.mxu0
        %v3904 = vadd.f32 %v810, %v3903
        %v3905 = vpop.f32.mrf.mxu0
        %3906 = vdwg.mxu0
        %3907 = vmatpush.bf16.msra.mxu0 %v2923
        %3908 = vmatpush.bf16.msra.mxu0 %v2859
        %3909 = vmatpush.bf16.msra.mxu0 %v2795
        %3910 = vmatpush.bf16.msra.mxu0 %v2731
        %3911 = vmatpush.bf16.msra.mxu0 %v2667
        %3912 = vmatpush.bf16.msra.mxu0 %v2603
        %3913 = vmatpush.bf16.msra.mxu0 %v2539
        %3914 = vmatpush.bf16.msra.mxu0 %v2475
        %3915 = vmatmul.bf16.gmra.mxu0 %v248
        %v3916 = vpop.f32.mrf.mxu0
        %v3917 = vadd.f32 %v811, %v3916
        %v3918 = vpop.f32.mrf.mxu0
        %3919 = vdwg.mxu0
        %3920 = vmatpush.bf16.msra.mxu0 %v2924
        %3921 = vmatpush.bf16.msra.mxu0 %v2860
        %3922 = vmatpush.bf16.msra.mxu0 %v2796
        %3923 = vmatpush.bf16.msra.mxu0 %v2732
        %3924 = vmatpush.bf16.msra.mxu0 %v2668
        %3925 = vmatpush.bf16.msra.mxu0 %v2604
        %3926 = vmatpush.bf16.msra.mxu0 %v2540
        %3927 = vmatpush.bf16.msra.mxu0 %v2476
        %3928 = vmatmul.bf16.gmra.mxu0 %v248
        %v3929 = vpop.f32.mrf.mxu0
        %v3930 = vadd.f32 %v812, %v3929
        %v3931 = vpop.f32.mrf.mxu0
        %3932 = vdwg.mxu0
        %3933 = vmatpush.bf16.msra.mxu0 %v2925
        %3934 = vmatpush.bf16.msra.mxu0 %v2861
        %3935 = vmatpush.bf16.msra.mxu0 %v2797
        %3936 = vmatpush.bf16.msra.mxu0 %v2733
        %3937 = vmatpush.bf16.msra.mxu0 %v2669
        %3938 = vmatpush.bf16.msra.mxu0 %v2605
        %3939 = vmatpush.bf16.msra.mxu0 %v2541
        %3940 = vmatpush.bf16.msra.mxu0 %v2477
        %3941 = vmatmul.bf16.gmra.mxu0 %v248
        %v3942 = vpop.f32.mrf.mxu0
        %v3943 = vadd.f32 %v813, %v3942
        %v3944 = vpop.f32.mrf.mxu0
        %3945 = vdwg.mxu0
        %3946 = vmatpush.bf16.msra.mxu0 %v2926
        %3947 = vmatpush.bf16.msra.mxu0 %v2862
        %3948 = vmatpush.bf16.msra.mxu0 %v2798
        %3949 = vmatpush.bf16.msra.mxu0 %v2734
        %3950 = vmatpush.bf16.msra.mxu0 %v2670
        %3951 = vmatpush.bf16.msra.mxu0 %v2606
        %3952 = vmatpush.bf16.msra.mxu0 %v2542
        %3953 = vmatpush.bf16.msra.mxu0 %v2478
        %3954 = vmatmul.bf16.gmra.mxu0 %v248
        %v3955 = vpop.f32.mrf.mxu0
        %v3956 = vadd.f32 %v814, %v3955
        %v3957 = vpop.f32.mrf.mxu0
        %3958 = vdwg.mxu0
        %3959 = vmatpush.bf16.msra.mxu0 %v2927
        %3960 = vmatpush.bf16.msra.mxu0 %v2863
        %3961 = vmatpush.bf16.msra.mxu0 %v2799
        %3962 = vmatpush.bf16.msra.mxu0 %v2735
        %3963 = vmatpush.bf16.msra.mxu0 %v2671
        %3964 = vmatpush.bf16.msra.mxu0 %v2607
        %3965 = vmatpush.bf16.msra.mxu0 %v2543
        %3966 = vmatpush.bf16.msra.mxu0 %v2479
        %3967 = vmatmul.bf16.gmra.mxu0 %v248
        %v3968 = vpop.f32.mrf.mxu0
        %v3969 = vadd.f32 %v815, %v3968
        %v3970 = vpop.f32.mrf.mxu0
        %3971 = vdwg.mxu0
        %3972 = vmatpush.bf16.msra.mxu0 %v2928
        %3973 = vmatpush.bf16.msra.mxu0 %v2864
        %3974 = vmatpush.bf16.msra.mxu0 %v2800
        %3975 = vmatpush.bf16.msra.mxu0 %v2736
        %3976 = vmatpush.bf16.msra.mxu0 %v2672
        %3977 = vmatpush.bf16.msra.mxu0 %v2608
        %3978 = vmatpush.bf16.msra.mxu0 %v2544
        %3979 = vmatpush.bf16.msra.mxu0 %v2480
        %3980 = vmatmul.bf16.gmra.mxu0 %v248
        %v3981 = vpop.f32.mrf.mxu0
        %v3982 = vadd.f32 %v816, %v3981
        %v3983 = vpop.f32.mrf.mxu0
        %3984 = vdwg.mxu0
        %3985 = vmatpush.bf16.msra.mxu0 %v2929
        %3986 = vmatpush.bf16.msra.mxu0 %v2865
        %3987 = vmatpush.bf16.msra.mxu0 %v2801
        %3988 = vmatpush.bf16.msra.mxu0 %v2737
        %3989 = vmatpush.bf16.msra.mxu0 %v2673
        %3990 = vmatpush.bf16.msra.mxu0 %v2609
        %3991 = vmatpush.bf16.msra.mxu0 %v2545
        %3992 = vmatpush.bf16.msra.mxu0 %v2481
        %3993 = vmatmul.bf16.gmra.mxu0 %v248
        %v3994 = vpop.f32.mrf.mxu0
        %v3995 = vadd.f32 %v817, %v3994
        %v3996 = vpop.f32.mrf.mxu0
        %3997 = vdwg.mxu0
        %3998 = vmatpush.bf16.msra.mxu0 %v2930
        %3999 = vmatpush.bf16.msra.mxu0 %v2866
        %4000 = vmatpush.bf16.msra.mxu0 %v2802
        %4001 = vmatpush.bf16.msra.mxu0 %v2738
        %4002 = vmatpush.bf16.msra.mxu0 %v2674
        %4003 = vmatpush.bf16.msra.mxu0 %v2610
        %4004 = vmatpush.bf16.msra.mxu0 %v2546
        %4005 = vmatpush.bf16.msra.mxu0 %v2482
        %4006 = vmatmul.bf16.gmra.mxu0 %v248
        %v4007 = vpop.f32.mrf.mxu0
        %v4008 = vadd.f32 %v818, %v4007
        %v4009 = vpop.f32.mrf.mxu0
        %4010 = vdwg.mxu0
        %4011 = vmatpush.bf16.msra.mxu0 %v2931
        %4012 = vmatpush.bf16.msra.mxu0 %v2867
        %4013 = vmatpush.bf16.msra.mxu0 %v2803
        %4014 = vmatpush.bf16.msra.mxu0 %v2739
        %4015 = vmatpush.bf16.msra.mxu0 %v2675
        %4016 = vmatpush.bf16.msra.mxu0 %v2611
        %4017 = vmatpush.bf16.msra.mxu0 %v2547
        %4018 = vmatpush.bf16.msra.mxu0 %v2483
        %4019 = vmatmul.bf16.gmra.mxu0 %v248
        %v4020 = vpop.f32.mrf.mxu0
        %v4021 = vadd.f32 %v819, %v4020
        %v4022 = vpop.f32.mrf.mxu0
        %4023 = vdwg.mxu0
        %4024 = vmatpush.bf16.msra.mxu0 %v2932
        %4025 = vmatpush.bf16.msra.mxu0 %v2868
        %4026 = vmatpush.bf16.msra.mxu0 %v2804
        %4027 = vmatpush.bf16.msra.mxu0 %v2740
        %4028 = vmatpush.bf16.msra.mxu0 %v2676
        %4029 = vmatpush.bf16.msra.mxu0 %v2612
        %4030 = vmatpush.bf16.msra.mxu0 %v2548
        %4031 = vmatpush.bf16.msra.mxu0 %v2484
        %4032 = vmatmul.bf16.gmra.mxu0 %v248
        %v4033 = vpop.f32.mrf.mxu0
        %v4034 = vadd.f32 %v820, %v4033
        %v4035 = vpop.f32.mrf.mxu0
        %4036 = vdwg.mxu0
        %4037 = vmatpush.bf16.msra.mxu0 %v2933
        %4038 = vmatpush.bf16.msra.mxu0 %v2869
        %4039 = vmatpush.bf16.msra.mxu0 %v2805
        %4040 = vmatpush.bf16.msra.mxu0 %v2741
        %4041 = vmatpush.bf16.msra.mxu0 %v2677
        %4042 = vmatpush.bf16.msra.mxu0 %v2613
        %4043 = vmatpush.bf16.msra.mxu0 %v2549
        %4044 = vmatpush.bf16.msra.mxu0 %v2485
        %4045 = vmatmul.bf16.gmra.mxu0 %v248
        %v4046 = vpop.f32.mrf.mxu0
        %v4047 = vadd.f32 %v821, %v4046
        %v4048 = vpop.f32.mrf.mxu0
        %4049 = vdwg.mxu0
        %4050 = vmatpush.bf16.msra.mxu0 %v2934
        %4051 = vmatpush.bf16.msra.mxu0 %v2870
        %4052 = vmatpush.bf16.msra.mxu0 %v2806
        %4053 = vmatpush.bf16.msra.mxu0 %v2742
        %4054 = vmatpush.bf16.msra.mxu0 %v2678
        %4055 = vmatpush.bf16.msra.mxu0 %v2614
        %4056 = vmatpush.bf16.msra.mxu0 %v2550
        %4057 = vmatpush.bf16.msra.mxu0 %v2486
        %4058 = vmatmul.bf16.gmra.mxu0 %v248
        %v4059 = vpop.f32.mrf.mxu0
        %v4060 = vadd.f32 %v822, %v4059
        %v4061 = vpop.f32.mrf.mxu0
        %4062 = vdwg.mxu0
        %4063 = vmatpush.bf16.msra.mxu0 %v2935
        %4064 = vmatpush.bf16.msra.mxu0 %v2871
        %4065 = vmatpush.bf16.msra.mxu0 %v2807
        %4066 = vmatpush.bf16.msra.mxu0 %v2743
        %4067 = vmatpush.bf16.msra.mxu0 %v2679
        %4068 = vmatpush.bf16.msra.mxu0 %v2615
        %4069 = vmatpush.bf16.msra.mxu0 %v2551
        %4070 = vmatpush.bf16.msra.mxu0 %v2487
        %4071 = vmatmul.bf16.gmra.mxu0 %v248
        %v4072 = vpop.f32.mrf.mxu0
        %v4073 = vadd.f32 %v823, %v4072
        %v4074 = vpop.f32.mrf.mxu0
        %4075 = vdwg.mxu0
        %4076 = vmatpush.bf16.msra.mxu0 %v2936
        %4077 = vmatpush.bf16.msra.mxu0 %v2872
        %4078 = vmatpush.bf16.msra.mxu0 %v2808
        %4079 = vmatpush.bf16.msra.mxu0 %v2744
        %4080 = vmatpush.bf16.msra.mxu0 %v2680
        %4081 = vmatpush.bf16.msra.mxu0 %v2616
        %4082 = vmatpush.bf16.msra.mxu0 %v2552
        %4083 = vmatpush.bf16.msra.mxu0 %v2488
        %4084 = vmatmul.bf16.gmra.mxu0 %v248
        %v4085 = vpop.f32.mrf.mxu0
        %v4086 = vadd.f32 %v824, %v4085
        %v4087 = vpop.f32.mrf.mxu0
        %4088 = vdwg.mxu0
        %4089 = vmatpush.bf16.msra.mxu0 %v2937
        %4090 = vmatpush.bf16.msra.mxu0 %v2873
        %4091 = vmatpush.bf16.msra.mxu0 %v2809
        %4092 = vmatpush.bf16.msra.mxu0 %v2745
        %4093 = vmatpush.bf16.msra.mxu0 %v2681
        %4094 = vmatpush.bf16.msra.mxu0 %v2617
        %4095 = vmatpush.bf16.msra.mxu0 %v2553
        %4096 = vmatpush.bf16.msra.mxu0 %v2489
        %4097 = vmatmul.bf16.gmra.mxu0 %v248
        %v4098 = vpop.f32.mrf.mxu0
        %v4099 = vadd.f32 %v825, %v4098
        %v4100 = vpop.f32.mrf.mxu0
        %4101 = vdwg.mxu0
        %4102 = vmatpush.bf16.msra.mxu0 %v2938
        %4103 = vmatpush.bf16.msra.mxu0 %v2874
        %4104 = vmatpush.bf16.msra.mxu0 %v2810
        %4105 = vmatpush.bf16.msra.mxu0 %v2746
        %4106 = vmatpush.bf16.msra.mxu0 %v2682
        %4107 = vmatpush.bf16.msra.mxu0 %v2618
        %4108 = vmatpush.bf16.msra.mxu0 %v2554
        %4109 = vmatpush.bf16.msra.mxu0 %v2490
        %4110 = vmatmul.bf16.gmra.mxu0 %v248
        %v4111 = vpop.f32.mrf.mxu0
        %v4112 = vadd.f32 %v826, %v4111
        %v4113 = vpop.f32.mrf.mxu0
        %4114 = vdwg.mxu0
        %4115 = vmatpush.bf16.msra.mxu0 %v2939
        %4116 = vmatpush.bf16.msra.mxu0 %v2875
        %4117 = vmatpush.bf16.msra.mxu0 %v2811
        %4118 = vmatpush.bf16.msra.mxu0 %v2747
        %4119 = vmatpush.bf16.msra.mxu0 %v2683
        %4120 = vmatpush.bf16.msra.mxu0 %v2619
        %4121 = vmatpush.bf16.msra.mxu0 %v2555
        %4122 = vmatpush.bf16.msra.mxu0 %v2491
        %4123 = vmatmul.bf16.gmra.mxu0 %v248
        %v4124 = vpop.f32.mrf.mxu0
        %v4125 = vadd.f32 %v827, %v4124
        %v4126 = vpop.f32.mrf.mxu0
        %4127 = vdwg.mxu0
        %4128 = vmatpush.bf16.msra.mxu0 %v2940
        %4129 = vmatpush.bf16.msra.mxu0 %v2876
        %4130 = vmatpush.bf16.msra.mxu0 %v2812
        %4131 = vmatpush.bf16.msra.mxu0 %v2748
        %4132 = vmatpush.bf16.msra.mxu0 %v2684
        %4133 = vmatpush.bf16.msra.mxu0 %v2620
        %4134 = vmatpush.bf16.msra.mxu0 %v2556
        %4135 = vmatpush.bf16.msra.mxu0 %v2492
        %4136 = vmatmul.bf16.gmra.mxu0 %v248
        %v4137 = vpop.f32.mrf.mxu0
        %v4138 = vadd.f32 %v828, %v4137
        %v4139 = vpop.f32.mrf.mxu0
        %4140 = vdwg.mxu0
        %4141 = vmatpush.bf16.msra.mxu0 %v2941
        %4142 = vmatpush.bf16.msra.mxu0 %v2877
        %4143 = vmatpush.bf16.msra.mxu0 %v2813
        %4144 = vmatpush.bf16.msra.mxu0 %v2749
        %4145 = vmatpush.bf16.msra.mxu0 %v2685
        %4146 = vmatpush.bf16.msra.mxu0 %v2621
        %4147 = vmatpush.bf16.msra.mxu0 %v2557
        %4148 = vmatpush.bf16.msra.mxu0 %v2493
        %4149 = vmatmul.bf16.gmra.mxu0 %v248
        %v4150 = vpop.f32.mrf.mxu0
        %v4151 = vadd.f32 %v829, %v4150
        %v4152 = vpop.f32.mrf.mxu0
        %4153 = vdwg.mxu0
        %4154 = vmatpush.bf16.msra.mxu0 %v2942
        %4155 = vmatpush.bf16.msra.mxu0 %v2878
        %4156 = vmatpush.bf16.msra.mxu0 %v2814
        %4157 = vmatpush.bf16.msra.mxu0 %v2750
        %4158 = vmatpush.bf16.msra.mxu0 %v2686
        %4159 = vmatpush.bf16.msra.mxu0 %v2622
        %4160 = vmatpush.bf16.msra.mxu0 %v2558
        %4161 = vmatpush.bf16.msra.mxu0 %v2494
        %4162 = vmatmul.bf16.gmra.mxu0 %v248
        %v4163 = vpop.f32.mrf.mxu0
        %v4164 = vadd.f32 %v830, %v4163
        %v4165 = vpop.f32.mrf.mxu0
        %4166 = vdwg.mxu0
        %4167 = vmatpush.bf16.msra.mxu0 %v2943
        %4168 = vmatpush.bf16.msra.mxu0 %v2879
        %4169 = vmatpush.bf16.msra.mxu0 %v2815
        %4170 = vmatpush.bf16.msra.mxu0 %v2751
        %4171 = vmatpush.bf16.msra.mxu0 %v2687
        %4172 = vmatpush.bf16.msra.mxu0 %v2623
        %4173 = vmatpush.bf16.msra.mxu0 %v2559
        %4174 = vmatpush.bf16.msra.mxu0 %v2495
        %4175 = vmatmul.bf16.gmra.mxu0 %v248
        %v4176 = vpop.f32.mrf.mxu0
        %v4177 = vadd.f32 %v831, %v4176
        %v4178 = vpop.f32.mrf.mxu0
        %4179 = vdwg.mxu0
        %4180 = vmatpush.bf16.msra.mxu0 %v2944
        %4181 = vmatpush.bf16.msra.mxu0 %v2880
        %4182 = vmatpush.bf16.msra.mxu0 %v2816
        %4183 = vmatpush.bf16.msra.mxu0 %v2752
        %4184 = vmatpush.bf16.msra.mxu0 %v2688
        %4185 = vmatpush.bf16.msra.mxu0 %v2624
        %4186 = vmatpush.bf16.msra.mxu0 %v2560
        %4187 = vmatpush.bf16.msra.mxu0 %v2496
        %4188 = vmatmul.bf16.gmra.mxu0 %v248
        %v4189 = vpop.f32.mrf.mxu0
        %v4190 = vadd.f32 %v832, %v4189
        %v4191 = vpop.f32.mrf.mxu0
        %4192 = vdwg.mxu0
        %4193 = vmatpush.bf16.msra.mxu0 %v2945
        %4194 = vmatpush.bf16.msra.mxu0 %v2881
        %4195 = vmatpush.bf16.msra.mxu0 %v2817
        %4196 = vmatpush.bf16.msra.mxu0 %v2753
        %4197 = vmatpush.bf16.msra.mxu0 %v2689
        %4198 = vmatpush.bf16.msra.mxu0 %v2625
        %4199 = vmatpush.bf16.msra.mxu0 %v2561
        %4200 = vmatpush.bf16.msra.mxu0 %v2497
        %4201 = vmatmul.bf16.gmra.mxu0 %v248
        %v4202 = vpop.f32.mrf.mxu0
        %v4203 = vadd.f32 %v833, %v4202
        %v4204 = vpop.f32.mrf.mxu0
        %4205 = vdwg.mxu0
        %4206 = vmatpush.bf16.msra.mxu0 %v2946
        %4207 = vmatpush.bf16.msra.mxu0 %v2882
        %4208 = vmatpush.bf16.msra.mxu0 %v2818
        %4209 = vmatpush.bf16.msra.mxu0 %v2754
        %4210 = vmatpush.bf16.msra.mxu0 %v2690
        %4211 = vmatpush.bf16.msra.mxu0 %v2626
        %4212 = vmatpush.bf16.msra.mxu0 %v2562
        %4213 = vmatpush.bf16.msra.mxu0 %v2498
        %4214 = vmatmul.bf16.gmra.mxu0 %v248
        %v4215 = vpop.f32.mrf.mxu0
        %v4216 = vadd.f32 %v834, %v4215
        %v4217 = vpop.f32.mrf.mxu0
        %4218 = vdwg.mxu0
        %4219 = vmatpush.bf16.msra.mxu0 %v2947
        %4220 = vmatpush.bf16.msra.mxu0 %v2883
        %4221 = vmatpush.bf16.msra.mxu0 %v2819
        %4222 = vmatpush.bf16.msra.mxu0 %v2755
        %4223 = vmatpush.bf16.msra.mxu0 %v2691
        %4224 = vmatpush.bf16.msra.mxu0 %v2627
        %4225 = vmatpush.bf16.msra.mxu0 %v2563
        %4226 = vmatpush.bf16.msra.mxu0 %v2499
        %4227 = vmatmul.bf16.gmra.mxu0 %v248
        %v4228 = vpop.f32.mrf.mxu0
        %v4229 = vadd.f32 %v835, %v4228
        %v4230 = vpop.f32.mrf.mxu0
        %4231 = vdwg.mxu0
        %4232 = vmatpush.bf16.msra.mxu0 %v2948
        %4233 = vmatpush.bf16.msra.mxu0 %v2884
        %4234 = vmatpush.bf16.msra.mxu0 %v2820
        %4235 = vmatpush.bf16.msra.mxu0 %v2756
        %4236 = vmatpush.bf16.msra.mxu0 %v2692
        %4237 = vmatpush.bf16.msra.mxu0 %v2628
        %4238 = vmatpush.bf16.msra.mxu0 %v2564
        %4239 = vmatpush.bf16.msra.mxu0 %v2500
        %4240 = vmatmul.bf16.gmra.mxu0 %v248
        %v4241 = vpop.f32.mrf.mxu0
        %v4242 = vadd.f32 %v836, %v4241
        %v4243 = vpop.f32.mrf.mxu0
        %4244 = vdwg.mxu0
        %4245 = vmatpush.bf16.msra.mxu0 %v2949
        %4246 = vmatpush.bf16.msra.mxu0 %v2885
        %4247 = vmatpush.bf16.msra.mxu0 %v2821
        %4248 = vmatpush.bf16.msra.mxu0 %v2757
        %4249 = vmatpush.bf16.msra.mxu0 %v2693
        %4250 = vmatpush.bf16.msra.mxu0 %v2629
        %4251 = vmatpush.bf16.msra.mxu0 %v2565
        %4252 = vmatpush.bf16.msra.mxu0 %v2501
        %4253 = vmatmul.bf16.gmra.mxu0 %v248
        %v4254 = vpop.f32.mrf.mxu0
        %v4255 = vadd.f32 %v837, %v4254
        %v4256 = vpop.f32.mrf.mxu0
        %4257 = vdwg.mxu0
        %4258 = vmatpush.bf16.msra.mxu0 %v2950
        %4259 = vmatpush.bf16.msra.mxu0 %v2886
        %4260 = vmatpush.bf16.msra.mxu0 %v2822
        %4261 = vmatpush.bf16.msra.mxu0 %v2758
        %4262 = vmatpush.bf16.msra.mxu0 %v2694
        %4263 = vmatpush.bf16.msra.mxu0 %v2630
        %4264 = vmatpush.bf16.msra.mxu0 %v2566
        %4265 = vmatpush.bf16.msra.mxu0 %v2502
        %4266 = vmatmul.bf16.gmra.mxu0 %v248
        %v4267 = vpop.f32.mrf.mxu0
        %v4268 = vadd.f32 %v838, %v4267
        %v4269 = vpop.f32.mrf.mxu0
        %4270 = vdwg.mxu0
        %4271 = vmatpush.bf16.msra.mxu0 %v2951
        %4272 = vmatpush.bf16.msra.mxu0 %v2887
        %4273 = vmatpush.bf16.msra.mxu0 %v2823
        %4274 = vmatpush.bf16.msra.mxu0 %v2759
        %4275 = vmatpush.bf16.msra.mxu0 %v2695
        %4276 = vmatpush.bf16.msra.mxu0 %v2631
        %4277 = vmatpush.bf16.msra.mxu0 %v2567
        %4278 = vmatpush.bf16.msra.mxu0 %v2503
        %4279 = vmatmul.bf16.gmra.mxu0 %v248
        %v4280 = vpop.f32.mrf.mxu0
        %v4281 = vadd.f32 %v839, %v4280
        %v4282 = vpop.f32.mrf.mxu0
        %4283 = vdwg.mxu0
        %4284 = vmatpush.bf16.msra.mxu0 %v2952
        %4285 = vmatpush.bf16.msra.mxu0 %v2888
        %4286 = vmatpush.bf16.msra.mxu0 %v2824
        %4287 = vmatpush.bf16.msra.mxu0 %v2760
        %4288 = vmatpush.bf16.msra.mxu0 %v2696
        %4289 = vmatpush.bf16.msra.mxu0 %v2632
        %4290 = vmatpush.bf16.msra.mxu0 %v2568
        %4291 = vmatpush.bf16.msra.mxu0 %v2504
        %4292 = vmatmul.bf16.gmra.mxu0 %v248
        %v4293 = vpop.f32.mrf.mxu0
        %v4294 = vadd.f32 %v840, %v4293
        %v4295 = vpop.f32.mrf.mxu0
        %4296 = vdwg.mxu0
        %v4297 = vmax.f32 %v3475, 0.0
        %v4298 = vmax.f32 %v3488, 0.0
        %v4299 = vmax.f32 %v3501, 0.0
        %v4300 = vmax.f32 %v3514, 0.0
        %v4301 = vmax.f32 %v3527, 0.0
        %v4302 = vmax.f32 %v3540, 0.0
        %v4303 = vmax.f32 %v3553, 0.0
        %v4304 = vmax.f32 %v3566, 0.0
        %v4305 = vmax.f32 %v3579, 0.0
        %v4306 = vmax.f32 %v3592, 0.0
        %v4307 = vmax.f32 %v3605, 0.0
        %v4308 = vmax.f32 %v3618, 0.0
        %v4309 = vmax.f32 %v3631, 0.0
        %v4310 = vmax.f32 %v3644, 0.0
        %v4311 = vmax.f32 %v3657, 0.0
        %v4312 = vmax.f32 %v3670, 0.0
        %v4313 = vmax.f32 %v3683, 0.0
        %v4314 = vmax.f32 %v3696, 0.0
        %v4315 = vmax.f32 %v3709, 0.0
        %v4316 = vmax.f32 %v3722, 0.0
        %v4317 = vmax.f32 %v3735, 0.0
        %v4318 = vmax.f32 %v3748, 0.0
        %v4319 = vmax.f32 %v3761, 0.0
        %v4320 = vmax.f32 %v3774, 0.0
        %v4321 = vmax.f32 %v3787, 0.0
        %v4322 = vmax.f32 %v3800, 0.0
        %v4323 = vmax.f32 %v3813, 0.0
        %v4324 = vmax.f32 %v3826, 0.0
        %v4325 = vmax.f32 %v3839, 0.0
        %v4326 = vmax.f32 %v3852, 0.0
        %v4327 = vmax.f32 %v3865, 0.0
        %v4328 = vmax.f32 %v3878, 0.0
        %v4329 = vmax.f32 %v3891, 0.0
        %v4330 = vmax.f32 %v3904, 0.0
        %v4331 = vmax.f32 %v3917, 0.0
        %v4332 = vmax.f32 %v3930, 0.0
        %v4333 = vmax.f32 %v3943, 0.0
        %v4334 = vmax.f32 %v3956, 0.0
        %v4335 = vmax.f32 %v3969, 0.0
        %v4336 = vmax.f32 %v3982, 0.0
        %v4337 = vmax.f32 %v3995, 0.0
        %v4338 = vmax.f32 %v4008, 0.0
        %v4339 = vmax.f32 %v4021, 0.0
        %v4340 = vmax.f32 %v4034, 0.0
        %v4341 = vmax.f32 %v4047, 0.0
        %v4342 = vmax.f32 %v4060, 0.0
        %v4343 = vmax.f32 %v4073, 0.0
        %v4344 = vmax.f32 %v4086, 0.0
        %v4345 = vmax.f32 %v4099, 0.0
        %v4346 = vmax.f32 %v4112, 0.0
        %v4347 = vmax.f32 %v4125, 0.0
        %v4348 = vmax.f32 %v4138, 0.0
        %v4349 = vmax.f32 %v4151, 0.0
        %v4350 = vmax.f32 %v4164, 0.0
        %v4351 = vmax.f32 %v4177, 0.0
        %v4352 = vmax.f32 %v4190, 0.0
        %v4353 = vmax.f32 %v4203, 0.0
        %v4354 = vmax.f32 %v4216, 0.0
        %v4355 = vmax.f32 %v4229, 0.0
        %v4356 = vmax.f32 %v4242, 0.0
        %v4357 = vmax.f32 %v4255, 0.0
        %v4358 = vmax.f32 %v4268, 0.0
        %v4359 = vmax.f32 %v4281, 0.0
        %v4360 = vmax.f32 %v4294, 0.0
        %v4425 = vrot.slane %v4298, 6
        %v4426 = vrot.slane %v4299, 4
        %v4427 = vrot.slane %v4300, 2
        %v4428 = vrot.slane %v4302, 6
        %v4429 = vrot.slane %v4303, 4
        %v4430 = vrot.slane %v4304, 2
        %v4431 = vrot.slane %v4306, 6
        %v4432 = vrot.slane %v4307, 4
        %v4433 = vrot.slane %v4308, 2
        %v4434 = vrot.slane %v4310, 6
        %v4435 = vrot.slane %v4311, 4
        %v4436 = vrot.slane %v4312, 2
        %v4437 = vrot.slane %v4314, 6
        %v4438 = vrot.slane %v4315, 4
        %v4439 = vrot.slane %v4316, 2
        %v4440 = vrot.slane %v4318, 6
        %v4441 = vrot.slane %v4319, 4
        %v4442 = vrot.slane %v4320, 2
        %v4443 = vrot.slane %v4322, 6
        %v4444 = vrot.slane %v4323, 4
        %v4445 = vrot.slane %v4324, 2
        %v4446 = vrot.slane %v4326, 6
        %v4447 = vrot.slane %v4327, 4
        %v4448 = vrot.slane %v4328, 2
        %v4449 = vrot.slane %v4330, 6
        %v4450 = vrot.slane %v4331, 4
        %v4451 = vrot.slane %v4332, 2
        %v4452 = vrot.slane %v4334, 6
        %v4453 = vrot.slane %v4335, 4
        %v4454 = vrot.slane %v4336, 2
        %v4455 = vrot.slane %v4338, 6
        %v4456 = vrot.slane %v4339, 4
        %v4457 = vrot.slane %v4340, 2
        %v4458 = vrot.slane %v4342, 6
        %v4459 = vrot.slane %v4343, 4
        %v4460 = vrot.slane %v4344, 2
        %v4461 = vrot.slane %v4346, 6
        %v4462 = vrot.slane %v4347, 4
        %v4463 = vrot.slane %v4348, 2
        %v4464 = vrot.slane %v4350, 6
        %v4465 = vrot.slane %v4351, 4
        %v4466 = vrot.slane %v4352, 2
        %v4467 = vrot.slane %v4354, 6
        %v4468 = vrot.slane %v4355, 4
        %v4469 = vrot.slane %v4356, 2
        %v4470 = vrot.slane %v4358, 6
        %v4471 = vrot.slane %v4359, 4
        %v4472 = vrot.slane %v4360, 2
        %vm4473 = vcmask 1041408
        %v4474 = vsel %vm4473, %v4297, %v4425
        %vm4475 = vcmask 1045508
        %v4476 = vsel %vm4475, %v4426, %v4427
        %vm4477 = vcmask 1043456
        %v4478 = vsel %vm4477, %v4474, %v4476
        %v4479 = vsel %vm4473, %v4301, %v4428
        %v4480 = vsel %vm4475, %v4429, %v4430
        %v4481 = vsel %vm4477, %v4479, %v4480
        %v4482 = vsel %vm4473, %v4305, %v4431
        %v4483 = vsel %vm4475, %v4432, %v4433
        %v4484 = vsel %vm4477, %v4482, %v4483
        %v4485 = vsel %vm4473, %v4309, %v4434
        %v4486 = vsel %vm4475, %v4435, %v4436
        %v4487 = vsel %vm4477, %v4485, %v4486
        %v4488 = vsel %vm4473, %v4313, %v4437
        %v4489 = vsel %vm4475, %v4438, %v4439
        %v4490 = vsel %vm4477, %v4488, %v4489
        %v4491 = vsel %vm4473, %v4317, %v4440
        %v4492 = vsel %vm4475, %v4441, %v4442
        %v4493 = vsel %vm4477, %v4491, %v4492
        %v4494 = vsel %vm4473, %v4321, %v4443
        %v4495 = vsel %vm4475, %v4444, %v4445
        %v4496 = vsel %vm4477, %v4494, %v4495
        %v4497 = vsel %vm4473, %v4325, %v4446
        %v4498 = vsel %vm4475, %v4447, %v4448
        %v4499 = vsel %vm4477, %v4497, %v4498
        %v4500 = vsel %vm4473, %v4329, %v4449
        %v4501 = vsel %vm4475, %v4450, %v4451
        %v4502 = vsel %vm4477, %v4500, %v4501
        %v4503 = vsel %vm4473, %v4333, %v4452
        %v4504 = vsel %vm4475, %v4453, %v4454
        %v4505 = vsel %vm4477, %v4503, %v4504
        %v4506 = vsel %vm4473, %v4337, %v4455
        %v4507 = vsel %vm4475, %v4456, %v4457
        %v4508 = vsel %vm4477, %v4506, %v4507
        %v4509 = vsel %vm4473, %v4341, %v4458
        %v4510 = vsel %vm4475, %v4459, %v4460
        %v4511 = vsel %vm4477, %v4509, %v4510
        %v4512 = vsel %vm4473, %v4345, %v4461
        %v4513 = vsel %vm4475, %v4462, %v4463
        %v4514 = vsel %vm4477, %v4512, %v4513
        %v4515 = vsel %vm4473, %v4349, %v4464
        %v4516 = vsel %vm4475, %v4465, %v4466
        %v4517 = vsel %vm4477, %v4515, %v4516
        %v4518 = vsel %vm4473, %v4353, %v4467
        %v4519 = vsel %vm4475, %v4468, %v4469
        %v4520 = vsel %vm4477, %v4518, %v4519
        %v4521 = vsel %vm4473, %v4357, %v4470
        %v4522 = vsel %vm4475, %v4471, %v4472
        %v4523 = vsel %vm4477, %v4521, %v4522
        %4540 = vst [vmem:[%s245] sm:$0xff] %v4478
        %4541 = vst [vmem:[%s245 + $0x8] sm:$0xff] %v4481
        %4542 = vst [vmem:[%s245 + $0x10] sm:$0xff] %v4484
        %4543 = vst [vmem:[%s245 + $0x18] sm:$0xff] %v4487
        %4544 = vst [vmem:[%s245 + $0x20] sm:$0xff] %v4490
        %4545 = vst [vmem:[%s245 + $0x28] sm:$0xff] %v4493
        %4546 = vst [vmem:[%s245 + $0x30] sm:$0xff] %v4496
        %4547 = vst [vmem:[%s245 + $0x38] sm:$0xff] %v4499
        %4548 = vst [vmem:[%s245 + $0x40] sm:$0xff] %v4502
        %4549 = vst [vmem:[%s245 + $0x48] sm:$0xff] %v4505
        %4550 = vst [vmem:[%s245 + $0x50] sm:$0xff] %v4508
        %4551 = vst [vmem:[%s245 + $0x58] sm:$0xff] %v4511
        %4552 = vst [vmem:[%s245 + $0x60] sm:$0xff] %v4514
        %4553 = vst [vmem:[%s245 + $0x68] sm:$0xff] %v4517
        %4554 = vst [vmem:[%s245 + $0x70] sm:$0xff] %v4520
        %4555 = vst [vmem:[%s245 + $0x78] sm:$0xff] %v4523
        %s4556 = smul.u32 64, %s18
        %p4557 = scmp.lt.s32.totalorder %s4556, 127
        %s4558 = scalar_select %p4557, %s4556, 127
        %s4559 = smul.addr %s4558, 2
        %s4560 = scalar_lea.vmem %s3, %s4559
        // Predicated region
        $region45: #{decoder_forward.2} parent=31 // pred_check
          %p4561 = pneg %p109
        $region46: #{decoder_forward.2} parent=31 // pred_check_branch
          %4563 = sbr.rel (%p4561) target = $region48
        $region47: #{decoder_forward.2} parent=31 // pred_region
          %s4564 = smul.u32 64, %s18
        $region48: #{decoder_forward.2} parent=31 // pred_fallthru
          _
      $region32: #{decoder_forward.2} parent=5 // pred_fallthru
        _
      %p4565 = scmp.le.s32.totalorder 2, %s13
      // Predicated region
      $region49: #{decoder_forward.2} parent=5 // pred_check
        %p4566 = pneg %p4565
      $region50: #{decoder_forward.2} parent=5 // pred_check_branch
        %4568 = sbr.rel (%p4566) target = $region52
      $region51: #{decoder_forward.2} parent=5 // pred_region
        %s4569 = ssub.s32 %s13, 2
        // Predicated region
        $region53: #{decoder_forward.2} parent=51 // pred_check
          %p4570 = pneg %p115
        $region54: #{decoder_forward.2} parent=51 // pred_check_branch
          %4572 = sbr.rel (%p4570) target = $region56
        $region55: #{decoder_forward.2} parent=51 // pred_region
          %s4573 = smul.u32 64, %s19
          %p4574 = scmp.lt.s32.totalorder %s4573, 127
          %s4575 = scalar_select %p4574, %s4573, 127
          %s4576 = smul.addr %s4575, 2
          %s4577 = scalar_lea.vmem %s3, %s4576
        $region56: #{decoder_forward.2} parent=51 // pred_fallthru
          _
      $region52: #{decoder_forward.2} parent=5 // pred_fallthru
        _
    $region6: #{decoder_forward.2} parent=1 // loop_footer
      %s17 = sadd.s32 1, %s13
    $region7: #{decoder_forward.2} parent=1 // loop_footer_branch
      %12 = sbr.rel target = $region3
    $region8: #{decoder_forward.2} parent=1 // loop_exit
      _
    %4578 = vsyncpa [#allocation3], 1
    %s4579 = scalar_lea.sflag [#allocation3], 1
    %4580 = vsyncpa %s4579, 1
    %4581 = vsyncpa [#allocation5], 1
    %s4582 = scalar_lea.sflag [#allocation5], 1
    %4583 = vsyncpa %s4582, 1

</llo_original>
